<compile_context>
chip_gen: v6e
topology: v6e:2x2x1
jax: 0.10.0
libtpu: 0.0.40
codegen_flags: <defaults>
</compile_context>

<pallas_src>
import functools

import jax
import jax.numpy as jnp
from jax import lax
from jax.experimental import pallas as pl
from jax.experimental.pallas import tpu as pltpu

BN_EPS = 1e-5
LRELU_SLOPE = 0.2
KSIZE = 4   # conv3d_kw = kw = 4
PAD = 1     # conv3d_padw = padw = 1


def _round_up(a, b):
    return (a + b - 1) // b * b


def _pick_tp(pn_pad):
    """Largest lane tile (multiple of 128) that divides pn_pad exactly, so no
    extra P padding and no masked stores.  Capped so the patch block stays a
    fraction of VMEM on every TPU generation."""
    if pn_pad <= 2048:
        return pn_pad
    for cand in (2048, 1536, 1024, 768, 512, 384, 256, 128):
        if pn_pad % cand == 0:
            return cand
    return 128


# -----------------------------------------------------------------------------
# Pallas kernel: single-step (Cout_pad, K) x (K, TP) MXU matmul with fused
# scale/shift (bias + eval BatchNorm) + LeakyReLU epilogue.  K fits one block
# for every layer, so there is no accumulator scratch and no K loop.
# -----------------------------------------------------------------------------
def _conv_mm_kernel(w_ref, p_ref, scale_ref, shift_ref, o_ref, *, apply_act):
    acc = jnp.dot(w_ref[...], p_ref[...], preferred_element_type=jnp.float32)
    y = acc * scale_ref[...] + shift_ref[...]          # f32 epilogue
    if apply_act:
        y = jnp.where(y >= 0.0, y, LRELU_SLOPE * y)
    o_ref[...] = y.astype(o_ref.dtype)                 # lane-dense store


def _fused_conv_matmul(w_mat, patches, scale, shift, apply_act, out_dtype):
    """w_mat: (c_pad, K) bf16 (pre-padded at build time);
    patches: (N, K, Pn_pad) bf16; scale/shift: (c_pad, 1) f32.
    Returns (N, c_pad, Pn_pad) in out_dtype."""
    c_pad, kdim = w_mat.shape
    n, _, pn_pad = patches.shape
    tp = _pick_tp(pn_pad)
    grid = (n, pn_pad // tp)                 # all-parallel grid (megacore/2-TC)

    grid_spec = pltpu.PrefetchScalarGridSpec(
        num_scalar_prefetch=0,
        grid=grid,
        in_specs=[
            # Constant block indices -> weight / scale / shift DMA'd once.
            pl.BlockSpec((c_pad, kdim), lambda b, i: (0, 0)),
            pl.BlockSpec((None, kdim, tp), lambda b, i: (b, 0, i)),
            pl.BlockSpec((c_pad, 1), lambda b, i: (0, 0)),
            pl.BlockSpec((c_pad, 1), lambda b, i: (0, 0)),
        ],
        out_specs=pl.BlockSpec((None, c_pad, tp), lambda b, i: (b, 0, i)),
    )

    return pl.pallas_call(
        functools.partial(_conv_mm_kernel, apply_act=apply_act),
        out_shape=jax.ShapeDtypeStruct((n, c_pad, pn_pad), out_dtype),
        grid_spec=grid_spec,
        compiler_params=pltpu.CompilerParams(
            dimension_semantics=("parallel", "parallel")),
    )(w_mat, patches, scale, shift)


# -----------------------------------------------------------------------------
# Wrapper-side layout plumbing: NCDHW im2col with taps stacked directly in the
# (K, P) order the kernel consumes (no transposes, contiguous reshapes only).
# -----------------------------------------------------------------------------
def _im2col_ncdhw(x, stride):
    """x: (N, C, D, H, W) bf16 -> (N, K=C*64, Pn=Do*Ho*Wo), K order = (cin, tap)
    matching w.reshape(Cout, Cin*64)."""
    n, c, d, h, w = x.shape
    xp = jnp.pad(x, ((0, 0), (0, 0), (PAD, PAD), (PAD, PAD), (PAD, PAD)))
    do = (d + 2 * PAD - KSIZE) // stride + 1
    ho = (h + 2 * PAD - KSIZE) // stride + 1
    wo = (w + 2 * PAD - KSIZE) // stride + 1
    taps = []
    for kd in range(KSIZE):
        for kh in range(KSIZE):
            for kw in range(KSIZE):
                taps.append(
                    xp[:, :,
                       kd:kd + stride * (do - 1) + 1:stride,
                       kh:kh + stride * (ho - 1) + 1:stride,
                       kw:kw + stride * (wo - 1) + 1:stride])
    pat = jnp.stack(taps, axis=2)                          # (N, C, 64, Do, Ho, Wo)
    pat = pat.reshape(n, c * KSIZE ** 3, do * ho * wo)     # contiguous (free)
    return pat, (do, ho, wo)


def _conv_layer(x, layer):
    """x: (N, Cin, D, H, W) bf16 -> (N, Cout, Do, Ho, Wo) in layer['out_dtype']."""
    n = x.shape[0]
    c_out = layer["c_out"]
    patches, (do, ho, wo) = _im2col_ncdhw(x, layer["stride"])
    pn = do * ho * wo
    pn_pad = _round_up(pn, 128)
    if pn_pad != pn:                                       # only tiny tail layers
        patches = jnp.pad(patches, ((0, 0), (0, 0), (0, pn_pad - pn)))
    out = _fused_conv_matmul(layer["w_mat"], patches, layer["scale"],
                             layer["shift"], layer["act"], layer["out_dtype"])
    out = out[:, :c_out, :pn]                              # no-op when unpadded
    return out.reshape(n, c_out, do, ho, wo)


def nlayer_discriminator_forward(x_ncdhw, layers):
    # Whole pipeline stays in NCDHW: the (N, Cout, Pn) kernel output reshapes
    # for free into the next layer's NCDHW activation (no transposes anywhere).
    h = x_ncdhw.astype(jnp.bfloat16)
    for layer in layers:
        h = _conv_layer(h, layer)
    return h                                               # last layer is f32


# -----------------------------------------------------------------------------
# Parameter construction (spectral norm + BatchNorm folding) and pure-JAX ref.
# -----------------------------------------------------------------------------
def _spectral_normalize(w, n_iter=50):
    c_out = w.shape[0]
    wm = w.reshape(c_out, -1)
    u = jnp.ones((c_out,), jnp.float32) / jnp.sqrt(float(c_out))
    v = None
    for _ in range(n_iter):
        v = wm.T @ u
        v = v / (jnp.linalg.norm(v) + 1e-12)
        u = wm @ v
        u = u / (jnp.linalg.norm(u) + 1e-12)
    sigma = u @ (wm @ v)
    return w / sigma


def build_layers(key, input_nc, ndf, n_layers):
    # (cin, cout, stride, has_bias, has_bn, act) following NLayerDiscriminator
    # with norm_layer=BatchNorm3d (use_bias=False on the normed convs).
    specs = [(input_nc, ndf, 2, True, False, True)]
    nf_mult = 1
    for n in range(1, n_layers):
        prev, nf_mult = nf_mult, min(2 ** n, 8)
        specs.append((ndf * prev, ndf * nf_mult, 2, False, True, True))
    prev, nf_mult = nf_mult, min(2 ** n_layers, 8)
    specs.append((ndf * prev, ndf * nf_mult, 1, False, True, True))
    specs.append((ndf * nf_mult, 1, 1, True, False, False))

    layers_k, layers_r = [], []
    for li, (cin, cout, stride, has_bias, has_bn, act) in enumerate(specs):
        key, kw_, kb_, kg_, kbe_, krm_, krv_ = jax.random.split(key, 7)
        fan_in = cin * KSIZE ** 3
        bound = 1.0 / jnp.sqrt(float(fan_in))
        w = jax.random.uniform(kw_, (cout, cin, KSIZE, KSIZE, KSIZE),
                               jnp.float32, -bound, bound)
        w = _spectral_normalize(w)
        bias = (jax.random.uniform(kb_, (cout,), jnp.float32, -bound, bound)
                if has_bias else None)
        if has_bn:
            gamma = jax.random.uniform(kg_, (cout,), jnp.float32, 0.5, 1.5)
            beta = jax.random.uniform(kbe_, (cout,), jnp.float32, -0.5, 0.5)
            rmean = jax.random.uniform(krm_, (cout,), jnp.float32, -0.5, 0.5)
            rvar = jax.random.uniform(krv_, (cout,), jnp.float32, 0.5, 1.5)
            s = gamma / jnp.sqrt(rvar + BN_EPS)
            scale = s
            shift = beta - rmean * s + (bias * s if bias is not None else 0.0)
            bn = (gamma, beta, rmean, rvar)
        else:
            scale = jnp.ones((cout,), jnp.float32)
            shift = bias if bias is not None else jnp.zeros((cout,), jnp.float32)
            bn = None

        # Kernel-ready parameters, built ONCE (not per forward call).
        # K order = (cin, kd, kh, kw) so the weight matrix is a free reshape.
        c_pad = _round_up(cout, 16)          # bf16 sublane packing is (16, 128)
        w_mat = w.reshape(cout, cin * KSIZE ** 3).astype(jnp.bfloat16)
        w_mat = jnp.pad(w_mat, ((0, c_pad - cout), (0, 0)))
        scale_p = jnp.pad(scale, (0, c_pad - cout)).reshape(c_pad, 1)
        shift_p = jnp.pad(shift, (0, c_pad - cout)).reshape(c_pad, 1)
        is_last = li == len(specs) - 1
        layers_k.append(dict(w_mat=w_mat, scale=scale_p, shift=shift_p,
                             stride=stride, act=act, c_out=cout,
                             out_dtype=jnp.float32 if is_last else jnp.bfloat16))
        layers_r.append(dict(w=w, bias=bias, bn=bn, stride=stride, act=act))
    return layers_k, layers_r


def nlayer_discriminator_ref(x_ncdhw, layers_r):
    """Independent pure-JAX reference (lax.conv, unfolded bias/BatchNorm)."""
    h = jnp.transpose(x_ncdhw, (0, 2, 3, 4, 1)).astype(jnp.float32)
    for layer in layers_r:
        w = jnp.transpose(layer["w"], (2, 3, 4, 1, 0))   # DHWIO
        y = lax.conv_general_dilated(
            h.astype(jnp.bfloat16), w.astype(jnp.bfloat16),
            window_strides=(layer["stride"],) * 3,
            padding=[(PAD, PAD)] * 3,
            dimension_numbers=("NDHWC", "DHWIO", "NDHWC"),
            preferred_element_type=jnp.float32)
        if layer["bias"] is not None:
            y = y + layer["bias"]
        if layer["bn"] is not None:
            gamma, beta, rmean, rvar = layer["bn"]
            y = (y - rmean) * lax.rsqrt(rvar + BN_EPS) * gamma + beta
        if layer["act"]:
            y = jnp.where(y >= 0.0, y, LRELU_SLOPE * y)
        h = y
    return jnp.transpose(h, (0, 4, 1, 2, 3))


if __name__ == "__main__":
    key = jax.random.PRNGKey(0)
    k_x, k_p = jax.random.split(key)

    # Small shapes consistent with the 3-D discriminator (5 conv layers):
    # (N, C, D, H, W) = (2, 3, 24, 32, 32), ndf=8, n_layers=3.
    N, INPUT_NC, D, H, W = 2, 3, 24, 32, 32
    NDF, N_LAYERS = 8, 3

    x = jax.random.normal(k_x, (N, INPUT_NC, D, H, W), dtype=jnp.float32)
    layers_k, layers_r = build_layers(k_p, INPUT_NC, NDF, N_LAYERS)

    fwd = jax.jit(lambda xin: nlayer_discriminator_forward(xin, layers_k))
    out = jax.block_until_ready(fwd(x))

    ref = jax.block_until_ready(nlayer_discriminator_ref(x, layers_r))

    assert out.shape == ref.shape == (N, 1, 1, 2, 2), (out.shape, ref.shape)
    max_err = float(jnp.max(jnp.abs(out.astype(jnp.float32) - ref)))
    assert jnp.allclose(out.astype(jnp.float32), ref, atol=2e-2, rtol=2e-2), max_err

    print("KERNEL_OK")
</pallas_src>

<mosaic_0001>
module attributes {stable_mosaic.version = 11 : i64} {
  func.func @_conv_mm_kernel(%arg0: i32, %arg1: i32, %arg2: memref<16x192xbf16, #tpu.memory_space<vmem>>, %arg3: memref<1x192x1536xbf16, #tpu.memory_space<vmem>>, %arg4: memref<16x1xf32, #tpu.memory_space<vmem>>, %arg5: memref<16x1xf32, #tpu.memory_space<vmem>>, %arg6: memref<1x16x1536xbf16, #tpu.memory_space<vmem>>) attributes {dimension_semantics = [#tpu.dimension_semantics<parallel>, #tpu.dimension_semantics<parallel>], iteration_bounds = array<i64: 2, 2>, scalar_prefetch = 0 : i64, scratch_operands = 0 : i64, tpu.core_type = #tpu.core_type<tc>, window_params = [{pipeline_mode = #tpu.pipeline_mode<synchronous>, transform_indices = @transform_0, window_bounds = array<i64: 16, 192>}, {transform_indices = @transform_1, window_bounds = array<i64: 1, 192, 1536>}, {pipeline_mode = #tpu.pipeline_mode<synchronous>, transform_indices = @transform_2, window_bounds = array<i64: 16, 1>}, {pipeline_mode = #tpu.pipeline_mode<synchronous>, transform_indices = @transform_3, window_bounds = array<i64: 16, 1>}, {transform_indices = @transform_4, window_bounds = array<i64: 1, 16, 1536>}]} {
    %c0 = arith.constant 0 : index
    %c0_0 = arith.constant 0 : index
    %0 = vector.load %arg2[%c0, %c0_0] : memref<16x192xbf16, #tpu.memory_space<vmem>>, vector<16x192xbf16>
    %c0_1 = arith.constant 0 : index
    %c0_2 = arith.constant 0 : index
    %c0_3 = arith.constant 0 : index
    %1 = vector.load %arg3[%c0_1, %c0_2, %c0_3] : memref<1x192x1536xbf16, #tpu.memory_space<vmem>>, vector<1x192x1536xbf16>
    %2 = vector.shape_cast %1 : vector<1x192x1536xbf16> to vector<192x1536xbf16>
    %cst = arith.constant dense<0.000000e+00> : vector<16x1536xf32>
    %3 = tpu.matmul %0, %2, %cst {dimension_numbers = #tpu.dot_dimension_numbers<[1], [0], [0], [1], [0, 0, 1, 1], [], []>} : vector<16x192xbf16>, vector<192x1536xbf16>, vector<16x1536xf32> -> vector<16x1536xf32>
    %c0_4 = arith.constant 0 : index
    %c0_5 = arith.constant 0 : index
    %4 = vector.load %arg4[%c0_4, %c0_5] : memref<16x1xf32, #tpu.memory_space<vmem>>, vector<16x1xf32>
    %5 = vector.broadcast %4 : vector<16x1xf32> to vector<16x1536xf32>
    %6 = arith.mulf %3, %5 : vector<16x1536xf32>
    %c0_6 = arith.constant 0 : index
    %c0_7 = arith.constant 0 : index
    %7 = vector.load %arg5[%c0_6, %c0_7] : memref<16x1xf32, #tpu.memory_space<vmem>>, vector<16x1xf32>
    %8 = vector.broadcast %7 : vector<16x1xf32> to vector<16x1536xf32>
    %9 = arith.addf %6, %8 : vector<16x1536xf32>
    %cst_8 = arith.constant 0.000000e+00 : f32
    %10 = vector.broadcast %cst_8 : f32 to vector<16x1536xf32>
    %11 = arith.cmpf oge, %9, %10 : vector<16x1536xf32>
    %cst_9 = arith.constant 2.000000e-01 : f32
    %12 = vector.broadcast %cst_9 : f32 to vector<16x1536xf32>
    %13 = arith.mulf %12, %9 : vector<16x1536xf32>
    %14 = arith.select %11, %9, %13 : vector<16x1536xi1>, vector<16x1536xf32>
    %15 = arith.truncf %14 : vector<16x1536xf32> to vector<16x1536xbf16>
    %c0_10 = arith.constant 0 : index
    %c0_11 = arith.constant 0 : index
    %c0_12 = arith.constant 0 : index
    %16 = vector.load %arg6[%c0_10, %c0_11, %c0_12] : memref<1x16x1536xbf16, #tpu.memory_space<vmem>>, vector<1x16x1536xbf16>
    %17 = vector.shape_cast %16 : vector<1x16x1536xbf16> to vector<16x1536xbf16>
    %18 = vector.shape_cast %15 : vector<16x1536xbf16> to vector<1x16x1536xbf16>
    tpu.vector_store %arg6[%c0_10, %c0_11, %c0_12], %18 {strides = array<i32>} : memref<1x16x1536xbf16, #tpu.memory_space<vmem>>, vector<1x16x1536xbf16>,
    return
  }
  func.func @transform_0(%arg0: i32, %arg1: i32) -> (i32, i32) {
    %c0_i32 = arith.constant 0 : i32
    %c0_i32_0 = arith.constant 0 : i32
    %c0_i32_1 = arith.constant 0 : i32
    return %c0_i32, %c0_i32_0 : i32, i32
  }
  func.func @transform_1(%arg0: i32, %arg1: i32) -> (i32, i32, i32) {
    %c0_i32 = arith.constant 0 : i32
    %c0_i32_0 = arith.constant 0 : i32
    return %arg0, %c0_i32, %arg1 : i32, i32, i32
  }
  func.func @transform_2(%arg0: i32, %arg1: i32) -> (i32, i32) {
    %c0_i32 = arith.constant 0 : i32
    %c0_i32_0 = arith.constant 0 : i32
    %c0_i32_1 = arith.constant 0 : i32
    return %c0_i32, %c0_i32_0 : i32, i32
  }
  func.func @transform_3(%arg0: i32, %arg1: i32) -> (i32, i32) {
    %c0_i32 = arith.constant 0 : i32
    %c0_i32_0 = arith.constant 0 : i32
    %c0_i32_1 = arith.constant 0 : i32
    return %c0_i32, %c0_i32_0 : i32, i32
  }
  func.func @transform_4(%arg0: i32, %arg1: i32) -> (i32, i32, i32) {
    %c0_i32 = arith.constant 0 : i32
    %c0_i32_0 = arith.constant 0 : i32
    return %arg0, %c0_i32, %arg1 : i32, i32, i32
  }
}

module attributes {stable_mosaic.version = 11 : i64} {
  func.func @_conv_mm_kernel(%arg0: i32, %arg1: i32, %arg2: memref<16x512xbf16, #tpu.memory_space<vmem>>, %arg3: memref<1x512x384xbf16, #tpu.memory_space<vmem>>, %arg4: memref<16x1xf32, #tpu.memory_space<vmem>>, %arg5: memref<16x1xf32, #tpu.memory_space<vmem>>, %arg6: memref<1x16x384xbf16, #tpu.memory_space<vmem>>) attributes {dimension_semantics = [#tpu.dimension_semantics<parallel>, #tpu.dimension_semantics<parallel>], iteration_bounds = array<i64: 2, 1>, scalar_prefetch = 0 : i64, scratch_operands = 0 : i64, tpu.core_type = #tpu.core_type<tc>, window_params = [{pipeline_mode = #tpu.pipeline_mode<synchronous>, transform_indices = @transform_0, window_bounds = array<i64: 16, 512>}, {transform_indices = @transform_1, window_bounds = array<i64: 1, 512, 384>}, {pipeline_mode = #tpu.pipeline_mode<synchronous>, transform_indices = @transform_2, window_bounds = array<i64: 16, 1>}, {pipeline_mode = #tpu.pipeline_mode<synchronous>, transform_indices = @transform_3, window_bounds = array<i64: 16, 1>}, {transform_indices = @transform_4, window_bounds = array<i64: 1, 16, 384>}]} {
    %c0 = arith.constant 0 : index
    %c0_0 = arith.constant 0 : index
    %0 = vector.load %arg2[%c0, %c0_0] : memref<16x512xbf16, #tpu.memory_space<vmem>>, vector<16x512xbf16>
    %c0_1 = arith.constant 0 : index
    %c0_2 = arith.constant 0 : index
    %c0_3 = arith.constant 0 : index
    %1 = vector.load %arg3[%c0_1, %c0_2, %c0_3] : memref<1x512x384xbf16, #tpu.memory_space<vmem>>, vector<1x512x384xbf16>
    %2 = vector.shape_cast %1 : vector<1x512x384xbf16> to vector<512x384xbf16>
    %cst = arith.constant dense<0.000000e+00> : vector<16x384xf32>
    %3 = tpu.matmul %0, %2, %cst {dimension_numbers = #tpu.dot_dimension_numbers<[1], [0], [0], [1], [0, 0, 1, 1], [], []>} : vector<16x512xbf16>, vector<512x384xbf16>, vector<16x384xf32> -> vector<16x384xf32>
    %c0_4 = arith.constant 0 : index
    %c0_5 = arith.constant 0 : index
    %4 = vector.load %arg4[%c0_4, %c0_5] : memref<16x1xf32, #tpu.memory_space<vmem>>, vector<16x1xf32>
    %5 = vector.broadcast %4 : vector<16x1xf32> to vector<16x384xf32>
    %6 = arith.mulf %3, %5 : vector<16x384xf32>
    %c0_6 = arith.constant 0 : index
    %c0_7 = arith.constant 0 : index
    %7 = vector.load %arg5[%c0_6, %c0_7] : memref<16x1xf32, #tpu.memory_space<vmem>>, vector<16x1xf32>
    %8 = vector.broadcast %7 : vector<16x1xf32> to vector<16x384xf32>
    %9 = arith.addf %6, %8 : vector<16x384xf32>
    %cst_8 = arith.constant 0.000000e+00 : f32
    %10 = vector.broadcast %cst_8 : f32 to vector<16x384xf32>
    %11 = arith.cmpf oge, %9, %10 : vector<16x384xf32>
    %cst_9 = arith.constant 2.000000e-01 : f32
    %12 = vector.broadcast %cst_9 : f32 to vector<16x384xf32>
    %13 = arith.mulf %12, %9 : vector<16x384xf32>
    %14 = arith.select %11, %9, %13 : vector<16x384xi1>, vector<16x384xf32>
    %15 = arith.truncf %14 : vector<16x384xf32> to vector<16x384xbf16>
    %c0_10 = arith.constant 0 : index
    %c0_11 = arith.constant 0 : index
    %c0_12 = arith.constant 0 : index
    %16 = vector.load %arg6[%c0_10, %c0_11, %c0_12] : memref<1x16x384xbf16, #tpu.memory_space<vmem>>, vector<1x16x384xbf16>
    %17 = vector.shape_cast %16 : vector<1x16x384xbf16> to vector<16x384xbf16>
    %18 = vector.shape_cast %15 : vector<16x384xbf16> to vector<1x16x384xbf16>
    tpu.vector_store %arg6[%c0_10, %c0_11, %c0_12], %18 {strides = array<i32>} : memref<1x16x384xbf16, #tpu.memory_space<vmem>>, vector<1x16x384xbf16>,
    return
  }
  func.func @transform_0(%arg0: i32, %arg1: i32) -> (i32, i32) {
    %c0_i32 = arith.constant 0 : i32
    %c0_i32_0 = arith.constant 0 : i32
    %c0_i32_1 = arith.constant 0 : i32
    return %c0_i32, %c0_i32_0 : i32, i32
  }
  func.func @transform_1(%arg0: i32, %arg1: i32) -> (i32, i32, i32) {
    %c0_i32 = arith.constant 0 : i32
    %c0_i32_0 = arith.constant 0 : i32
    return %arg0, %c0_i32, %arg1 : i32, i32, i32
  }
  func.func @transform_2(%arg0: i32, %arg1: i32) -> (i32, i32) {
    %c0_i32 = arith.constant 0 : i32
    %c0_i32_0 = arith.constant 0 : i32
    %c0_i32_1 = arith.constant 0 : i32
    return %c0_i32, %c0_i32_0 : i32, i32
  }
  func.func @transform_3(%arg0: i32, %arg1: i32) -> (i32, i32) {
    %c0_i32 = arith.constant 0 : i32
    %c0_i32_0 = arith.constant 0 : i32
    %c0_i32_1 = arith.constant 0 : i32
    return %c0_i32, %c0_i32_0 : i32, i32
  }
  func.func @transform_4(%arg0: i32, %arg1: i32) -> (i32, i32, i32) {
    %c0_i32 = arith.constant 0 : i32
    %c0_i32_0 = arith.constant 0 : i32
    return %arg0, %c0_i32, %arg1 : i32, i32, i32
  }
}

module attributes {stable_mosaic.version = 11 : i64} {
  func.func @_conv_mm_kernel(%arg0: i32, %arg1: i32, %arg2: memref<32x1024xbf16, #tpu.memory_space<vmem>>, %arg3: memref<1x1024x128xbf16, #tpu.memory_space<vmem>>, %arg4: memref<32x1xf32, #tpu.memory_space<vmem>>, %arg5: memref<32x1xf32, #tpu.memory_space<vmem>>, %arg6: memref<1x32x128xbf16, #tpu.memory_space<vmem>>) attributes {dimension_semantics = [#tpu.dimension_semantics<parallel>, #tpu.dimension_semantics<parallel>], iteration_bounds = array<i64: 2, 1>, scalar_prefetch = 0 : i64, scratch_operands = 0 : i64, tpu.core_type = #tpu.core_type<tc>, window_params = [{pipeline_mode = #tpu.pipeline_mode<synchronous>, transform_indices = @transform_0, window_bounds = array<i64: 32, 1024>}, {transform_indices = @transform_1, window_bounds = array<i64: 1, 1024, 128>}, {pipeline_mode = #tpu.pipeline_mode<synchronous>, transform_indices = @transform_2, window_bounds = array<i64: 32, 1>}, {pipeline_mode = #tpu.pipeline_mode<synchronous>, transform_indices = @transform_3, window_bounds = array<i64: 32, 1>}, {transform_indices = @transform_4, window_bounds = array<i64: 1, 32, 128>}]} {
    %c0 = arith.constant 0 : index
    %c0_0 = arith.constant 0 : index
    %0 = vector.load %arg2[%c0, %c0_0] : memref<32x1024xbf16, #tpu.memory_space<vmem>>, vector<32x1024xbf16>
    %c0_1 = arith.constant 0 : index
    %c0_2 = arith.constant 0 : index
    %c0_3 = arith.constant 0 : index
    %1 = vector.load %arg3[%c0_1, %c0_2, %c0_3] : memref<1x1024x128xbf16, #tpu.memory_space<vmem>>, vector<1x1024x128xbf16>
    %2 = vector.shape_cast %1 : vector<1x1024x128xbf16> to vector<1024x128xbf16>
    %cst = arith.constant dense<0.000000e+00> : vector<32x128xf32>
    %3 = tpu.matmul %0, %2, %cst {dimension_numbers = #tpu.dot_dimension_numbers<[1], [0], [0], [1], [0, 0, 1, 1], [], []>} : vector<32x1024xbf16>, vector<1024x128xbf16>, vector<32x128xf32> -> vector<32x128xf32>
    %c0_4 = arith.constant 0 : index
    %c0_5 = arith.constant 0 : index
    %4 = vector.load %arg4[%c0_4, %c0_5] : memref<32x1xf32, #tpu.memory_space<vmem>>, vector<32x1xf32>
    %5 = vector.broadcast %4 : vector<32x1xf32> to vector<32x128xf32>
    %6 = arith.mulf %3, %5 : vector<32x128xf32>
    %c0_6 = arith.constant 0 : index
    %c0_7 = arith.constant 0 : index
    %7 = vector.load %arg5[%c0_6, %c0_7] : memref<32x1xf32, #tpu.memory_space<vmem>>, vector<32x1xf32>
    %8 = vector.broadcast %7 : vector<32x1xf32> to vector<32x128xf32>
    %9 = arith.addf %6, %8 : vector<32x128xf32>
    %cst_8 = arith.constant 0.000000e+00 : f32
    %10 = vector.broadcast %cst_8 : f32 to vector<32x128xf32>
    %11 = arith.cmpf oge, %9, %10 : vector<32x128xf32>
    %cst_9 = arith.constant 2.000000e-01 : f32
    %12 = vector.broadcast %cst_9 : f32 to vector<32x128xf32>
    %13 = arith.mulf %12, %9 : vector<32x128xf32>
    %14 = arith.select %11, %9, %13 : vector<32x128xi1>, vector<32x128xf32>
    %15 = arith.truncf %14 : vector<32x128xf32> to vector<32x128xbf16>
    %c0_10 = arith.constant 0 : index
    %c0_11 = arith.constant 0 : index
    %c0_12 = arith.constant 0 : index
    %16 = vector.load %arg6[%c0_10, %c0_11, %c0_12] : memref<1x32x128xbf16, #tpu.memory_space<vmem>>, vector<1x32x128xbf16>
    %17 = vector.shape_cast %16 : vector<1x32x128xbf16> to vector<32x128xbf16>
    %18 = vector.shape_cast %15 : vector<32x128xbf16> to vector<1x32x128xbf16>
    tpu.vector_store %arg6[%c0_10, %c0_11, %c0_12], %18 {strides = array<i32>} : memref<1x32x128xbf16, #tpu.memory_space<vmem>>, vector<1x32x128xbf16>,
    return
  }
  func.func @transform_0(%arg0: i32, %arg1: i32) -> (i32, i32) {
    %c0_i32 = arith.constant 0 : i32
    %c0_i32_0 = arith.constant 0 : i32
    %c0_i32_1 = arith.constant 0 : i32
    return %c0_i32, %c0_i32_0 : i32, i32
  }
  func.func @transform_1(%arg0: i32, %arg1: i32) -> (i32, i32, i32) {
    %c0_i32 = arith.constant 0 : i32
    %c0_i32_0 = arith.constant 0 : i32
    return %arg0, %c0_i32, %arg1 : i32, i32, i32
  }
  func.func @transform_2(%arg0: i32, %arg1: i32) -> (i32, i32) {
    %c0_i32 = arith.constant 0 : i32
    %c0_i32_0 = arith.constant 0 : i32
    %c0_i32_1 = arith.constant 0 : i32
    return %c0_i32, %c0_i32_0 : i32, i32
  }
  func.func @transform_3(%arg0: i32, %arg1: i32) -> (i32, i32) {
    %c0_i32 = arith.constant 0 : i32
    %c0_i32_0 = arith.constant 0 : i32
    %c0_i32_1 = arith.constant 0 : i32
    return %c0_i32, %c0_i32_0 : i32, i32
  }
  func.func @transform_4(%arg0: i32, %arg1: i32) -> (i32, i32, i32) {
    %c0_i32 = arith.constant 0 : i32
    %c0_i32_0 = arith.constant 0 : i32
    return %arg0, %c0_i32, %arg1 : i32, i32, i32
  }
}

module attributes {stable_mosaic.version = 11 : i64} {
  func.func @_conv_mm_kernel(%arg0: i32, %arg1: i32, %arg2: memref<64x2048xbf16, #tpu.memory_space<vmem>>, %arg3: memref<1x2048x128xbf16, #tpu.memory_space<vmem>>, %arg4: memref<64x1xf32, #tpu.memory_space<vmem>>, %arg5: memref<64x1xf32, #tpu.memory_space<vmem>>, %arg6: memref<1x64x128xbf16, #tpu.memory_space<vmem>>) attributes {dimension_semantics = [#tpu.dimension_semantics<parallel>, #tpu.dimension_semantics<parallel>], iteration_bounds = array<i64: 2, 1>, scalar_prefetch = 0 : i64, scratch_operands = 0 : i64, tpu.core_type = #tpu.core_type<tc>, window_params = [{pipeline_mode = #tpu.pipeline_mode<synchronous>, transform_indices = @transform_0, window_bounds = array<i64: 64, 2048>}, {transform_indices = @transform_1, window_bounds = array<i64: 1, 2048, 128>}, {pipeline_mode = #tpu.pipeline_mode<synchronous>, transform_indices = @transform_2, window_bounds = array<i64: 64, 1>}, {pipeline_mode = #tpu.pipeline_mode<synchronous>, transform_indices = @transform_3, window_bounds = array<i64: 64, 1>}, {transform_indices = @transform_4, window_bounds = array<i64: 1, 64, 128>}]} {
    %c0 = arith.constant 0 : index
    %c0_0 = arith.constant 0 : index
    %0 = vector.load %arg2[%c0, %c0_0] : memref<64x2048xbf16, #tpu.memory_space<vmem>>, vector<64x2048xbf16>
    %c0_1 = arith.constant 0 : index
    %c0_2 = arith.constant 0 : index
    %c0_3 = arith.constant 0 : index
    %1 = vector.load %arg3[%c0_1, %c0_2, %c0_3] : memref<1x2048x128xbf16, #tpu.memory_space<vmem>>, vector<1x2048x128xbf16>
    %2 = vector.shape_cast %1 : vector<1x2048x128xbf16> to vector<2048x128xbf16>
    %cst = arith.constant dense<0.000000e+00> : vector<64x128xf32>
    %3 = tpu.matmul %0, %2, %cst {dimension_numbers = #tpu.dot_dimension_numbers<[1], [0], [0], [1], [0, 0, 1, 1], [], []>} : vector<64x2048xbf16>, vector<2048x128xbf16>, vector<64x128xf32> -> vector<64x128xf32>
    %c0_4 = arith.constant 0 : index
    %c0_5 = arith.constant 0 : index
    %4 = vector.load %arg4[%c0_4, %c0_5] : memref<64x1xf32, #tpu.memory_space<vmem>>, vector<64x1xf32>
    %5 = vector.broadcast %4 : vector<64x1xf32> to vector<64x128xf32>
    %6 = arith.mulf %3, %5 : vector<64x128xf32>
    %c0_6 = arith.constant 0 : index
    %c0_7 = arith.constant 0 : index
    %7 = vector.load %arg5[%c0_6, %c0_7] : memref<64x1xf32, #tpu.memory_space<vmem>>, vector<64x1xf32>
    %8 = vector.broadcast %7 : vector<64x1xf32> to vector<64x128xf32>
    %9 = arith.addf %6, %8 : vector<64x128xf32>
    %cst_8 = arith.constant 0.000000e+00 : f32
    %10 = vector.broadcast %cst_8 : f32 to vector<64x128xf32>
    %11 = arith.cmpf oge, %9, %10 : vector<64x128xf32>
    %cst_9 = arith.constant 2.000000e-01 : f32
    %12 = vector.broadcast %cst_9 : f32 to vector<64x128xf32>
    %13 = arith.mulf %12, %9 : vector<64x128xf32>
    %14 = arith.select %11, %9, %13 : vector<64x128xi1>, vector<64x128xf32>
    %15 = arith.truncf %14 : vector<64x128xf32> to vector<64x128xbf16>
    %c0_10 = arith.constant 0 : index
    %c0_11 = arith.constant 0 : index
    %c0_12 = arith.constant 0 : index
    %16 = vector.load %arg6[%c0_10, %c0_11, %c0_12] : memref<1x64x128xbf16, #tpu.memory_space<vmem>>, vector<1x64x128xbf16>
    %17 = vector.shape_cast %16 : vector<1x64x128xbf16> to vector<64x128xbf16>
    %18 = vector.shape_cast %15 : vector<64x128xbf16> to vector<1x64x128xbf16>
    tpu.vector_store %arg6[%c0_10, %c0_11, %c0_12], %18 {strides = array<i32>} : memref<1x64x128xbf16, #tpu.memory_space<vmem>>, vector<1x64x128xbf16>,
    return
  }
  func.func @transform_0(%arg0: i32, %arg1: i32) -> (i32, i32) {
    %c0_i32 = arith.constant 0 : i32
    %c0_i32_0 = arith.constant 0 : i32
    %c0_i32_1 = arith.constant 0 : i32
    return %c0_i32, %c0_i32_0 : i32, i32
  }
  func.func @transform_1(%arg0: i32, %arg1: i32) -> (i32, i32, i32) {
    %c0_i32 = arith.constant 0 : i32
    %c0_i32_0 = arith.constant 0 : i32
    return %arg0, %c0_i32, %arg1 : i32, i32, i32
  }
  func.func @transform_2(%arg0: i32, %arg1: i32) -> (i32, i32) {
    %c0_i32 = arith.constant 0 : i32
    %c0_i32_0 = arith.constant 0 : i32
    %c0_i32_1 = arith.constant 0 : i32
    return %c0_i32, %c0_i32_0 : i32, i32
  }
  func.func @transform_3(%arg0: i32, %arg1: i32) -> (i32, i32) {
    %c0_i32 = arith.constant 0 : i32
    %c0_i32_0 = arith.constant 0 : i32
    %c0_i32_1 = arith.constant 0 : i32
    return %c0_i32, %c0_i32_0 : i32, i32
  }
  func.func @transform_4(%arg0: i32, %arg1: i32) -> (i32, i32, i32) {
    %c0_i32 = arith.constant 0 : i32
    %c0_i32_0 = arith.constant 0 : i32
    return %arg0, %c0_i32, %arg1 : i32, i32, i32
  }
}

module attributes {stable_mosaic.version = 11 : i64} {
  func.func @_conv_mm_kernel(%arg0: i32, %arg1: i32, %arg2: memref<16x4096xbf16, #tpu.memory_space<vmem>>, %arg3: memref<1x4096x128xbf16, #tpu.memory_space<vmem>>, %arg4: memref<16x1xf32, #tpu.memory_space<vmem>>, %arg5: memref<16x1xf32, #tpu.memory_space<vmem>>, %arg6: memref<1x16x128xf32, #tpu.memory_space<vmem>>) attributes {dimension_semantics = [#tpu.dimension_semantics<parallel>, #tpu.dimension_semantics<parallel>], iteration_bounds = array<i64: 2, 1>, scalar_prefetch = 0 : i64, scratch_operands = 0 : i64, tpu.core_type = #tpu.core_type<tc>, window_params = [{pipeline_mode = #tpu.pipeline_mode<synchronous>, transform_indices = @transform_0, window_bounds = array<i64: 16, 4096>}, {transform_indices = @transform_1, window_bounds = array<i64: 1, 4096, 128>}, {pipeline_mode = #tpu.pipeline_mode<synchronous>, transform_indices = @transform_2, window_bounds = array<i64: 16, 1>}, {pipeline_mode = #tpu.pipeline_mode<synchronous>, transform_indices = @transform_3, window_bounds = array<i64: 16, 1>}, {transform_indices = @transform_4, window_bounds = array<i64: 1, 16, 128>}]} {
    %c0 = arith.constant 0 : index
    %c0_0 = arith.constant 0 : index
    %0 = vector.load %arg2[%c0, %c0_0] : memref<16x4096xbf16, #tpu.memory_space<vmem>>, vector<16x4096xbf16>
    %c0_1 = arith.constant 0 : index
    %c0_2 = arith.constant 0 : index
    %c0_3 = arith.constant 0 : index
    %1 = vector.load %arg3[%c0_1, %c0_2, %c0_3] : memref<1x4096x128xbf16, #tpu.memory_space<vmem>>, vector<1x4096x128xbf16>
    %2 = vector.shape_cast %1 : vector<1x4096x128xbf16> to vector<4096x128xbf16>
    %cst = arith.constant dense<0.000000e+00> : vector<16x128xf32>
    %3 = tpu.matmul %0, %2, %cst {dimension_numbers = #tpu.dot_dimension_numbers<[1], [0], [0], [1], [0, 0, 1, 1], [], []>} : vector<16x4096xbf16>, vector<4096x128xbf16>, vector<16x128xf32> -> vector<16x128xf32>
    %c0_4 = arith.constant 0 : index
    %c0_5 = arith.constant 0 : index
    %4 = vector.load %arg4[%c0_4, %c0_5] : memref<16x1xf32, #tpu.memory_space<vmem>>, vector<16x1xf32>
    %5 = vector.broadcast %4 : vector<16x1xf32> to vector<16x128xf32>
    %6 = arith.mulf %3, %5 : vector<16x128xf32>
    %c0_6 = arith.constant 0 : index
    %c0_7 = arith.constant 0 : index
    %7 = vector.load %arg5[%c0_6, %c0_7] : memref<16x1xf32, #tpu.memory_space<vmem>>, vector<16x1xf32>
    %8 = vector.broadcast %7 : vector<16x1xf32> to vector<16x128xf32>
    %9 = arith.addf %6, %8 : vector<16x128xf32>
    %c0_8 = arith.constant 0 : index
    %c0_9 = arith.constant 0 : index
    %c0_10 = arith.constant 0 : index
    %10 = vector.load %arg6[%c0_8, %c0_9, %c0_10] : memref<1x16x128xf32, #tpu.memory_space<vmem>>, vector<1x16x128xf32>
    %11 = vector.shape_cast %10 : vector<1x16x128xf32> to vector<16x128xf32>
    %12 = vector.shape_cast %9 : vector<16x128xf32> to vector<1x16x128xf32>
    tpu.vector_store %arg6[%c0_8, %c0_9, %c0_10], %12 {strides = array<i32>} : memref<1x16x128xf32, #tpu.memory_space<vmem>>, vector<1x16x128xf32>,
    return
  }
  func.func @transform_0(%arg0: i32, %arg1: i32) -> (i32, i32) {
    %c0_i32 = arith.constant 0 : i32
    %c0_i32_0 = arith.constant 0 : i32
    %c0_i32_1 = arith.constant 0 : i32
    return %c0_i32, %c0_i32_0 : i32, i32
  }
  func.func @transform_1(%arg0: i32, %arg1: i32) -> (i32, i32, i32) {
    %c0_i32 = arith.constant 0 : i32
    %c0_i32_0 = arith.constant 0 : i32
    return %arg0, %c0_i32, %arg1 : i32, i32, i32
  }
  func.func @transform_2(%arg0: i32, %arg1: i32) -> (i32, i32) {
    %c0_i32 = arith.constant 0 : i32
    %c0_i32_0 = arith.constant 0 : i32
    %c0_i32_1 = arith.constant 0 : i32
    return %c0_i32, %c0_i32_0 : i32, i32
  }
  func.func @transform_3(%arg0: i32, %arg1: i32) -> (i32, i32) {
    %c0_i32 = arith.constant 0 : i32
    %c0_i32_0 = arith.constant 0 : i32
    %c0_i32_1 = arith.constant 0 : i32
    return %c0_i32, %c0_i32_0 : i32, i32
  }
  func.func @transform_4(%arg0: i32, %arg1: i32) -> (i32, i32, i32) {
    %c0_i32 = arith.constant 0 : i32
    %c0_i32_0 = arith.constant 0 : i32
    return %arg0, %c0_i32, %arg1 : i32, i32, i32
  }
}

</mosaic_0001>

<llo_original>
// kernel: _lambda_.5
$region0: #{_lambda_.5}
  #allocation0 [shape = 'u32[]', space=smem, size = 0x4, offset = 0x4, fixed_abs, tag = 'smem constant byte address 0x4 - core index']
  #allocation1 [shape = 'u32[144,128]{1,0:T(1,128)}', space=vmem, size = 0x12000, scoped, tag = 'internal scratch']
  %s0 = inlined_call_operand.vmem [shape: bf16[16,192], index: 0, kind: input, shape index: {}]
  %s1 = inlined_call_operand.vmem [shape: bf16[2,192,3072], index: 1, kind: input, shape index: {}]
  %s2 = inlined_call_operand.vmem [shape: f32[16,1], index: 2, kind: input, shape index: {}]
  %s3 = inlined_call_operand.vmem [shape: f32[16,1], index: 3, kind: input, shape index: {}]
  %s4 = inlined_call_operand.vmem [shape: bf16[2,16,3072], index: 4, kind: output, shape index: {}]
  %s5 = sld [smem:[#allocation0]]
  $region91: #{_lambda_.5} parent=0
    _
  %s7 = ssub.s32 1, %s5
  %s8 = scalar_select 0, %s7, %s5
  $region1: #{_lambda_.5} parent=0
    #allocation2 [shape = 'u8[1179648]{0}', space=vmem, size = 0x120000, scoped, tag = 'input window, operand 1']
    #allocation3 [shape = 'u8[98304]{0}', space=vmem, size = 0x18000, scoped, tag = 'output window, operand 0']
    loop: start=0, step=1, limit=6
    $region2: #{_lambda_.5} parent=1 // loop_pre_header
      _
    $region3: #{_lambda_.5} parent=1 // loop_header
      %s10 = sphi 0, %s14
      %p11 = scmp.ge.s32.totalorder %s10, 6
      %s17 = sphi 0, %s29
      %s18 = sphi 0, %s25
      %s19 = sphi 0, %s17
      %s20 = sphi 0, %s18
      %s21 = sphi 0, %s19
      %s22 = sphi 0, %s20
      %s30 = sphi 0, %s30
      %s32 = sphi 0, %s30
      %s33 = sphi 0, %s32
      %s47 = sphi 0, %s33
      %s55 = sphi 0, %s57
      %s58 = sphi 0, %s55
      %s59 = sphi 0, %s58
      %s75 = sphi 0, %s59
      %s79 = sphi 0, %s79
      %s81 = sphi 0, %s79
      %s82 = sphi 0, %s81
      %s96 = sphi 0, %s82
      %s100 = sphi 0, %s100
      %s102 = sphi 0, %s100
      %s103 = sphi 0, %s102
      %s117 = sphi 0, %s103
      %s125 = sphi 0, %s127
      %s128 = sphi 0, %s125
      %s129 = sphi 0, %s128
      %s145 = sphi 0, %s129
    $region4: #{_lambda_.5} parent=1 // loop_header_branch
      %13 = sbr.rel (%p11) target = $region8
    $region5: #{_lambda_.5} parent=1 // loop_body
      %s15 = ssub.s32 %s10, 1
      %s16 = ssub.s32 %s10, 2
      %s23 = sadd.s32 1, %s18
      %p24 = scmp.ge.s32.totalorder %s23, 2
      %s25 = scalar_select %p24, 0, %s23
      %s26 = sadd.s32 1, %s17
      %s27 = scalar_select %p24, %s26, %s17
      %p28 = scmp.ge.s32.totalorder %s27, 2
      %s29 = scalar_select %p28, 0, %s27
      %s31 = sadd.s32 %s30, 1
      %p34 = scmp.eq.s32.totalorder %s10, 3
      %p35 = scmp.ne.s32.totalorder %s30, %s32
      %p36 = scmp.eq.s32.totalorder %s10, 0
      %p37 = por %p35, %p36
      %p38 = scmp.ne.s32.totalorder %s30, %s32
      %p39 = scmp.eq.s32.totalorder %s15, 3
      %p40 = por %p38, %p39
      %p41 = scmp.ne.s32.totalorder %s32, %s33
      %p42 = scmp.eq.s32.totalorder %s15, 0
      %p43 = por %p41, %p42
      %p44 = scmp.ne.s32.totalorder %s32, %s33
      %p45 = scmp.eq.s32.totalorder %s16, 3
      %p46 = por %p44, %p45
      %p48 = scmp.ne.s32.totalorder %s33, %s47
      %p49 = scmp.eq.s32.totalorder %s16, 0
      %p50 = por %p48, %p49
      %s51 = ssub.s32 %s17, %s29
      %s52 = ssub.s32 %s18, %s25
      %s53 = sor.u32 %s51, %s52
      %p54 = scmp.eq.s32.totalorder %s53, 0
      %s56 = sadd.s32 %s55, 1
      %s57 = scalar_select %p54, %s55, %s56
      %p60 = pneg %p54
      %p61 = scmp.eq.s32.totalorder %s10, 3
      %p62 = por %p60, %p61
      %p63 = scmp.ne.s32.totalorder %s55, %s58
      %p64 = scmp.eq.s32.totalorder %s10, 0
      %p65 = por %p63, %p64
      %p66 = scmp.ne.s32.totalorder %s55, %s58
      %p67 = scmp.eq.s32.totalorder %s15, 3
      %p68 = por %p66, %p67
      %p69 = scmp.ne.s32.totalorder %s58, %s59
      %p70 = scmp.eq.s32.totalorder %s15, 0
      %p71 = por %p69, %p70
      %p72 = scmp.ne.s32.totalorder %s58, %s59
      %p73 = scmp.eq.s32.totalorder %s16, 3
      %p74 = por %p72, %p73
      %p76 = scmp.ne.s32.totalorder %s59, %s75
      %p77 = scmp.eq.s32.totalorder %s16, 0
      %p78 = por %p76, %p77
      %s80 = sadd.s32 %s79, 1
      %p83 = scmp.eq.s32.totalorder %s10, 3
      %p84 = scmp.ne.s32.totalorder %s79, %s81
      %p85 = scmp.eq.s32.totalorder %s10, 0
      %p86 = por %p84, %p85
      %p87 = scmp.ne.s32.totalorder %s79, %s81
      %p88 = scmp.eq.s32.totalorder %s15, 3
      %p89 = por %p87, %p88
      %p90 = scmp.ne.s32.totalorder %s81, %s82
      %p91 = scmp.eq.s32.totalorder %s15, 0
      %p92 = por %p90, %p91
      %p93 = scmp.ne.s32.totalorder %s81, %s82
      %p94 = scmp.eq.s32.totalorder %s16, 3
      %p95 = por %p93, %p94
      %p97 = scmp.ne.s32.totalorder %s82, %s96
      %p98 = scmp.eq.s32.totalorder %s16, 0
      %p99 = por %p97, %p98
      %s101 = sadd.s32 %s100, 1
      %p104 = scmp.eq.s32.totalorder %s10, 3
      %p105 = scmp.ne.s32.totalorder %s100, %s102
      %p106 = scmp.eq.s32.totalorder %s10, 0
      %p107 = por %p105, %p106
      %p108 = scmp.ne.s32.totalorder %s100, %s102
      %p109 = scmp.eq.s32.totalorder %s15, 3
      %p110 = por %p108, %p109
      %p111 = scmp.ne.s32.totalorder %s102, %s103
      %p112 = scmp.eq.s32.totalorder %s15, 0
      %p113 = por %p111, %p112
      %p114 = scmp.ne.s32.totalorder %s102, %s103
      %p115 = scmp.eq.s32.totalorder %s16, 3
      %p116 = por %p114, %p115
      %p118 = scmp.ne.s32.totalorder %s103, %s117
      %p119 = scmp.eq.s32.totalorder %s16, 0
      %p120 = por %p118, %p119
      %s121 = ssub.s32 %s17, %s29
      %s122 = ssub.s32 %s18, %s25
      %s123 = sor.u32 %s121, %s122
      %p124 = scmp.eq.s32.totalorder %s123, 0
      %s126 = sadd.s32 %s125, 1
      %s127 = scalar_select %p124, %s125, %s126
      %p130 = pneg %p124
      %p131 = scmp.eq.s32.totalorder %s10, 3
      %p132 = por %p130, %p131
      %p133 = scmp.ne.s32.totalorder %s125, %s128
      %p134 = scmp.eq.s32.totalorder %s10, 0
      %p135 = por %p133, %p134
      %p136 = scmp.ne.s32.totalorder %s125, %s128
      %p137 = scmp.eq.s32.totalorder %s15, 3
      %p138 = por %p136, %p137
      %p139 = scmp.ne.s32.totalorder %s128, %s129
      %p140 = scmp.eq.s32.totalorder %s15, 0
      %p141 = por %p139, %p140
      %p142 = scmp.ne.s32.totalorder %s128, %s129
      %p143 = scmp.eq.s32.totalorder %s16, 3
      %p144 = por %p142, %p143
      %p146 = scmp.ne.s32.totalorder %s129, %s145
      %p147 = scmp.eq.s32.totalorder %s16, 0
      %p148 = por %p146, %p147
      %p149 = scmp.le.s32.totalorder 1, %s10
      %p150 = scmp.lt.s32.totalorder %s10, 5
      %p151 = pnand %p149, %p150
      %p152 = pneg %p151
      // Predicated region
      $region9: #{_lambda_.5} parent=5 // pred_check
        _
      $region10: #{_lambda_.5} parent=5 // pred_check_branch
        %154 = sbr.rel (%p151) target = $region12
      $region11: #{_lambda_.5} parent=5 // pred_region
        %s155 = ssub.s32 %s10, 1
        // Predicated region
        $region13: #{_lambda_.5} parent=11 // pred_check
          %p156 = pneg %p43
        $region14: #{_lambda_.5} parent=11 // pred_check_branch
          %158 = sbr.rel (%p156) target = $region16
        $region15: #{_lambda_.5} parent=11 // pred_region
          _
        $region16: #{_lambda_.5} parent=11 // pred_fallthru
          _
        // Predicated region
        $region17: #{_lambda_.5} parent=11 // pred_check
          %p159 = pneg %p92
        $region18: #{_lambda_.5} parent=11 // pred_check_branch
          %161 = sbr.rel (%p159) target = $region20
        $region19: #{_lambda_.5} parent=11 // pred_region
          _
        $region20: #{_lambda_.5} parent=11 // pred_fallthru
          _
        // Predicated region
        $region21: #{_lambda_.5} parent=11 // pred_check
          %p162 = pneg %p113
        $region22: #{_lambda_.5} parent=11 // pred_check_branch
          %164 = sbr.rel (%p162) target = $region24
        $region23: #{_lambda_.5} parent=11 // pred_region
          _
        $region24: #{_lambda_.5} parent=11 // pred_fallthru
          _
      $region12: #{_lambda_.5} parent=5 // pred_fallthru
        _
      %p165 = scmp.lt.s32.totalorder %s10, 4
      // Predicated region
      $region25: #{_lambda_.5} parent=5 // pred_check
        %p166 = pneg %p165
      $region26: #{_lambda_.5} parent=5 // pred_check_branch
        %168 = sbr.rel (%p166) target = $region28
      $region27: #{_lambda_.5} parent=5 // pred_region
        // Predicated region
        $region29: #{_lambda_.5} parent=27 // pred_check
          %p169 = pneg %p65
        $region30: #{_lambda_.5} parent=27 // pred_check_branch
          %171 = sbr.rel (%p169) target = $region32
        $region31: #{_lambda_.5} parent=27 // pred_region
          %s172 = sand.u32 %s55, 1
          %s173 = sand.u32 %s55, 1
          %s174 = smul.addr %s173, 1152
          %s175 = scalar_lea.vmem [#allocation2], %s174
          %s176 = smul.u32 12, %s18
          %s177 = smul.addr %s17, 576
          %s178 = sadd.s32 %s176, %s177
          %s179 = smul.addr %s178, 4
          %s180 = scalar_lea.vmem %s1, %s179
          // Predicated region
          $region33: #{_lambda_.5} parent=31 // pred_check
            _
          $region34: #{_lambda_.5} parent=31 // pred_check_branch
            %182 = sbr.rel (0) target = $region36
          $region35: #{_lambda_.5} parent=31 // pred_region
            // Predicated region
            $region37: #{_lambda_.5} parent=35 // pred_check
              _
            $region38: #{_lambda_.5} parent=35 // pred_check_branch
              %184 = sbr.rel (0) target = $region40
            $region39: #{_lambda_.5} parent=35 // pred_region
              loop: start=0, step=1, limit=1
              $region41: #{_lambda_.5} parent=39 // loop_pre_header
                _
              $region42: #{_lambda_.5} parent=39 // loop_header
                %s186 = sphi 0, %s190
                %p187 = scmp.ge.s32.totalorder %s186, 1
                %s191 = sphi %s180, %s180
                %s192 = sphi %s175, %s175
              $region43: #{_lambda_.5} parent=39 // loop_header_branch
                %189 = sbr.rel (%p187) target = $region47
              $region44: #{_lambda_.5} parent=39 // loop_body
                %v193 = vld [vmem:[%s191] sm:$0xff]
                %194 = vst [vmem:[%s192] sm:$0xff] %v193
                %v195 = vld [vmem:[%s191 + $0x8] sm:$0xff]
                %196 = vst [vmem:[%s192 + $0x8] sm:$0xff] %v195
                %v197 = vld [vmem:[%s191 + $0x10] sm:$0xff]
                %198 = vst [vmem:[%s192 + $0x10] sm:$0xff] %v197
                %v199 = vld [vmem:[%s191 + $0x18] sm:$0xff]
                %200 = vst [vmem:[%s192 + $0x18] sm:$0xff] %v199
                %v201 = vld [vmem:[%s191 + $0x20] sm:$0xff]
                %202 = vst [vmem:[%s192 + $0x20] sm:$0xff] %v201
                %v203 = vld [vmem:[%s191 + $0x28] sm:$0xff]
                %204 = vst [vmem:[%s192 + $0x28] sm:$0xff] %v203
                %v205 = vld [vmem:[%s191 + $0x60] sm:$0xff]
                %206 = vst [vmem:[%s192 + $0x30] sm:$0xff] %v205
                %v207 = vld [vmem:[%s191 + $0x68] sm:$0xff]
                %208 = vst [vmem:[%s192 + $0x38] sm:$0xff] %v207
                %v209 = vld [vmem:[%s191 + $0x70] sm:$0xff]
                %210 = vst [vmem:[%s192 + $0x40] sm:$0xff] %v209
                %v211 = vld [vmem:[%s191 + $0x78] sm:$0xff]
                %212 = vst [vmem:[%s192 + $0x48] sm:$0xff] %v211
                %v213 = vld [vmem:[%s191 + $0x80] sm:$0xff]
                %214 = vst [vmem:[%s192 + $0x50] sm:$0xff] %v213
                %v215 = vld [vmem:[%s191 + $0x88] sm:$0xff]
                %216 = vst [vmem:[%s192 + $0x58] sm:$0xff] %v215
                %v217 = vld [vmem:[%s191 + $0xc0] sm:$0xff]
                %218 = vst [vmem:[%s192 + $0x60] sm:$0xff] %v217
                %v219 = vld [vmem:[%s191 + $0xc8] sm:$0xff]
                %220 = vst [vmem:[%s192 + $0x68] sm:$0xff] %v219
                %v221 = vld [vmem:[%s191 + $0xd0] sm:$0xff]
                %222 = vst [vmem:[%s192 + $0x70] sm:$0xff] %v221
                %v223 = vld [vmem:[%s191 + $0xd8] sm:$0xff]
                %224 = vst [vmem:[%s192 + $0x78] sm:$0xff] %v223
                %v225 = vld [vmem:[%s191 + $0xe0] sm:$0xff]
                %226 = vst [vmem:[%s192 + $0x80] sm:$0xff] %v225
                %v227 = vld [vmem:[%s191 + $0xe8] sm:$0xff]
                %228 = vst [vmem:[%s192 + $0x88] sm:$0xff] %v227
                %v229 = vld [vmem:[%s191 + $0x120] sm:$0xff]
                %230 = vst [vmem:[%s192 + $0x90] sm:$0xff] %v229
                %v231 = vld [vmem:[%s191 + $0x128] sm:$0xff]
                %232 = vst [vmem:[%s192 + $0x98] sm:$0xff] %v231
                %v233 = vld [vmem:[%s191 + $0x130] sm:$0xff]
                %234 = vst [vmem:[%s192 + $0xa0] sm:$0xff] %v233
                %v235 = vld [vmem:[%s191 + $0x138] sm:$0xff]
                %236 = vst [vmem:[%s192 + $0xa8] sm:$0xff] %v235
                %v237 = vld [vmem:[%s191 + $0x140] sm:$0xff]
                %238 = vst [vmem:[%s192 + $0xb0] sm:$0xff] %v237
                %v239 = vld [vmem:[%s191 + $0x148] sm:$0xff]
                %240 = vst [vmem:[%s192 + $0xb8] sm:$0xff] %v239
                %v241 = vld [vmem:[%s191 + $0x180] sm:$0xff]
                %242 = vst [vmem:[%s192 + $0xc0] sm:$0xff] %v241
                %v243 = vld [vmem:[%s191 + $0x188] sm:$0xff]
                %244 = vst [vmem:[%s192 + $0xc8] sm:$0xff] %v243
                %v245 = vld [vmem:[%s191 + $0x190] sm:$0xff]
                %246 = vst [vmem:[%s192 + $0xd0] sm:$0xff] %v245
                %v247 = vld [vmem:[%s191 + $0x198] sm:$0xff]
                %248 = vst [vmem:[%s192 + $0xd8] sm:$0xff] %v247
                %v249 = vld [vmem:[%s191 + $0x1a0] sm:$0xff]
                %250 = vst [vmem:[%s192 + $0xe0] sm:$0xff] %v249
                %v251 = vld [vmem:[%s191 + $0x1a8] sm:$0xff]
                %252 = vst [vmem:[%s192 + $0xe8] sm:$0xff] %v251
                %v253 = vld [vmem:[%s191 + $0x1e0] sm:$0xff]
                %254 = vst [vmem:[%s192 + $0xf0] sm:$0xff] %v253
                %v255 = vld [vmem:[%s191 + $0x1e8] sm:$0xff]
                %256 = vst [vmem:[%s192 + $0xf8] sm:$0xff] %v255
                %v257 = vld [vmem:[%s191 + $0x1f0] sm:$0xff]
                %258 = vst [vmem:[%s192 + $0x100] sm:$0xff] %v257
                %v259 = vld [vmem:[%s191 + $0x1f8] sm:$0xff]
                %260 = vst [vmem:[%s192 + $0x108] sm:$0xff] %v259
                %v261 = vld [vmem:[%s191 + $0x200] sm:$0xff]
                %262 = vst [vmem:[%s192 + $0x110] sm:$0xff] %v261
                %v263 = vld [vmem:[%s191 + $0x208] sm:$0xff]
                %264 = vst [vmem:[%s192 + $0x118] sm:$0xff] %v263
                %v265 = vld [vmem:[%s191 + $0x240] sm:$0xff]
                %266 = vst [vmem:[%s192 + $0x120] sm:$0xff] %v265
                %v267 = vld [vmem:[%s191 + $0x248] sm:$0xff]
                %268 = vst [vmem:[%s192 + $0x128] sm:$0xff] %v267
                %v269 = vld [vmem:[%s191 + $0x250] sm:$0xff]
                %270 = vst [vmem:[%s192 + $0x130] sm:$0xff] %v269
                %v271 = vld [vmem:[%s191 + $0x258] sm:$0xff]
                %272 = vst [vmem:[%s192 + $0x138] sm:$0xff] %v271
                %v273 = vld [vmem:[%s191 + $0x260] sm:$0xff]
                %274 = vst [vmem:[%s192 + $0x140] sm:$0xff] %v273
                %v275 = vld [vmem:[%s191 + $0x268] sm:$0xff]
                %276 = vst [vmem:[%s192 + $0x148] sm:$0xff] %v275
                %v277 = vld [vmem:[%s191 + $0x2a0] sm:$0xff]
                %278 = vst [vmem:[%s192 + $0x150] sm:$0xff] %v277
                %v279 = vld [vmem:[%s191 + $0x2a8] sm:$0xff]
                %280 = vst [vmem:[%s192 + $0x158] sm:$0xff] %v279
                %v281 = vld [vmem:[%s191 + $0x2b0] sm:$0xff]
                %282 = vst [vmem:[%s192 + $0x160] sm:$0xff] %v281
                %v283 = vld [vmem:[%s191 + $0x2b8] sm:$0xff]
                %284 = vst [vmem:[%s192 + $0x168] sm:$0xff] %v283
                %v285 = vld [vmem:[%s191 + $0x2c0] sm:$0xff]
                %286 = vst [vmem:[%s192 + $0x170] sm:$0xff] %v285
                %v287 = vld [vmem:[%s191 + $0x2c8] sm:$0xff]
                %288 = vst [vmem:[%s192 + $0x178] sm:$0xff] %v287
                %v289 = vld [vmem:[%s191 + $0x300] sm:$0xff]
                %290 = vst [vmem:[%s192 + $0x180] sm:$0xff] %v289
                %v291 = vld [vmem:[%s191 + $0x308] sm:$0xff]
                %292 = vst [vmem:[%s192 + $0x188] sm:$0xff] %v291
                %v293 = vld [vmem:[%s191 + $0x310] sm:$0xff]
                %294 = vst [vmem:[%s192 + $0x190] sm:$0xff] %v293
                %v295 = vld [vmem:[%s191 + $0x318] sm:$0xff]
                %296 = vst [vmem:[%s192 + $0x198] sm:$0xff] %v295
                %v297 = vld [vmem:[%s191 + $0x320] sm:$0xff]
                %298 = vst [vmem:[%s192 + $0x1a0] sm:$0xff] %v297
                %v299 = vld [vmem:[%s191 + $0x328] sm:$0xff]
                %300 = vst [vmem:[%s192 + $0x1a8] sm:$0xff] %v299
                %v301 = vld [vmem:[%s191 + $0x360] sm:$0xff]
                %302 = vst [vmem:[%s192 + $0x1b0] sm:$0xff] %v301
                %v303 = vld [vmem:[%s191 + $0x368] sm:$0xff]
                %304 = vst [vmem:[%s192 + $0x1b8] sm:$0xff] %v303
                %v305 = vld [vmem:[%s191 + $0x370] sm:$0xff]
                %306 = vst [vmem:[%s192 + $0x1c0] sm:$0xff] %v305
                %v307 = vld [vmem:[%s191 + $0x378] sm:$0xff]
                %308 = vst [vmem:[%s192 + $0x1c8] sm:$0xff] %v307
                %v309 = vld [vmem:[%s191 + $0x380] sm:$0xff]
                %310 = vst [vmem:[%s192 + $0x1d0] sm:$0xff] %v309
                %v311 = vld [vmem:[%s191 + $0x388] sm:$0xff]
                %312 = vst [vmem:[%s192 + $0x1d8] sm:$0xff] %v311
                %v313 = vld [vmem:[%s191 + $0x3c0] sm:$0xff]
                %314 = vst [vmem:[%s192 + $0x1e0] sm:$0xff] %v313
                %v315 = vld [vmem:[%s191 + $0x3c8] sm:$0xff]
                %316 = vst [vmem:[%s192 + $0x1e8] sm:$0xff] %v315
                %v317 = vld [vmem:[%s191 + $0x3d0] sm:$0xff]
                %318 = vst [vmem:[%s192 + $0x1f0] sm:$0xff] %v317
                %v319 = vld [vmem:[%s191 + $0x3d8] sm:$0xff]
                %320 = vst [vmem:[%s192 + $0x1f8] sm:$0xff] %v319
                %v321 = vld [vmem:[%s191 + $0x3e0] sm:$0xff]
                %322 = vst [vmem:[%s192 + $0x200] sm:$0xff] %v321
                %v323 = vld [vmem:[%s191 + $0x3e8] sm:$0xff]
                %324 = vst [vmem:[%s192 + $0x208] sm:$0xff] %v323
                %v325 = vld [vmem:[%s191 + $0x420] sm:$0xff]
                %326 = vst [vmem:[%s192 + $0x210] sm:$0xff] %v325
                %v327 = vld [vmem:[%s191 + $0x428] sm:$0xff]
                %328 = vst [vmem:[%s192 + $0x218] sm:$0xff] %v327
                %v329 = vld [vmem:[%s191 + $0x430] sm:$0xff]
                %330 = vst [vmem:[%s192 + $0x220] sm:$0xff] %v329
                %v331 = vld [vmem:[%s191 + $0x438] sm:$0xff]
                %332 = vst [vmem:[%s192 + $0x228] sm:$0xff] %v331
                %v333 = vld [vmem:[%s191 + $0x440] sm:$0xff]
                %334 = vst [vmem:[%s192 + $0x230] sm:$0xff] %v333
                %v335 = vld [vmem:[%s191 + $0x448] sm:$0xff]
                %336 = vst [vmem:[%s192 + $0x238] sm:$0xff] %v335
                %v337 = vld [vmem:[%s191 + $0x480] sm:$0xff]
                %338 = vst [vmem:[%s192 + $0x240] sm:$0xff] %v337
                %v339 = vld [vmem:[%s191 + $0x488] sm:$0xff]
                %340 = vst [vmem:[%s192 + $0x248] sm:$0xff] %v339
                %v341 = vld [vmem:[%s191 + $0x490] sm:$0xff]
                %342 = vst [vmem:[%s192 + $0x250] sm:$0xff] %v341
                %v343 = vld [vmem:[%s191 + $0x498] sm:$0xff]
                %344 = vst [vmem:[%s192 + $0x258] sm:$0xff] %v343
                %v345 = vld [vmem:[%s191 + $0x4a0] sm:$0xff]
                %346 = vst [vmem:[%s192 + $0x260] sm:$0xff] %v345
                %v347 = vld [vmem:[%s191 + $0x4a8] sm:$0xff]
                %348 = vst [vmem:[%s192 + $0x268] sm:$0xff] %v347
                %v349 = vld [vmem:[%s191 + $0x4e0] sm:$0xff]
                %350 = vst [vmem:[%s192 + $0x270] sm:$0xff] %v349
                %v351 = vld [vmem:[%s191 + $0x4e8] sm:$0xff]
                %352 = vst [vmem:[%s192 + $0x278] sm:$0xff] %v351
                %v353 = vld [vmem:[%s191 + $0x4f0] sm:$0xff]
                %354 = vst [vmem:[%s192 + $0x280] sm:$0xff] %v353
                %v355 = vld [vmem:[%s191 + $0x4f8] sm:$0xff]
                %356 = vst [vmem:[%s192 + $0x288] sm:$0xff] %v355
                %v357 = vld [vmem:[%s191 + $0x500] sm:$0xff]
                %358 = vst [vmem:[%s192 + $0x290] sm:$0xff] %v357
                %v359 = vld [vmem:[%s191 + $0x508] sm:$0xff]
                %360 = vst [vmem:[%s192 + $0x298] sm:$0xff] %v359
                %v361 = vld [vmem:[%s191 + $0x540] sm:$0xff]
                %362 = vst [vmem:[%s192 + $0x2a0] sm:$0xff] %v361
                %v363 = vld [vmem:[%s191 + $0x548] sm:$0xff]
                %364 = vst [vmem:[%s192 + $0x2a8] sm:$0xff] %v363
                %v365 = vld [vmem:[%s191 + $0x550] sm:$0xff]
                %366 = vst [vmem:[%s192 + $0x2b0] sm:$0xff] %v365
                %v367 = vld [vmem:[%s191 + $0x558] sm:$0xff]
                %368 = vst [vmem:[%s192 + $0x2b8] sm:$0xff] %v367
                %v369 = vld [vmem:[%s191 + $0x560] sm:$0xff]
                %370 = vst [vmem:[%s192 + $0x2c0] sm:$0xff] %v369
                %v371 = vld [vmem:[%s191 + $0x568] sm:$0xff]
                %372 = vst [vmem:[%s192 + $0x2c8] sm:$0xff] %v371
                %v373 = vld [vmem:[%s191 + $0x5a0] sm:$0xff]
                %374 = vst [vmem:[%s192 + $0x2d0] sm:$0xff] %v373
                %v375 = vld [vmem:[%s191 + $0x5a8] sm:$0xff]
                %376 = vst [vmem:[%s192 + $0x2d8] sm:$0xff] %v375
                %v377 = vld [vmem:[%s191 + $0x5b0] sm:$0xff]
                %378 = vst [vmem:[%s192 + $0x2e0] sm:$0xff] %v377
                %v379 = vld [vmem:[%s191 + $0x5b8] sm:$0xff]
                %380 = vst [vmem:[%s192 + $0x2e8] sm:$0xff] %v379
                %v381 = vld [vmem:[%s191 + $0x5c0] sm:$0xff]
                %382 = vst [vmem:[%s192 + $0x2f0] sm:$0xff] %v381
                %v383 = vld [vmem:[%s191 + $0x5c8] sm:$0xff]
                %384 = vst [vmem:[%s192 + $0x2f8] sm:$0xff] %v383
                %v385 = vld [vmem:[%s191 + $0x600] sm:$0xff]
                %386 = vst [vmem:[%s192 + $0x300] sm:$0xff] %v385
                %v387 = vld [vmem:[%s191 + $0x608] sm:$0xff]
                %388 = vst [vmem:[%s192 + $0x308] sm:$0xff] %v387
                %v389 = vld [vmem:[%s191 + $0x610] sm:$0xff]
                %390 = vst [vmem:[%s192 + $0x310] sm:$0xff] %v389
                %v391 = vld [vmem:[%s191 + $0x618] sm:$0xff]
                %392 = vst [vmem:[%s192 + $0x318] sm:$0xff] %v391
                %v393 = vld [vmem:[%s191 + $0x620] sm:$0xff]
                %394 = vst [vmem:[%s192 + $0x320] sm:$0xff] %v393
                %v395 = vld [vmem:[%s191 + $0x628] sm:$0xff]
                %396 = vst [vmem:[%s192 + $0x328] sm:$0xff] %v395
                %v397 = vld [vmem:[%s191 + $0x660] sm:$0xff]
                %398 = vst [vmem:[%s192 + $0x330] sm:$0xff] %v397
                %v399 = vld [vmem:[%s191 + $0x668] sm:$0xff]
                %400 = vst [vmem:[%s192 + $0x338] sm:$0xff] %v399
                %v401 = vld [vmem:[%s191 + $0x670] sm:$0xff]
                %402 = vst [vmem:[%s192 + $0x340] sm:$0xff] %v401
                %v403 = vld [vmem:[%s191 + $0x678] sm:$0xff]
                %404 = vst [vmem:[%s192 + $0x348] sm:$0xff] %v403
                %v405 = vld [vmem:[%s191 + $0x680] sm:$0xff]
                %406 = vst [vmem:[%s192 + $0x350] sm:$0xff] %v405
                %v407 = vld [vmem:[%s191 + $0x688] sm:$0xff]
                %408 = vst [vmem:[%s192 + $0x358] sm:$0xff] %v407
                %v409 = vld [vmem:[%s191 + $0x6c0] sm:$0xff]
                %410 = vst [vmem:[%s192 + $0x360] sm:$0xff] %v409
                %v411 = vld [vmem:[%s191 + $0x6c8] sm:$0xff]
                %412 = vst [vmem:[%s192 + $0x368] sm:$0xff] %v411
                %v413 = vld [vmem:[%s191 + $0x6d0] sm:$0xff]
                %414 = vst [vmem:[%s192 + $0x370] sm:$0xff] %v413
                %v415 = vld [vmem:[%s191 + $0x6d8] sm:$0xff]
                %416 = vst [vmem:[%s192 + $0x378] sm:$0xff] %v415
                %v417 = vld [vmem:[%s191 + $0x6e0] sm:$0xff]
                %418 = vst [vmem:[%s192 + $0x380] sm:$0xff] %v417
                %v419 = vld [vmem:[%s191 + $0x6e8] sm:$0xff]
                %420 = vst [vmem:[%s192 + $0x388] sm:$0xff] %v419
                %v421 = vld [vmem:[%s191 + $0x720] sm:$0xff]
                %422 = vst [vmem:[%s192 + $0x390] sm:$0xff] %v421
                %v423 = vld [vmem:[%s191 + $0x728] sm:$0xff]
                %424 = vst [vmem:[%s192 + $0x398] sm:$0xff] %v423
                %v425 = vld [vmem:[%s191 + $0x730] sm:$0xff]
                %426 = vst [vmem:[%s192 + $0x3a0] sm:$0xff] %v425
                %v427 = vld [vmem:[%s191 + $0x738] sm:$0xff]
                %428 = vst [vmem:[%s192 + $0x3a8] sm:$0xff] %v427
                %v429 = vld [vmem:[%s191 + $0x740] sm:$0xff]
                %430 = vst [vmem:[%s192 + $0x3b0] sm:$0xff] %v429
                %v431 = vld [vmem:[%s191 + $0x748] sm:$0xff]
                %432 = vst [vmem:[%s192 + $0x3b8] sm:$0xff] %v431
                %v433 = vld [vmem:[%s191 + $0x780] sm:$0xff]
                %434 = vst [vmem:[%s192 + $0x3c0] sm:$0xff] %v433
                %v435 = vld [vmem:[%s191 + $0x788] sm:$0xff]
                %436 = vst [vmem:[%s192 + $0x3c8] sm:$0xff] %v435
                %v437 = vld [vmem:[%s191 + $0x790] sm:$0xff]
                %438 = vst [vmem:[%s192 + $0x3d0] sm:$0xff] %v437
                %v439 = vld [vmem:[%s191 + $0x798] sm:$0xff]
                %440 = vst [vmem:[%s192 + $0x3d8] sm:$0xff] %v439
                %v441 = vld [vmem:[%s191 + $0x7a0] sm:$0xff]
                %442 = vst [vmem:[%s192 + $0x3e0] sm:$0xff] %v441
                %v443 = vld [vmem:[%s191 + $0x7a8] sm:$0xff]
                %444 = vst [vmem:[%s192 + $0x3e8] sm:$0xff] %v443
                %v445 = vld [vmem:[%s191 + $0x7e0] sm:$0xff]
                %446 = vst [vmem:[%s192 + $0x3f0] sm:$0xff] %v445
                %v447 = vld [vmem:[%s191 + $0x7e8] sm:$0xff]
                %448 = vst [vmem:[%s192 + $0x3f8] sm:$0xff] %v447
                %v449 = vld [vmem:[%s191 + $0x7f0] sm:$0xff]
                %450 = vst [vmem:[%s192 + $0x400] sm:$0xff] %v449
                %v451 = vld [vmem:[%s191 + $0x7f8] sm:$0xff]
                %452 = vst [vmem:[%s192 + $0x408] sm:$0xff] %v451
                %v453 = vld [vmem:[%s191 + $0x800] sm:$0xff]
                %454 = vst [vmem:[%s192 + $0x410] sm:$0xff] %v453
                %v455 = vld [vmem:[%s191 + $0x808] sm:$0xff]
                %456 = vst [vmem:[%s192 + $0x418] sm:$0xff] %v455
                %v457 = vld [vmem:[%s191 + $0x840] sm:$0xff]
                %458 = vst [vmem:[%s192 + $0x420] sm:$0xff] %v457
                %v459 = vld [vmem:[%s191 + $0x848] sm:$0xff]
                %460 = vst [vmem:[%s192 + $0x428] sm:$0xff] %v459
                %v461 = vld [vmem:[%s191 + $0x850] sm:$0xff]
                %462 = vst [vmem:[%s192 + $0x430] sm:$0xff] %v461
                %v463 = vld [vmem:[%s191 + $0x858] sm:$0xff]
                %464 = vst [vmem:[%s192 + $0x438] sm:$0xff] %v463
                %v465 = vld [vmem:[%s191 + $0x860] sm:$0xff]
                %466 = vst [vmem:[%s192 + $0x440] sm:$0xff] %v465
                %v467 = vld [vmem:[%s191 + $0x868] sm:$0xff]
                %468 = vst [vmem:[%s192 + $0x448] sm:$0xff] %v467
                %v469 = vld [vmem:[%s191 + $0x8a0] sm:$0xff]
                %470 = vst [vmem:[%s192 + $0x450] sm:$0xff] %v469
                %v471 = vld [vmem:[%s191 + $0x8a8] sm:$0xff]
                %472 = vst [vmem:[%s192 + $0x458] sm:$0xff] %v471
                %v473 = vld [vmem:[%s191 + $0x8b0] sm:$0xff]
                %474 = vst [vmem:[%s192 + $0x460] sm:$0xff] %v473
                %v475 = vld [vmem:[%s191 + $0x8b8] sm:$0xff]
                %476 = vst [vmem:[%s192 + $0x468] sm:$0xff] %v475
                %v477 = vld [vmem:[%s191 + $0x8c0] sm:$0xff]
                %478 = vst [vmem:[%s192 + $0x470] sm:$0xff] %v477
                %v479 = vld [vmem:[%s191 + $0x8c8] sm:$0xff]
                %480 = vst [vmem:[%s192 + $0x478] sm:$0xff] %v479
              $region45: #{_lambda_.5} parent=39 // loop_footer
                %s190 = sadd.s32 1, %s186
              $region46: #{_lambda_.5} parent=39 // loop_footer_branch
                %185 = sbr.rel target = $region42
              $region47: #{_lambda_.5} parent=39 // loop_exit
                _
            $region40: #{_lambda_.5} parent=35 // pred_fallthru
              _
            // Predicated region
            $region48: #{_lambda_.5} parent=35 // pred_check
              _
            $region49: #{_lambda_.5} parent=35 // pred_check_branch
              %482 = sbr.rel target = $region51
            $region50: #{_lambda_.5} parent=35 // pred_region
              _
            $region51: #{_lambda_.5} parent=35 // pred_fallthru
              _
          $region36: #{_lambda_.5} parent=31 // pred_fallthru
            _
          %483 = vnop
        $region32: #{_lambda_.5} parent=27 // pred_fallthru
          _
      $region28: #{_lambda_.5} parent=5 // pred_fallthru
        _
      %p484 = scmp.le.s32.totalorder 1, %s10
      %p485 = scmp.lt.s32.totalorder %s10, 5
      %p486 = pnand %p484, %p485
      %p487 = pneg %p486
      // Predicated region
      $region52: #{_lambda_.5} parent=5 // pred_check
        _
      $region53: #{_lambda_.5} parent=5 // pred_check_branch
        %489 = sbr.rel (%p486) target = $region55
      $region54: #{_lambda_.5} parent=5 // pred_region
        %s490 = ssub.s32 %s10, 1
        %s491 = sand.u32 %s58, 1
        %s492 = sand.u32 %s58, 1
        %s493 = smul.addr %s492, 1152
        %s494 = scalar_lea.vmem [#allocation2], %s493
        // Predicated region
        $region56: #{_lambda_.5} parent=54 // pred_check
          %p495 = pneg %p71
        $region57: #{_lambda_.5} parent=54 // pred_check_branch
          %497 = sbr.rel (%p495) target = $region59
        $region58: #{_lambda_.5} parent=54 // pred_region
          _
        $region59: #{_lambda_.5} parent=54 // pred_fallthru
          _
        %p498 = pneg %p43
        %p499 = pneg %p40
        %s500 = sand.u32 %s58, 1
        %s501 = sand.u32 %s58, 1
        %s502 = smul.addr %s501, 1152
        %s503 = scalar_lea.vmem [#allocation2], %s502
        %p504 = pneg %p71
        %p505 = pneg %p68
        %p506 = pneg %p92
        %p507 = pneg %p89
        %p508 = pneg %p113
        %p509 = pneg %p110
        %p510 = pneg %p141
        %p511 = pneg %p138
        %s512 = sand.u32 %s128, 1
        %s513 = sand.u32 %s128, 1
        %s514 = smul.addr %s513, 96
        %s515 = scalar_lea.vmem [#allocation3], %s514
        %s516 = smul.u32 12, %s20
        %s517 = smul.u32 12, %s20
        %v519 = vld [vmem:[%s0] sm:$0xff]
        %v520 = vld [vmem:[%s0 + $0x8] sm:$0xff]
        %v521 = vld [vmem:[%s494] sm:$0xff]
        %v522 = vld [vmem:[%s494 + $0x8] sm:$0xff]
        %v523 = vld [vmem:[%s494 + $0x10] sm:$0xff]
        %v524 = vld [vmem:[%s494 + $0x18] sm:$0xff]
        %v525 = vld [vmem:[%s494 + $0x20] sm:$0xff]
        %v526 = vld [vmem:[%s494 + $0x28] sm:$0xff]
        %v527 = vld [vmem:[%s494 + $0x30] sm:$0xff]
        %v528 = vld [vmem:[%s494 + $0x38] sm:$0xff]
        %v529 = vld [vmem:[%s494 + $0x40] sm:$0xff]
        %v530 = vld [vmem:[%s494 + $0x48] sm:$0xff]
        %v531 = vld [vmem:[%s494 + $0x50] sm:$0xff]
        %v532 = vld [vmem:[%s494 + $0x58] sm:$0xff]
        %v533 = vld [vmem:[%s494 + $0x60] sm:$0xff]
        %v534 = vld [vmem:[%s494 + $0x68] sm:$0xff]
        %v535 = vld [vmem:[%s494 + $0x70] sm:$0xff]
        %v536 = vld [vmem:[%s494 + $0x78] sm:$0xff]
        %v537 = vld [vmem:[%s494 + $0x80] sm:$0xff]
        %v538 = vld [vmem:[%s494 + $0x88] sm:$0xff]
        %v539 = vld [vmem:[%s494 + $0x90] sm:$0xff]
        %v540 = vld [vmem:[%s494 + $0x98] sm:$0xff]
        %v541 = vld [vmem:[%s494 + $0xa0] sm:$0xff]
        %v542 = vld [vmem:[%s494 + $0xa8] sm:$0xff]
        %v543 = vld [vmem:[%s494 + $0xb0] sm:$0xff]
        %v544 = vld [vmem:[%s494 + $0xb8] sm:$0xff]
        %v545 = vld [vmem:[%s494 + $0xc0] sm:$0xff]
        %v546 = vld [vmem:[%s494 + $0xc8] sm:$0xff]
        %v547 = vld [vmem:[%s494 + $0xd0] sm:$0xff]
        %v548 = vld [vmem:[%s494 + $0xd8] sm:$0xff]
        %v549 = vld [vmem:[%s494 + $0xe0] sm:$0xff]
        %v550 = vld [vmem:[%s494 + $0xe8] sm:$0xff]
        %v551 = vld [vmem:[%s494 + $0xf0] sm:$0xff]
        %v552 = vld [vmem:[%s494 + $0xf8] sm:$0xff]
        %v553 = vld [vmem:[%s494 + $0x100] sm:$0xff]
        %v554 = vld [vmem:[%s494 + $0x108] sm:$0xff]
        %v555 = vld [vmem:[%s494 + $0x110] sm:$0xff]
        %v556 = vld [vmem:[%s494 + $0x118] sm:$0xff]
        %v557 = vld [vmem:[%s494 + $0x120] sm:$0xff]
        %v558 = vld [vmem:[%s494 + $0x128] sm:$0xff]
        %v559 = vld [vmem:[%s494 + $0x130] sm:$0xff]
        %v560 = vld [vmem:[%s494 + $0x138] sm:$0xff]
        %v561 = vld [vmem:[%s494 + $0x140] sm:$0xff]
        %v562 = vld [vmem:[%s494 + $0x148] sm:$0xff]
        %v563 = vld [vmem:[%s494 + $0x150] sm:$0xff]
        %v564 = vld [vmem:[%s494 + $0x158] sm:$0xff]
        %v565 = vld [vmem:[%s494 + $0x160] sm:$0xff]
        %v566 = vld [vmem:[%s494 + $0x168] sm:$0xff]
        %v567 = vld [vmem:[%s494 + $0x170] sm:$0xff]
        %v568 = vld [vmem:[%s494 + $0x178] sm:$0xff]
        %v569 = vld [vmem:[%s494 + $0x180] sm:$0xff]
        %v570 = vld [vmem:[%s494 + $0x188] sm:$0xff]
        %v571 = vld [vmem:[%s494 + $0x190] sm:$0xff]
        %v572 = vld [vmem:[%s494 + $0x198] sm:$0xff]
        %v573 = vld [vmem:[%s494 + $0x1a0] sm:$0xff]
        %v574 = vld [vmem:[%s494 + $0x1a8] sm:$0xff]
        %v575 = vld [vmem:[%s494 + $0x1b0] sm:$0xff]
        %v576 = vld [vmem:[%s494 + $0x1b8] sm:$0xff]
        %v577 = vld [vmem:[%s494 + $0x1c0] sm:$0xff]
        %v578 = vld [vmem:[%s494 + $0x1c8] sm:$0xff]
        %v579 = vld [vmem:[%s494 + $0x1d0] sm:$0xff]
        %v580 = vld [vmem:[%s494 + $0x1d8] sm:$0xff]
        %v581 = vld [vmem:[%s494 + $0x1e0] sm:$0xff]
        %v582 = vld [vmem:[%s494 + $0x1e8] sm:$0xff]
        %v583 = vld [vmem:[%s494 + $0x1f0] sm:$0xff]
        %v584 = vld [vmem:[%s494 + $0x1f8] sm:$0xff]
        %v585 = vld [vmem:[%s494 + $0x200] sm:$0xff]
        %v586 = vld [vmem:[%s494 + $0x208] sm:$0xff]
        %v587 = vld [vmem:[%s494 + $0x210] sm:$0xff]
        %v588 = vld [vmem:[%s494 + $0x218] sm:$0xff]
        %v589 = vld [vmem:[%s494 + $0x220] sm:$0xff]
        %v590 = vld [vmem:[%s494 + $0x228] sm:$0xff]
        %v591 = vld [vmem:[%s494 + $0x230] sm:$0xff]
        %v592 = vld [vmem:[%s494 + $0x238] sm:$0xff]
        %v593 = vld [vmem:[%s494 + $0x240] sm:$0xff]
        %v594 = vld [vmem:[%s494 + $0x248] sm:$0xff]
        %v595 = vld [vmem:[%s494 + $0x250] sm:$0xff]
        %v596 = vld [vmem:[%s494 + $0x258] sm:$0xff]
        %v597 = vld [vmem:[%s494 + $0x260] sm:$0xff]
        %v598 = vld [vmem:[%s494 + $0x268] sm:$0xff]
        %v599 = vld [vmem:[%s494 + $0x270] sm:$0xff]
        %v600 = vld [vmem:[%s494 + $0x278] sm:$0xff]
        %v601 = vld [vmem:[%s494 + $0x280] sm:$0xff]
        %v602 = vld [vmem:[%s494 + $0x288] sm:$0xff]
        %v603 = vld [vmem:[%s494 + $0x290] sm:$0xff]
        %v604 = vld [vmem:[%s494 + $0x298] sm:$0xff]
        %v605 = vld [vmem:[%s494 + $0x2a0] sm:$0xff]
        %v606 = vld [vmem:[%s494 + $0x2a8] sm:$0xff]
        %v607 = vld [vmem:[%s494 + $0x2b0] sm:$0xff]
        %v608 = vld [vmem:[%s494 + $0x2b8] sm:$0xff]
        %v609 = vld [vmem:[%s494 + $0x2c0] sm:$0xff]
        %v610 = vld [vmem:[%s494 + $0x2c8] sm:$0xff]
        %v611 = vld [vmem:[%s494 + $0x2d0] sm:$0xff]
        %v612 = vld [vmem:[%s494 + $0x2d8] sm:$0xff]
        %v613 = vld [vmem:[%s494 + $0x2e0] sm:$0xff]
        %v614 = vld [vmem:[%s494 + $0x2e8] sm:$0xff]
        %v615 = vld [vmem:[%s494 + $0x2f0] sm:$0xff]
        %v616 = vld [vmem:[%s494 + $0x2f8] sm:$0xff]
        %v617 = vld [vmem:[%s494 + $0x300] sm:$0xff]
        %v618 = vld [vmem:[%s494 + $0x308] sm:$0xff]
        %v619 = vld [vmem:[%s494 + $0x310] sm:$0xff]
        %v620 = vld [vmem:[%s494 + $0x318] sm:$0xff]
        %v621 = vld [vmem:[%s494 + $0x320] sm:$0xff]
        %v622 = vld [vmem:[%s494 + $0x328] sm:$0xff]
        %v623 = vld [vmem:[%s494 + $0x330] sm:$0xff]
        %v624 = vld [vmem:[%s494 + $0x338] sm:$0xff]
        %v625 = vld [vmem:[%s494 + $0x340] sm:$0xff]
        %v626 = vld [vmem:[%s494 + $0x348] sm:$0xff]
        %v627 = vld [vmem:[%s494 + $0x350] sm:$0xff]
        %v628 = vld [vmem:[%s494 + $0x358] sm:$0xff]
        %v629 = vld [vmem:[%s494 + $0x360] sm:$0xff]
        %v630 = vld [vmem:[%s494 + $0x368] sm:$0xff]
        %v631 = vld [vmem:[%s494 + $0x370] sm:$0xff]
        %v632 = vld [vmem:[%s494 + $0x378] sm:$0xff]
        %v633 = vld [vmem:[%s494 + $0x380] sm:$0xff]
        %v634 = vld [vmem:[%s494 + $0x388] sm:$0xff]
        %v635 = vld [vmem:[%s494 + $0x390] sm:$0xff]
        %v636 = vld [vmem:[%s494 + $0x398] sm:$0xff]
        %v637 = vld [vmem:[%s494 + $0x3a0] sm:$0xff]
        %v638 = vld [vmem:[%s494 + $0x3a8] sm:$0xff]
        %v639 = vld [vmem:[%s494 + $0x3b0] sm:$0xff]
        %v640 = vld [vmem:[%s494 + $0x3b8] sm:$0xff]
        %v641 = vld [vmem:[%s494 + $0x3c0] sm:$0xff]
        %v642 = vld [vmem:[%s494 + $0x3c8] sm:$0xff]
        %v643 = vld [vmem:[%s494 + $0x3d0] sm:$0xff]
        %v644 = vld [vmem:[%s494 + $0x3d8] sm:$0xff]
        %v645 = vld [vmem:[%s494 + $0x3e0] sm:$0xff]
        %v646 = vld [vmem:[%s494 + $0x3e8] sm:$0xff]
        %v647 = vld [vmem:[%s494 + $0x3f0] sm:$0xff]
        %v648 = vld [vmem:[%s494 + $0x3f8] sm:$0xff]
        %v649 = vld [vmem:[%s494 + $0x400] sm:$0xff]
        %v650 = vld [vmem:[%s494 + $0x408] sm:$0xff]
        %v651 = vld [vmem:[%s494 + $0x410] sm:$0xff]
        %v652 = vld [vmem:[%s494 + $0x418] sm:$0xff]
        %v653 = vld [vmem:[%s494 + $0x420] sm:$0xff]
        %v654 = vld [vmem:[%s494 + $0x428] sm:$0xff]
        %v655 = vld [vmem:[%s494 + $0x430] sm:$0xff]
        %v656 = vld [vmem:[%s494 + $0x438] sm:$0xff]
        %v657 = vld [vmem:[%s494 + $0x440] sm:$0xff]
        %v658 = vld [vmem:[%s494 + $0x448] sm:$0xff]
        %v659 = vld [vmem:[%s494 + $0x450] sm:$0xff]
        %v660 = vld [vmem:[%s494 + $0x458] sm:$0xff]
        %v661 = vld [vmem:[%s494 + $0x460] sm:$0xff]
        %v662 = vld [vmem:[%s494 + $0x468] sm:$0xff]
        %v663 = vld [vmem:[%s494 + $0x470] sm:$0xff]
        %v664 = vld [vmem:[%s494 + $0x478] sm:$0xff]
        %v667 = vunpack.c.l.b16 %v519
        %v668 = vunpack.c.h.b16 %v519
        %v669 = vunpack.c.l.b16 %v520
        %v670 = vunpack.c.h.b16 %v520
        %v671 = vpack.c.b16 %v669, %v667
        %v672 = vpack.c.b16 %v670, %v668
        %v818 = vunpack.c.l.b16 %v521
        %v819 = vunpack.c.h.b16 %v521
        %v820 = vunpack.c.l.b16 %v522
        %v821 = vunpack.c.h.b16 %v522
        %v822 = vunpack.c.l.b16 %v523
        %v823 = vunpack.c.h.b16 %v523
        %v824 = vunpack.c.l.b16 %v524
        %v825 = vunpack.c.h.b16 %v524
        %v826 = vunpack.c.l.b16 %v525
        %v827 = vunpack.c.h.b16 %v525
        %v828 = vunpack.c.l.b16 %v526
        %v829 = vunpack.c.h.b16 %v526
        %v830 = vunpack.c.l.b16 %v527
        %v831 = vunpack.c.h.b16 %v527
        %v832 = vunpack.c.l.b16 %v528
        %v833 = vunpack.c.h.b16 %v528
        %v834 = vunpack.c.l.b16 %v529
        %v835 = vunpack.c.h.b16 %v529
        %v836 = vunpack.c.l.b16 %v530
        %v837 = vunpack.c.h.b16 %v530
        %v838 = vunpack.c.l.b16 %v531
        %v839 = vunpack.c.h.b16 %v531
        %v840 = vunpack.c.l.b16 %v532
        %v841 = vunpack.c.h.b16 %v532
        %v842 = vunpack.c.l.b16 %v533
        %v843 = vunpack.c.h.b16 %v533
        %v844 = vunpack.c.l.b16 %v534
        %v845 = vunpack.c.h.b16 %v534
        %v846 = vunpack.c.l.b16 %v535
        %v847 = vunpack.c.h.b16 %v535
        %v848 = vunpack.c.l.b16 %v536
        %v849 = vunpack.c.h.b16 %v536
        %v850 = vunpack.c.l.b16 %v537
        %v851 = vunpack.c.h.b16 %v537
        %v852 = vunpack.c.l.b16 %v538
        %v853 = vunpack.c.h.b16 %v538
        %v854 = vunpack.c.l.b16 %v539
        %v855 = vunpack.c.h.b16 %v539
        %v856 = vunpack.c.l.b16 %v540
        %v857 = vunpack.c.h.b16 %v540
        %v858 = vunpack.c.l.b16 %v541
        %v859 = vunpack.c.h.b16 %v541
        %v860 = vunpack.c.l.b16 %v542
        %v861 = vunpack.c.h.b16 %v542
        %v862 = vunpack.c.l.b16 %v543
        %v863 = vunpack.c.h.b16 %v543
        %v864 = vunpack.c.l.b16 %v544
        %v865 = vunpack.c.h.b16 %v544
        %v866 = vunpack.c.l.b16 %v545
        %v867 = vunpack.c.h.b16 %v545
        %v868 = vunpack.c.l.b16 %v546
        %v869 = vunpack.c.h.b16 %v546
        %v870 = vunpack.c.l.b16 %v547
        %v871 = vunpack.c.h.b16 %v547
        %v872 = vunpack.c.l.b16 %v548
        %v873 = vunpack.c.h.b16 %v548
        %v874 = vunpack.c.l.b16 %v549
        %v875 = vunpack.c.h.b16 %v549
        %v876 = vunpack.c.l.b16 %v550
        %v877 = vunpack.c.h.b16 %v550
        %v878 = vunpack.c.l.b16 %v551
        %v879 = vunpack.c.h.b16 %v551
        %v880 = vunpack.c.l.b16 %v552
        %v881 = vunpack.c.h.b16 %v552
        %v882 = vunpack.c.l.b16 %v553
        %v883 = vunpack.c.h.b16 %v553
        %v884 = vunpack.c.l.b16 %v554
        %v885 = vunpack.c.h.b16 %v554
        %v886 = vunpack.c.l.b16 %v555
        %v887 = vunpack.c.h.b16 %v555
        %v888 = vunpack.c.l.b16 %v556
        %v889 = vunpack.c.h.b16 %v556
        %v890 = vunpack.c.l.b16 %v557
        %v891 = vunpack.c.h.b16 %v557
        %v892 = vunpack.c.l.b16 %v558
        %v893 = vunpack.c.h.b16 %v558
        %v894 = vunpack.c.l.b16 %v559
        %v895 = vunpack.c.h.b16 %v559
        %v896 = vunpack.c.l.b16 %v560
        %v897 = vunpack.c.h.b16 %v560
        %v898 = vunpack.c.l.b16 %v561
        %v899 = vunpack.c.h.b16 %v561
        %v900 = vunpack.c.l.b16 %v562
        %v901 = vunpack.c.h.b16 %v562
        %v902 = vunpack.c.l.b16 %v563
        %v903 = vunpack.c.h.b16 %v563
        %v904 = vunpack.c.l.b16 %v564
        %v905 = vunpack.c.h.b16 %v564
        %v906 = vunpack.c.l.b16 %v565
        %v907 = vunpack.c.h.b16 %v565
        %v908 = vunpack.c.l.b16 %v566
        %v909 = vunpack.c.h.b16 %v566
        %v910 = vunpack.c.l.b16 %v567
        %v911 = vunpack.c.h.b16 %v567
        %v912 = vunpack.c.l.b16 %v568
        %v913 = vunpack.c.h.b16 %v568
        %v914 = vunpack.c.l.b16 %v569
        %v915 = vunpack.c.h.b16 %v569
        %v916 = vunpack.c.l.b16 %v570
        %v917 = vunpack.c.h.b16 %v570
        %v918 = vunpack.c.l.b16 %v571
        %v919 = vunpack.c.h.b16 %v571
        %v920 = vunpack.c.l.b16 %v572
        %v921 = vunpack.c.h.b16 %v572
        %v922 = vunpack.c.l.b16 %v573
        %v923 = vunpack.c.h.b16 %v573
        %v924 = vunpack.c.l.b16 %v574
        %v925 = vunpack.c.h.b16 %v574
        %v926 = vunpack.c.l.b16 %v575
        %v927 = vunpack.c.h.b16 %v575
        %v928 = vunpack.c.l.b16 %v576
        %v929 = vunpack.c.h.b16 %v576
        %v930 = vunpack.c.l.b16 %v577
        %v931 = vunpack.c.h.b16 %v577
        %v932 = vunpack.c.l.b16 %v578
        %v933 = vunpack.c.h.b16 %v578
        %v934 = vunpack.c.l.b16 %v579
        %v935 = vunpack.c.h.b16 %v579
        %v936 = vunpack.c.l.b16 %v580
        %v937 = vunpack.c.h.b16 %v580
        %v938 = vunpack.c.l.b16 %v581
        %v939 = vunpack.c.h.b16 %v581
        %v940 = vunpack.c.l.b16 %v582
        %v941 = vunpack.c.h.b16 %v582
        %v942 = vunpack.c.l.b16 %v583
        %v943 = vunpack.c.h.b16 %v583
        %v944 = vunpack.c.l.b16 %v584
        %v945 = vunpack.c.h.b16 %v584
        %v946 = vunpack.c.l.b16 %v585
        %v947 = vunpack.c.h.b16 %v585
        %v948 = vunpack.c.l.b16 %v586
        %v949 = vunpack.c.h.b16 %v586
        %v950 = vunpack.c.l.b16 %v587
        %v951 = vunpack.c.h.b16 %v587
        %v952 = vunpack.c.l.b16 %v588
        %v953 = vunpack.c.h.b16 %v588
        %v954 = vunpack.c.l.b16 %v589
        %v955 = vunpack.c.h.b16 %v589
        %v956 = vunpack.c.l.b16 %v590
        %v957 = vunpack.c.h.b16 %v590
        %v958 = vunpack.c.l.b16 %v591
        %v959 = vunpack.c.h.b16 %v591
        %v960 = vunpack.c.l.b16 %v592
        %v961 = vunpack.c.h.b16 %v592
        %v962 = vunpack.c.l.b16 %v593
        %v963 = vunpack.c.h.b16 %v593
        %v964 = vunpack.c.l.b16 %v594
        %v965 = vunpack.c.h.b16 %v594
        %v966 = vunpack.c.l.b16 %v595
        %v967 = vunpack.c.h.b16 %v595
        %v968 = vunpack.c.l.b16 %v596
        %v969 = vunpack.c.h.b16 %v596
        %v970 = vunpack.c.l.b16 %v597
        %v971 = vunpack.c.h.b16 %v597
        %v972 = vunpack.c.l.b16 %v598
        %v973 = vunpack.c.h.b16 %v598
        %v974 = vunpack.c.l.b16 %v599
        %v975 = vunpack.c.h.b16 %v599
        %v976 = vunpack.c.l.b16 %v600
        %v977 = vunpack.c.h.b16 %v600
        %v978 = vunpack.c.l.b16 %v601
        %v979 = vunpack.c.h.b16 %v601
        %v980 = vunpack.c.l.b16 %v602
        %v981 = vunpack.c.h.b16 %v602
        %v982 = vunpack.c.l.b16 %v603
        %v983 = vunpack.c.h.b16 %v603
        %v984 = vunpack.c.l.b16 %v604
        %v985 = vunpack.c.h.b16 %v604
        %v986 = vunpack.c.l.b16 %v605
        %v987 = vunpack.c.h.b16 %v605
        %v988 = vunpack.c.l.b16 %v606
        %v989 = vunpack.c.h.b16 %v606
        %v990 = vunpack.c.l.b16 %v607
        %v991 = vunpack.c.h.b16 %v607
        %v992 = vunpack.c.l.b16 %v608
        %v993 = vunpack.c.h.b16 %v608
        %v994 = vunpack.c.l.b16 %v609
        %v995 = vunpack.c.h.b16 %v609
        %v996 = vunpack.c.l.b16 %v610
        %v997 = vunpack.c.h.b16 %v610
        %v998 = vunpack.c.l.b16 %v611
        %v999 = vunpack.c.h.b16 %v611
        %v1000 = vunpack.c.l.b16 %v612
        %v1001 = vunpack.c.h.b16 %v612
        %v1002 = vunpack.c.l.b16 %v613
        %v1003 = vunpack.c.h.b16 %v613
        %v1004 = vunpack.c.l.b16 %v614
        %v1005 = vunpack.c.h.b16 %v614
        %v1006 = vunpack.c.l.b16 %v615
        %v1007 = vunpack.c.h.b16 %v615
        %v1008 = vunpack.c.l.b16 %v616
        %v1009 = vunpack.c.h.b16 %v616
        %v1010 = vunpack.c.l.b16 %v617
        %v1011 = vunpack.c.h.b16 %v617
        %v1012 = vunpack.c.l.b16 %v618
        %v1013 = vunpack.c.h.b16 %v618
        %v1014 = vunpack.c.l.b16 %v619
        %v1015 = vunpack.c.h.b16 %v619
        %v1016 = vunpack.c.l.b16 %v620
        %v1017 = vunpack.c.h.b16 %v620
        %v1018 = vunpack.c.l.b16 %v621
        %v1019 = vunpack.c.h.b16 %v621
        %v1020 = vunpack.c.l.b16 %v622
        %v1021 = vunpack.c.h.b16 %v622
        %v1022 = vunpack.c.l.b16 %v623
        %v1023 = vunpack.c.h.b16 %v623
        %v1024 = vunpack.c.l.b16 %v624
        %v1025 = vunpack.c.h.b16 %v624
        %v1026 = vunpack.c.l.b16 %v625
        %v1027 = vunpack.c.h.b16 %v625
        %v1028 = vunpack.c.l.b16 %v626
        %v1029 = vunpack.c.h.b16 %v626
        %v1030 = vunpack.c.l.b16 %v627
        %v1031 = vunpack.c.h.b16 %v627
        %v1032 = vunpack.c.l.b16 %v628
        %v1033 = vunpack.c.h.b16 %v628
        %v1034 = vunpack.c.l.b16 %v629
        %v1035 = vunpack.c.h.b16 %v629
        %v1036 = vunpack.c.l.b16 %v630
        %v1037 = vunpack.c.h.b16 %v630
        %v1038 = vunpack.c.l.b16 %v631
        %v1039 = vunpack.c.h.b16 %v631
        %v1040 = vunpack.c.l.b16 %v632
        %v1041 = vunpack.c.h.b16 %v632
        %v1042 = vunpack.c.l.b16 %v633
        %v1043 = vunpack.c.h.b16 %v633
        %v1044 = vunpack.c.l.b16 %v634
        %v1045 = vunpack.c.h.b16 %v634
        %v1046 = vunpack.c.l.b16 %v635
        %v1047 = vunpack.c.h.b16 %v635
        %v1048 = vunpack.c.l.b16 %v636
        %v1049 = vunpack.c.h.b16 %v636
        %v1050 = vunpack.c.l.b16 %v637
        %v1051 = vunpack.c.h.b16 %v637
        %v1052 = vunpack.c.l.b16 %v638
        %v1053 = vunpack.c.h.b16 %v638
        %v1054 = vunpack.c.l.b16 %v639
        %v1055 = vunpack.c.h.b16 %v639
        %v1056 = vunpack.c.l.b16 %v640
        %v1057 = vunpack.c.h.b16 %v640
        %v1058 = vunpack.c.l.b16 %v641
        %v1059 = vunpack.c.h.b16 %v641
        %v1060 = vunpack.c.l.b16 %v642
        %v1061 = vunpack.c.h.b16 %v642
        %v1062 = vunpack.c.l.b16 %v643
        %v1063 = vunpack.c.h.b16 %v643
        %v1064 = vunpack.c.l.b16 %v644
        %v1065 = vunpack.c.h.b16 %v644
        %v1066 = vunpack.c.l.b16 %v645
        %v1067 = vunpack.c.h.b16 %v645
        %v1068 = vunpack.c.l.b16 %v646
        %v1069 = vunpack.c.h.b16 %v646
        %v1070 = vunpack.c.l.b16 %v647
        %v1071 = vunpack.c.h.b16 %v647
        %v1072 = vunpack.c.l.b16 %v648
        %v1073 = vunpack.c.h.b16 %v648
        %v1074 = vunpack.c.l.b16 %v649
        %v1075 = vunpack.c.h.b16 %v649
        %v1076 = vunpack.c.l.b16 %v650
        %v1077 = vunpack.c.h.b16 %v650
        %v1078 = vunpack.c.l.b16 %v651
        %v1079 = vunpack.c.h.b16 %v651
        %v1080 = vunpack.c.l.b16 %v652
        %v1081 = vunpack.c.h.b16 %v652
        %v1082 = vunpack.c.l.b16 %v653
        %v1083 = vunpack.c.h.b16 %v653
        %v1084 = vunpack.c.l.b16 %v654
        %v1085 = vunpack.c.h.b16 %v654
        %v1086 = vunpack.c.l.b16 %v655
        %v1087 = vunpack.c.h.b16 %v655
        %v1088 = vunpack.c.l.b16 %v656
        %v1089 = vunpack.c.h.b16 %v656
        %v1090 = vunpack.c.l.b16 %v657
        %v1091 = vunpack.c.h.b16 %v657
        %v1092 = vunpack.c.l.b16 %v658
        %v1093 = vunpack.c.h.b16 %v658
        %v1094 = vunpack.c.l.b16 %v659
        %v1095 = vunpack.c.h.b16 %v659
        %v1096 = vunpack.c.l.b16 %v660
        %v1097 = vunpack.c.h.b16 %v660
        %v1098 = vunpack.c.l.b16 %v661
        %v1099 = vunpack.c.h.b16 %v661
        %v1100 = vunpack.c.l.b16 %v662
        %v1101 = vunpack.c.h.b16 %v662
        %v1102 = vunpack.c.l.b16 %v663
        %v1103 = vunpack.c.h.b16 %v663
        %v1104 = vunpack.c.l.b16 %v664
        %v1105 = vunpack.c.h.b16 %v664
        %v1106 = vpack.c.b16 %v830, %v818
        %v1107 = vpack.c.b16 %v831, %v819
        %v1108 = vpack.c.b16 %v832, %v820
        %v1109 = vpack.c.b16 %v833, %v821
        %v1110 = vpack.c.b16 %v834, %v822
        %v1111 = vpack.c.b16 %v835, %v823
        %v1112 = vpack.c.b16 %v836, %v824
        %v1113 = vpack.c.b16 %v837, %v825
        %v1114 = vpack.c.b16 %v838, %v826
        %v1115 = vpack.c.b16 %v839, %v827
        %v1116 = vpack.c.b16 %v840, %v828
        %v1117 = vpack.c.b16 %v841, %v829
        %v1118 = vpack.c.b16 %v854, %v842
        %v1119 = vpack.c.b16 %v855, %v843
        %v1120 = vpack.c.b16 %v856, %v844
        %v1121 = vpack.c.b16 %v857, %v845
        %v1122 = vpack.c.b16 %v858, %v846
        %v1123 = vpack.c.b16 %v859, %v847
        %v1124 = vpack.c.b16 %v860, %v848
        %v1125 = vpack.c.b16 %v861, %v849
        %v1126 = vpack.c.b16 %v862, %v850
        %v1127 = vpack.c.b16 %v863, %v851
        %v1128 = vpack.c.b16 %v864, %v852
        %v1129 = vpack.c.b16 %v865, %v853
        %v1130 = vpack.c.b16 %v878, %v866
        %v1131 = vpack.c.b16 %v879, %v867
        %v1132 = vpack.c.b16 %v880, %v868
        %v1133 = vpack.c.b16 %v881, %v869
        %v1134 = vpack.c.b16 %v882, %v870
        %v1135 = vpack.c.b16 %v883, %v871
        %v1136 = vpack.c.b16 %v884, %v872
        %v1137 = vpack.c.b16 %v885, %v873
        %v1138 = vpack.c.b16 %v886, %v874
        %v1139 = vpack.c.b16 %v887, %v875
        %v1140 = vpack.c.b16 %v888, %v876
        %v1141 = vpack.c.b16 %v889, %v877
        %v1142 = vpack.c.b16 %v902, %v890
        %v1143 = vpack.c.b16 %v903, %v891
        %v1144 = vpack.c.b16 %v904, %v892
        %v1145 = vpack.c.b16 %v905, %v893
        %v1146 = vpack.c.b16 %v906, %v894
        %v1147 = vpack.c.b16 %v907, %v895
        %v1148 = vpack.c.b16 %v908, %v896
        %v1149 = vpack.c.b16 %v909, %v897
        %v1150 = vpack.c.b16 %v910, %v898
        %v1151 = vpack.c.b16 %v911, %v899
        %v1152 = vpack.c.b16 %v912, %v900
        %v1153 = vpack.c.b16 %v913, %v901
        %v1154 = vpack.c.b16 %v926, %v914
        %v1155 = vpack.c.b16 %v927, %v915
        %v1156 = vpack.c.b16 %v928, %v916
        %v1157 = vpack.c.b16 %v929, %v917
        %v1158 = vpack.c.b16 %v930, %v918
        %v1159 = vpack.c.b16 %v931, %v919
        %v1160 = vpack.c.b16 %v932, %v920
        %v1161 = vpack.c.b16 %v933, %v921
        %v1162 = vpack.c.b16 %v934, %v922
        %v1163 = vpack.c.b16 %v935, %v923
        %v1164 = vpack.c.b16 %v936, %v924
        %v1165 = vpack.c.b16 %v937, %v925
        %v1166 = vpack.c.b16 %v950, %v938
        %v1167 = vpack.c.b16 %v951, %v939
        %v1168 = vpack.c.b16 %v952, %v940
        %v1169 = vpack.c.b16 %v953, %v941
        %v1170 = vpack.c.b16 %v954, %v942
        %v1171 = vpack.c.b16 %v955, %v943
        %v1172 = vpack.c.b16 %v956, %v944
        %v1173 = vpack.c.b16 %v957, %v945
        %v1174 = vpack.c.b16 %v958, %v946
        %v1175 = vpack.c.b16 %v959, %v947
        %v1176 = vpack.c.b16 %v960, %v948
        %v1177 = vpack.c.b16 %v961, %v949
        %v1178 = vpack.c.b16 %v974, %v962
        %v1179 = vpack.c.b16 %v975, %v963
        %v1180 = vpack.c.b16 %v976, %v964
        %v1181 = vpack.c.b16 %v977, %v965
        %v1182 = vpack.c.b16 %v978, %v966
        %v1183 = vpack.c.b16 %v979, %v967
        %v1184 = vpack.c.b16 %v980, %v968
        %v1185 = vpack.c.b16 %v981, %v969
        %v1186 = vpack.c.b16 %v982, %v970
        %v1187 = vpack.c.b16 %v983, %v971
        %v1188 = vpack.c.b16 %v984, %v972
        %v1189 = vpack.c.b16 %v985, %v973
        %v1190 = vpack.c.b16 %v998, %v986
        %v1191 = vpack.c.b16 %v999, %v987
        %v1192 = vpack.c.b16 %v1000, %v988
        %v1193 = vpack.c.b16 %v1001, %v989
        %v1194 = vpack.c.b16 %v1002, %v990
        %v1195 = vpack.c.b16 %v1003, %v991
        %v1196 = vpack.c.b16 %v1004, %v992
        %v1197 = vpack.c.b16 %v1005, %v993
        %v1198 = vpack.c.b16 %v1006, %v994
        %v1199 = vpack.c.b16 %v1007, %v995
        %v1200 = vpack.c.b16 %v1008, %v996
        %v1201 = vpack.c.b16 %v1009, %v997
        %v1202 = vpack.c.b16 %v1022, %v1010
        %v1203 = vpack.c.b16 %v1023, %v1011
        %v1204 = vpack.c.b16 %v1024, %v1012
        %v1205 = vpack.c.b16 %v1025, %v1013
        %v1206 = vpack.c.b16 %v1026, %v1014
        %v1207 = vpack.c.b16 %v1027, %v1015
        %v1208 = vpack.c.b16 %v1028, %v1016
        %v1209 = vpack.c.b16 %v1029, %v1017
        %v1210 = vpack.c.b16 %v1030, %v1018
        %v1211 = vpack.c.b16 %v1031, %v1019
        %v1212 = vpack.c.b16 %v1032, %v1020
        %v1213 = vpack.c.b16 %v1033, %v1021
        %v1214 = vpack.c.b16 %v1046, %v1034
        %v1215 = vpack.c.b16 %v1047, %v1035
        %v1216 = vpack.c.b16 %v1048, %v1036
        %v1217 = vpack.c.b16 %v1049, %v1037
        %v1218 = vpack.c.b16 %v1050, %v1038
        %v1219 = vpack.c.b16 %v1051, %v1039
        %v1220 = vpack.c.b16 %v1052, %v1040
        %v1221 = vpack.c.b16 %v1053, %v1041
        %v1222 = vpack.c.b16 %v1054, %v1042
        %v1223 = vpack.c.b16 %v1055, %v1043
        %v1224 = vpack.c.b16 %v1056, %v1044
        %v1225 = vpack.c.b16 %v1057, %v1045
        %v1226 = vpack.c.b16 %v1070, %v1058
        %v1227 = vpack.c.b16 %v1071, %v1059
        %v1228 = vpack.c.b16 %v1072, %v1060
        %v1229 = vpack.c.b16 %v1073, %v1061
        %v1230 = vpack.c.b16 %v1074, %v1062
        %v1231 = vpack.c.b16 %v1075, %v1063
        %v1232 = vpack.c.b16 %v1076, %v1064
        %v1233 = vpack.c.b16 %v1077, %v1065
        %v1234 = vpack.c.b16 %v1078, %v1066
        %v1235 = vpack.c.b16 %v1079, %v1067
        %v1236 = vpack.c.b16 %v1080, %v1068
        %v1237 = vpack.c.b16 %v1081, %v1069
        %v1238 = vpack.c.b16 %v1094, %v1082
        %v1239 = vpack.c.b16 %v1095, %v1083
        %v1240 = vpack.c.b16 %v1096, %v1084
        %v1241 = vpack.c.b16 %v1097, %v1085
        %v1242 = vpack.c.b16 %v1098, %v1086
        %v1243 = vpack.c.b16 %v1099, %v1087
        %v1244 = vpack.c.b16 %v1100, %v1088
        %v1245 = vpack.c.b16 %v1101, %v1089
        %v1246 = vpack.c.b16 %v1102, %v1090
        %v1247 = vpack.c.b16 %v1103, %v1091
        %v1248 = vpack.c.b16 %v1104, %v1092
        %v1249 = vpack.c.b16 %v1105, %v1093
        %vm1394 = vcmask 523264
        %v1396 = vsel %vm1394, %v672, 0
        %1398 = vmatprep.subr.bf16.mxu0 %v1191
        %1399 = vmatpush1.bf16.msra.mxu0 %v1190
        %1400 = vmatprep.subr.bf16.mxu0 %v1179
        %1401 = vmatpush1.bf16.msra.mxu0 %v1178
        %1402 = vmatprep.subr.bf16.mxu0 %v1167
        %1403 = vmatpush1.bf16.msra.mxu0 %v1166
        %1404 = vmatprep.subr.bf16.mxu0 %v1155
        %1405 = vmatpush1.bf16.msra.mxu0 %v1154
        %1406 = vmatprep.subr.bf16.mxu0 %v1143
        %1407 = vmatpush1.bf16.msra.mxu0 %v1142
        %1408 = vmatprep.subr.bf16.mxu0 %v1131
        %1409 = vmatpush1.bf16.msra.mxu0 %v1130
        %1410 = vmatprep.subr.bf16.mxu0 %v1119
        %1411 = vmatpush1.bf16.msra.mxu0 %v1118
        %1412 = vmatprep.subr.bf16.mxu0 %v1107
        %1413 = vmatpush1.bf16.msra.mxu0 %v1106
        %1414 = vmatprep.subr.bf16.mxu0 0
        %1415 = vmatpush2.bf16.msra.mxu0 0
        %1416 = vmatprep.subr.bf16.mxu0 0
        %1417 = vmatpush2.bf16.msra.mxu0 0
        %1418 = vmatprep.subr.bf16.mxu0 0
        %1419 = vmatpush2.bf16.msra.mxu0 0
        %1420 = vmatprep.subr.bf16.mxu0 0
        %1421 = vmatpush2.bf16.msra.mxu0 0
        %1422 = vmatprep.subr.bf16.mxu0 %v1239
        %1423 = vmatpush2.bf16.msra.mxu0 %v1238
        %1424 = vmatprep.subr.bf16.mxu0 %v1227
        %1425 = vmatpush2.bf16.msra.mxu0 %v1226
        %1426 = vmatprep.subr.bf16.mxu0 %v1215
        %1427 = vmatpush2.bf16.msra.mxu0 %v1214
        %1428 = vmatprep.subr.bf16.mxu0 %v1203
        %1429 = vmatpush2.bf16.msra.mxu0 %v1202
        %1430 = vmatprep.mubr.bf16.mxu0 %v1396
        %1431 = vmatmul.mubr.bf16.gmra.mxu0 %v671
        %v1432 = vpop.f32.mrf.mxu0
        %v1433 = vadd.f32 0.0, %v1432
        %v1434 = vpop.f32.mrf.mxu0
        %v1435 = vadd.f32 0.0, %v1434
        %v1436 = vpop.f32.mrf.mxu0
        %v1437 = vadd.f32 0.0, %v1436
        %v1438 = vpop.f32.mrf.mxu0
        %v1439 = vadd.f32 0.0, %v1438
        %1440 = vdwg.mxu0
        %1441 = vmatprep.subr.bf16.mxu0 %v1193
        %1442 = vmatpush1.bf16.msra.mxu0 %v1192
        %1443 = vmatprep.subr.bf16.mxu0 %v1181
        %1444 = vmatpush1.bf16.msra.mxu0 %v1180
        %1445 = vmatprep.subr.bf16.mxu0 %v1169
        %1446 = vmatpush1.bf16.msra.mxu0 %v1168
        %1447 = vmatprep.subr.bf16.mxu0 %v1157
        %1448 = vmatpush1.bf16.msra.mxu0 %v1156
        %1449 = vmatprep.subr.bf16.mxu0 %v1145
        %1450 = vmatpush1.bf16.msra.mxu0 %v1144
        %1451 = vmatprep.subr.bf16.mxu0 %v1133
        %1452 = vmatpush1.bf16.msra.mxu0 %v1132
        %1453 = vmatprep.subr.bf16.mxu0 %v1121
        %1454 = vmatpush1.bf16.msra.mxu0 %v1120
        %1455 = vmatprep.subr.bf16.mxu0 %v1109
        %1456 = vmatpush1.bf16.msra.mxu0 %v1108
        %1457 = vmatprep.subr.bf16.mxu0 0
        %1458 = vmatpush2.bf16.msra.mxu0 0
        %1459 = vmatprep.subr.bf16.mxu0 0
        %1460 = vmatpush2.bf16.msra.mxu0 0
        %1461 = vmatprep.subr.bf16.mxu0 0
        %1462 = vmatpush2.bf16.msra.mxu0 0
        %1463 = vmatprep.subr.bf16.mxu0 0
        %1464 = vmatpush2.bf16.msra.mxu0 0
        %1465 = vmatprep.subr.bf16.mxu0 %v1241
        %1466 = vmatpush2.bf16.msra.mxu0 %v1240
        %1467 = vmatprep.subr.bf16.mxu0 %v1229
        %1468 = vmatpush2.bf16.msra.mxu0 %v1228
        %1469 = vmatprep.subr.bf16.mxu0 %v1217
        %1470 = vmatpush2.bf16.msra.mxu0 %v1216
        %1471 = vmatprep.subr.bf16.mxu0 %v1205
        %1472 = vmatpush2.bf16.msra.mxu0 %v1204
        %1473 = vmatprep.mubr.bf16.mxu0 %v1396
        %1474 = vmatmul.mubr.bf16.gmra.mxu0 %v671
        %v1475 = vpop.f32.mrf.mxu0
        %v1476 = vadd.f32 0.0, %v1475
        %v1477 = vpop.f32.mrf.mxu0
        %v1478 = vadd.f32 0.0, %v1477
        %v1479 = vpop.f32.mrf.mxu0
        %v1480 = vadd.f32 0.0, %v1479
        %v1481 = vpop.f32.mrf.mxu0
        %v1482 = vadd.f32 0.0, %v1481
        %1483 = vdwg.mxu0
        %1484 = vmatprep.subr.bf16.mxu0 %v1195
        %1485 = vmatpush1.bf16.msra.mxu0 %v1194
        %1486 = vmatprep.subr.bf16.mxu0 %v1183
        %1487 = vmatpush1.bf16.msra.mxu0 %v1182
        %1488 = vmatprep.subr.bf16.mxu0 %v1171
        %1489 = vmatpush1.bf16.msra.mxu0 %v1170
        %1490 = vmatprep.subr.bf16.mxu0 %v1159
        %1491 = vmatpush1.bf16.msra.mxu0 %v1158
        %1492 = vmatprep.subr.bf16.mxu0 %v1147
        %1493 = vmatpush1.bf16.msra.mxu0 %v1146
        %1494 = vmatprep.subr.bf16.mxu0 %v1135
        %1495 = vmatpush1.bf16.msra.mxu0 %v1134
        %1496 = vmatprep.subr.bf16.mxu0 %v1123
        %1497 = vmatpush1.bf16.msra.mxu0 %v1122
        %1498 = vmatprep.subr.bf16.mxu0 %v1111
        %1499 = vmatpush1.bf16.msra.mxu0 %v1110
        %1500 = vmatprep.subr.bf16.mxu0 0
        %1501 = vmatpush2.bf16.msra.mxu0 0
        %1502 = vmatprep.subr.bf16.mxu0 0
        %1503 = vmatpush2.bf16.msra.mxu0 0
        %1504 = vmatprep.subr.bf16.mxu0 0
        %1505 = vmatpush2.bf16.msra.mxu0 0
        %1506 = vmatprep.subr.bf16.mxu0 0
        %1507 = vmatpush2.bf16.msra.mxu0 0
        %1508 = vmatprep.subr.bf16.mxu0 %v1243
        %1509 = vmatpush2.bf16.msra.mxu0 %v1242
        %1510 = vmatprep.subr.bf16.mxu0 %v1231
        %1511 = vmatpush2.bf16.msra.mxu0 %v1230
        %1512 = vmatprep.subr.bf16.mxu0 %v1219
        %1513 = vmatpush2.bf16.msra.mxu0 %v1218
        %1514 = vmatprep.subr.bf16.mxu0 %v1207
        %1515 = vmatpush2.bf16.msra.mxu0 %v1206
        %1516 = vmatprep.mubr.bf16.mxu0 %v1396
        %1517 = vmatmul.mubr.bf16.gmra.mxu0 %v671
        %v1518 = vpop.f32.mrf.mxu0
        %v1519 = vadd.f32 0.0, %v1518
        %v1520 = vpop.f32.mrf.mxu0
        %v1521 = vadd.f32 0.0, %v1520
        %v1522 = vpop.f32.mrf.mxu0
        %v1523 = vadd.f32 0.0, %v1522
        %v1524 = vpop.f32.mrf.mxu0
        %v1525 = vadd.f32 0.0, %v1524
        %1526 = vdwg.mxu0
        %1527 = vmatprep.subr.bf16.mxu0 %v1197
        %1528 = vmatpush1.bf16.msra.mxu0 %v1196
        %1529 = vmatprep.subr.bf16.mxu0 %v1185
        %1530 = vmatpush1.bf16.msra.mxu0 %v1184
        %1531 = vmatprep.subr.bf16.mxu0 %v1173
        %1532 = vmatpush1.bf16.msra.mxu0 %v1172
        %1533 = vmatprep.subr.bf16.mxu0 %v1161
        %1534 = vmatpush1.bf16.msra.mxu0 %v1160
        %1535 = vmatprep.subr.bf16.mxu0 %v1149
        %1536 = vmatpush1.bf16.msra.mxu0 %v1148
        %1537 = vmatprep.subr.bf16.mxu0 %v1137
        %1538 = vmatpush1.bf16.msra.mxu0 %v1136
        %1539 = vmatprep.subr.bf16.mxu0 %v1125
        %1540 = vmatpush1.bf16.msra.mxu0 %v1124
        %1541 = vmatprep.subr.bf16.mxu0 %v1113
        %1542 = vmatpush1.bf16.msra.mxu0 %v1112
        %1543 = vmatprep.subr.bf16.mxu0 0
        %1544 = vmatpush2.bf16.msra.mxu0 0
        %1545 = vmatprep.subr.bf16.mxu0 0
        %1546 = vmatpush2.bf16.msra.mxu0 0
        %1547 = vmatprep.subr.bf16.mxu0 0
        %1548 = vmatpush2.bf16.msra.mxu0 0
        %1549 = vmatprep.subr.bf16.mxu0 0
        %1550 = vmatpush2.bf16.msra.mxu0 0
        %1551 = vmatprep.subr.bf16.mxu0 %v1245
        %1552 = vmatpush2.bf16.msra.mxu0 %v1244
        %1553 = vmatprep.subr.bf16.mxu0 %v1233
        %1554 = vmatpush2.bf16.msra.mxu0 %v1232
        %1555 = vmatprep.subr.bf16.mxu0 %v1221
        %1556 = vmatpush2.bf16.msra.mxu0 %v1220
        %1557 = vmatprep.subr.bf16.mxu0 %v1209
        %1558 = vmatpush2.bf16.msra.mxu0 %v1208
        %1559 = vmatprep.mubr.bf16.mxu0 %v1396
        %1560 = vmatmul.mubr.bf16.gmra.mxu0 %v671
        %v1561 = vpop.f32.mrf.mxu0
        %v1562 = vadd.f32 0.0, %v1561
        %v1563 = vpop.f32.mrf.mxu0
        %v1564 = vadd.f32 0.0, %v1563
        %v1565 = vpop.f32.mrf.mxu0
        %v1566 = vadd.f32 0.0, %v1565
        %v1567 = vpop.f32.mrf.mxu0
        %v1568 = vadd.f32 0.0, %v1567
        %1569 = vdwg.mxu0
        %1570 = vmatprep.subr.bf16.mxu0 %v1199
        %1571 = vmatpush1.bf16.msra.mxu0 %v1198
        %1572 = vmatprep.subr.bf16.mxu0 %v1187
        %1573 = vmatpush1.bf16.msra.mxu0 %v1186
        %1574 = vmatprep.subr.bf16.mxu0 %v1175
        %1575 = vmatpush1.bf16.msra.mxu0 %v1174
        %1576 = vmatprep.subr.bf16.mxu0 %v1163
        %1577 = vmatpush1.bf16.msra.mxu0 %v1162
        %1578 = vmatprep.subr.bf16.mxu0 %v1151
        %1579 = vmatpush1.bf16.msra.mxu0 %v1150
        %1580 = vmatprep.subr.bf16.mxu0 %v1139
        %1581 = vmatpush1.bf16.msra.mxu0 %v1138
        %1582 = vmatprep.subr.bf16.mxu0 %v1127
        %1583 = vmatpush1.bf16.msra.mxu0 %v1126
        %1584 = vmatprep.subr.bf16.mxu0 %v1115
        %1585 = vmatpush1.bf16.msra.mxu0 %v1114
        %1586 = vmatprep.subr.bf16.mxu0 0
        %1587 = vmatpush2.bf16.msra.mxu0 0
        %1588 = vmatprep.subr.bf16.mxu0 0
        %1589 = vmatpush2.bf16.msra.mxu0 0
        %1590 = vmatprep.subr.bf16.mxu0 0
        %1591 = vmatpush2.bf16.msra.mxu0 0
        %1592 = vmatprep.subr.bf16.mxu0 0
        %1593 = vmatpush2.bf16.msra.mxu0 0
        %1594 = vmatprep.subr.bf16.mxu0 %v1247
        %1595 = vmatpush2.bf16.msra.mxu0 %v1246
        %1596 = vmatprep.subr.bf16.mxu0 %v1235
        %1597 = vmatpush2.bf16.msra.mxu0 %v1234
        %1598 = vmatprep.subr.bf16.mxu0 %v1223
        %1599 = vmatpush2.bf16.msra.mxu0 %v1222
        %1600 = vmatprep.subr.bf16.mxu0 %v1211
        %1601 = vmatpush2.bf16.msra.mxu0 %v1210
        %1602 = vmatprep.mubr.bf16.mxu0 %v1396
        %1603 = vmatmul.mubr.bf16.gmra.mxu0 %v671
        %v1604 = vpop.f32.mrf.mxu0
        %v1605 = vadd.f32 0.0, %v1604
        %v1606 = vpop.f32.mrf.mxu0
        %v1607 = vadd.f32 0.0, %v1606
        %v1608 = vpop.f32.mrf.mxu0
        %v1609 = vadd.f32 0.0, %v1608
        %v1610 = vpop.f32.mrf.mxu0
        %v1611 = vadd.f32 0.0, %v1610
        %1612 = vdwg.mxu0
        %1613 = vmatprep.subr.bf16.mxu0 %v1201
        %1614 = vmatpush1.bf16.msra.mxu0 %v1200
        %1615 = vmatprep.subr.bf16.mxu0 %v1189
        %1616 = vmatpush1.bf16.msra.mxu0 %v1188
        %1617 = vmatprep.subr.bf16.mxu0 %v1177
        %1618 = vmatpush1.bf16.msra.mxu0 %v1176
        %1619 = vmatprep.subr.bf16.mxu0 %v1165
        %1620 = vmatpush1.bf16.msra.mxu0 %v1164
        %1621 = vmatprep.subr.bf16.mxu0 %v1153
        %1622 = vmatpush1.bf16.msra.mxu0 %v1152
        %1623 = vmatprep.subr.bf16.mxu0 %v1141
        %1624 = vmatpush1.bf16.msra.mxu0 %v1140
        %1625 = vmatprep.subr.bf16.mxu0 %v1129
        %1626 = vmatpush1.bf16.msra.mxu0 %v1128
        %1627 = vmatprep.subr.bf16.mxu0 %v1117
        %1628 = vmatpush1.bf16.msra.mxu0 %v1116
        %1629 = vmatprep.subr.bf16.mxu0 0
        %1630 = vmatpush2.bf16.msra.mxu0 0
        %1631 = vmatprep.subr.bf16.mxu0 0
        %1632 = vmatpush2.bf16.msra.mxu0 0
        %1633 = vmatprep.subr.bf16.mxu0 0
        %1634 = vmatpush2.bf16.msra.mxu0 0
        %1635 = vmatprep.subr.bf16.mxu0 0
        %1636 = vmatpush2.bf16.msra.mxu0 0
        %1637 = vmatprep.subr.bf16.mxu0 %v1249
        %1638 = vmatpush2.bf16.msra.mxu0 %v1248
        %1639 = vmatprep.subr.bf16.mxu0 %v1237
        %1640 = vmatpush2.bf16.msra.mxu0 %v1236
        %1641 = vmatprep.subr.bf16.mxu0 %v1225
        %1642 = vmatpush2.bf16.msra.mxu0 %v1224
        %1643 = vmatprep.subr.bf16.mxu0 %v1213
        %1644 = vmatpush2.bf16.msra.mxu0 %v1212
        %1645 = vmatprep.mubr.bf16.mxu0 %v1396
        %1646 = vmatmul.mubr.bf16.gmra.mxu0 %v671
        %v1647 = vpop.f32.mrf.mxu0
        %v1648 = vadd.f32 0.0, %v1647
        %v1649 = vpop.f32.mrf.mxu0
        %v1650 = vadd.f32 0.0, %v1649
        %v1651 = vpop.f32.mrf.mxu0
        %v1652 = vadd.f32 0.0, %v1651
        %v1653 = vpop.f32.mrf.mxu0
        %v1654 = vadd.f32 0.0, %v1653
        %1655 = vdwg.mxu0
        %v1656 = vld [vmem:[%s2] sm:$0xff]
        %v1657 = vld [vmem:[%s2 + $0x8] sm:$0xff]
        %1659 = vset.pattern.permute.xlu0 0
        %1660 = vperm.xlu0 %1659, %v1656
        %v1661 = vpop.permute.xlu0 %1660
        %1664 = vset.pattern.permute.xlu0 0
        %1665 = vperm.xlu0 %1664, %v1657
        %v1666 = vpop.permute.xlu0 %1665
        %v1668 = vmul.f32 %v1433, %v1661
        %v1669 = vmul.f32 %v1435, %v1661
        %v1670 = vmul.f32 %v1476, %v1661
        %v1671 = vmul.f32 %v1478, %v1661
        %v1672 = vmul.f32 %v1519, %v1661
        %v1673 = vmul.f32 %v1521, %v1661
        %v1674 = vmul.f32 %v1562, %v1661
        %v1675 = vmul.f32 %v1564, %v1661
        %v1676 = vmul.f32 %v1605, %v1661
        %v1677 = vmul.f32 %v1607, %v1661
        %v1678 = vmul.f32 %v1648, %v1661
        %v1679 = vmul.f32 %v1650, %v1661
        %v1680 = vmul.f32 %v1437, %v1666
        %v1681 = vmul.f32 %v1439, %v1666
        %v1682 = vmul.f32 %v1480, %v1666
        %v1683 = vmul.f32 %v1482, %v1666
        %v1684 = vmul.f32 %v1523, %v1666
        %v1685 = vmul.f32 %v1525, %v1666
        %v1686 = vmul.f32 %v1566, %v1666
        %v1687 = vmul.f32 %v1568, %v1666
        %v1688 = vmul.f32 %v1609, %v1666
        %v1689 = vmul.f32 %v1611, %v1666
        %v1690 = vmul.f32 %v1652, %v1666
        %v1691 = vmul.f32 %v1654, %v1666
        %v1692 = vld [vmem:[%s3] sm:$0xff]
        %v1693 = vld [vmem:[%s3 + $0x8] sm:$0xff]
        %1695 = vset.pattern.permute.xlu0 0
        %1696 = vperm.xlu0 %1695, %v1692
        %v1697 = vpop.permute.xlu0 %1696
        %1700 = vset.pattern.permute.xlu0 0
        %1701 = vperm.xlu0 %1700, %v1693
        %v1702 = vpop.permute.xlu0 %1701
        %v1704 = vadd.f32 %v1668, %v1697
        %v1705 = vadd.f32 %v1669, %v1697
        %v1706 = vadd.f32 %v1670, %v1697
        %v1707 = vadd.f32 %v1671, %v1697
        %v1708 = vadd.f32 %v1672, %v1697
        %v1709 = vadd.f32 %v1673, %v1697
        %v1710 = vadd.f32 %v1674, %v1697
        %v1711 = vadd.f32 %v1675, %v1697
        %v1712 = vadd.f32 %v1676, %v1697
        %v1713 = vadd.f32 %v1677, %v1697
        %v1714 = vadd.f32 %v1678, %v1697
        %v1715 = vadd.f32 %v1679, %v1697
        %v1716 = vadd.f32 %v1680, %v1702
        %v1717 = vadd.f32 %v1681, %v1702
        %v1718 = vadd.f32 %v1682, %v1702
        %v1719 = vadd.f32 %v1683, %v1702
        %v1720 = vadd.f32 %v1684, %v1702
        %v1721 = vadd.f32 %v1685, %v1702
        %v1722 = vadd.f32 %v1686, %v1702
        %v1723 = vadd.f32 %v1687, %v1702
        %v1724 = vadd.f32 %v1688, %v1702
        %v1725 = vadd.f32 %v1689, %v1702
        %v1726 = vadd.f32 %v1690, %v1702
        %v1727 = vadd.f32 %v1691, %v1702
        %vm1728 = vcmp.ge.f32.partialorder %v1704, 0.0
        %vm1729 = vcmp.ge.f32.partialorder %v1705, 0.0
        %vm1730 = vcmp.ge.f32.partialorder %v1706, 0.0
        %vm1731 = vcmp.ge.f32.partialorder %v1707, 0.0
        %vm1732 = vcmp.ge.f32.partialorder %v1708, 0.0
        %vm1733 = vcmp.ge.f32.partialorder %v1709, 0.0
        %vm1734 = vcmp.ge.f32.partialorder %v1710, 0.0
        %vm1735 = vcmp.ge.f32.partialorder %v1711, 0.0
        %vm1736 = vcmp.ge.f32.partialorder %v1712, 0.0
        %vm1737 = vcmp.ge.f32.partialorder %v1713, 0.0
        %vm1738 = vcmp.ge.f32.partialorder %v1714, 0.0
        %vm1739 = vcmp.ge.f32.partialorder %v1715, 0.0
        %vm1740 = vcmp.ge.f32.partialorder %v1716, 0.0
        %vm1741 = vcmp.ge.f32.partialorder %v1717, 0.0
        %vm1742 = vcmp.ge.f32.partialorder %v1718, 0.0
        %vm1743 = vcmp.ge.f32.partialorder %v1719, 0.0
        %vm1744 = vcmp.ge.f32.partialorder %v1720, 0.0
        %vm1745 = vcmp.ge.f32.partialorder %v1721, 0.0
        %vm1746 = vcmp.ge.f32.partialorder %v1722, 0.0
        %vm1747 = vcmp.ge.f32.partialorder %v1723, 0.0
        %vm1748 = vcmp.ge.f32.partialorder %v1724, 0.0
        %vm1749 = vcmp.ge.f32.partialorder %v1725, 0.0
        %vm1750 = vcmp.ge.f32.partialorder %v1726, 0.0
        %vm1751 = vcmp.ge.f32.partialorder %v1727, 0.0
        %v1752 = vmul.f32 %v1704, 0.2
        %v1753 = vmul.f32 %v1705, 0.2
        %v1754 = vmul.f32 %v1706, 0.2
        %v1755 = vmul.f32 %v1707, 0.2
        %v1756 = vmul.f32 %v1708, 0.2
        %v1757 = vmul.f32 %v1709, 0.2
        %v1758 = vmul.f32 %v1710, 0.2
        %v1759 = vmul.f32 %v1711, 0.2
        %v1760 = vmul.f32 %v1712, 0.2
        %v1761 = vmul.f32 %v1713, 0.2
        %v1762 = vmul.f32 %v1714, 0.2
        %v1763 = vmul.f32 %v1715, 0.2
        %v1764 = vmul.f32 %v1716, 0.2
        %v1765 = vmul.f32 %v1717, 0.2
        %v1766 = vmul.f32 %v1718, 0.2
        %v1767 = vmul.f32 %v1719, 0.2
        %v1768 = vmul.f32 %v1720, 0.2
        %v1769 = vmul.f32 %v1721, 0.2
        %v1770 = vmul.f32 %v1722, 0.2
        %v1771 = vmul.f32 %v1723, 0.2
        %v1772 = vmul.f32 %v1724, 0.2
        %v1773 = vmul.f32 %v1725, 0.2
        %v1774 = vmul.f32 %v1726, 0.2
        %v1775 = vmul.f32 %v1727, 0.2
        %v1776 = vsel %vm1728, %v1704, %v1752
        %v1777 = vsel %vm1729, %v1705, %v1753
        %v1778 = vsel %vm1730, %v1706, %v1754
        %v1779 = vsel %vm1731, %v1707, %v1755
        %v1780 = vsel %vm1732, %v1708, %v1756
        %v1781 = vsel %vm1733, %v1709, %v1757
        %v1782 = vsel %vm1734, %v1710, %v1758
        %v1783 = vsel %vm1735, %v1711, %v1759
        %v1784 = vsel %vm1736, %v1712, %v1760
        %v1785 = vsel %vm1737, %v1713, %v1761
        %v1786 = vsel %vm1738, %v1714, %v1762
        %v1787 = vsel %vm1739, %v1715, %v1763
        %v1788 = vsel %vm1740, %v1716, %v1764
        %v1789 = vsel %vm1741, %v1717, %v1765
        %v1790 = vsel %vm1742, %v1718, %v1766
        %v1791 = vsel %vm1743, %v1719, %v1767
        %v1792 = vsel %vm1744, %v1720, %v1768
        %v1793 = vsel %vm1745, %v1721, %v1769
        %v1794 = vsel %vm1746, %v1722, %v1770
        %v1795 = vsel %vm1747, %v1723, %v1771
        %v1796 = vsel %vm1748, %v1724, %v1772
        %v1797 = vsel %vm1749, %v1725, %v1773
        %v1798 = vsel %vm1750, %v1726, %v1774
        %v1799 = vsel %vm1751, %v1727, %v1775
        %v1800 = vpack.c.bf16 %v1788, %v1776
        %v1801 = vpack.c.bf16 %v1789, %v1777
        %v1802 = vpack.c.bf16 %v1790, %v1778
        %v1803 = vpack.c.bf16 %v1791, %v1779
        %v1804 = vpack.c.bf16 %v1792, %v1780
        %v1805 = vpack.c.bf16 %v1793, %v1781
        %v1806 = vpack.c.bf16 %v1794, %v1782
        %v1807 = vpack.c.bf16 %v1795, %v1783
        %v1808 = vpack.c.bf16 %v1796, %v1784
        %v1809 = vpack.c.bf16 %v1797, %v1785
        %v1810 = vpack.c.bf16 %v1798, %v1786
        %v1811 = vpack.c.bf16 %v1799, %v1787
        %v1824 = vunpack.c.l.b16 %v1800
        %v1825 = vunpack.c.l.b16 %v1801
        %v1826 = vunpack.c.l.b16 %v1802
        %v1827 = vunpack.c.l.b16 %v1803
        %v1828 = vunpack.c.l.b16 %v1804
        %v1829 = vunpack.c.l.b16 %v1805
        %v1830 = vunpack.c.l.b16 %v1806
        %v1831 = vunpack.c.l.b16 %v1807
        %v1832 = vunpack.c.l.b16 %v1808
        %v1833 = vunpack.c.l.b16 %v1809
        %v1834 = vunpack.c.l.b16 %v1810
        %v1835 = vunpack.c.l.b16 %v1811
        %v1836 = vunpack.c.h.b16 %v1800
        %v1837 = vunpack.c.h.b16 %v1801
        %v1838 = vunpack.c.h.b16 %v1802
        %v1839 = vunpack.c.h.b16 %v1803
        %v1840 = vunpack.c.h.b16 %v1804
        %v1841 = vunpack.c.h.b16 %v1805
        %v1842 = vunpack.c.h.b16 %v1806
        %v1843 = vunpack.c.h.b16 %v1807
        %v1844 = vunpack.c.h.b16 %v1808
        %v1845 = vunpack.c.h.b16 %v1809
        %v1846 = vunpack.c.h.b16 %v1810
        %v1847 = vunpack.c.h.b16 %v1811
        %v1848 = vpack.c.b16 %v1825, %v1824
        %v1849 = vpack.c.b16 %v1827, %v1826
        %v1850 = vpack.c.b16 %v1829, %v1828
        %v1851 = vpack.c.b16 %v1831, %v1830
        %v1852 = vpack.c.b16 %v1833, %v1832
        %v1853 = vpack.c.b16 %v1835, %v1834
        %v1854 = vpack.c.b16 %v1837, %v1836
        %v1855 = vpack.c.b16 %v1839, %v1838
        %v1856 = vpack.c.b16 %v1841, %v1840
        %v1857 = vpack.c.b16 %v1843, %v1842
        %v1858 = vpack.c.b16 %v1845, %v1844
        %v1859 = vpack.c.b16 %v1847, %v1846
        %1872 = vst [vmem:[%s515] sm:$0xff] %v1848
        %1873 = vst [vmem:[%s515 + $0x8] sm:$0xff] %v1849
        %1874 = vst [vmem:[%s515 + $0x10] sm:$0xff] %v1850
        %1875 = vst [vmem:[%s515 + $0x18] sm:$0xff] %v1851
        %1876 = vst [vmem:[%s515 + $0x20] sm:$0xff] %v1852
        %1877 = vst [vmem:[%s515 + $0x28] sm:$0xff] %v1853
        %1878 = vst [vmem:[%s515 + $0x30] sm:$0xff] %v1854
        %1879 = vst [vmem:[%s515 + $0x38] sm:$0xff] %v1855
        %1880 = vst [vmem:[%s515 + $0x40] sm:$0xff] %v1856
        %1881 = vst [vmem:[%s515 + $0x48] sm:$0xff] %v1857
        %1882 = vst [vmem:[%s515 + $0x50] sm:$0xff] %v1858
        %1883 = vst [vmem:[%s515 + $0x58] sm:$0xff] %v1859
        %s1884 = sand.u32 %s128, 1
        %s1885 = sand.u32 %s128, 1
        %s1886 = smul.addr %s1885, 96
        %s1887 = scalar_lea.vmem [#allocation3], %s1886
        // Predicated region
        $region60: #{_lambda_.5} parent=54 // pred_check
          %p1888 = pneg %p138
        $region61: #{_lambda_.5} parent=54 // pred_check_branch
          %1890 = sbr.rel (%p1888) target = $region63
        $region62: #{_lambda_.5} parent=54 // pred_region
          %s1891 = smul.u32 12, %s20
          %s1892 = smul.addr %s19, 48
          %s1893 = sadd.s32 %s1891, %s1892
          %s1894 = smul.addr %s1893, 4
          %s1895 = scalar_lea.vmem %s4, %s1894
          // Predicated region
          $region64: #{_lambda_.5} parent=62 // pred_check
            _
          $region65: #{_lambda_.5} parent=62 // pred_check_branch
            %1897 = sbr.rel (0) target = $region67
          $region66: #{_lambda_.5} parent=62 // pred_region
            // Predicated region
            $region68: #{_lambda_.5} parent=66 // pred_check
              _
            $region69: #{_lambda_.5} parent=66 // pred_check_branch
              %1899 = sbr.rel (0) target = $region71
            $region70: #{_lambda_.5} parent=66 // pred_region
              loop: start=0, step=1, limit=1
              $region72: #{_lambda_.5} parent=70 // loop_pre_header
                _
              $region73: #{_lambda_.5} parent=70 // loop_header
                %s1901 = sphi 0, %s1905
                %p1902 = scmp.ge.s32.totalorder %s1901, 1
                %s1906 = sphi %s1887, %s1887
                %s1907 = sphi %s1895, %s1895
              $region74: #{_lambda_.5} parent=70 // loop_header_branch
                %1904 = sbr.rel (%p1902) target = $region78
              $region75: #{_lambda_.5} parent=70 // loop_body
                %v1908 = vld [vmem:[%s1906] sm:$0xff]
                %1909 = vst [vmem:[%s1907] sm:$0xff] %v1908
                %v1910 = vld [vmem:[%s1906 + $0x8] sm:$0xff]
                %1911 = vst [vmem:[%s1907 + $0x8] sm:$0xff] %v1910
                %v1912 = vld [vmem:[%s1906 + $0x10] sm:$0xff]
                %1913 = vst [vmem:[%s1907 + $0x10] sm:$0xff] %v1912
                %v1914 = vld [vmem:[%s1906 + $0x18] sm:$0xff]
                %1915 = vst [vmem:[%s1907 + $0x18] sm:$0xff] %v1914
                %v1916 = vld [vmem:[%s1906 + $0x20] sm:$0xff]
                %1917 = vst [vmem:[%s1907 + $0x20] sm:$0xff] %v1916
                %v1918 = vld [vmem:[%s1906 + $0x28] sm:$0xff]
                %1919 = vst [vmem:[%s1907 + $0x28] sm:$0xff] %v1918
                %v1920 = vld [vmem:[%s1906 + $0x30] sm:$0xff]
                %1921 = vst [vmem:[%s1907 + $0x60] sm:$0xff] %v1920
                %v1922 = vld [vmem:[%s1906 + $0x38] sm:$0xff]
                %1923 = vst [vmem:[%s1907 + $0x68] sm:$0xff] %v1922
                %v1924 = vld [vmem:[%s1906 + $0x40] sm:$0xff]
                %1925 = vst [vmem:[%s1907 + $0x70] sm:$0xff] %v1924
                %v1926 = vld [vmem:[%s1906 + $0x48] sm:$0xff]
                %1927 = vst [vmem:[%s1907 + $0x78] sm:$0xff] %v1926
                %v1928 = vld [vmem:[%s1906 + $0x50] sm:$0xff]
                %1929 = vst [vmem:[%s1907 + $0x80] sm:$0xff] %v1928
                %v1930 = vld [vmem:[%s1906 + $0x58] sm:$0xff]
                %1931 = vst [vmem:[%s1907 + $0x88] sm:$0xff] %v1930
              $region76: #{_lambda_.5} parent=70 // loop_footer
                %s1905 = sadd.s32 1, %s1901
              $region77: #{_lambda_.5} parent=70 // loop_footer_branch
                %1900 = sbr.rel target = $region73
              $region78: #{_lambda_.5} parent=70 // loop_exit
                _
            $region71: #{_lambda_.5} parent=66 // pred_fallthru
              _
            // Predicated region
            $region79: #{_lambda_.5} parent=66 // pred_check
              _
            $region80: #{_lambda_.5} parent=66 // pred_check_branch
              %1933 = sbr.rel target = $region82
            $region81: #{_lambda_.5} parent=66 // pred_region
              _
            $region82: #{_lambda_.5} parent=66 // pred_fallthru
              _
          $region67: #{_lambda_.5} parent=62 // pred_fallthru
            _
          %1934 = vnop
        $region63: #{_lambda_.5} parent=54 // pred_fallthru
          _
      $region55: #{_lambda_.5} parent=5 // pred_fallthru
        _
      %p1935 = scmp.le.s32.totalorder 2, %s10
      // Predicated region
      $region83: #{_lambda_.5} parent=5 // pred_check
        %p1936 = pneg %p1935
      $region84: #{_lambda_.5} parent=5 // pred_check_branch
        %1938 = sbr.rel (%p1936) target = $region86
      $region85: #{_lambda_.5} parent=5 // pred_region
        %s1939 = ssub.s32 %s10, 2
        // Predicated region
        $region87: #{_lambda_.5} parent=85 // pred_check
          %p1940 = pneg %p144
        $region88: #{_lambda_.5} parent=85 // pred_check_branch
          %1942 = sbr.rel (%p1940) target = $region90
        $region89: #{_lambda_.5} parent=85 // pred_region
          %s1943 = sand.u32 %s129, 1
          %s1944 = sand.u32 %s129, 1
          %s1945 = smul.addr %s1944, 96
          %s1946 = scalar_lea.vmem [#allocation3], %s1945
        $region90: #{_lambda_.5} parent=85 // pred_fallthru
          _
      $region86: #{_lambda_.5} parent=5 // pred_fallthru
        _
    $region6: #{_lambda_.5} parent=1 // loop_footer
      %s14 = sadd.s32 1, %s10
    $region7: #{_lambda_.5} parent=1 // loop_footer_branch
      %9 = sbr.rel target = $region3
    $region8: #{_lambda_.5} parent=1 // loop_exit
      _

// kernel: _lambda_.6
$region0: #{_lambda_.6}
  #allocation0 [shape = 'u32[]', space=smem, size = 0x4, offset = 0x4, fixed_abs, tag = 'smem constant byte address 0x4 - core index']
  #allocation1 [shape = 'u32[144,128]{1,0:T(1,128)}', space=vmem, size = 0x12000, scoped, tag = 'internal scratch']
  %s0 = inlined_call_operand.vmem [shape: bf16[16,512], index: 0, kind: input, shape index: {}]
  %s1 = inlined_call_operand.vmem [shape: bf16[2,512,384], index: 1, kind: input, shape index: {}]
  %s2 = inlined_call_operand.vmem [shape: f32[16,1], index: 2, kind: input, shape index: {}]
  %s3 = inlined_call_operand.vmem [shape: f32[16,1], index: 3, kind: input, shape index: {}]
  %s4 = inlined_call_operand.vmem [shape: bf16[2,16,384], index: 4, kind: output, shape index: {}]
  %s5 = sld [smem:[#allocation0]]
  $region49: #{_lambda_.6} parent=0
    _
  %s7 = ssub.s32 1, %s5
  %s8 = scalar_select 0, %s7, %s5
  loop: start=0, step=1, limit=4
  $region2: #{_lambda_.6} parent=0 // loop_pre_header
    _
  $region3: #{_lambda_.6} parent=0 // loop_header
    %s10 = sphi 0, %s14
    %p11 = scmp.ge.s32.totalorder %s10, 4
    %s17 = sphi 0, %s29
    %s18 = sphi 0, %s25
    %s19 = sphi 0, %s17
    %s20 = sphi 0, %s18
    %s21 = sphi 0, %s19
    %s22 = sphi 0, %s20
    %s30 = sphi 0, %s30
    %s32 = sphi 0, %s30
    %s33 = sphi 0, %s32
    %s47 = sphi 0, %s33
    %s55 = sphi 0, %s57
    %s58 = sphi 0, %s55
    %s59 = sphi 0, %s58
    %s75 = sphi 0, %s59
    %s79 = sphi 0, %s79
    %s81 = sphi 0, %s79
    %s82 = sphi 0, %s81
    %s96 = sphi 0, %s82
    %s100 = sphi 0, %s100
    %s102 = sphi 0, %s100
    %s103 = sphi 0, %s102
    %s117 = sphi 0, %s103
    %s125 = sphi 0, %s127
    %s128 = sphi 0, %s125
    %s129 = sphi 0, %s128
    %s145 = sphi 0, %s129
  $region4: #{_lambda_.6} parent=0 // loop_header_branch
    %13 = sbr.rel (%p11) target = $region8
  $region5: #{_lambda_.6} parent=0 // loop_body
    %s15 = ssub.s32 %s10, 1
    %s16 = ssub.s32 %s10, 2
    %s23 = sadd.s32 1, %s18
    %p24 = scmp.ge.s32.totalorder %s23, 1
    %s25 = scalar_select %p24, 0, %s23
    %s26 = sadd.s32 1, %s17
    %s27 = scalar_select %p24, %s26, %s17
    %p28 = scmp.ge.s32.totalorder %s27, 2
    %s29 = scalar_select %p28, 0, %s27
    %s31 = sadd.s32 %s30, 1
    %p34 = scmp.eq.s32.totalorder %s10, 1
    %p35 = scmp.ne.s32.totalorder %s30, %s32
    %p36 = scmp.eq.s32.totalorder %s10, 0
    %p37 = por %p35, %p36
    %p38 = scmp.ne.s32.totalorder %s30, %s32
    %p39 = scmp.eq.s32.totalorder %s15, 1
    %p40 = por %p38, %p39
    %p41 = scmp.ne.s32.totalorder %s32, %s33
    %p42 = scmp.eq.s32.totalorder %s15, 0
    %p43 = por %p41, %p42
    %p44 = scmp.ne.s32.totalorder %s32, %s33
    %p45 = scmp.eq.s32.totalorder %s16, 1
    %p46 = por %p44, %p45
    %p48 = scmp.ne.s32.totalorder %s33, %s47
    %p49 = scmp.eq.s32.totalorder %s16, 0
    %p50 = por %p48, %p49
    %s51 = ssub.s32 %s17, %s29
    %s52 = ssub.s32 %s18, %s25
    %s53 = sor.u32 %s51, %s52
    %p54 = scmp.eq.s32.totalorder %s53, 0
    %s56 = sadd.s32 %s55, 1
    %s57 = scalar_select %p54, %s55, %s56
    %p60 = pneg %p54
    %p61 = scmp.eq.s32.totalorder %s10, 1
    %p62 = por %p60, %p61
    %p63 = scmp.ne.s32.totalorder %s55, %s58
    %p64 = scmp.eq.s32.totalorder %s10, 0
    %p65 = por %p63, %p64
    %p66 = scmp.ne.s32.totalorder %s55, %s58
    %p67 = scmp.eq.s32.totalorder %s15, 1
    %p68 = por %p66, %p67
    %p69 = scmp.ne.s32.totalorder %s58, %s59
    %p70 = scmp.eq.s32.totalorder %s15, 0
    %p71 = por %p69, %p70
    %p72 = scmp.ne.s32.totalorder %s58, %s59
    %p73 = scmp.eq.s32.totalorder %s16, 1
    %p74 = por %p72, %p73
    %p76 = scmp.ne.s32.totalorder %s59, %s75
    %p77 = scmp.eq.s32.totalorder %s16, 0
    %p78 = por %p76, %p77
    %s80 = sadd.s32 %s79, 1
    %p83 = scmp.eq.s32.totalorder %s10, 1
    %p84 = scmp.ne.s32.totalorder %s79, %s81
    %p85 = scmp.eq.s32.totalorder %s10, 0
    %p86 = por %p84, %p85
    %p87 = scmp.ne.s32.totalorder %s79, %s81
    %p88 = scmp.eq.s32.totalorder %s15, 1
    %p89 = por %p87, %p88
    %p90 = scmp.ne.s32.totalorder %s81, %s82
    %p91 = scmp.eq.s32.totalorder %s15, 0
    %p92 = por %p90, %p91
    %p93 = scmp.ne.s32.totalorder %s81, %s82
    %p94 = scmp.eq.s32.totalorder %s16, 1
    %p95 = por %p93, %p94
    %p97 = scmp.ne.s32.totalorder %s82, %s96
    %p98 = scmp.eq.s32.totalorder %s16, 0
    %p99 = por %p97, %p98
    %s101 = sadd.s32 %s100, 1
    %p104 = scmp.eq.s32.totalorder %s10, 1
    %p105 = scmp.ne.s32.totalorder %s100, %s102
    %p106 = scmp.eq.s32.totalorder %s10, 0
    %p107 = por %p105, %p106
    %p108 = scmp.ne.s32.totalorder %s100, %s102
    %p109 = scmp.eq.s32.totalorder %s15, 1
    %p110 = por %p108, %p109
    %p111 = scmp.ne.s32.totalorder %s102, %s103
    %p112 = scmp.eq.s32.totalorder %s15, 0
    %p113 = por %p111, %p112
    %p114 = scmp.ne.s32.totalorder %s102, %s103
    %p115 = scmp.eq.s32.totalorder %s16, 1
    %p116 = por %p114, %p115
    %p118 = scmp.ne.s32.totalorder %s103, %s117
    %p119 = scmp.eq.s32.totalorder %s16, 0
    %p120 = por %p118, %p119
    %s121 = ssub.s32 %s17, %s29
    %s122 = ssub.s32 %s18, %s25
    %s123 = sor.u32 %s121, %s122
    %p124 = scmp.eq.s32.totalorder %s123, 0
    %s126 = sadd.s32 %s125, 1
    %s127 = scalar_select %p124, %s125, %s126
    %p130 = pneg %p124
    %p131 = scmp.eq.s32.totalorder %s10, 1
    %p132 = por %p130, %p131
    %p133 = scmp.ne.s32.totalorder %s125, %s128
    %p134 = scmp.eq.s32.totalorder %s10, 0
    %p135 = por %p133, %p134
    %p136 = scmp.ne.s32.totalorder %s125, %s128
    %p137 = scmp.eq.s32.totalorder %s15, 1
    %p138 = por %p136, %p137
    %p139 = scmp.ne.s32.totalorder %s128, %s129
    %p140 = scmp.eq.s32.totalorder %s15, 0
    %p141 = por %p139, %p140
    %p142 = scmp.ne.s32.totalorder %s128, %s129
    %p143 = scmp.eq.s32.totalorder %s16, 1
    %p144 = por %p142, %p143
    %p146 = scmp.ne.s32.totalorder %s129, %s145
    %p147 = scmp.eq.s32.totalorder %s16, 0
    %p148 = por %p146, %p147
    %p149 = scmp.le.s32.totalorder 1, %s10
    %p150 = scmp.lt.s32.totalorder %s10, 3
    %p151 = pnand %p149, %p150
    %p152 = pneg %p151
    // Predicated region
    $region9: #{_lambda_.6} parent=5 // pred_check
      _
    $region10: #{_lambda_.6} parent=5 // pred_check_branch
      %154 = sbr.rel (%p151) target = $region12
    $region11: #{_lambda_.6} parent=5 // pred_region
      %s155 = ssub.s32 %s10, 1
      // Predicated region
      $region13: #{_lambda_.6} parent=11 // pred_check
        %p156 = pneg %p43
      $region14: #{_lambda_.6} parent=11 // pred_check_branch
        %158 = sbr.rel (%p156) target = $region16
      $region15: #{_lambda_.6} parent=11 // pred_region
        _
      $region16: #{_lambda_.6} parent=11 // pred_fallthru
        _
      // Predicated region
      $region17: #{_lambda_.6} parent=11 // pred_check
        %p159 = pneg %p92
      $region18: #{_lambda_.6} parent=11 // pred_check_branch
        %161 = sbr.rel (%p159) target = $region20
      $region19: #{_lambda_.6} parent=11 // pred_region
        _
      $region20: #{_lambda_.6} parent=11 // pred_fallthru
        _
      // Predicated region
      $region21: #{_lambda_.6} parent=11 // pred_check
        %p162 = pneg %p113
      $region22: #{_lambda_.6} parent=11 // pred_check_branch
        %164 = sbr.rel (%p162) target = $region24
      $region23: #{_lambda_.6} parent=11 // pred_region
        _
      $region24: #{_lambda_.6} parent=11 // pred_fallthru
        _
    $region12: #{_lambda_.6} parent=5 // pred_fallthru
      _
    %p165 = scmp.lt.s32.totalorder %s10, 2
    // Predicated region
    $region25: #{_lambda_.6} parent=5 // pred_check
      %p166 = pneg %p165
    $region26: #{_lambda_.6} parent=5 // pred_check_branch
      %168 = sbr.rel (%p166) target = $region28
    $region27: #{_lambda_.6} parent=5 // pred_region
      // Predicated region
      $region29: #{_lambda_.6} parent=27 // pred_check
        %p169 = pneg %p65
      $region30: #{_lambda_.6} parent=27 // pred_check_branch
        %171 = sbr.rel (%p169) target = $region32
      $region31: #{_lambda_.6} parent=27 // pred_region
        %s172 = smul.u32 3, %s18
        %p173 = scmp.lt.s32.totalorder %s17, 1
        %s174 = scalar_select %p173, %s17, 1
        %p175 = scmp.lt.s32.totalorder %s172, 2
        %s176 = scalar_select %p175, %s172, 2
        %s177 = smul.addr %s174, 192
        %s178 = sadd.s32 %s176, %s177
        %s179 = smul.addr %s178, 4
        %s180 = scalar_lea.vmem %s1, %s179
        %s181 = smul.u32 3, %s18
      $region32: #{_lambda_.6} parent=27 // pred_fallthru
        _
    $region28: #{_lambda_.6} parent=5 // pred_fallthru
      _
    %p182 = scmp.le.s32.totalorder 1, %s10
    %p183 = scmp.lt.s32.totalorder %s10, 3
    %p184 = pnand %p182, %p183
    %p185 = pneg %p184
    // Predicated region
    $region33: #{_lambda_.6} parent=5 // pred_check
      _
    $region34: #{_lambda_.6} parent=5 // pred_check_branch
      %187 = sbr.rel (%p184) target = $region36
    $region35: #{_lambda_.6} parent=5 // pred_region
      %s188 = ssub.s32 %s10, 1
      %p189 = pneg %p43
      %p190 = pneg %p40
      %s191 = smul.u32 3, %s20
      %p192 = scmp.lt.s32.totalorder %s19, 1
      %s193 = scalar_select %p192, %s19, 1
      %p194 = scmp.lt.s32.totalorder %s191, 2
      %s195 = scalar_select %p194, %s191, 2
      %s196 = smul.addr %s193, 192
      %s197 = sadd.s32 %s195, %s196
      %s198 = smul.addr %s197, 4
      %s199 = scalar_lea.vmem %s1, %s198
      %p200 = pneg %p71
      %p201 = pneg %p68
      %p202 = pneg %p92
      %p203 = pneg %p89
      %p204 = pneg %p113
      %p205 = pneg %p110
      %p206 = pneg %p141
      %p207 = pneg %p138
      %s208 = smul.u32 3, %s20
      %p209 = scmp.lt.s32.totalorder %s19, 1
      %s210 = scalar_select %p209, %s19, 1
      %p211 = scmp.lt.s32.totalorder %s208, 2
      %s212 = scalar_select %p211, %s208, 2
      %s213 = smul.addr %s210, 6
      %s214 = sadd.s32 %s212, %s213
      %s215 = smul.addr %s214, 4
      %s216 = scalar_lea.vmem %s4, %s215
      %s217 = smul.u32 3, %s20
      %p218 = scmp.lt.s32.totalorder %s19, 1
      %s219 = scalar_select %p218, %s19, 1
      %p220 = scmp.lt.s32.totalorder %s217, 2
      %s221 = scalar_select %p220, %s217, 2
      %s222 = smul.addr %s219, 192
      %s223 = sadd.s32 %s221, %s222
      %s224 = smul.addr %s223, 4
      %s225 = scalar_lea.vmem %s1, %s224
      %s226 = smul.u32 3, %s20
      %s227 = smul.u32 3, %s20
      %p228 = scmp.lt.s32.totalorder %s19, 1
      %s229 = scalar_select %p228, %s19, 1
      %p230 = scmp.lt.s32.totalorder %s227, 2
      %s231 = scalar_select %p230, %s227, 2
      %s232 = smul.addr %s229, 6
      %s233 = sadd.s32 %s231, %s232
      %s234 = smul.addr %s233, 4
      %s235 = scalar_lea.vmem %s4, %s234
      %s236 = smul.u32 3, %s20
      %v238 = vld [vmem:[%s0] sm:$0xff]
      %v239 = vld [vmem:[%s0 + $0x8] sm:$0xff]
      %v240 = vld [vmem:[%s0 + $0x10] sm:$0xff]
      %v241 = vld [vmem:[%s0 + $0x18] sm:$0xff]
      %v242 = vld [vmem:[%s225] sm:$0xff]
      %v243 = vld [vmem:[%s225 + $0x8] sm:$0xf]
      %v244 = vld [vmem:[%s225 + $0xc] sm:$0xff]
      %v245 = vld [vmem:[%s225 + $0x14] sm:$0xf]
      %v246 = vld [vmem:[%s225 + $0x18] sm:$0xff]
      %v247 = vld [vmem:[%s225 + $0x20] sm:$0xf]
      %v248 = vld [vmem:[%s225 + $0x24] sm:$0xff]
      %v249 = vld [vmem:[%s225 + $0x2c] sm:$0xf]
      %v250 = vld [vmem:[%s225 + $0x30] sm:$0xff]
      %v251 = vld [vmem:[%s225 + $0x38] sm:$0xf]
      %v252 = vld [vmem:[%s225 + $0x3c] sm:$0xff]
      %v253 = vld [vmem:[%s225 + $0x44] sm:$0xf]
      %v254 = vld [vmem:[%s225 + $0x48] sm:$0xff]
      %v255 = vld [vmem:[%s225 + $0x50] sm:$0xf]
      %v256 = vld [vmem:[%s225 + $0x54] sm:$0xff]
      %v257 = vld [vmem:[%s225 + $0x5c] sm:$0xf]
      %v258 = vld [vmem:[%s225 + $0x60] sm:$0xff]
      %v259 = vld [vmem:[%s225 + $0x68] sm:$0xf]
      %v260 = vld [vmem:[%s225 + $0x6c] sm:$0xff]
      %v261 = vld [vmem:[%s225 + $0x74] sm:$0xf]
      %v262 = vld [vmem:[%s225 + $0x78] sm:$0xff]
      %v263 = vld [vmem:[%s225 + $0x80] sm:$0xf]
      %v264 = vld [vmem:[%s225 + $0x84] sm:$0xff]
      %v265 = vld [vmem:[%s225 + $0x8c] sm:$0xf]
      %v266 = vld [vmem:[%s225 + $0x90] sm:$0xff]
      %v267 = vld [vmem:[%s225 + $0x98] sm:$0xf]
      %v268 = vld [vmem:[%s225 + $0x9c] sm:$0xff]
      %v269 = vld [vmem:[%s225 + $0xa4] sm:$0xf]
      %v270 = vld [vmem:[%s225 + $0xa8] sm:$0xff]
      %v271 = vld [vmem:[%s225 + $0xb0] sm:$0xf]
      %v272 = vld [vmem:[%s225 + $0xb4] sm:$0xff]
      %v273 = vld [vmem:[%s225 + $0xbc] sm:$0xf]
      %v274 = vld [vmem:[%s225 + $0xc0] sm:$0xff]
      %v275 = vld [vmem:[%s225 + $0xc8] sm:$0xf]
      %v276 = vld [vmem:[%s225 + $0xcc] sm:$0xff]
      %v277 = vld [vmem:[%s225 + $0xd4] sm:$0xf]
      %v278 = vld [vmem:[%s225 + $0xd8] sm:$0xff]
      %v279 = vld [vmem:[%s225 + $0xe0] sm:$0xf]
      %v280 = vld [vmem:[%s225 + $0xe4] sm:$0xff]
      %v281 = vld [vmem:[%s225 + $0xec] sm:$0xf]
      %v282 = vld [vmem:[%s225 + $0xf0] sm:$0xff]
      %v283 = vld [vmem:[%s225 + $0xf8] sm:$0xf]
      %v284 = vld [vmem:[%s225 + $0xfc] sm:$0xff]
      %v285 = vld [vmem:[%s225 + $0x104] sm:$0xf]
      %v286 = vld [vmem:[%s225 + $0x108] sm:$0xff]
      %v287 = vld [vmem:[%s225 + $0x110] sm:$0xf]
      %v288 = vld [vmem:[%s225 + $0x114] sm:$0xff]
      %v289 = vld [vmem:[%s225 + $0x11c] sm:$0xf]
      %v290 = vld [vmem:[%s225 + $0x120] sm:$0xff]
      %v291 = vld [vmem:[%s225 + $0x128] sm:$0xf]
      %v292 = vld [vmem:[%s225 + $0x12c] sm:$0xff]
      %v293 = vld [vmem:[%s225 + $0x134] sm:$0xf]
      %v294 = vld [vmem:[%s225 + $0x138] sm:$0xff]
      %v295 = vld [vmem:[%s225 + $0x140] sm:$0xf]
      %v296 = vld [vmem:[%s225 + $0x144] sm:$0xff]
      %v297 = vld [vmem:[%s225 + $0x14c] sm:$0xf]
      %v298 = vld [vmem:[%s225 + $0x150] sm:$0xff]
      %v299 = vld [vmem:[%s225 + $0x158] sm:$0xf]
      %v300 = vld [vmem:[%s225 + $0x15c] sm:$0xff]
      %v301 = vld [vmem:[%s225 + $0x164] sm:$0xf]
      %v302 = vld [vmem:[%s225 + $0x168] sm:$0xff]
      %v303 = vld [vmem:[%s225 + $0x170] sm:$0xf]
      %v304 = vld [vmem:[%s225 + $0x174] sm:$0xff]
      %v305 = vld [vmem:[%s225 + $0x17c] sm:$0xf]
      %v306 = vld [vmem:[%s225 + $0x180] sm:$0xff]
      %v307 = vld [vmem:[%s225 + $0x188] sm:$0xf]
      %v308 = vld [vmem:[%s225 + $0x18c] sm:$0xff]
      %v309 = vld [vmem:[%s225 + $0x194] sm:$0xf]
      %v310 = vld [vmem:[%s225 + $0x198] sm:$0xff]
      %v311 = vld [vmem:[%s225 + $0x1a0] sm:$0xf]
      %v312 = vld [vmem:[%s225 + $0x1a4] sm:$0xff]
      %v313 = vld [vmem:[%s225 + $0x1ac] sm:$0xf]
      %v314 = vld [vmem:[%s225 + $0x1b0] sm:$0xff]
      %v315 = vld [vmem:[%s225 + $0x1b8] sm:$0xf]
      %v316 = vld [vmem:[%s225 + $0x1bc] sm:$0xff]
      %v317 = vld [vmem:[%s225 + $0x1c4] sm:$0xf]
      %v318 = vld [vmem:[%s225 + $0x1c8] sm:$0xff]
      %v319 = vld [vmem:[%s225 + $0x1d0] sm:$0xf]
      %v320 = vld [vmem:[%s225 + $0x1d4] sm:$0xff]
      %v321 = vld [vmem:[%s225 + $0x1dc] sm:$0xf]
      %v322 = vld [vmem:[%s225 + $0x1e0] sm:$0xff]
      %v323 = vld [vmem:[%s225 + $0x1e8] sm:$0xf]
      %v324 = vld [vmem:[%s225 + $0x1ec] sm:$0xff]
      %v325 = vld [vmem:[%s225 + $0x1f4] sm:$0xf]
      %v326 = vld [vmem:[%s225 + $0x1f8] sm:$0xff]
      %v327 = vld [vmem:[%s225 + $0x200] sm:$0xf]
      %v328 = vld [vmem:[%s225 + $0x204] sm:$0xff]
      %v329 = vld [vmem:[%s225 + $0x20c] sm:$0xf]
      %v330 = vld [vmem:[%s225 + $0x210] sm:$0xff]
      %v331 = vld [vmem:[%s225 + $0x218] sm:$0xf]
      %v332 = vld [vmem:[%s225 + $0x21c] sm:$0xff]
      %v333 = vld [vmem:[%s225 + $0x224] sm:$0xf]
      %v334 = vld [vmem:[%s225 + $0x228] sm:$0xff]
      %v335 = vld [vmem:[%s225 + $0x230] sm:$0xf]
      %v336 = vld [vmem:[%s225 + $0x234] sm:$0xff]
      %v337 = vld [vmem:[%s225 + $0x23c] sm:$0xf]
      %v338 = vld [vmem:[%s225 + $0x240] sm:$0xff]
      %v339 = vld [vmem:[%s225 + $0x248] sm:$0xf]
      %v340 = vld [vmem:[%s225 + $0x24c] sm:$0xff]
      %v341 = vld [vmem:[%s225 + $0x254] sm:$0xf]
      %v342 = vld [vmem:[%s225 + $0x258] sm:$0xff]
      %v343 = vld [vmem:[%s225 + $0x260] sm:$0xf]
      %v344 = vld [vmem:[%s225 + $0x264] sm:$0xff]
      %v345 = vld [vmem:[%s225 + $0x26c] sm:$0xf]
      %v346 = vld [vmem:[%s225 + $0x270] sm:$0xff]
      %v347 = vld [vmem:[%s225 + $0x278] sm:$0xf]
      %v348 = vld [vmem:[%s225 + $0x27c] sm:$0xff]
      %v349 = vld [vmem:[%s225 + $0x284] sm:$0xf]
      %v350 = vld [vmem:[%s225 + $0x288] sm:$0xff]
      %v351 = vld [vmem:[%s225 + $0x290] sm:$0xf]
      %v352 = vld [vmem:[%s225 + $0x294] sm:$0xff]
      %v353 = vld [vmem:[%s225 + $0x29c] sm:$0xf]
      %v354 = vld [vmem:[%s225 + $0x2a0] sm:$0xff]
      %v355 = vld [vmem:[%s225 + $0x2a8] sm:$0xf]
      %v356 = vld [vmem:[%s225 + $0x2ac] sm:$0xff]
      %v357 = vld [vmem:[%s225 + $0x2b4] sm:$0xf]
      %v358 = vld [vmem:[%s225 + $0x2b8] sm:$0xff]
      %v359 = vld [vmem:[%s225 + $0x2c0] sm:$0xf]
      %v360 = vld [vmem:[%s225 + $0x2c4] sm:$0xff]
      %v361 = vld [vmem:[%s225 + $0x2cc] sm:$0xf]
      %v362 = vld [vmem:[%s225 + $0x2d0] sm:$0xff]
      %v363 = vld [vmem:[%s225 + $0x2d8] sm:$0xf]
      %v364 = vld [vmem:[%s225 + $0x2dc] sm:$0xff]
      %v365 = vld [vmem:[%s225 + $0x2e4] sm:$0xf]
      %v366 = vld [vmem:[%s225 + $0x2e8] sm:$0xff]
      %v367 = vld [vmem:[%s225 + $0x2f0] sm:$0xf]
      %v368 = vld [vmem:[%s225 + $0x2f4] sm:$0xff]
      %v369 = vld [vmem:[%s225 + $0x2fc] sm:$0xf]
      %v374 = vunpack.c.l.b16 %v238
      %v375 = vunpack.c.h.b16 %v238
      %v376 = vunpack.c.l.b16 %v239
      %v377 = vunpack.c.h.b16 %v239
      %v378 = vunpack.c.l.b16 %v240
      %v379 = vunpack.c.h.b16 %v240
      %v380 = vunpack.c.l.b16 %v241
      %v381 = vunpack.c.h.b16 %v241
      %v382 = vpack.c.b16 %v378, %v374
      %v383 = vpack.c.b16 %v379, %v375
      %v384 = vpack.c.b16 %v380, %v376
      %v385 = vpack.c.b16 %v381, %v377
      %v518 = vunpack.c.l.b16 %v242
      %v519 = vunpack.c.h.b16 %v242
      %v520 = vunpack.c.l.b16 %v243
      %v521 = vunpack.c.l.b16 %v244
      %v522 = vunpack.c.h.b16 %v244
      %v523 = vunpack.c.l.b16 %v245
      %v524 = vunpack.c.l.b16 %v246
      %v525 = vunpack.c.h.b16 %v246
      %v526 = vunpack.c.l.b16 %v247
      %v527 = vunpack.c.l.b16 %v248
      %v528 = vunpack.c.h.b16 %v248
      %v529 = vunpack.c.l.b16 %v249
      %v530 = vunpack.c.l.b16 %v250
      %v531 = vunpack.c.h.b16 %v250
      %v532 = vunpack.c.l.b16 %v251
      %v533 = vunpack.c.l.b16 %v252
      %v534 = vunpack.c.h.b16 %v252
      %v535 = vunpack.c.l.b16 %v253
      %v536 = vunpack.c.l.b16 %v254
      %v537 = vunpack.c.h.b16 %v254
      %v538 = vunpack.c.l.b16 %v255
      %v539 = vunpack.c.l.b16 %v256
      %v540 = vunpack.c.h.b16 %v256
      %v541 = vunpack.c.l.b16 %v257
      %v542 = vunpack.c.l.b16 %v258
      %v543 = vunpack.c.h.b16 %v258
      %v544 = vunpack.c.l.b16 %v259
      %v545 = vunpack.c.l.b16 %v260
      %v546 = vunpack.c.h.b16 %v260
      %v547 = vunpack.c.l.b16 %v261
      %v548 = vunpack.c.l.b16 %v262
      %v549 = vunpack.c.h.b16 %v262
      %v550 = vunpack.c.l.b16 %v263
      %v551 = vunpack.c.l.b16 %v264
      %v552 = vunpack.c.h.b16 %v264
      %v553 = vunpack.c.l.b16 %v265
      %v554 = vunpack.c.l.b16 %v266
      %v555 = vunpack.c.h.b16 %v266
      %v556 = vunpack.c.l.b16 %v267
      %v557 = vunpack.c.l.b16 %v268
      %v558 = vunpack.c.h.b16 %v268
      %v559 = vunpack.c.l.b16 %v269
      %v560 = vunpack.c.l.b16 %v270
      %v561 = vunpack.c.h.b16 %v270
      %v562 = vunpack.c.l.b16 %v271
      %v563 = vunpack.c.l.b16 %v272
      %v564 = vunpack.c.h.b16 %v272
      %v565 = vunpack.c.l.b16 %v273
      %v566 = vunpack.c.l.b16 %v274
      %v567 = vunpack.c.h.b16 %v274
      %v568 = vunpack.c.l.b16 %v275
      %v569 = vunpack.c.l.b16 %v276
      %v570 = vunpack.c.h.b16 %v276
      %v571 = vunpack.c.l.b16 %v277
      %v572 = vunpack.c.l.b16 %v278
      %v573 = vunpack.c.h.b16 %v278
      %v574 = vunpack.c.l.b16 %v279
      %v575 = vunpack.c.l.b16 %v280
      %v576 = vunpack.c.h.b16 %v280
      %v577 = vunpack.c.l.b16 %v281
      %v578 = vunpack.c.l.b16 %v282
      %v579 = vunpack.c.h.b16 %v282
      %v580 = vunpack.c.l.b16 %v283
      %v581 = vunpack.c.l.b16 %v284
      %v582 = vunpack.c.h.b16 %v284
      %v583 = vunpack.c.l.b16 %v285
      %v584 = vunpack.c.l.b16 %v286
      %v585 = vunpack.c.h.b16 %v286
      %v586 = vunpack.c.l.b16 %v287
      %v587 = vunpack.c.l.b16 %v288
      %v588 = vunpack.c.h.b16 %v288
      %v589 = vunpack.c.l.b16 %v289
      %v590 = vunpack.c.l.b16 %v290
      %v591 = vunpack.c.h.b16 %v290
      %v592 = vunpack.c.l.b16 %v291
      %v593 = vunpack.c.l.b16 %v292
      %v594 = vunpack.c.h.b16 %v292
      %v595 = vunpack.c.l.b16 %v293
      %v596 = vunpack.c.l.b16 %v294
      %v597 = vunpack.c.h.b16 %v294
      %v598 = vunpack.c.l.b16 %v295
      %v599 = vunpack.c.l.b16 %v296
      %v600 = vunpack.c.h.b16 %v296
      %v601 = vunpack.c.l.b16 %v297
      %v602 = vunpack.c.l.b16 %v298
      %v603 = vunpack.c.h.b16 %v298
      %v604 = vunpack.c.l.b16 %v299
      %v605 = vunpack.c.l.b16 %v300
      %v606 = vunpack.c.h.b16 %v300
      %v607 = vunpack.c.l.b16 %v301
      %v608 = vunpack.c.l.b16 %v302
      %v609 = vunpack.c.h.b16 %v302
      %v610 = vunpack.c.l.b16 %v303
      %v611 = vunpack.c.l.b16 %v304
      %v612 = vunpack.c.h.b16 %v304
      %v613 = vunpack.c.l.b16 %v305
      %v614 = vunpack.c.l.b16 %v306
      %v615 = vunpack.c.h.b16 %v306
      %v616 = vunpack.c.l.b16 %v307
      %v617 = vunpack.c.l.b16 %v308
      %v618 = vunpack.c.h.b16 %v308
      %v619 = vunpack.c.l.b16 %v309
      %v620 = vunpack.c.l.b16 %v310
      %v621 = vunpack.c.h.b16 %v310
      %v622 = vunpack.c.l.b16 %v311
      %v623 = vunpack.c.l.b16 %v312
      %v624 = vunpack.c.h.b16 %v312
      %v625 = vunpack.c.l.b16 %v313
      %v626 = vunpack.c.l.b16 %v314
      %v627 = vunpack.c.h.b16 %v314
      %v628 = vunpack.c.l.b16 %v315
      %v629 = vunpack.c.l.b16 %v316
      %v630 = vunpack.c.h.b16 %v316
      %v631 = vunpack.c.l.b16 %v317
      %v632 = vunpack.c.l.b16 %v318
      %v633 = vunpack.c.h.b16 %v318
      %v634 = vunpack.c.l.b16 %v319
      %v635 = vunpack.c.l.b16 %v320
      %v636 = vunpack.c.h.b16 %v320
      %v637 = vunpack.c.l.b16 %v321
      %v638 = vunpack.c.l.b16 %v322
      %v639 = vunpack.c.h.b16 %v322
      %v640 = vunpack.c.l.b16 %v323
      %v641 = vunpack.c.l.b16 %v324
      %v642 = vunpack.c.h.b16 %v324
      %v643 = vunpack.c.l.b16 %v325
      %v644 = vunpack.c.l.b16 %v326
      %v645 = vunpack.c.h.b16 %v326
      %v646 = vunpack.c.l.b16 %v327
      %v647 = vunpack.c.l.b16 %v328
      %v648 = vunpack.c.h.b16 %v328
      %v649 = vunpack.c.l.b16 %v329
      %v650 = vunpack.c.l.b16 %v330
      %v651 = vunpack.c.h.b16 %v330
      %v652 = vunpack.c.l.b16 %v331
      %v653 = vunpack.c.l.b16 %v332
      %v654 = vunpack.c.h.b16 %v332
      %v655 = vunpack.c.l.b16 %v333
      %v656 = vunpack.c.l.b16 %v334
      %v657 = vunpack.c.h.b16 %v334
      %v658 = vunpack.c.l.b16 %v335
      %v659 = vunpack.c.l.b16 %v336
      %v660 = vunpack.c.h.b16 %v336
      %v661 = vunpack.c.l.b16 %v337
      %v662 = vunpack.c.l.b16 %v338
      %v663 = vunpack.c.h.b16 %v338
      %v664 = vunpack.c.l.b16 %v339
      %v665 = vunpack.c.l.b16 %v340
      %v666 = vunpack.c.h.b16 %v340
      %v667 = vunpack.c.l.b16 %v341
      %v668 = vunpack.c.l.b16 %v342
      %v669 = vunpack.c.h.b16 %v342
      %v670 = vunpack.c.l.b16 %v343
      %v671 = vunpack.c.l.b16 %v344
      %v672 = vunpack.c.h.b16 %v344
      %v673 = vunpack.c.l.b16 %v345
      %v674 = vunpack.c.l.b16 %v346
      %v675 = vunpack.c.h.b16 %v346
      %v676 = vunpack.c.l.b16 %v347
      %v677 = vunpack.c.l.b16 %v348
      %v678 = vunpack.c.h.b16 %v348
      %v679 = vunpack.c.l.b16 %v349
      %v680 = vunpack.c.l.b16 %v350
      %v681 = vunpack.c.h.b16 %v350
      %v682 = vunpack.c.l.b16 %v351
      %v683 = vunpack.c.l.b16 %v352
      %v684 = vunpack.c.h.b16 %v352
      %v685 = vunpack.c.l.b16 %v353
      %v686 = vunpack.c.l.b16 %v354
      %v687 = vunpack.c.h.b16 %v354
      %v688 = vunpack.c.l.b16 %v355
      %v689 = vunpack.c.l.b16 %v356
      %v690 = vunpack.c.h.b16 %v356
      %v691 = vunpack.c.l.b16 %v357
      %v692 = vunpack.c.l.b16 %v358
      %v693 = vunpack.c.h.b16 %v358
      %v694 = vunpack.c.l.b16 %v359
      %v695 = vunpack.c.l.b16 %v360
      %v696 = vunpack.c.h.b16 %v360
      %v697 = vunpack.c.l.b16 %v361
      %v698 = vunpack.c.l.b16 %v362
      %v699 = vunpack.c.h.b16 %v362
      %v700 = vunpack.c.l.b16 %v363
      %v701 = vunpack.c.l.b16 %v364
      %v702 = vunpack.c.h.b16 %v364
      %v703 = vunpack.c.l.b16 %v365
      %v704 = vunpack.c.l.b16 %v366
      %v705 = vunpack.c.h.b16 %v366
      %v706 = vunpack.c.l.b16 %v367
      %v707 = vunpack.c.l.b16 %v368
      %v708 = vunpack.c.h.b16 %v368
      %v709 = vunpack.c.l.b16 %v369
      %v710 = vpack.c.b16 %v521, %v518
      %v711 = vpack.c.b16 %v522, %v519
      %v712 = vpack.c.b16 %v523, %v520
      %v713 = vpack.c.b16 %v527, %v524
      %v714 = vpack.c.b16 %v528, %v525
      %v715 = vpack.c.b16 %v529, %v526
      %v716 = vpack.c.b16 %v533, %v530
      %v717 = vpack.c.b16 %v534, %v531
      %v718 = vpack.c.b16 %v535, %v532
      %v719 = vpack.c.b16 %v539, %v536
      %v720 = vpack.c.b16 %v540, %v537
      %v721 = vpack.c.b16 %v541, %v538
      %v722 = vpack.c.b16 %v545, %v542
      %v723 = vpack.c.b16 %v546, %v543
      %v724 = vpack.c.b16 %v547, %v544
      %v725 = vpack.c.b16 %v551, %v548
      %v726 = vpack.c.b16 %v552, %v549
      %v727 = vpack.c.b16 %v553, %v550
      %v728 = vpack.c.b16 %v557, %v554
      %v729 = vpack.c.b16 %v558, %v555
      %v730 = vpack.c.b16 %v559, %v556
      %v731 = vpack.c.b16 %v563, %v560
      %v732 = vpack.c.b16 %v564, %v561
      %v733 = vpack.c.b16 %v565, %v562
      %v734 = vpack.c.b16 %v569, %v566
      %v735 = vpack.c.b16 %v570, %v567
      %v736 = vpack.c.b16 %v571, %v568
      %v737 = vpack.c.b16 %v575, %v572
      %v738 = vpack.c.b16 %v576, %v573
      %v739 = vpack.c.b16 %v577, %v574
      %v740 = vpack.c.b16 %v581, %v578
      %v741 = vpack.c.b16 %v582, %v579
      %v742 = vpack.c.b16 %v583, %v580
      %v743 = vpack.c.b16 %v587, %v584
      %v744 = vpack.c.b16 %v588, %v585
      %v745 = vpack.c.b16 %v589, %v586
      %v746 = vpack.c.b16 %v593, %v590
      %v747 = vpack.c.b16 %v594, %v591
      %v748 = vpack.c.b16 %v595, %v592
      %v749 = vpack.c.b16 %v599, %v596
      %v750 = vpack.c.b16 %v600, %v597
      %v751 = vpack.c.b16 %v601, %v598
      %v752 = vpack.c.b16 %v605, %v602
      %v753 = vpack.c.b16 %v606, %v603
      %v754 = vpack.c.b16 %v607, %v604
      %v755 = vpack.c.b16 %v611, %v608
      %v756 = vpack.c.b16 %v612, %v609
      %v757 = vpack.c.b16 %v613, %v610
      %v758 = vpack.c.b16 %v617, %v614
      %v759 = vpack.c.b16 %v618, %v615
      %v760 = vpack.c.b16 %v619, %v616
      %v761 = vpack.c.b16 %v623, %v620
      %v762 = vpack.c.b16 %v624, %v621
      %v763 = vpack.c.b16 %v625, %v622
      %v764 = vpack.c.b16 %v629, %v626
      %v765 = vpack.c.b16 %v630, %v627
      %v766 = vpack.c.b16 %v631, %v628
      %v767 = vpack.c.b16 %v635, %v632
      %v768 = vpack.c.b16 %v636, %v633
      %v769 = vpack.c.b16 %v637, %v634
      %v770 = vpack.c.b16 %v641, %v638
      %v771 = vpack.c.b16 %v642, %v639
      %v772 = vpack.c.b16 %v643, %v640
      %v773 = vpack.c.b16 %v647, %v644
      %v774 = vpack.c.b16 %v648, %v645
      %v775 = vpack.c.b16 %v649, %v646
      %v776 = vpack.c.b16 %v653, %v650
      %v777 = vpack.c.b16 %v654, %v651
      %v778 = vpack.c.b16 %v655, %v652
      %v779 = vpack.c.b16 %v659, %v656
      %v780 = vpack.c.b16 %v660, %v657
      %v781 = vpack.c.b16 %v661, %v658
      %v782 = vpack.c.b16 %v665, %v662
      %v783 = vpack.c.b16 %v666, %v663
      %v784 = vpack.c.b16 %v667, %v664
      %v785 = vpack.c.b16 %v671, %v668
      %v786 = vpack.c.b16 %v672, %v669
      %v787 = vpack.c.b16 %v673, %v670
      %v788 = vpack.c.b16 %v677, %v674
      %v789 = vpack.c.b16 %v678, %v675
      %v790 = vpack.c.b16 %v679, %v676
      %v791 = vpack.c.b16 %v683, %v680
      %v792 = vpack.c.b16 %v684, %v681
      %v793 = vpack.c.b16 %v685, %v682
      %v794 = vpack.c.b16 %v689, %v686
      %v795 = vpack.c.b16 %v690, %v687
      %v796 = vpack.c.b16 %v691, %v688
      %v797 = vpack.c.b16 %v695, %v692
      %v798 = vpack.c.b16 %v696, %v693
      %v799 = vpack.c.b16 %v697, %v694
      %v800 = vpack.c.b16 %v701, %v698
      %v801 = vpack.c.b16 %v702, %v699
      %v802 = vpack.c.b16 %v703, %v700
      %v803 = vpack.c.b16 %v707, %v704
      %v804 = vpack.c.b16 %v708, %v705
      %v805 = vpack.c.b16 %v709, %v706
      %902 = vmatprep.subr.bf16.mxu0 %v732
      %903 = vmatpush1.bf16.msra.mxu0 %v731
      %904 = vmatprep.subr.bf16.mxu0 %v729
      %905 = vmatpush1.bf16.msra.mxu0 %v728
      %906 = vmatprep.subr.bf16.mxu0 %v726
      %907 = vmatpush1.bf16.msra.mxu0 %v725
      %908 = vmatprep.subr.bf16.mxu0 %v723
      %909 = vmatpush1.bf16.msra.mxu0 %v722
      %910 = vmatprep.subr.bf16.mxu0 %v720
      %911 = vmatpush1.bf16.msra.mxu0 %v719
      %912 = vmatprep.subr.bf16.mxu0 %v717
      %913 = vmatpush1.bf16.msra.mxu0 %v716
      %914 = vmatprep.subr.bf16.mxu0 %v714
      %915 = vmatpush1.bf16.msra.mxu0 %v713
      %916 = vmatprep.subr.bf16.mxu0 %v711
      %917 = vmatpush1.bf16.msra.mxu0 %v710
      %918 = vmatprep.subr.bf16.mxu0 %v756
      %919 = vmatpush2.bf16.msra.mxu0 %v755
      %920 = vmatprep.subr.bf16.mxu0 %v753
      %921 = vmatpush2.bf16.msra.mxu0 %v752
      %922 = vmatprep.subr.bf16.mxu0 %v750
      %923 = vmatpush2.bf16.msra.mxu0 %v749
      %924 = vmatprep.subr.bf16.mxu0 %v747
      %925 = vmatpush2.bf16.msra.mxu0 %v746
      %926 = vmatprep.subr.bf16.mxu0 %v744
      %927 = vmatpush2.bf16.msra.mxu0 %v743
      %928 = vmatprep.subr.bf16.mxu0 %v741
      %929 = vmatpush2.bf16.msra.mxu0 %v740
      %930 = vmatprep.subr.bf16.mxu0 %v738
      %931 = vmatpush2.bf16.msra.mxu0 %v737
      %932 = vmatprep.subr.bf16.mxu0 %v735
      %933 = vmatpush2.bf16.msra.mxu0 %v734
      %934 = vmatprep.mubr.bf16.mxu0 %v383
      %935 = vmatmul.mubr.bf16.gmra.mxu0 %v382
      %v936 = vpop.f32.mrf.mxu0
      %v937 = vadd.f32 0.0, %v936
      %v938 = vpop.f32.mrf.mxu0
      %v939 = vadd.f32 0.0, %v938
      %v940 = vpop.f32.mrf.mxu0
      %v941 = vadd.f32 0.0, %v940
      %v942 = vpop.f32.mrf.mxu0
      %v943 = vadd.f32 0.0, %v942
      %944 = vdwg.mxu0
      %945 = vmatprep.subr.bf16.mxu0 %v780
      %946 = vmatpush1.bf16.msra.mxu0 %v779
      %947 = vmatprep.subr.bf16.mxu0 %v777
      %948 = vmatpush1.bf16.msra.mxu0 %v776
      %949 = vmatprep.subr.bf16.mxu0 %v774
      %950 = vmatpush1.bf16.msra.mxu0 %v773
      %951 = vmatprep.subr.bf16.mxu0 %v771
      %952 = vmatpush1.bf16.msra.mxu0 %v770
      %953 = vmatprep.subr.bf16.mxu0 %v768
      %954 = vmatpush1.bf16.msra.mxu0 %v767
      %955 = vmatprep.subr.bf16.mxu0 %v765
      %956 = vmatpush1.bf16.msra.mxu0 %v764
      %957 = vmatprep.subr.bf16.mxu0 %v762
      %958 = vmatpush1.bf16.msra.mxu0 %v761
      %959 = vmatprep.subr.bf16.mxu0 %v759
      %960 = vmatpush1.bf16.msra.mxu0 %v758
      %961 = vmatprep.subr.bf16.mxu0 %v804
      %962 = vmatpush2.bf16.msra.mxu0 %v803
      %963 = vmatprep.subr.bf16.mxu0 %v801
      %964 = vmatpush2.bf16.msra.mxu0 %v800
      %965 = vmatprep.subr.bf16.mxu0 %v798
      %966 = vmatpush2.bf16.msra.mxu0 %v797
      %967 = vmatprep.subr.bf16.mxu0 %v795
      %968 = vmatpush2.bf16.msra.mxu0 %v794
      %969 = vmatprep.subr.bf16.mxu0 %v792
      %970 = vmatpush2.bf16.msra.mxu0 %v791
      %971 = vmatprep.subr.bf16.mxu0 %v789
      %972 = vmatpush2.bf16.msra.mxu0 %v788
      %973 = vmatprep.subr.bf16.mxu0 %v786
      %974 = vmatpush2.bf16.msra.mxu0 %v785
      %975 = vmatprep.subr.bf16.mxu0 %v783
      %976 = vmatpush2.bf16.msra.mxu0 %v782
      %977 = vmatprep.mubr.bf16.mxu0 %v385
      %978 = vmatmul.mubr.bf16.gmra.mxu0 %v384
      %v979 = vpop.f32.mrf.mxu0
      %v980 = vadd.f32 %v937, %v979
      %v981 = vpop.f32.mrf.mxu0
      %v982 = vadd.f32 %v939, %v981
      %v983 = vpop.f32.mrf.mxu0
      %v984 = vadd.f32 %v941, %v983
      %v985 = vpop.f32.mrf.mxu0
      %v986 = vadd.f32 %v943, %v985
      %987 = vdwg.mxu0
      %988 = vmatprep.subr.bf16.mxu0 0
      %989 = vmatpush1.bf16.msra.mxu0 %v733
      %990 = vmatprep.subr.bf16.mxu0 0
      %991 = vmatpush1.bf16.msra.mxu0 %v730
      %992 = vmatprep.subr.bf16.mxu0 0
      %993 = vmatpush1.bf16.msra.mxu0 %v727
      %994 = vmatprep.subr.bf16.mxu0 0
      %995 = vmatpush1.bf16.msra.mxu0 %v724
      %996 = vmatprep.subr.bf16.mxu0 0
      %997 = vmatpush1.bf16.msra.mxu0 %v721
      %998 = vmatprep.subr.bf16.mxu0 0
      %999 = vmatpush1.bf16.msra.mxu0 %v718
      %1000 = vmatprep.subr.bf16.mxu0 0
      %1001 = vmatpush1.bf16.msra.mxu0 %v715
      %1002 = vmatprep.subr.bf16.mxu0 0
      %1003 = vmatpush1.bf16.msra.mxu0 %v712
      %1004 = vmatprep.subr.bf16.mxu0 0
      %1005 = vmatpush2.bf16.msra.mxu0 %v757
      %1006 = vmatprep.subr.bf16.mxu0 0
      %1007 = vmatpush2.bf16.msra.mxu0 %v754
      %1008 = vmatprep.subr.bf16.mxu0 0
      %1009 = vmatpush2.bf16.msra.mxu0 %v751
      %1010 = vmatprep.subr.bf16.mxu0 0
      %1011 = vmatpush2.bf16.msra.mxu0 %v748
      %1012 = vmatprep.subr.bf16.mxu0 0
      %1013 = vmatpush2.bf16.msra.mxu0 %v745
      %1014 = vmatprep.subr.bf16.mxu0 0
      %1015 = vmatpush2.bf16.msra.mxu0 %v742
      %1016 = vmatprep.subr.bf16.mxu0 0
      %1017 = vmatpush2.bf16.msra.mxu0 %v739
      %1018 = vmatprep.subr.bf16.mxu0 0
      %1019 = vmatpush2.bf16.msra.mxu0 %v736
      %1020 = vmatprep.mubr.bf16.mxu0 %v383
      %1021 = vmatmul.mubr.bf16.gmra.mxu0 %v382
      %v1022 = vpop.f32.mrf.mxu0
      %v1023 = vadd.f32 0.0, %v1022
      %v1024 = vpop.f32.mrf.mxu0
      %v1025 = vpop.f32.mrf.mxu0
      %v1026 = vadd.f32 0.0, %v1025
      %v1027 = vpop.f32.mrf.mxu0
      %1028 = vdwg.mxu0
      %1029 = vmatprep.subr.bf16.mxu0 0
      %1030 = vmatpush1.bf16.msra.mxu0 %v781
      %1031 = vmatprep.subr.bf16.mxu0 0
      %1032 = vmatpush1.bf16.msra.mxu0 %v778
      %1033 = vmatprep.subr.bf16.mxu0 0
      %1034 = vmatpush1.bf16.msra.mxu0 %v775
      %1035 = vmatprep.subr.bf16.mxu0 0
      %1036 = vmatpush1.bf16.msra.mxu0 %v772
      %1037 = vmatprep.subr.bf16.mxu0 0
      %1038 = vmatpush1.bf16.msra.mxu0 %v769
      %1039 = vmatprep.subr.bf16.mxu0 0
      %1040 = vmatpush1.bf16.msra.mxu0 %v766
      %1041 = vmatprep.subr.bf16.mxu0 0
      %1042 = vmatpush1.bf16.msra.mxu0 %v763
      %1043 = vmatprep.subr.bf16.mxu0 0
      %1044 = vmatpush1.bf16.msra.mxu0 %v760
      %1045 = vmatprep.subr.bf16.mxu0 0
      %1046 = vmatpush2.bf16.msra.mxu0 %v805
      %1047 = vmatprep.subr.bf16.mxu0 0
      %1048 = vmatpush2.bf16.msra.mxu0 %v802
      %1049 = vmatprep.subr.bf16.mxu0 0
      %1050 = vmatpush2.bf16.msra.mxu0 %v799
      %1051 = vmatprep.subr.bf16.mxu0 0
      %1052 = vmatpush2.bf16.msra.mxu0 %v796
      %1053 = vmatprep.subr.bf16.mxu0 0
      %1054 = vmatpush2.bf16.msra.mxu0 %v793
      %1055 = vmatprep.subr.bf16.mxu0 0
      %1056 = vmatpush2.bf16.msra.mxu0 %v790
      %1057 = vmatprep.subr.bf16.mxu0 0
      %1058 = vmatpush2.bf16.msra.mxu0 %v787
      %1059 = vmatprep.subr.bf16.mxu0 0
      %1060 = vmatpush2.bf16.msra.mxu0 %v784
      %1061 = vmatprep.mubr.bf16.mxu0 %v385
      %1062 = vmatmul.mubr.bf16.gmra.mxu0 %v384
      %v1063 = vpop.f32.mrf.mxu0
      %v1064 = vadd.f32 %v1023, %v1063
      %v1065 = vpop.f32.mrf.mxu0
      %v1066 = vpop.f32.mrf.mxu0
      %v1067 = vadd.f32 %v1026, %v1066
      %v1068 = vpop.f32.mrf.mxu0
      %1069 = vdwg.mxu0
      %v1070 = vld [vmem:[%s2] sm:$0xff]
      %v1071 = vld [vmem:[%s2 + $0x8] sm:$0xff]
      %1073 = vset.pattern.permute.xlu0 0
      %1074 = vperm.xlu0 %1073, %v1070
      %v1075 = vpop.permute.xlu0 %1074
      %1078 = vset.pattern.permute.xlu0 0
      %1079 = vperm.xlu0 %1078, %v1071
      %v1080 = vpop.permute.xlu0 %1079
      %v1082 = vmul.f32 %v980, %v1075
      %v1083 = vmul.f32 %v982, %v1075
      %v1084 = vmul.f32 %v1064, %v1075
      %v1085 = vmul.f32 %v984, %v1080
      %v1086 = vmul.f32 %v986, %v1080
      %v1087 = vmul.f32 %v1067, %v1080
      %v1088 = vld [vmem:[%s3] sm:$0xff]
      %v1089 = vld [vmem:[%s3 + $0x8] sm:$0xff]
      %1091 = vset.pattern.permute.xlu0 0
      %1092 = vperm.xlu0 %1091, %v1088
      %v1093 = vpop.permute.xlu0 %1092
      %1096 = vset.pattern.permute.xlu0 0
      %1097 = vperm.xlu0 %1096, %v1089
      %v1098 = vpop.permute.xlu0 %1097
      %v1100 = vadd.f32 %v1082, %v1093
      %v1101 = vadd.f32 %v1083, %v1093
      %v1102 = vadd.f32 %v1084, %v1093
      %v1103 = vadd.f32 %v1085, %v1098
      %v1104 = vadd.f32 %v1086, %v1098
      %v1105 = vadd.f32 %v1087, %v1098
      %vm1106 = vcmp.ge.f32.partialorder %v1100, 0.0
      %vm1107 = vcmp.ge.f32.partialorder %v1101, 0.0
      %vm1108 = vcmp.ge.f32.partialorder %v1102, 0.0
      %vm1109 = vcmp.ge.f32.partialorder %v1103, 0.0
      %vm1110 = vcmp.ge.f32.partialorder %v1104, 0.0
      %vm1111 = vcmp.ge.f32.partialorder %v1105, 0.0
      %v1112 = vmul.f32 %v1100, 0.2
      %v1113 = vmul.f32 %v1101, 0.2
      %v1114 = vmul.f32 %v1102, 0.2
      %v1115 = vmul.f32 %v1103, 0.2
      %v1116 = vmul.f32 %v1104, 0.2
      %v1117 = vmul.f32 %v1105, 0.2
      %v1118 = vsel %vm1106, %v1100, %v1112
      %v1119 = vsel %vm1107, %v1101, %v1113
      %v1120 = vsel %vm1108, %v1102, %v1114
      %v1121 = vsel %vm1109, %v1103, %v1115
      %v1122 = vsel %vm1110, %v1104, %v1116
      %v1123 = vsel %vm1111, %v1105, %v1117
      %v1124 = vpack.c.bf16 %v1121, %v1118
      %v1125 = vpack.c.bf16 %v1122, %v1119
      %v1126 = vpack.c.bf16 %v1123, %v1120
      %v1130 = vunpack.c.l.b16 %v1124
      %v1131 = vunpack.c.l.b16 %v1125
      %v1132 = vunpack.c.l.b16 %v1126
      %v1133 = vunpack.c.h.b16 %v1124
      %v1134 = vunpack.c.h.b16 %v1125
      %v1135 = vunpack.c.h.b16 %v1126
      %v1136 = vpack.c.b16 %v1131, %v1130
      %v1137 = vpack.c.b16 %v1132, %v1132
      %v1138 = vpack.c.b16 %v1134, %v1133
      %v1139 = vpack.c.b16 %v1135, %v1135
      %1144 = vst [vmem:[%s235] sm:$0xff] %v1136
      %1145 = vst [vmem:[%s235 + $0x8] sm:$0xf] %v1137
      %1146 = vst [vmem:[%s235 + $0xc] sm:$0xff] %v1138
      %1147 = vst [vmem:[%s235 + $0x14] sm:$0xf] %v1139
      %s1148 = smul.u32 3, %s20
      %p1149 = scmp.lt.s32.totalorder %s19, 1
      %s1150 = scalar_select %p1149, %s19, 1
      %p1151 = scmp.lt.s32.totalorder %s1148, 2
      %s1152 = scalar_select %p1151, %s1148, 2
      %s1153 = smul.addr %s1150, 6
      %s1154 = sadd.s32 %s1152, %s1153
      %s1155 = smul.addr %s1154, 4
      %s1156 = scalar_lea.vmem %s4, %s1155
      // Predicated region
      $region37: #{_lambda_.6} parent=35 // pred_check
        %p1157 = pneg %p138
      $region38: #{_lambda_.6} parent=35 // pred_check_branch
        %1159 = sbr.rel (%p1157) target = $region40
      $region39: #{_lambda_.6} parent=35 // pred_region
        %s1160 = smul.u32 3, %s20
      $region40: #{_lambda_.6} parent=35 // pred_fallthru
        _
    $region36: #{_lambda_.6} parent=5 // pred_fallthru
      _
    %p1161 = scmp.le.s32.totalorder 2, %s10
    // Predicated region
    $region41: #{_lambda_.6} parent=5 // pred_check
      %p1162 = pneg %p1161
    $region42: #{_lambda_.6} parent=5 // pred_check_branch
      %1164 = sbr.rel (%p1162) target = $region44
    $region43: #{_lambda_.6} parent=5 // pred_region
      %s1165 = ssub.s32 %s10, 2
      // Predicated region
      $region45: #{_lambda_.6} parent=43 // pred_check
        %p1166 = pneg %p144
      $region46: #{_lambda_.6} parent=43 // pred_check_branch
        %1168 = sbr.rel (%p1166) target = $region48
      $region47: #{_lambda_.6} parent=43 // pred_region
        %s1169 = smul.u32 3, %s22
        %p1170 = scmp.lt.s32.totalorder %s21, 1
        %s1171 = scalar_select %p1170, %s21, 1
        %p1172 = scmp.lt.s32.totalorder %s1169, 2
        %s1173 = scalar_select %p1172, %s1169, 2
        %s1174 = smul.addr %s1171, 6
        %s1175 = sadd.s32 %s1173, %s1174
        %s1176 = smul.addr %s1175, 4
        %s1177 = scalar_lea.vmem %s4, %s1176
      $region48: #{_lambda_.6} parent=43 // pred_fallthru
        _
    $region44: #{_lambda_.6} parent=5 // pred_fallthru
      _
  $region6: #{_lambda_.6} parent=0 // loop_footer
    %s14 = sadd.s32 1, %s10
  $region7: #{_lambda_.6} parent=0 // loop_footer_branch
    %9 = sbr.rel target = $region3
  $region8: #{_lambda_.6} parent=0 // loop_exit
    _

// kernel: _lambda_.7
$region0: #{_lambda_.7}
  #allocation0 [shape = 'u32[]', space=smem, size = 0x4, offset = 0x4, fixed_abs, tag = 'smem constant byte address 0x4 - core index']
  #allocation1 [shape = 'u32[144,128]{1,0:T(1,128)}', space=vmem, size = 0x12000, scoped, tag = 'internal scratch']
  %s0 = inlined_call_operand.vmem [shape: bf16[32,1024], index: 0, kind: input, shape index: {}]
  %s1 = inlined_call_operand.vmem [shape: bf16[2,1024,128], index: 1, kind: input, shape index: {}]
  %s2 = inlined_call_operand.vmem [shape: f32[32,1], index: 2, kind: input, shape index: {}]
  %s3 = inlined_call_operand.vmem [shape: f32[32,1], index: 3, kind: input, shape index: {}]
  %s4 = inlined_call_operand.vmem [shape: bf16[2,32,128], index: 4, kind: output, shape index: {}]
  %s5 = sld [smem:[#allocation0]]
  $region49: #{_lambda_.7} parent=0
    _
  %s7 = ssub.s32 1, %s5
  %s8 = scalar_select 0, %s7, %s5
  loop: start=0, step=1, limit=4
  $region2: #{_lambda_.7} parent=0 // loop_pre_header
    _
  $region3: #{_lambda_.7} parent=0 // loop_header
    %s10 = sphi 0, %s14
    %p11 = scmp.ge.s32.totalorder %s10, 4
    %s17 = sphi 0, %s29
    %s18 = sphi 0, %s25
    %s19 = sphi 0, %s17
    %s20 = sphi 0, %s18
    %s21 = sphi 0, %s19
    %s22 = sphi 0, %s20
    %s30 = sphi 0, %s30
    %s32 = sphi 0, %s30
    %s33 = sphi 0, %s32
    %s47 = sphi 0, %s33
    %s55 = sphi 0, %s57
    %s58 = sphi 0, %s55
    %s59 = sphi 0, %s58
    %s75 = sphi 0, %s59
    %s79 = sphi 0, %s79
    %s81 = sphi 0, %s79
    %s82 = sphi 0, %s81
    %s96 = sphi 0, %s82
    %s100 = sphi 0, %s100
    %s102 = sphi 0, %s100
    %s103 = sphi 0, %s102
    %s117 = sphi 0, %s103
    %s125 = sphi 0, %s127
    %s128 = sphi 0, %s125
    %s129 = sphi 0, %s128
    %s145 = sphi 0, %s129
  $region4: #{_lambda_.7} parent=0 // loop_header_branch
    %13 = sbr.rel (%p11) target = $region8
  $region5: #{_lambda_.7} parent=0 // loop_body
    %s15 = ssub.s32 %s10, 1
    %s16 = ssub.s32 %s10, 2
    %s23 = sadd.s32 1, %s18
    %p24 = scmp.ge.s32.totalorder %s23, 1
    %s25 = scalar_select %p24, 0, %s23
    %s26 = sadd.s32 1, %s17
    %s27 = scalar_select %p24, %s26, %s17
    %p28 = scmp.ge.s32.totalorder %s27, 2
    %s29 = scalar_select %p28, 0, %s27
    %s31 = sadd.s32 %s30, 1
    %p34 = scmp.eq.s32.totalorder %s10, 1
    %p35 = scmp.ne.s32.totalorder %s30, %s32
    %p36 = scmp.eq.s32.totalorder %s10, 0
    %p37 = por %p35, %p36
    %p38 = scmp.ne.s32.totalorder %s30, %s32
    %p39 = scmp.eq.s32.totalorder %s15, 1
    %p40 = por %p38, %p39
    %p41 = scmp.ne.s32.totalorder %s32, %s33
    %p42 = scmp.eq.s32.totalorder %s15, 0
    %p43 = por %p41, %p42
    %p44 = scmp.ne.s32.totalorder %s32, %s33
    %p45 = scmp.eq.s32.totalorder %s16, 1
    %p46 = por %p44, %p45
    %p48 = scmp.ne.s32.totalorder %s33, %s47
    %p49 = scmp.eq.s32.totalorder %s16, 0
    %p50 = por %p48, %p49
    %s51 = ssub.s32 %s17, %s29
    %s52 = ssub.s32 %s18, %s25
    %s53 = sor.u32 %s51, %s52
    %p54 = scmp.eq.s32.totalorder %s53, 0
    %s56 = sadd.s32 %s55, 1
    %s57 = scalar_select %p54, %s55, %s56
    %p60 = pneg %p54
    %p61 = scmp.eq.s32.totalorder %s10, 1
    %p62 = por %p60, %p61
    %p63 = scmp.ne.s32.totalorder %s55, %s58
    %p64 = scmp.eq.s32.totalorder %s10, 0
    %p65 = por %p63, %p64
    %p66 = scmp.ne.s32.totalorder %s55, %s58
    %p67 = scmp.eq.s32.totalorder %s15, 1
    %p68 = por %p66, %p67
    %p69 = scmp.ne.s32.totalorder %s58, %s59
    %p70 = scmp.eq.s32.totalorder %s15, 0
    %p71 = por %p69, %p70
    %p72 = scmp.ne.s32.totalorder %s58, %s59
    %p73 = scmp.eq.s32.totalorder %s16, 1
    %p74 = por %p72, %p73
    %p76 = scmp.ne.s32.totalorder %s59, %s75
    %p77 = scmp.eq.s32.totalorder %s16, 0
    %p78 = por %p76, %p77
    %s80 = sadd.s32 %s79, 1
    %p83 = scmp.eq.s32.totalorder %s10, 1
    %p84 = scmp.ne.s32.totalorder %s79, %s81
    %p85 = scmp.eq.s32.totalorder %s10, 0
    %p86 = por %p84, %p85
    %p87 = scmp.ne.s32.totalorder %s79, %s81
    %p88 = scmp.eq.s32.totalorder %s15, 1
    %p89 = por %p87, %p88
    %p90 = scmp.ne.s32.totalorder %s81, %s82
    %p91 = scmp.eq.s32.totalorder %s15, 0
    %p92 = por %p90, %p91
    %p93 = scmp.ne.s32.totalorder %s81, %s82
    %p94 = scmp.eq.s32.totalorder %s16, 1
    %p95 = por %p93, %p94
    %p97 = scmp.ne.s32.totalorder %s82, %s96
    %p98 = scmp.eq.s32.totalorder %s16, 0
    %p99 = por %p97, %p98
    %s101 = sadd.s32 %s100, 1
    %p104 = scmp.eq.s32.totalorder %s10, 1
    %p105 = scmp.ne.s32.totalorder %s100, %s102
    %p106 = scmp.eq.s32.totalorder %s10, 0
    %p107 = por %p105, %p106
    %p108 = scmp.ne.s32.totalorder %s100, %s102
    %p109 = scmp.eq.s32.totalorder %s15, 1
    %p110 = por %p108, %p109
    %p111 = scmp.ne.s32.totalorder %s102, %s103
    %p112 = scmp.eq.s32.totalorder %s15, 0
    %p113 = por %p111, %p112
    %p114 = scmp.ne.s32.totalorder %s102, %s103
    %p115 = scmp.eq.s32.totalorder %s16, 1
    %p116 = por %p114, %p115
    %p118 = scmp.ne.s32.totalorder %s103, %s117
    %p119 = scmp.eq.s32.totalorder %s16, 0
    %p120 = por %p118, %p119
    %s121 = ssub.s32 %s17, %s29
    %s122 = ssub.s32 %s18, %s25
    %s123 = sor.u32 %s121, %s122
    %p124 = scmp.eq.s32.totalorder %s123, 0
    %s126 = sadd.s32 %s125, 1
    %s127 = scalar_select %p124, %s125, %s126
    %p130 = pneg %p124
    %p131 = scmp.eq.s32.totalorder %s10, 1
    %p132 = por %p130, %p131
    %p133 = scmp.ne.s32.totalorder %s125, %s128
    %p134 = scmp.eq.s32.totalorder %s10, 0
    %p135 = por %p133, %p134
    %p136 = scmp.ne.s32.totalorder %s125, %s128
    %p137 = scmp.eq.s32.totalorder %s15, 1
    %p138 = por %p136, %p137
    %p139 = scmp.ne.s32.totalorder %s128, %s129
    %p140 = scmp.eq.s32.totalorder %s15, 0
    %p141 = por %p139, %p140
    %p142 = scmp.ne.s32.totalorder %s128, %s129
    %p143 = scmp.eq.s32.totalorder %s16, 1
    %p144 = por %p142, %p143
    %p146 = scmp.ne.s32.totalorder %s129, %s145
    %p147 = scmp.eq.s32.totalorder %s16, 0
    %p148 = por %p146, %p147
    %p149 = scmp.le.s32.totalorder 1, %s10
    %p150 = scmp.lt.s32.totalorder %s10, 3
    %p151 = pnand %p149, %p150
    %p152 = pneg %p151
    // Predicated region
    $region9: #{_lambda_.7} parent=5 // pred_check
      _
    $region10: #{_lambda_.7} parent=5 // pred_check_branch
      %154 = sbr.rel (%p151) target = $region12
    $region11: #{_lambda_.7} parent=5 // pred_region
      %s155 = ssub.s32 %s10, 1
      // Predicated region
      $region13: #{_lambda_.7} parent=11 // pred_check
        %p156 = pneg %p43
      $region14: #{_lambda_.7} parent=11 // pred_check_branch
        %158 = sbr.rel (%p156) target = $region16
      $region15: #{_lambda_.7} parent=11 // pred_region
        _
      $region16: #{_lambda_.7} parent=11 // pred_fallthru
        _
      // Predicated region
      $region17: #{_lambda_.7} parent=11 // pred_check
        %p159 = pneg %p92
      $region18: #{_lambda_.7} parent=11 // pred_check_branch
        %161 = sbr.rel (%p159) target = $region20
      $region19: #{_lambda_.7} parent=11 // pred_region
        _
      $region20: #{_lambda_.7} parent=11 // pred_fallthru
        _
      // Predicated region
      $region21: #{_lambda_.7} parent=11 // pred_check
        %p162 = pneg %p113
      $region22: #{_lambda_.7} parent=11 // pred_check_branch
        %164 = sbr.rel (%p162) target = $region24
      $region23: #{_lambda_.7} parent=11 // pred_region
        _
      $region24: #{_lambda_.7} parent=11 // pred_fallthru
        _
    $region12: #{_lambda_.7} parent=5 // pred_fallthru
      _
    %p165 = scmp.lt.s32.totalorder %s10, 2
    // Predicated region
    $region25: #{_lambda_.7} parent=5 // pred_check
      %p166 = pneg %p165
    $region26: #{_lambda_.7} parent=5 // pred_check_branch
      %168 = sbr.rel (%p166) target = $region28
    $region27: #{_lambda_.7} parent=5 // pred_region
      // Predicated region
      $region29: #{_lambda_.7} parent=27 // pred_check
        %p169 = pneg %p65
      $region30: #{_lambda_.7} parent=27 // pred_check_branch
        %171 = sbr.rel (%p169) target = $region32
      $region31: #{_lambda_.7} parent=27 // pred_region
        %p172 = scmp.lt.s32.totalorder %s17, 1
        %s173 = scalar_select %p172, %s17, 1
        %p174 = scmp.lt.s32.totalorder %s18, 0
        %s175 = scalar_select %p174, %s18, 0
        %s176 = smul.addr %s173, 128
        %s177 = sadd.s32 %s175, %s176
        %s178 = smul.addr %s177, 4
        %s179 = scalar_lea.vmem %s1, %s178
      $region32: #{_lambda_.7} parent=27 // pred_fallthru
        _
    $region28: #{_lambda_.7} parent=5 // pred_fallthru
      _
    %p180 = scmp.le.s32.totalorder 1, %s10
    %p181 = scmp.lt.s32.totalorder %s10, 3
    %p182 = pnand %p180, %p181
    %p183 = pneg %p182
    // Predicated region
    $region33: #{_lambda_.7} parent=5 // pred_check
      _
    $region34: #{_lambda_.7} parent=5 // pred_check_branch
      %185 = sbr.rel (%p182) target = $region36
    $region35: #{_lambda_.7} parent=5 // pred_region
      %s186 = ssub.s32 %s10, 1
      %p187 = pneg %p43
      %p188 = pneg %p40
      %p189 = scmp.lt.s32.totalorder %s19, 1
      %s190 = scalar_select %p189, %s19, 1
      %p191 = scmp.lt.s32.totalorder %s20, 0
      %s192 = scalar_select %p191, %s20, 0
      %s193 = smul.addr %s190, 128
      %s194 = sadd.s32 %s192, %s193
      %s195 = smul.addr %s194, 4
      %s196 = scalar_lea.vmem %s1, %s195
      %p197 = pneg %p71
      %p198 = pneg %p68
      %p199 = pneg %p92
      %p200 = pneg %p89
      %p201 = pneg %p113
      %p202 = pneg %p110
      %p203 = pneg %p141
      %p204 = pneg %p138
      %p205 = scmp.lt.s32.totalorder %s19, 1
      %s206 = scalar_select %p205, %s19, 1
      %p207 = scmp.lt.s32.totalorder %s20, 0
      %s208 = scalar_select %p207, %s20, 0
      %s209 = smul.addr %s206, 4
      %s210 = sadd.s32 %s208, %s209
      %s211 = smul.addr %s210, 4
      %s212 = scalar_lea.vmem %s4, %s211
      %p213 = scmp.lt.s32.totalorder %s19, 1
      %s214 = scalar_select %p213, %s19, 1
      %p215 = scmp.lt.s32.totalorder %s20, 0
      %s216 = scalar_select %p215, %s20, 0
      %s217 = smul.addr %s214, 128
      %s218 = sadd.s32 %s216, %s217
      %s219 = smul.addr %s218, 4
      %s220 = scalar_lea.vmem %s1, %s219
      %p221 = scmp.lt.s32.totalorder %s19, 1
      %s222 = scalar_select %p221, %s19, 1
      %p223 = scmp.lt.s32.totalorder %s20, 0
      %s224 = scalar_select %p223, %s20, 0
      %s225 = smul.addr %s222, 4
      %s226 = sadd.s32 %s224, %s225
      %s227 = smul.addr %s226, 4
      %s228 = scalar_lea.vmem %s4, %s227
      %v230 = vld [vmem:[%s0] sm:$0xff]
      %v231 = vld [vmem:[%s0 + $0x8] sm:$0xff]
      %v232 = vld [vmem:[%s0 + $0x10] sm:$0xff]
      %v233 = vld [vmem:[%s0 + $0x18] sm:$0xff]
      %v234 = vld [vmem:[%s0 + $0x20] sm:$0xff]
      %v235 = vld [vmem:[%s0 + $0x28] sm:$0xff]
      %v236 = vld [vmem:[%s0 + $0x30] sm:$0xff]
      %v237 = vld [vmem:[%s0 + $0x38] sm:$0xff]
      %v238 = vld [vmem:[%s0 + $0x40] sm:$0xff]
      %v239 = vld [vmem:[%s0 + $0x48] sm:$0xff]
      %v240 = vld [vmem:[%s0 + $0x50] sm:$0xff]
      %v241 = vld [vmem:[%s0 + $0x58] sm:$0xff]
      %v242 = vld [vmem:[%s0 + $0x60] sm:$0xff]
      %v243 = vld [vmem:[%s0 + $0x68] sm:$0xff]
      %v244 = vld [vmem:[%s0 + $0x70] sm:$0xff]
      %v245 = vld [vmem:[%s0 + $0x78] sm:$0xff]
      %v246 = vld [vmem:[%s220] sm:$0xf]
      %v247 = vld [vmem:[%s220 + $0x4] sm:$0xf]
      %v248 = vld [vmem:[%s220 + $0x8] sm:$0xf]
      %v249 = vld [vmem:[%s220 + $0xc] sm:$0xf]
      %v250 = vld [vmem:[%s220 + $0x10] sm:$0xf]
      %v251 = vld [vmem:[%s220 + $0x14] sm:$0xf]
      %v252 = vld [vmem:[%s220 + $0x18] sm:$0xf]
      %v253 = vld [vmem:[%s220 + $0x1c] sm:$0xf]
      %v254 = vld [vmem:[%s220 + $0x20] sm:$0xf]
      %v255 = vld [vmem:[%s220 + $0x24] sm:$0xf]
      %v256 = vld [vmem:[%s220 + $0x28] sm:$0xf]
      %v257 = vld [vmem:[%s220 + $0x2c] sm:$0xf]
      %v258 = vld [vmem:[%s220 + $0x30] sm:$0xf]
      %v259 = vld [vmem:[%s220 + $0x34] sm:$0xf]
      %v260 = vld [vmem:[%s220 + $0x38] sm:$0xf]
      %v261 = vld [vmem:[%s220 + $0x3c] sm:$0xf]
      %v262 = vld [vmem:[%s220 + $0x40] sm:$0xf]
      %v263 = vld [vmem:[%s220 + $0x44] sm:$0xf]
      %v264 = vld [vmem:[%s220 + $0x48] sm:$0xf]
      %v265 = vld [vmem:[%s220 + $0x4c] sm:$0xf]
      %v266 = vld [vmem:[%s220 + $0x50] sm:$0xf]
      %v267 = vld [vmem:[%s220 + $0x54] sm:$0xf]
      %v268 = vld [vmem:[%s220 + $0x58] sm:$0xf]
      %v269 = vld [vmem:[%s220 + $0x5c] sm:$0xf]
      %v270 = vld [vmem:[%s220 + $0x60] sm:$0xf]
      %v271 = vld [vmem:[%s220 + $0x64] sm:$0xf]
      %v272 = vld [vmem:[%s220 + $0x68] sm:$0xf]
      %v273 = vld [vmem:[%s220 + $0x6c] sm:$0xf]
      %v274 = vld [vmem:[%s220 + $0x70] sm:$0xf]
      %v275 = vld [vmem:[%s220 + $0x74] sm:$0xf]
      %v276 = vld [vmem:[%s220 + $0x78] sm:$0xf]
      %v277 = vld [vmem:[%s220 + $0x7c] sm:$0xf]
      %v278 = vld [vmem:[%s220 + $0x80] sm:$0xf]
      %v279 = vld [vmem:[%s220 + $0x84] sm:$0xf]
      %v280 = vld [vmem:[%s220 + $0x88] sm:$0xf]
      %v281 = vld [vmem:[%s220 + $0x8c] sm:$0xf]
      %v282 = vld [vmem:[%s220 + $0x90] sm:$0xf]
      %v283 = vld [vmem:[%s220 + $0x94] sm:$0xf]
      %v284 = vld [vmem:[%s220 + $0x98] sm:$0xf]
      %v285 = vld [vmem:[%s220 + $0x9c] sm:$0xf]
      %v286 = vld [vmem:[%s220 + $0xa0] sm:$0xf]
      %v287 = vld [vmem:[%s220 + $0xa4] sm:$0xf]
      %v288 = vld [vmem:[%s220 + $0xa8] sm:$0xf]
      %v289 = vld [vmem:[%s220 + $0xac] sm:$0xf]
      %v290 = vld [vmem:[%s220 + $0xb0] sm:$0xf]
      %v291 = vld [vmem:[%s220 + $0xb4] sm:$0xf]
      %v292 = vld [vmem:[%s220 + $0xb8] sm:$0xf]
      %v293 = vld [vmem:[%s220 + $0xbc] sm:$0xf]
      %v294 = vld [vmem:[%s220 + $0xc0] sm:$0xf]
      %v295 = vld [vmem:[%s220 + $0xc4] sm:$0xf]
      %v296 = vld [vmem:[%s220 + $0xc8] sm:$0xf]
      %v297 = vld [vmem:[%s220 + $0xcc] sm:$0xf]
      %v298 = vld [vmem:[%s220 + $0xd0] sm:$0xf]
      %v299 = vld [vmem:[%s220 + $0xd4] sm:$0xf]
      %v300 = vld [vmem:[%s220 + $0xd8] sm:$0xf]
      %v301 = vld [vmem:[%s220 + $0xdc] sm:$0xf]
      %v302 = vld [vmem:[%s220 + $0xe0] sm:$0xf]
      %v303 = vld [vmem:[%s220 + $0xe4] sm:$0xf]
      %v304 = vld [vmem:[%s220 + $0xe8] sm:$0xf]
      %v305 = vld [vmem:[%s220 + $0xec] sm:$0xf]
      %v306 = vld [vmem:[%s220 + $0xf0] sm:$0xf]
      %v307 = vld [vmem:[%s220 + $0xf4] sm:$0xf]
      %v308 = vld [vmem:[%s220 + $0xf8] sm:$0xf]
      %v309 = vld [vmem:[%s220 + $0xfc] sm:$0xf]
      %v310 = vld [vmem:[%s220 + $0x100] sm:$0xf]
      %v311 = vld [vmem:[%s220 + $0x104] sm:$0xf]
      %v312 = vld [vmem:[%s220 + $0x108] sm:$0xf]
      %v313 = vld [vmem:[%s220 + $0x10c] sm:$0xf]
      %v314 = vld [vmem:[%s220 + $0x110] sm:$0xf]
      %v315 = vld [vmem:[%s220 + $0x114] sm:$0xf]
      %v316 = vld [vmem:[%s220 + $0x118] sm:$0xf]
      %v317 = vld [vmem:[%s220 + $0x11c] sm:$0xf]
      %v318 = vld [vmem:[%s220 + $0x120] sm:$0xf]
      %v319 = vld [vmem:[%s220 + $0x124] sm:$0xf]
      %v320 = vld [vmem:[%s220 + $0x128] sm:$0xf]
      %v321 = vld [vmem:[%s220 + $0x12c] sm:$0xf]
      %v322 = vld [vmem:[%s220 + $0x130] sm:$0xf]
      %v323 = vld [vmem:[%s220 + $0x134] sm:$0xf]
      %v324 = vld [vmem:[%s220 + $0x138] sm:$0xf]
      %v325 = vld [vmem:[%s220 + $0x13c] sm:$0xf]
      %v326 = vld [vmem:[%s220 + $0x140] sm:$0xf]
      %v327 = vld [vmem:[%s220 + $0x144] sm:$0xf]
      %v328 = vld [vmem:[%s220 + $0x148] sm:$0xf]
      %v329 = vld [vmem:[%s220 + $0x14c] sm:$0xf]
      %v330 = vld [vmem:[%s220 + $0x150] sm:$0xf]
      %v331 = vld [vmem:[%s220 + $0x154] sm:$0xf]
      %v332 = vld [vmem:[%s220 + $0x158] sm:$0xf]
      %v333 = vld [vmem:[%s220 + $0x15c] sm:$0xf]
      %v334 = vld [vmem:[%s220 + $0x160] sm:$0xf]
      %v335 = vld [vmem:[%s220 + $0x164] sm:$0xf]
      %v336 = vld [vmem:[%s220 + $0x168] sm:$0xf]
      %v337 = vld [vmem:[%s220 + $0x16c] sm:$0xf]
      %v338 = vld [vmem:[%s220 + $0x170] sm:$0xf]
      %v339 = vld [vmem:[%s220 + $0x174] sm:$0xf]
      %v340 = vld [vmem:[%s220 + $0x178] sm:$0xf]
      %v341 = vld [vmem:[%s220 + $0x17c] sm:$0xf]
      %v342 = vld [vmem:[%s220 + $0x180] sm:$0xf]
      %v343 = vld [vmem:[%s220 + $0x184] sm:$0xf]
      %v344 = vld [vmem:[%s220 + $0x188] sm:$0xf]
      %v345 = vld [vmem:[%s220 + $0x18c] sm:$0xf]
      %v346 = vld [vmem:[%s220 + $0x190] sm:$0xf]
      %v347 = vld [vmem:[%s220 + $0x194] sm:$0xf]
      %v348 = vld [vmem:[%s220 + $0x198] sm:$0xf]
      %v349 = vld [vmem:[%s220 + $0x19c] sm:$0xf]
      %v350 = vld [vmem:[%s220 + $0x1a0] sm:$0xf]
      %v351 = vld [vmem:[%s220 + $0x1a4] sm:$0xf]
      %v352 = vld [vmem:[%s220 + $0x1a8] sm:$0xf]
      %v353 = vld [vmem:[%s220 + $0x1ac] sm:$0xf]
      %v354 = vld [vmem:[%s220 + $0x1b0] sm:$0xf]
      %v355 = vld [vmem:[%s220 + $0x1b4] sm:$0xf]
      %v356 = vld [vmem:[%s220 + $0x1b8] sm:$0xf]
      %v357 = vld [vmem:[%s220 + $0x1bc] sm:$0xf]
      %v358 = vld [vmem:[%s220 + $0x1c0] sm:$0xf]
      %v359 = vld [vmem:[%s220 + $0x1c4] sm:$0xf]
      %v360 = vld [vmem:[%s220 + $0x1c8] sm:$0xf]
      %v361 = vld [vmem:[%s220 + $0x1cc] sm:$0xf]
      %v362 = vld [vmem:[%s220 + $0x1d0] sm:$0xf]
      %v363 = vld [vmem:[%s220 + $0x1d4] sm:$0xf]
      %v364 = vld [vmem:[%s220 + $0x1d8] sm:$0xf]
      %v365 = vld [vmem:[%s220 + $0x1dc] sm:$0xf]
      %v366 = vld [vmem:[%s220 + $0x1e0] sm:$0xf]
      %v367 = vld [vmem:[%s220 + $0x1e4] sm:$0xf]
      %v368 = vld [vmem:[%s220 + $0x1e8] sm:$0xf]
      %v369 = vld [vmem:[%s220 + $0x1ec] sm:$0xf]
      %v370 = vld [vmem:[%s220 + $0x1f0] sm:$0xf]
      %v371 = vld [vmem:[%s220 + $0x1f4] sm:$0xf]
      %v372 = vld [vmem:[%s220 + $0x1f8] sm:$0xf]
      %v373 = vld [vmem:[%s220 + $0x1fc] sm:$0xf]
      %v390 = vunpack.c.l.b16 %v230
      %v391 = vunpack.c.h.b16 %v230
      %v392 = vunpack.c.l.b16 %v231
      %v393 = vunpack.c.h.b16 %v231
      %v394 = vunpack.c.l.b16 %v232
      %v395 = vunpack.c.h.b16 %v232
      %v396 = vunpack.c.l.b16 %v233
      %v397 = vunpack.c.h.b16 %v233
      %v398 = vunpack.c.l.b16 %v234
      %v399 = vunpack.c.h.b16 %v234
      %v400 = vunpack.c.l.b16 %v235
      %v401 = vunpack.c.h.b16 %v235
      %v402 = vunpack.c.l.b16 %v236
      %v403 = vunpack.c.h.b16 %v236
      %v404 = vunpack.c.l.b16 %v237
      %v405 = vunpack.c.h.b16 %v237
      %v406 = vunpack.c.l.b16 %v238
      %v407 = vunpack.c.h.b16 %v238
      %v408 = vunpack.c.l.b16 %v239
      %v409 = vunpack.c.h.b16 %v239
      %v410 = vunpack.c.l.b16 %v240
      %v411 = vunpack.c.h.b16 %v240
      %v412 = vunpack.c.l.b16 %v241
      %v413 = vunpack.c.h.b16 %v241
      %v414 = vunpack.c.l.b16 %v242
      %v415 = vunpack.c.h.b16 %v242
      %v416 = vunpack.c.l.b16 %v243
      %v417 = vunpack.c.h.b16 %v243
      %v418 = vunpack.c.l.b16 %v244
      %v419 = vunpack.c.h.b16 %v244
      %v420 = vunpack.c.l.b16 %v245
      %v421 = vunpack.c.h.b16 %v245
      %v422 = vpack.c.b16 %v398, %v390
      %v423 = vpack.c.b16 %v399, %v391
      %v424 = vpack.c.b16 %v400, %v392
      %v425 = vpack.c.b16 %v401, %v393
      %v426 = vpack.c.b16 %v402, %v394
      %v427 = vpack.c.b16 %v403, %v395
      %v428 = vpack.c.b16 %v404, %v396
      %v429 = vpack.c.b16 %v405, %v397
      %v430 = vpack.c.b16 %v414, %v406
      %v431 = vpack.c.b16 %v415, %v407
      %v432 = vpack.c.b16 %v416, %v408
      %v433 = vpack.c.b16 %v417, %v409
      %v434 = vpack.c.b16 %v418, %v410
      %v435 = vpack.c.b16 %v419, %v411
      %v436 = vpack.c.b16 %v420, %v412
      %v437 = vpack.c.b16 %v421, %v413
      %v582 = vunpack.c.l.b16 %v246
      %v583 = vunpack.c.l.b16 %v247
      %v584 = vunpack.c.l.b16 %v248
      %v585 = vunpack.c.l.b16 %v249
      %v586 = vunpack.c.l.b16 %v250
      %v587 = vunpack.c.l.b16 %v251
      %v588 = vunpack.c.l.b16 %v252
      %v589 = vunpack.c.l.b16 %v253
      %v590 = vunpack.c.l.b16 %v254
      %v591 = vunpack.c.l.b16 %v255
      %v592 = vunpack.c.l.b16 %v256
      %v593 = vunpack.c.l.b16 %v257
      %v594 = vunpack.c.l.b16 %v258
      %v595 = vunpack.c.l.b16 %v259
      %v596 = vunpack.c.l.b16 %v260
      %v597 = vunpack.c.l.b16 %v261
      %v598 = vunpack.c.l.b16 %v262
      %v599 = vunpack.c.l.b16 %v263
      %v600 = vunpack.c.l.b16 %v264
      %v601 = vunpack.c.l.b16 %v265
      %v602 = vunpack.c.l.b16 %v266
      %v603 = vunpack.c.l.b16 %v267
      %v604 = vunpack.c.l.b16 %v268
      %v605 = vunpack.c.l.b16 %v269
      %v606 = vunpack.c.l.b16 %v270
      %v607 = vunpack.c.l.b16 %v271
      %v608 = vunpack.c.l.b16 %v272
      %v609 = vunpack.c.l.b16 %v273
      %v610 = vunpack.c.l.b16 %v274
      %v611 = vunpack.c.l.b16 %v275
      %v612 = vunpack.c.l.b16 %v276
      %v613 = vunpack.c.l.b16 %v277
      %v614 = vunpack.c.l.b16 %v278
      %v615 = vunpack.c.l.b16 %v279
      %v616 = vunpack.c.l.b16 %v280
      %v617 = vunpack.c.l.b16 %v281
      %v618 = vunpack.c.l.b16 %v282
      %v619 = vunpack.c.l.b16 %v283
      %v620 = vunpack.c.l.b16 %v284
      %v621 = vunpack.c.l.b16 %v285
      %v622 = vunpack.c.l.b16 %v286
      %v623 = vunpack.c.l.b16 %v287
      %v624 = vunpack.c.l.b16 %v288
      %v625 = vunpack.c.l.b16 %v289
      %v626 = vunpack.c.l.b16 %v290
      %v627 = vunpack.c.l.b16 %v291
      %v628 = vunpack.c.l.b16 %v292
      %v629 = vunpack.c.l.b16 %v293
      %v630 = vunpack.c.l.b16 %v294
      %v631 = vunpack.c.l.b16 %v295
      %v632 = vunpack.c.l.b16 %v296
      %v633 = vunpack.c.l.b16 %v297
      %v634 = vunpack.c.l.b16 %v298
      %v635 = vunpack.c.l.b16 %v299
      %v636 = vunpack.c.l.b16 %v300
      %v637 = vunpack.c.l.b16 %v301
      %v638 = vunpack.c.l.b16 %v302
      %v639 = vunpack.c.l.b16 %v303
      %v640 = vunpack.c.l.b16 %v304
      %v641 = vunpack.c.l.b16 %v305
      %v642 = vunpack.c.l.b16 %v306
      %v643 = vunpack.c.l.b16 %v307
      %v644 = vunpack.c.l.b16 %v308
      %v645 = vunpack.c.l.b16 %v309
      %v646 = vunpack.c.l.b16 %v310
      %v647 = vunpack.c.l.b16 %v311
      %v648 = vunpack.c.l.b16 %v312
      %v649 = vunpack.c.l.b16 %v313
      %v650 = vunpack.c.l.b16 %v314
      %v651 = vunpack.c.l.b16 %v315
      %v652 = vunpack.c.l.b16 %v316
      %v653 = vunpack.c.l.b16 %v317
      %v654 = vunpack.c.l.b16 %v318
      %v655 = vunpack.c.l.b16 %v319
      %v656 = vunpack.c.l.b16 %v320
      %v657 = vunpack.c.l.b16 %v321
      %v658 = vunpack.c.l.b16 %v322
      %v659 = vunpack.c.l.b16 %v323
      %v660 = vunpack.c.l.b16 %v324
      %v661 = vunpack.c.l.b16 %v325
      %v662 = vunpack.c.l.b16 %v326
      %v663 = vunpack.c.l.b16 %v327
      %v664 = vunpack.c.l.b16 %v328
      %v665 = vunpack.c.l.b16 %v329
      %v666 = vunpack.c.l.b16 %v330
      %v667 = vunpack.c.l.b16 %v331
      %v668 = vunpack.c.l.b16 %v332
      %v669 = vunpack.c.l.b16 %v333
      %v670 = vunpack.c.l.b16 %v334
      %v671 = vunpack.c.l.b16 %v335
      %v672 = vunpack.c.l.b16 %v336
      %v673 = vunpack.c.l.b16 %v337
      %v674 = vunpack.c.l.b16 %v338
      %v675 = vunpack.c.l.b16 %v339
      %v676 = vunpack.c.l.b16 %v340
      %v677 = vunpack.c.l.b16 %v341
      %v678 = vunpack.c.l.b16 %v342
      %v679 = vunpack.c.l.b16 %v343
      %v680 = vunpack.c.l.b16 %v344
      %v681 = vunpack.c.l.b16 %v345
      %v682 = vunpack.c.l.b16 %v346
      %v683 = vunpack.c.l.b16 %v347
      %v684 = vunpack.c.l.b16 %v348
      %v685 = vunpack.c.l.b16 %v349
      %v686 = vunpack.c.l.b16 %v350
      %v687 = vunpack.c.l.b16 %v351
      %v688 = vunpack.c.l.b16 %v352
      %v689 = vunpack.c.l.b16 %v353
      %v690 = vunpack.c.l.b16 %v354
      %v691 = vunpack.c.l.b16 %v355
      %v692 = vunpack.c.l.b16 %v356
      %v693 = vunpack.c.l.b16 %v357
      %v694 = vunpack.c.l.b16 %v358
      %v695 = vunpack.c.l.b16 %v359
      %v696 = vunpack.c.l.b16 %v360
      %v697 = vunpack.c.l.b16 %v361
      %v698 = vunpack.c.l.b16 %v362
      %v699 = vunpack.c.l.b16 %v363
      %v700 = vunpack.c.l.b16 %v364
      %v701 = vunpack.c.l.b16 %v365
      %v702 = vunpack.c.l.b16 %v366
      %v703 = vunpack.c.l.b16 %v367
      %v704 = vunpack.c.l.b16 %v368
      %v705 = vunpack.c.l.b16 %v369
      %v706 = vunpack.c.l.b16 %v370
      %v707 = vunpack.c.l.b16 %v371
      %v708 = vunpack.c.l.b16 %v372
      %v709 = vunpack.c.l.b16 %v373
      %v710 = vpack.c.b16 %v583, %v582
      %v711 = vpack.c.b16 %v585, %v584
      %v712 = vpack.c.b16 %v587, %v586
      %v713 = vpack.c.b16 %v589, %v588
      %v714 = vpack.c.b16 %v591, %v590
      %v715 = vpack.c.b16 %v593, %v592
      %v716 = vpack.c.b16 %v595, %v594
      %v717 = vpack.c.b16 %v597, %v596
      %v718 = vpack.c.b16 %v599, %v598
      %v719 = vpack.c.b16 %v601, %v600
      %v720 = vpack.c.b16 %v603, %v602
      %v721 = vpack.c.b16 %v605, %v604
      %v722 = vpack.c.b16 %v607, %v606
      %v723 = vpack.c.b16 %v609, %v608
      %v724 = vpack.c.b16 %v611, %v610
      %v725 = vpack.c.b16 %v613, %v612
      %v726 = vpack.c.b16 %v615, %v614
      %v727 = vpack.c.b16 %v617, %v616
      %v728 = vpack.c.b16 %v619, %v618
      %v729 = vpack.c.b16 %v621, %v620
      %v730 = vpack.c.b16 %v623, %v622
      %v731 = vpack.c.b16 %v625, %v624
      %v732 = vpack.c.b16 %v627, %v626
      %v733 = vpack.c.b16 %v629, %v628
      %v734 = vpack.c.b16 %v631, %v630
      %v735 = vpack.c.b16 %v633, %v632
      %v736 = vpack.c.b16 %v635, %v634
      %v737 = vpack.c.b16 %v637, %v636
      %v738 = vpack.c.b16 %v639, %v638
      %v739 = vpack.c.b16 %v641, %v640
      %v740 = vpack.c.b16 %v643, %v642
      %v741 = vpack.c.b16 %v645, %v644
      %v742 = vpack.c.b16 %v647, %v646
      %v743 = vpack.c.b16 %v649, %v648
      %v744 = vpack.c.b16 %v651, %v650
      %v745 = vpack.c.b16 %v653, %v652
      %v746 = vpack.c.b16 %v655, %v654
      %v747 = vpack.c.b16 %v657, %v656
      %v748 = vpack.c.b16 %v659, %v658
      %v749 = vpack.c.b16 %v661, %v660
      %v750 = vpack.c.b16 %v663, %v662
      %v751 = vpack.c.b16 %v665, %v664
      %v752 = vpack.c.b16 %v667, %v666
      %v753 = vpack.c.b16 %v669, %v668
      %v754 = vpack.c.b16 %v671, %v670
      %v755 = vpack.c.b16 %v673, %v672
      %v756 = vpack.c.b16 %v675, %v674
      %v757 = vpack.c.b16 %v677, %v676
      %v758 = vpack.c.b16 %v679, %v678
      %v759 = vpack.c.b16 %v681, %v680
      %v760 = vpack.c.b16 %v683, %v682
      %v761 = vpack.c.b16 %v685, %v684
      %v762 = vpack.c.b16 %v687, %v686
      %v763 = vpack.c.b16 %v689, %v688
      %v764 = vpack.c.b16 %v691, %v690
      %v765 = vpack.c.b16 %v693, %v692
      %v766 = vpack.c.b16 %v695, %v694
      %v767 = vpack.c.b16 %v697, %v696
      %v768 = vpack.c.b16 %v699, %v698
      %v769 = vpack.c.b16 %v701, %v700
      %v770 = vpack.c.b16 %v703, %v702
      %v771 = vpack.c.b16 %v705, %v704
      %v772 = vpack.c.b16 %v707, %v706
      %v773 = vpack.c.b16 %v709, %v708
      %838 = vmatprep.subr.bf16.mxu0 0
      %839 = vmatpush1.bf16.msra.mxu0 %v717
      %840 = vmatprep.subr.bf16.mxu0 0
      %841 = vmatpush1.bf16.msra.mxu0 %v716
      %842 = vmatprep.subr.bf16.mxu0 0
      %843 = vmatpush1.bf16.msra.mxu0 %v715
      %844 = vmatprep.subr.bf16.mxu0 0
      %845 = vmatpush1.bf16.msra.mxu0 %v714
      %846 = vmatprep.subr.bf16.mxu0 0
      %847 = vmatpush1.bf16.msra.mxu0 %v713
      %848 = vmatprep.subr.bf16.mxu0 0
      %849 = vmatpush1.bf16.msra.mxu0 %v712
      %850 = vmatprep.subr.bf16.mxu0 0
      %851 = vmatpush1.bf16.msra.mxu0 %v711
      %852 = vmatprep.subr.bf16.mxu0 0
      %853 = vmatpush1.bf16.msra.mxu0 %v710
      %854 = vmatprep.subr.bf16.mxu0 0
      %855 = vmatpush2.bf16.msra.mxu0 %v725
      %856 = vmatprep.subr.bf16.mxu0 0
      %857 = vmatpush2.bf16.msra.mxu0 %v724
      %858 = vmatprep.subr.bf16.mxu0 0
      %859 = vmatpush2.bf16.msra.mxu0 %v723
      %860 = vmatprep.subr.bf16.mxu0 0
      %861 = vmatpush2.bf16.msra.mxu0 %v722
      %862 = vmatprep.subr.bf16.mxu0 0
      %863 = vmatpush2.bf16.msra.mxu0 %v721
      %864 = vmatprep.subr.bf16.mxu0 0
      %865 = vmatpush2.bf16.msra.mxu0 %v720
      %866 = vmatprep.subr.bf16.mxu0 0
      %867 = vmatpush2.bf16.msra.mxu0 %v719
      %868 = vmatprep.subr.bf16.mxu0 0
      %869 = vmatpush2.bf16.msra.mxu0 %v718
      %870 = vmatprep.mubr.bf16.mxu0 %v423
      %871 = vmatmul.mubr.bf16.gmra.mxu0 %v422
      %v872 = vpop.f32.mrf.mxu0
      %v873 = vadd.f32 0.0, %v872
      %v874 = vpop.f32.mrf.mxu0
      %v875 = vpop.f32.mrf.mxu0
      %v876 = vadd.f32 0.0, %v875
      %v877 = vpop.f32.mrf.mxu0
      %878 = vmatprep.mubr.bf16.mxu0 %v431
      %879 = vmatmul.mubr.bf16.gmra.mxu0 %v430
      %v880 = vpop.f32.mrf.mxu0
      %v881 = vadd.f32 0.0, %v880
      %v882 = vpop.f32.mrf.mxu0
      %v883 = vpop.f32.mrf.mxu0
      %v884 = vadd.f32 0.0, %v883
      %v885 = vpop.f32.mrf.mxu0
      %886 = vdwg.mxu0
      %887 = vmatprep.subr.bf16.mxu0 0
      %888 = vmatpush1.bf16.msra.mxu0 %v733
      %889 = vmatprep.subr.bf16.mxu0 0
      %890 = vmatpush1.bf16.msra.mxu0 %v732
      %891 = vmatprep.subr.bf16.mxu0 0
      %892 = vmatpush1.bf16.msra.mxu0 %v731
      %893 = vmatprep.subr.bf16.mxu0 0
      %894 = vmatpush1.bf16.msra.mxu0 %v730
      %895 = vmatprep.subr.bf16.mxu0 0
      %896 = vmatpush1.bf16.msra.mxu0 %v729
      %897 = vmatprep.subr.bf16.mxu0 0
      %898 = vmatpush1.bf16.msra.mxu0 %v728
      %899 = vmatprep.subr.bf16.mxu0 0
      %900 = vmatpush1.bf16.msra.mxu0 %v727
      %901 = vmatprep.subr.bf16.mxu0 0
      %902 = vmatpush1.bf16.msra.mxu0 %v726
      %903 = vmatprep.subr.bf16.mxu0 0
      %904 = vmatpush2.bf16.msra.mxu0 %v741
      %905 = vmatprep.subr.bf16.mxu0 0
      %906 = vmatpush2.bf16.msra.mxu0 %v740
      %907 = vmatprep.subr.bf16.mxu0 0
      %908 = vmatpush2.bf16.msra.mxu0 %v739
      %909 = vmatprep.subr.bf16.mxu0 0
      %910 = vmatpush2.bf16.msra.mxu0 %v738
      %911 = vmatprep.subr.bf16.mxu0 0
      %912 = vmatpush2.bf16.msra.mxu0 %v737
      %913 = vmatprep.subr.bf16.mxu0 0
      %914 = vmatpush2.bf16.msra.mxu0 %v736
      %915 = vmatprep.subr.bf16.mxu0 0
      %916 = vmatpush2.bf16.msra.mxu0 %v735
      %917 = vmatprep.subr.bf16.mxu0 0
      %918 = vmatpush2.bf16.msra.mxu0 %v734
      %919 = vmatprep.mubr.bf16.mxu0 %v425
      %920 = vmatmul.mubr.bf16.gmra.mxu0 %v424
      %v921 = vpop.f32.mrf.mxu0
      %v922 = vadd.f32 %v873, %v921
      %v923 = vpop.f32.mrf.mxu0
      %v924 = vpop.f32.mrf.mxu0
      %v925 = vadd.f32 %v876, %v924
      %v926 = vpop.f32.mrf.mxu0
      %927 = vmatprep.mubr.bf16.mxu0 %v433
      %928 = vmatmul.mubr.bf16.gmra.mxu0 %v432
      %v929 = vpop.f32.mrf.mxu0
      %v930 = vadd.f32 %v881, %v929
      %v931 = vpop.f32.mrf.mxu0
      %v932 = vpop.f32.mrf.mxu0
      %v933 = vadd.f32 %v884, %v932
      %v934 = vpop.f32.mrf.mxu0
      %935 = vdwg.mxu0
      %936 = vmatprep.subr.bf16.mxu0 0
      %937 = vmatpush1.bf16.msra.mxu0 %v749
      %938 = vmatprep.subr.bf16.mxu0 0
      %939 = vmatpush1.bf16.msra.mxu0 %v748
      %940 = vmatprep.subr.bf16.mxu0 0
      %941 = vmatpush1.bf16.msra.mxu0 %v747
      %942 = vmatprep.subr.bf16.mxu0 0
      %943 = vmatpush1.bf16.msra.mxu0 %v746
      %944 = vmatprep.subr.bf16.mxu0 0
      %945 = vmatpush1.bf16.msra.mxu0 %v745
      %946 = vmatprep.subr.bf16.mxu0 0
      %947 = vmatpush1.bf16.msra.mxu0 %v744
      %948 = vmatprep.subr.bf16.mxu0 0
      %949 = vmatpush1.bf16.msra.mxu0 %v743
      %950 = vmatprep.subr.bf16.mxu0 0
      %951 = vmatpush1.bf16.msra.mxu0 %v742
      %952 = vmatprep.subr.bf16.mxu0 0
      %953 = vmatpush2.bf16.msra.mxu0 %v757
      %954 = vmatprep.subr.bf16.mxu0 0
      %955 = vmatpush2.bf16.msra.mxu0 %v756
      %956 = vmatprep.subr.bf16.mxu0 0
      %957 = vmatpush2.bf16.msra.mxu0 %v755
      %958 = vmatprep.subr.bf16.mxu0 0
      %959 = vmatpush2.bf16.msra.mxu0 %v754
      %960 = vmatprep.subr.bf16.mxu0 0
      %961 = vmatpush2.bf16.msra.mxu0 %v753
      %962 = vmatprep.subr.bf16.mxu0 0
      %963 = vmatpush2.bf16.msra.mxu0 %v752
      %964 = vmatprep.subr.bf16.mxu0 0
      %965 = vmatpush2.bf16.msra.mxu0 %v751
      %966 = vmatprep.subr.bf16.mxu0 0
      %967 = vmatpush2.bf16.msra.mxu0 %v750
      %968 = vmatprep.mubr.bf16.mxu0 %v427
      %969 = vmatmul.mubr.bf16.gmra.mxu0 %v426
      %v970 = vpop.f32.mrf.mxu0
      %v971 = vadd.f32 %v922, %v970
      %v972 = vpop.f32.mrf.mxu0
      %v973 = vpop.f32.mrf.mxu0
      %v974 = vadd.f32 %v925, %v973
      %v975 = vpop.f32.mrf.mxu0
      %976 = vmatprep.mubr.bf16.mxu0 %v435
      %977 = vmatmul.mubr.bf16.gmra.mxu0 %v434
      %v978 = vpop.f32.mrf.mxu0
      %v979 = vadd.f32 %v930, %v978
      %v980 = vpop.f32.mrf.mxu0
      %v981 = vpop.f32.mrf.mxu0
      %v982 = vadd.f32 %v933, %v981
      %v983 = vpop.f32.mrf.mxu0
      %984 = vdwg.mxu0
      %985 = vmatprep.subr.bf16.mxu0 0
      %986 = vmatpush1.bf16.msra.mxu0 %v765
      %987 = vmatprep.subr.bf16.mxu0 0
      %988 = vmatpush1.bf16.msra.mxu0 %v764
      %989 = vmatprep.subr.bf16.mxu0 0
      %990 = vmatpush1.bf16.msra.mxu0 %v763
      %991 = vmatprep.subr.bf16.mxu0 0
      %992 = vmatpush1.bf16.msra.mxu0 %v762
      %993 = vmatprep.subr.bf16.mxu0 0
      %994 = vmatpush1.bf16.msra.mxu0 %v761
      %995 = vmatprep.subr.bf16.mxu0 0
      %996 = vmatpush1.bf16.msra.mxu0 %v760
      %997 = vmatprep.subr.bf16.mxu0 0
      %998 = vmatpush1.bf16.msra.mxu0 %v759
      %999 = vmatprep.subr.bf16.mxu0 0
      %1000 = vmatpush1.bf16.msra.mxu0 %v758
      %1001 = vmatprep.subr.bf16.mxu0 0
      %1002 = vmatpush2.bf16.msra.mxu0 %v773
      %1003 = vmatprep.subr.bf16.mxu0 0
      %1004 = vmatpush2.bf16.msra.mxu0 %v772
      %1005 = vmatprep.subr.bf16.mxu0 0
      %1006 = vmatpush2.bf16.msra.mxu0 %v771
      %1007 = vmatprep.subr.bf16.mxu0 0
      %1008 = vmatpush2.bf16.msra.mxu0 %v770
      %1009 = vmatprep.subr.bf16.mxu0 0
      %1010 = vmatpush2.bf16.msra.mxu0 %v769
      %1011 = vmatprep.subr.bf16.mxu0 0
      %1012 = vmatpush2.bf16.msra.mxu0 %v768
      %1013 = vmatprep.subr.bf16.mxu0 0
      %1014 = vmatpush2.bf16.msra.mxu0 %v767
      %1015 = vmatprep.subr.bf16.mxu0 0
      %1016 = vmatpush2.bf16.msra.mxu0 %v766
      %1017 = vmatprep.mubr.bf16.mxu0 %v429
      %1018 = vmatmul.mubr.bf16.gmra.mxu0 %v428
      %v1019 = vpop.f32.mrf.mxu0
      %v1020 = vadd.f32 %v971, %v1019
      %v1021 = vpop.f32.mrf.mxu0
      %v1022 = vpop.f32.mrf.mxu0
      %v1023 = vadd.f32 %v974, %v1022
      %v1024 = vpop.f32.mrf.mxu0
      %1025 = vmatprep.mubr.bf16.mxu0 %v437
      %1026 = vmatmul.mubr.bf16.gmra.mxu0 %v436
      %v1027 = vpop.f32.mrf.mxu0
      %v1028 = vadd.f32 %v979, %v1027
      %v1029 = vpop.f32.mrf.mxu0
      %v1030 = vpop.f32.mrf.mxu0
      %v1031 = vadd.f32 %v982, %v1030
      %v1032 = vpop.f32.mrf.mxu0
      %1033 = vdwg.mxu0
      %v1034 = vld [vmem:[%s2] sm:$0xff]
      %v1035 = vld [vmem:[%s2 + $0x8] sm:$0xff]
      %v1036 = vld [vmem:[%s2 + $0x10] sm:$0xff]
      %v1037 = vld [vmem:[%s2 + $0x18] sm:$0xff]
      %1039 = vset.pattern.permute.xlu0 0
      %1040 = vperm.xlu0 %1039, %v1034
      %v1041 = vpop.permute.xlu0 %1040
      %1044 = vset.pattern.permute.xlu0 0
      %1045 = vperm.xlu0 %1044, %v1035
      %v1046 = vpop.permute.xlu0 %1045
      %1049 = vset.pattern.permute.xlu0 0
      %1050 = vperm.xlu0 %1049, %v1036
      %v1051 = vpop.permute.xlu0 %1050
      %1054 = vset.pattern.permute.xlu0 0
      %1055 = vperm.xlu0 %1054, %v1037
      %v1056 = vpop.permute.xlu0 %1055
      %v1058 = vmul.f32 %v1020, %v1041
      %v1059 = vmul.f32 %v1023, %v1046
      %v1060 = vmul.f32 %v1028, %v1051
      %v1061 = vmul.f32 %v1031, %v1056
      %v1062 = vld [vmem:[%s3] sm:$0xff]
      %v1063 = vld [vmem:[%s3 + $0x8] sm:$0xff]
      %v1064 = vld [vmem:[%s3 + $0x10] sm:$0xff]
      %v1065 = vld [vmem:[%s3 + $0x18] sm:$0xff]
      %1067 = vset.pattern.permute.xlu0 0
      %1068 = vperm.xlu0 %1067, %v1062
      %v1069 = vpop.permute.xlu0 %1068
      %1072 = vset.pattern.permute.xlu0 0
      %1073 = vperm.xlu0 %1072, %v1063
      %v1074 = vpop.permute.xlu0 %1073
      %1077 = vset.pattern.permute.xlu0 0
      %1078 = vperm.xlu0 %1077, %v1064
      %v1079 = vpop.permute.xlu0 %1078
      %1082 = vset.pattern.permute.xlu0 0
      %1083 = vperm.xlu0 %1082, %v1065
      %v1084 = vpop.permute.xlu0 %1083
      %v1086 = vadd.f32 %v1058, %v1069
      %v1087 = vadd.f32 %v1059, %v1074
      %v1088 = vadd.f32 %v1060, %v1079
      %v1089 = vadd.f32 %v1061, %v1084
      %vm1090 = vcmp.ge.f32.partialorder %v1086, 0.0
      %vm1091 = vcmp.ge.f32.partialorder %v1087, 0.0
      %vm1092 = vcmp.ge.f32.partialorder %v1088, 0.0
      %vm1093 = vcmp.ge.f32.partialorder %v1089, 0.0
      %v1094 = vmul.f32 %v1086, 0.2
      %v1095 = vmul.f32 %v1087, 0.2
      %v1096 = vmul.f32 %v1088, 0.2
      %v1097 = vmul.f32 %v1089, 0.2
      %v1098 = vsel %vm1090, %v1086, %v1094
      %v1099 = vsel %vm1091, %v1087, %v1095
      %v1100 = vsel %vm1092, %v1088, %v1096
      %v1101 = vsel %vm1093, %v1089, %v1097
      %v1102 = vpack.c.bf16 %v1099, %v1098
      %v1103 = vpack.c.bf16 %v1101, %v1100
      %v1106 = vunpack.c.l.b16 %v1102
      %v1107 = vunpack.c.h.b16 %v1102
      %v1108 = vunpack.c.l.b16 %v1103
      %v1109 = vunpack.c.h.b16 %v1103
      %v1110 = vpack.c.b16 %v1106, %v1106
      %v1111 = vpack.c.b16 %v1107, %v1107
      %v1112 = vpack.c.b16 %v1108, %v1108
      %v1113 = vpack.c.b16 %v1109, %v1109
      %1118 = vst [vmem:[%s228] sm:$0xf] %v1110
      %1119 = vst [vmem:[%s228 + $0x4] sm:$0xf] %v1111
      %1120 = vst [vmem:[%s228 + $0x8] sm:$0xf] %v1112
      %1121 = vst [vmem:[%s228 + $0xc] sm:$0xf] %v1113
      %p1122 = scmp.lt.s32.totalorder %s19, 1
      %s1123 = scalar_select %p1122, %s19, 1
      %p1124 = scmp.lt.s32.totalorder %s20, 0
      %s1125 = scalar_select %p1124, %s20, 0
      %s1126 = smul.addr %s1123, 4
      %s1127 = sadd.s32 %s1125, %s1126
      %s1128 = smul.addr %s1127, 4
      %s1129 = scalar_lea.vmem %s4, %s1128
      // Predicated region
      $region37: #{_lambda_.7} parent=35 // pred_check
        %p1130 = pneg %p138
      $region38: #{_lambda_.7} parent=35 // pred_check_branch
        %1132 = sbr.rel (%p1130) target = $region40
      $region39: #{_lambda_.7} parent=35 // pred_region
        _
      $region40: #{_lambda_.7} parent=35 // pred_fallthru
        _
    $region36: #{_lambda_.7} parent=5 // pred_fallthru
      _
    %p1133 = scmp.le.s32.totalorder 2, %s10
    // Predicated region
    $region41: #{_lambda_.7} parent=5 // pred_check
      %p1134 = pneg %p1133
    $region42: #{_lambda_.7} parent=5 // pred_check_branch
      %1136 = sbr.rel (%p1134) target = $region44
    $region43: #{_lambda_.7} parent=5 // pred_region
      %s1137 = ssub.s32 %s10, 2
      // Predicated region
      $region45: #{_lambda_.7} parent=43 // pred_check
        %p1138 = pneg %p144
      $region46: #{_lambda_.7} parent=43 // pred_check_branch
        %1140 = sbr.rel (%p1138) target = $region48
      $region47: #{_lambda_.7} parent=43 // pred_region
        %p1141 = scmp.lt.s32.totalorder %s21, 1
        %s1142 = scalar_select %p1141, %s21, 1
        %p1143 = scmp.lt.s32.totalorder %s22, 0
        %s1144 = scalar_select %p1143, %s22, 0
        %s1145 = smul.addr %s1142, 4
        %s1146 = sadd.s32 %s1144, %s1145
        %s1147 = smul.addr %s1146, 4
        %s1148 = scalar_lea.vmem %s4, %s1147
      $region48: #{_lambda_.7} parent=43 // pred_fallthru
        _
    $region44: #{_lambda_.7} parent=5 // pred_fallthru
      _
  $region6: #{_lambda_.7} parent=0 // loop_footer
    %s14 = sadd.s32 1, %s10
  $region7: #{_lambda_.7} parent=0 // loop_footer_branch
    %9 = sbr.rel target = $region3
  $region8: #{_lambda_.7} parent=0 // loop_exit
    _

// kernel: _lambda_.8
$region0: #{_lambda_.8}
  #allocation0 [shape = 'u32[]', space=smem, size = 0x4, offset = 0x4, fixed_abs, tag = 'smem constant byte address 0x4 - core index']
  #allocation1 [shape = 'u32[144,128]{1,0:T(1,128)}', space=vmem, size = 0x12000, scoped, tag = 'internal scratch']
  %s0 = inlined_call_operand.vmem [shape: bf16[64,2048], index: 0, kind: input, shape index: {}]
  %s1 = inlined_call_operand.vmem [shape: bf16[2,2048,128], index: 1, kind: input, shape index: {}]
  %s2 = inlined_call_operand.vmem [shape: f32[64,1], index: 2, kind: input, shape index: {}]
  %s3 = inlined_call_operand.vmem [shape: f32[64,1], index: 3, kind: input, shape index: {}]
  %s4 = inlined_call_operand.vmem [shape: bf16[2,64,128], index: 4, kind: output, shape index: {}]
  %s5 = sld [smem:[#allocation0]]
  $region49: #{_lambda_.8} parent=0
    _
  %s7 = ssub.s32 1, %s5
  %s8 = scalar_select 0, %s7, %s5
  loop: start=0, step=1, limit=4
  $region2: #{_lambda_.8} parent=0 // loop_pre_header
    _
  $region3: #{_lambda_.8} parent=0 // loop_header
    %s10 = sphi 0, %s14
    %p11 = scmp.ge.s32.totalorder %s10, 4
    %s17 = sphi 0, %s29
    %s18 = sphi 0, %s25
    %s19 = sphi 0, %s17
    %s20 = sphi 0, %s18
    %s21 = sphi 0, %s19
    %s22 = sphi 0, %s20
    %s30 = sphi 0, %s30
    %s32 = sphi 0, %s30
    %s33 = sphi 0, %s32
    %s47 = sphi 0, %s33
    %s55 = sphi 0, %s57
    %s58 = sphi 0, %s55
    %s59 = sphi 0, %s58
    %s75 = sphi 0, %s59
    %s79 = sphi 0, %s79
    %s81 = sphi 0, %s79
    %s82 = sphi 0, %s81
    %s96 = sphi 0, %s82
    %s100 = sphi 0, %s100
    %s102 = sphi 0, %s100
    %s103 = sphi 0, %s102
    %s117 = sphi 0, %s103
    %s125 = sphi 0, %s127
    %s128 = sphi 0, %s125
    %s129 = sphi 0, %s128
    %s145 = sphi 0, %s129
  $region4: #{_lambda_.8} parent=0 // loop_header_branch
    %13 = sbr.rel (%p11) target = $region8
  $region5: #{_lambda_.8} parent=0 // loop_body
    %s15 = ssub.s32 %s10, 1
    %s16 = ssub.s32 %s10, 2
    %s23 = sadd.s32 1, %s18
    %p24 = scmp.ge.s32.totalorder %s23, 1
    %s25 = scalar_select %p24, 0, %s23
    %s26 = sadd.s32 1, %s17
    %s27 = scalar_select %p24, %s26, %s17
    %p28 = scmp.ge.s32.totalorder %s27, 2
    %s29 = scalar_select %p28, 0, %s27
    %s31 = sadd.s32 %s30, 1
    %p34 = scmp.eq.s32.totalorder %s10, 1
    %p35 = scmp.ne.s32.totalorder %s30, %s32
    %p36 = scmp.eq.s32.totalorder %s10, 0
    %p37 = por %p35, %p36
    %p38 = scmp.ne.s32.totalorder %s30, %s32
    %p39 = scmp.eq.s32.totalorder %s15, 1
    %p40 = por %p38, %p39
    %p41 = scmp.ne.s32.totalorder %s32, %s33
    %p42 = scmp.eq.s32.totalorder %s15, 0
    %p43 = por %p41, %p42
    %p44 = scmp.ne.s32.totalorder %s32, %s33
    %p45 = scmp.eq.s32.totalorder %s16, 1
    %p46 = por %p44, %p45
    %p48 = scmp.ne.s32.totalorder %s33, %s47
    %p49 = scmp.eq.s32.totalorder %s16, 0
    %p50 = por %p48, %p49
    %s51 = ssub.s32 %s17, %s29
    %s52 = ssub.s32 %s18, %s25
    %s53 = sor.u32 %s51, %s52
    %p54 = scmp.eq.s32.totalorder %s53, 0
    %s56 = sadd.s32 %s55, 1
    %s57 = scalar_select %p54, %s55, %s56
    %p60 = pneg %p54
    %p61 = scmp.eq.s32.totalorder %s10, 1
    %p62 = por %p60, %p61
    %p63 = scmp.ne.s32.totalorder %s55, %s58
    %p64 = scmp.eq.s32.totalorder %s10, 0
    %p65 = por %p63, %p64
    %p66 = scmp.ne.s32.totalorder %s55, %s58
    %p67 = scmp.eq.s32.totalorder %s15, 1
    %p68 = por %p66, %p67
    %p69 = scmp.ne.s32.totalorder %s58, %s59
    %p70 = scmp.eq.s32.totalorder %s15, 0
    %p71 = por %p69, %p70
    %p72 = scmp.ne.s32.totalorder %s58, %s59
    %p73 = scmp.eq.s32.totalorder %s16, 1
    %p74 = por %p72, %p73
    %p76 = scmp.ne.s32.totalorder %s59, %s75
    %p77 = scmp.eq.s32.totalorder %s16, 0
    %p78 = por %p76, %p77
    %s80 = sadd.s32 %s79, 1
    %p83 = scmp.eq.s32.totalorder %s10, 1
    %p84 = scmp.ne.s32.totalorder %s79, %s81
    %p85 = scmp.eq.s32.totalorder %s10, 0
    %p86 = por %p84, %p85
    %p87 = scmp.ne.s32.totalorder %s79, %s81
    %p88 = scmp.eq.s32.totalorder %s15, 1
    %p89 = por %p87, %p88
    %p90 = scmp.ne.s32.totalorder %s81, %s82
    %p91 = scmp.eq.s32.totalorder %s15, 0
    %p92 = por %p90, %p91
    %p93 = scmp.ne.s32.totalorder %s81, %s82
    %p94 = scmp.eq.s32.totalorder %s16, 1
    %p95 = por %p93, %p94
    %p97 = scmp.ne.s32.totalorder %s82, %s96
    %p98 = scmp.eq.s32.totalorder %s16, 0
    %p99 = por %p97, %p98
    %s101 = sadd.s32 %s100, 1
    %p104 = scmp.eq.s32.totalorder %s10, 1
    %p105 = scmp.ne.s32.totalorder %s100, %s102
    %p106 = scmp.eq.s32.totalorder %s10, 0
    %p107 = por %p105, %p106
    %p108 = scmp.ne.s32.totalorder %s100, %s102
    %p109 = scmp.eq.s32.totalorder %s15, 1
    %p110 = por %p108, %p109
    %p111 = scmp.ne.s32.totalorder %s102, %s103
    %p112 = scmp.eq.s32.totalorder %s15, 0
    %p113 = por %p111, %p112
    %p114 = scmp.ne.s32.totalorder %s102, %s103
    %p115 = scmp.eq.s32.totalorder %s16, 1
    %p116 = por %p114, %p115
    %p118 = scmp.ne.s32.totalorder %s103, %s117
    %p119 = scmp.eq.s32.totalorder %s16, 0
    %p120 = por %p118, %p119
    %s121 = ssub.s32 %s17, %s29
    %s122 = ssub.s32 %s18, %s25
    %s123 = sor.u32 %s121, %s122
    %p124 = scmp.eq.s32.totalorder %s123, 0
    %s126 = sadd.s32 %s125, 1
    %s127 = scalar_select %p124, %s125, %s126
    %p130 = pneg %p124
    %p131 = scmp.eq.s32.totalorder %s10, 1
    %p132 = por %p130, %p131
    %p133 = scmp.ne.s32.totalorder %s125, %s128
    %p134 = scmp.eq.s32.totalorder %s10, 0
    %p135 = por %p133, %p134
    %p136 = scmp.ne.s32.totalorder %s125, %s128
    %p137 = scmp.eq.s32.totalorder %s15, 1
    %p138 = por %p136, %p137
    %p139 = scmp.ne.s32.totalorder %s128, %s129
    %p140 = scmp.eq.s32.totalorder %s15, 0
    %p141 = por %p139, %p140
    %p142 = scmp.ne.s32.totalorder %s128, %s129
    %p143 = scmp.eq.s32.totalorder %s16, 1
    %p144 = por %p142, %p143
    %p146 = scmp.ne.s32.totalorder %s129, %s145
    %p147 = scmp.eq.s32.totalorder %s16, 0
    %p148 = por %p146, %p147
    %p149 = scmp.le.s32.totalorder 1, %s10
    %p150 = scmp.lt.s32.totalorder %s10, 3
    %p151 = pnand %p149, %p150
    %p152 = pneg %p151
    // Predicated region
    $region9: #{_lambda_.8} parent=5 // pred_check
      _
    $region10: #{_lambda_.8} parent=5 // pred_check_branch
      %154 = sbr.rel (%p151) target = $region12
    $region11: #{_lambda_.8} parent=5 // pred_region
      %s155 = ssub.s32 %s10, 1
      // Predicated region
      $region13: #{_lambda_.8} parent=11 // pred_check
        %p156 = pneg %p43
      $region14: #{_lambda_.8} parent=11 // pred_check_branch
        %158 = sbr.rel (%p156) target = $region16
      $region15: #{_lambda_.8} parent=11 // pred_region
        _
      $region16: #{_lambda_.8} parent=11 // pred_fallthru
        _
      // Predicated region
      $region17: #{_lambda_.8} parent=11 // pred_check
        %p159 = pneg %p92
      $region18: #{_lambda_.8} parent=11 // pred_check_branch
        %161 = sbr.rel (%p159) target = $region20
      $region19: #{_lambda_.8} parent=11 // pred_region
        _
      $region20: #{_lambda_.8} parent=11 // pred_fallthru
        _
      // Predicated region
      $region21: #{_lambda_.8} parent=11 // pred_check
        %p162 = pneg %p113
      $region22: #{_lambda_.8} parent=11 // pred_check_branch
        %164 = sbr.rel (%p162) target = $region24
      $region23: #{_lambda_.8} parent=11 // pred_region
        _
      $region24: #{_lambda_.8} parent=11 // pred_fallthru
        _
    $region12: #{_lambda_.8} parent=5 // pred_fallthru
      _
    %p165 = scmp.lt.s32.totalorder %s10, 2
    // Predicated region
    $region25: #{_lambda_.8} parent=5 // pred_check
      %p166 = pneg %p165
    $region26: #{_lambda_.8} parent=5 // pred_check_branch
      %168 = sbr.rel (%p166) target = $region28
    $region27: #{_lambda_.8} parent=5 // pred_region
      // Predicated region
      $region29: #{_lambda_.8} parent=27 // pred_check
        %p169 = pneg %p65
      $region30: #{_lambda_.8} parent=27 // pred_check_branch
        %171 = sbr.rel (%p169) target = $region32
      $region31: #{_lambda_.8} parent=27 // pred_region
        %p172 = scmp.lt.s32.totalorder %s17, 1
        %s173 = scalar_select %p172, %s17, 1
        %p174 = scmp.lt.s32.totalorder %s18, 0
        %s175 = scalar_select %p174, %s18, 0
        %s176 = smul.addr %s173, 256
        %s177 = sadd.s32 %s175, %s176
        %s178 = smul.addr %s177, 4
        %s179 = scalar_lea.vmem %s1, %s178
      $region32: #{_lambda_.8} parent=27 // pred_fallthru
        _
    $region28: #{_lambda_.8} parent=5 // pred_fallthru
      _
    %p180 = scmp.le.s32.totalorder 1, %s10
    %p181 = scmp.lt.s32.totalorder %s10, 3
    %p182 = pnand %p180, %p181
    %p183 = pneg %p182
    // Predicated region
    $region33: #{_lambda_.8} parent=5 // pred_check
      _
    $region34: #{_lambda_.8} parent=5 // pred_check_branch
      %185 = sbr.rel (%p182) target = $region36
    $region35: #{_lambda_.8} parent=5 // pred_region
      %s186 = ssub.s32 %s10, 1
      %p187 = pneg %p43
      %p188 = pneg %p40
      %p189 = scmp.lt.s32.totalorder %s19, 1
      %s190 = scalar_select %p189, %s19, 1
      %p191 = scmp.lt.s32.totalorder %s20, 0
      %s192 = scalar_select %p191, %s20, 0
      %s193 = smul.addr %s190, 256
      %s194 = sadd.s32 %s192, %s193
      %s195 = smul.addr %s194, 4
      %s196 = scalar_lea.vmem %s1, %s195
      %p197 = pneg %p71
      %p198 = pneg %p68
      %p199 = pneg %p92
      %p200 = pneg %p89
      %p201 = pneg %p113
      %p202 = pneg %p110
      %p203 = pneg %p141
      %p204 = pneg %p138
      %p205 = scmp.lt.s32.totalorder %s19, 1
      %s206 = scalar_select %p205, %s19, 1
      %p207 = scmp.lt.s32.totalorder %s20, 0
      %s208 = scalar_select %p207, %s20, 0
      %s209 = smul.addr %s206, 8
      %s210 = sadd.s32 %s208, %s209
      %s211 = smul.addr %s210, 4
      %s212 = scalar_lea.vmem %s4, %s211
      %p213 = scmp.lt.s32.totalorder %s19, 1
      %s214 = scalar_select %p213, %s19, 1
      %p215 = scmp.lt.s32.totalorder %s20, 0
      %s216 = scalar_select %p215, %s20, 0
      %s217 = smul.addr %s214, 256
      %s218 = sadd.s32 %s216, %s217
      %s219 = smul.addr %s218, 4
      %s220 = scalar_lea.vmem %s1, %s219
      %p221 = scmp.lt.s32.totalorder %s19, 1
      %s222 = scalar_select %p221, %s19, 1
      %p223 = scmp.lt.s32.totalorder %s20, 0
      %s224 = scalar_select %p223, %s20, 0
      %s225 = smul.addr %s222, 8
      %s226 = sadd.s32 %s224, %s225
      %s227 = smul.addr %s226, 4
      %s228 = scalar_lea.vmem %s4, %s227
      %v230 = vld [vmem:[%s0] sm:$0xff]
      %v231 = vld [vmem:[%s0 + $0x8] sm:$0xff]
      %v232 = vld [vmem:[%s0 + $0x10] sm:$0xff]
      %v233 = vld [vmem:[%s0 + $0x18] sm:$0xff]
      %v234 = vld [vmem:[%s0 + $0x20] sm:$0xff]
      %v235 = vld [vmem:[%s0 + $0x28] sm:$0xff]
      %v236 = vld [vmem:[%s0 + $0x30] sm:$0xff]
      %v237 = vld [vmem:[%s0 + $0x38] sm:$0xff]
      %v238 = vld [vmem:[%s0 + $0x40] sm:$0xff]
      %v239 = vld [vmem:[%s0 + $0x48] sm:$0xff]
      %v240 = vld [vmem:[%s0 + $0x50] sm:$0xff]
      %v241 = vld [vmem:[%s0 + $0x58] sm:$0xff]
      %v242 = vld [vmem:[%s0 + $0x60] sm:$0xff]
      %v243 = vld [vmem:[%s0 + $0x68] sm:$0xff]
      %v244 = vld [vmem:[%s0 + $0x70] sm:$0xff]
      %v245 = vld [vmem:[%s0 + $0x78] sm:$0xff]
      %v246 = vld [vmem:[%s0 + $0x80] sm:$0xff]
      %v247 = vld [vmem:[%s0 + $0x88] sm:$0xff]
      %v248 = vld [vmem:[%s0 + $0x90] sm:$0xff]
      %v249 = vld [vmem:[%s0 + $0x98] sm:$0xff]
      %v250 = vld [vmem:[%s0 + $0xa0] sm:$0xff]
      %v251 = vld [vmem:[%s0 + $0xa8] sm:$0xff]
      %v252 = vld [vmem:[%s0 + $0xb0] sm:$0xff]
      %v253 = vld [vmem:[%s0 + $0xb8] sm:$0xff]
      %v254 = vld [vmem:[%s0 + $0xc0] sm:$0xff]
      %v255 = vld [vmem:[%s0 + $0xc8] sm:$0xff]
      %v256 = vld [vmem:[%s0 + $0xd0] sm:$0xff]
      %v257 = vld [vmem:[%s0 + $0xd8] sm:$0xff]
      %v258 = vld [vmem:[%s0 + $0xe0] sm:$0xff]
      %v259 = vld [vmem:[%s0 + $0xe8] sm:$0xff]
      %v260 = vld [vmem:[%s0 + $0xf0] sm:$0xff]
      %v261 = vld [vmem:[%s0 + $0xf8] sm:$0xff]
      %v262 = vld [vmem:[%s0 + $0x100] sm:$0xff]
      %v263 = vld [vmem:[%s0 + $0x108] sm:$0xff]
      %v264 = vld [vmem:[%s0 + $0x110] sm:$0xff]
      %v265 = vld [vmem:[%s0 + $0x118] sm:$0xff]
      %v266 = vld [vmem:[%s0 + $0x120] sm:$0xff]
      %v267 = vld [vmem:[%s0 + $0x128] sm:$0xff]
      %v268 = vld [vmem:[%s0 + $0x130] sm:$0xff]
      %v269 = vld [vmem:[%s0 + $0x138] sm:$0xff]
      %v270 = vld [vmem:[%s0 + $0x140] sm:$0xff]
      %v271 = vld [vmem:[%s0 + $0x148] sm:$0xff]
      %v272 = vld [vmem:[%s0 + $0x150] sm:$0xff]
      %v273 = vld [vmem:[%s0 + $0x158] sm:$0xff]
      %v274 = vld [vmem:[%s0 + $0x160] sm:$0xff]
      %v275 = vld [vmem:[%s0 + $0x168] sm:$0xff]
      %v276 = vld [vmem:[%s0 + $0x170] sm:$0xff]
      %v277 = vld [vmem:[%s0 + $0x178] sm:$0xff]
      %v278 = vld [vmem:[%s0 + $0x180] sm:$0xff]
      %v279 = vld [vmem:[%s0 + $0x188] sm:$0xff]
      %v280 = vld [vmem:[%s0 + $0x190] sm:$0xff]
      %v281 = vld [vmem:[%s0 + $0x198] sm:$0xff]
      %v282 = vld [vmem:[%s0 + $0x1a0] sm:$0xff]
      %v283 = vld [vmem:[%s0 + $0x1a8] sm:$0xff]
      %v284 = vld [vmem:[%s0 + $0x1b0] sm:$0xff]
      %v285 = vld [vmem:[%s0 + $0x1b8] sm:$0xff]
      %v286 = vld [vmem:[%s0 + $0x1c0] sm:$0xff]
      %v287 = vld [vmem:[%s0 + $0x1c8] sm:$0xff]
      %v288 = vld [vmem:[%s0 + $0x1d0] sm:$0xff]
      %v289 = vld [vmem:[%s0 + $0x1d8] sm:$0xff]
      %v290 = vld [vmem:[%s0 + $0x1e0] sm:$0xff]
      %v291 = vld [vmem:[%s0 + $0x1e8] sm:$0xff]
      %v292 = vld [vmem:[%s0 + $0x1f0] sm:$0xff]
      %v293 = vld [vmem:[%s0 + $0x1f8] sm:$0xff]
      %v294 = vld [vmem:[%s220] sm:$0xf]
      %v295 = vld [vmem:[%s220 + $0x4] sm:$0xf]
      %v296 = vld [vmem:[%s220 + $0x8] sm:$0xf]
      %v297 = vld [vmem:[%s220 + $0xc] sm:$0xf]
      %v298 = vld [vmem:[%s220 + $0x10] sm:$0xf]
      %v299 = vld [vmem:[%s220 + $0x14] sm:$0xf]
      %v300 = vld [vmem:[%s220 + $0x18] sm:$0xf]
      %v301 = vld [vmem:[%s220 + $0x1c] sm:$0xf]
      %v302 = vld [vmem:[%s220 + $0x20] sm:$0xf]
      %v303 = vld [vmem:[%s220 + $0x24] sm:$0xf]
      %v304 = vld [vmem:[%s220 + $0x28] sm:$0xf]
      %v305 = vld [vmem:[%s220 + $0x2c] sm:$0xf]
      %v306 = vld [vmem:[%s220 + $0x30] sm:$0xf]
      %v307 = vld [vmem:[%s220 + $0x34] sm:$0xf]
      %v308 = vld [vmem:[%s220 + $0x38] sm:$0xf]
      %v309 = vld [vmem:[%s220 + $0x3c] sm:$0xf]
      %v310 = vld [vmem:[%s220 + $0x40] sm:$0xf]
      %v311 = vld [vmem:[%s220 + $0x44] sm:$0xf]
      %v312 = vld [vmem:[%s220 + $0x48] sm:$0xf]
      %v313 = vld [vmem:[%s220 + $0x4c] sm:$0xf]
      %v314 = vld [vmem:[%s220 + $0x50] sm:$0xf]
      %v315 = vld [vmem:[%s220 + $0x54] sm:$0xf]
      %v316 = vld [vmem:[%s220 + $0x58] sm:$0xf]
      %v317 = vld [vmem:[%s220 + $0x5c] sm:$0xf]
      %v318 = vld [vmem:[%s220 + $0x60] sm:$0xf]
      %v319 = vld [vmem:[%s220 + $0x64] sm:$0xf]
      %v320 = vld [vmem:[%s220 + $0x68] sm:$0xf]
      %v321 = vld [vmem:[%s220 + $0x6c] sm:$0xf]
      %v322 = vld [vmem:[%s220 + $0x70] sm:$0xf]
      %v323 = vld [vmem:[%s220 + $0x74] sm:$0xf]
      %v324 = vld [vmem:[%s220 + $0x78] sm:$0xf]
      %v325 = vld [vmem:[%s220 + $0x7c] sm:$0xf]
      %v326 = vld [vmem:[%s220 + $0x80] sm:$0xf]
      %v327 = vld [vmem:[%s220 + $0x84] sm:$0xf]
      %v328 = vld [vmem:[%s220 + $0x88] sm:$0xf]
      %v329 = vld [vmem:[%s220 + $0x8c] sm:$0xf]
      %v330 = vld [vmem:[%s220 + $0x90] sm:$0xf]
      %v331 = vld [vmem:[%s220 + $0x94] sm:$0xf]
      %v332 = vld [vmem:[%s220 + $0x98] sm:$0xf]
      %v333 = vld [vmem:[%s220 + $0x9c] sm:$0xf]
      %v334 = vld [vmem:[%s220 + $0xa0] sm:$0xf]
      %v335 = vld [vmem:[%s220 + $0xa4] sm:$0xf]
      %v336 = vld [vmem:[%s220 + $0xa8] sm:$0xf]
      %v337 = vld [vmem:[%s220 + $0xac] sm:$0xf]
      %v338 = vld [vmem:[%s220 + $0xb0] sm:$0xf]
      %v339 = vld [vmem:[%s220 + $0xb4] sm:$0xf]
      %v340 = vld [vmem:[%s220 + $0xb8] sm:$0xf]
      %v341 = vld [vmem:[%s220 + $0xbc] sm:$0xf]
      %v342 = vld [vmem:[%s220 + $0xc0] sm:$0xf]
      %v343 = vld [vmem:[%s220 + $0xc4] sm:$0xf]
      %v344 = vld [vmem:[%s220 + $0xc8] sm:$0xf]
      %v345 = vld [vmem:[%s220 + $0xcc] sm:$0xf]
      %v346 = vld [vmem:[%s220 + $0xd0] sm:$0xf]
      %v347 = vld [vmem:[%s220 + $0xd4] sm:$0xf]
      %v348 = vld [vmem:[%s220 + $0xd8] sm:$0xf]
      %v349 = vld [vmem:[%s220 + $0xdc] sm:$0xf]
      %v350 = vld [vmem:[%s220 + $0xe0] sm:$0xf]
      %v351 = vld [vmem:[%s220 + $0xe4] sm:$0xf]
      %v352 = vld [vmem:[%s220 + $0xe8] sm:$0xf]
      %v353 = vld [vmem:[%s220 + $0xec] sm:$0xf]
      %v354 = vld [vmem:[%s220 + $0xf0] sm:$0xf]
      %v355 = vld [vmem:[%s220 + $0xf4] sm:$0xf]
      %v356 = vld [vmem:[%s220 + $0xf8] sm:$0xf]
      %v357 = vld [vmem:[%s220 + $0xfc] sm:$0xf]
      %v358 = vld [vmem:[%s220 + $0x100] sm:$0xf]
      %v359 = vld [vmem:[%s220 + $0x104] sm:$0xf]
      %v360 = vld [vmem:[%s220 + $0x108] sm:$0xf]
      %v361 = vld [vmem:[%s220 + $0x10c] sm:$0xf]
      %v362 = vld [vmem:[%s220 + $0x110] sm:$0xf]
      %v363 = vld [vmem:[%s220 + $0x114] sm:$0xf]
      %v364 = vld [vmem:[%s220 + $0x118] sm:$0xf]
      %v365 = vld [vmem:[%s220 + $0x11c] sm:$0xf]
      %v366 = vld [vmem:[%s220 + $0x120] sm:$0xf]
      %v367 = vld [vmem:[%s220 + $0x124] sm:$0xf]
      %v368 = vld [vmem:[%s220 + $0x128] sm:$0xf]
      %v369 = vld [vmem:[%s220 + $0x12c] sm:$0xf]
      %v370 = vld [vmem:[%s220 + $0x130] sm:$0xf]
      %v371 = vld [vmem:[%s220 + $0x134] sm:$0xf]
      %v372 = vld [vmem:[%s220 + $0x138] sm:$0xf]
      %v373 = vld [vmem:[%s220 + $0x13c] sm:$0xf]
      %v374 = vld [vmem:[%s220 + $0x140] sm:$0xf]
      %v375 = vld [vmem:[%s220 + $0x144] sm:$0xf]
      %v376 = vld [vmem:[%s220 + $0x148] sm:$0xf]
      %v377 = vld [vmem:[%s220 + $0x14c] sm:$0xf]
      %v378 = vld [vmem:[%s220 + $0x150] sm:$0xf]
      %v379 = vld [vmem:[%s220 + $0x154] sm:$0xf]
      %v380 = vld [vmem:[%s220 + $0x158] sm:$0xf]
      %v381 = vld [vmem:[%s220 + $0x15c] sm:$0xf]
      %v382 = vld [vmem:[%s220 + $0x160] sm:$0xf]
      %v383 = vld [vmem:[%s220 + $0x164] sm:$0xf]
      %v384 = vld [vmem:[%s220 + $0x168] sm:$0xf]
      %v385 = vld [vmem:[%s220 + $0x16c] sm:$0xf]
      %v386 = vld [vmem:[%s220 + $0x170] sm:$0xf]
      %v387 = vld [vmem:[%s220 + $0x174] sm:$0xf]
      %v388 = vld [vmem:[%s220 + $0x178] sm:$0xf]
      %v389 = vld [vmem:[%s220 + $0x17c] sm:$0xf]
      %v390 = vld [vmem:[%s220 + $0x180] sm:$0xf]
      %v391 = vld [vmem:[%s220 + $0x184] sm:$0xf]
      %v392 = vld [vmem:[%s220 + $0x188] sm:$0xf]
      %v393 = vld [vmem:[%s220 + $0x18c] sm:$0xf]
      %v394 = vld [vmem:[%s220 + $0x190] sm:$0xf]
      %v395 = vld [vmem:[%s220 + $0x194] sm:$0xf]
      %v396 = vld [vmem:[%s220 + $0x198] sm:$0xf]
      %v397 = vld [vmem:[%s220 + $0x19c] sm:$0xf]
      %v398 = vld [vmem:[%s220 + $0x1a0] sm:$0xf]
      %v399 = vld [vmem:[%s220 + $0x1a4] sm:$0xf]
      %v400 = vld [vmem:[%s220 + $0x1a8] sm:$0xf]
      %v401 = vld [vmem:[%s220 + $0x1ac] sm:$0xf]
      %v402 = vld [vmem:[%s220 + $0x1b0] sm:$0xf]
      %v403 = vld [vmem:[%s220 + $0x1b4] sm:$0xf]
      %v404 = vld [vmem:[%s220 + $0x1b8] sm:$0xf]
      %v405 = vld [vmem:[%s220 + $0x1bc] sm:$0xf]
      %v406 = vld [vmem:[%s220 + $0x1c0] sm:$0xf]
      %v407 = vld [vmem:[%s220 + $0x1c4] sm:$0xf]
      %v408 = vld [vmem:[%s220 + $0x1c8] sm:$0xf]
      %v409 = vld [vmem:[%s220 + $0x1cc] sm:$0xf]
      %v410 = vld [vmem:[%s220 + $0x1d0] sm:$0xf]
      %v411 = vld [vmem:[%s220 + $0x1d4] sm:$0xf]
      %v412 = vld [vmem:[%s220 + $0x1d8] sm:$0xf]
      %v413 = vld [vmem:[%s220 + $0x1dc] sm:$0xf]
      %v414 = vld [vmem:[%s220 + $0x1e0] sm:$0xf]
      %v415 = vld [vmem:[%s220 + $0x1e4] sm:$0xf]
      %v416 = vld [vmem:[%s220 + $0x1e8] sm:$0xf]
      %v417 = vld [vmem:[%s220 + $0x1ec] sm:$0xf]
      %v418 = vld [vmem:[%s220 + $0x1f0] sm:$0xf]
      %v419 = vld [vmem:[%s220 + $0x1f4] sm:$0xf]
      %v420 = vld [vmem:[%s220 + $0x1f8] sm:$0xf]
      %v421 = vld [vmem:[%s220 + $0x1fc] sm:$0xf]
      %v422 = vld [vmem:[%s220 + $0x200] sm:$0xf]
      %v423 = vld [vmem:[%s220 + $0x204] sm:$0xf]
      %v424 = vld [vmem:[%s220 + $0x208] sm:$0xf]
      %v425 = vld [vmem:[%s220 + $0x20c] sm:$0xf]
      %v426 = vld [vmem:[%s220 + $0x210] sm:$0xf]
      %v427 = vld [vmem:[%s220 + $0x214] sm:$0xf]
      %v428 = vld [vmem:[%s220 + $0x218] sm:$0xf]
      %v429 = vld [vmem:[%s220 + $0x21c] sm:$0xf]
      %v430 = vld [vmem:[%s220 + $0x220] sm:$0xf]
      %v431 = vld [vmem:[%s220 + $0x224] sm:$0xf]
      %v432 = vld [vmem:[%s220 + $0x228] sm:$0xf]
      %v433 = vld [vmem:[%s220 + $0x22c] sm:$0xf]
      %v434 = vld [vmem:[%s220 + $0x230] sm:$0xf]
      %v435 = vld [vmem:[%s220 + $0x234] sm:$0xf]
      %v436 = vld [vmem:[%s220 + $0x238] sm:$0xf]
      %v437 = vld [vmem:[%s220 + $0x23c] sm:$0xf]
      %v438 = vld [vmem:[%s220 + $0x240] sm:$0xf]
      %v439 = vld [vmem:[%s220 + $0x244] sm:$0xf]
      %v440 = vld [vmem:[%s220 + $0x248] sm:$0xf]
      %v441 = vld [vmem:[%s220 + $0x24c] sm:$0xf]
      %v442 = vld [vmem:[%s220 + $0x250] sm:$0xf]
      %v443 = vld [vmem:[%s220 + $0x254] sm:$0xf]
      %v444 = vld [vmem:[%s220 + $0x258] sm:$0xf]
      %v445 = vld [vmem:[%s220 + $0x25c] sm:$0xf]
      %v446 = vld [vmem:[%s220 + $0x260] sm:$0xf]
      %v447 = vld [vmem:[%s220 + $0x264] sm:$0xf]
      %v448 = vld [vmem:[%s220 + $0x268] sm:$0xf]
      %v449 = vld [vmem:[%s220 + $0x26c] sm:$0xf]
      %v450 = vld [vmem:[%s220 + $0x270] sm:$0xf]
      %v451 = vld [vmem:[%s220 + $0x274] sm:$0xf]
      %v452 = vld [vmem:[%s220 + $0x278] sm:$0xf]
      %v453 = vld [vmem:[%s220 + $0x27c] sm:$0xf]
      %v454 = vld [vmem:[%s220 + $0x280] sm:$0xf]
      %v455 = vld [vmem:[%s220 + $0x284] sm:$0xf]
      %v456 = vld [vmem:[%s220 + $0x288] sm:$0xf]
      %v457 = vld [vmem:[%s220 + $0x28c] sm:$0xf]
      %v458 = vld [vmem:[%s220 + $0x290] sm:$0xf]
      %v459 = vld [vmem:[%s220 + $0x294] sm:$0xf]
      %v460 = vld [vmem:[%s220 + $0x298] sm:$0xf]
      %v461 = vld [vmem:[%s220 + $0x29c] sm:$0xf]
      %v462 = vld [vmem:[%s220 + $0x2a0] sm:$0xf]
      %v463 = vld [vmem:[%s220 + $0x2a4] sm:$0xf]
      %v464 = vld [vmem:[%s220 + $0x2a8] sm:$0xf]
      %v465 = vld [vmem:[%s220 + $0x2ac] sm:$0xf]
      %v466 = vld [vmem:[%s220 + $0x2b0] sm:$0xf]
      %v467 = vld [vmem:[%s220 + $0x2b4] sm:$0xf]
      %v468 = vld [vmem:[%s220 + $0x2b8] sm:$0xf]
      %v469 = vld [vmem:[%s220 + $0x2bc] sm:$0xf]
      %v470 = vld [vmem:[%s220 + $0x2c0] sm:$0xf]
      %v471 = vld [vmem:[%s220 + $0x2c4] sm:$0xf]
      %v472 = vld [vmem:[%s220 + $0x2c8] sm:$0xf]
      %v473 = vld [vmem:[%s220 + $0x2cc] sm:$0xf]
      %v474 = vld [vmem:[%s220 + $0x2d0] sm:$0xf]
      %v475 = vld [vmem:[%s220 + $0x2d4] sm:$0xf]
      %v476 = vld [vmem:[%s220 + $0x2d8] sm:$0xf]
      %v477 = vld [vmem:[%s220 + $0x2dc] sm:$0xf]
      %v478 = vld [vmem:[%s220 + $0x2e0] sm:$0xf]
      %v479 = vld [vmem:[%s220 + $0x2e4] sm:$0xf]
      %v480 = vld [vmem:[%s220 + $0x2e8] sm:$0xf]
      %v481 = vld [vmem:[%s220 + $0x2ec] sm:$0xf]
      %v482 = vld [vmem:[%s220 + $0x2f0] sm:$0xf]
      %v483 = vld [vmem:[%s220 + $0x2f4] sm:$0xf]
      %v484 = vld [vmem:[%s220 + $0x2f8] sm:$0xf]
      %v485 = vld [vmem:[%s220 + $0x2fc] sm:$0xf]
      %v486 = vld [vmem:[%s220 + $0x300] sm:$0xf]
      %v487 = vld [vmem:[%s220 + $0x304] sm:$0xf]
      %v488 = vld [vmem:[%s220 + $0x308] sm:$0xf]
      %v489 = vld [vmem:[%s220 + $0x30c] sm:$0xf]
      %v490 = vld [vmem:[%s220 + $0x310] sm:$0xf]
      %v491 = vld [vmem:[%s220 + $0x314] sm:$0xf]
      %v492 = vld [vmem:[%s220 + $0x318] sm:$0xf]
      %v493 = vld [vmem:[%s220 + $0x31c] sm:$0xf]
      %v494 = vld [vmem:[%s220 + $0x320] sm:$0xf]
      %v495 = vld [vmem:[%s220 + $0x324] sm:$0xf]
      %v496 = vld [vmem:[%s220 + $0x328] sm:$0xf]
      %v497 = vld [vmem:[%s220 + $0x32c] sm:$0xf]
      %v498 = vld [vmem:[%s220 + $0x330] sm:$0xf]
      %v499 = vld [vmem:[%s220 + $0x334] sm:$0xf]
      %v500 = vld [vmem:[%s220 + $0x338] sm:$0xf]
      %v501 = vld [vmem:[%s220 + $0x33c] sm:$0xf]
      %v502 = vld [vmem:[%s220 + $0x340] sm:$0xf]
      %v503 = vld [vmem:[%s220 + $0x344] sm:$0xf]
      %v504 = vld [vmem:[%s220 + $0x348] sm:$0xf]
      %v505 = vld [vmem:[%s220 + $0x34c] sm:$0xf]
      %v506 = vld [vmem:[%s220 + $0x350] sm:$0xf]
      %v507 = vld [vmem:[%s220 + $0x354] sm:$0xf]
      %v508 = vld [vmem:[%s220 + $0x358] sm:$0xf]
      %v509 = vld [vmem:[%s220 + $0x35c] sm:$0xf]
      %v510 = vld [vmem:[%s220 + $0x360] sm:$0xf]
      %v511 = vld [vmem:[%s220 + $0x364] sm:$0xf]
      %v512 = vld [vmem:[%s220 + $0x368] sm:$0xf]
      %v513 = vld [vmem:[%s220 + $0x36c] sm:$0xf]
      %v514 = vld [vmem:[%s220 + $0x370] sm:$0xf]
      %v515 = vld [vmem:[%s220 + $0x374] sm:$0xf]
      %v516 = vld [vmem:[%s220 + $0x378] sm:$0xf]
      %v517 = vld [vmem:[%s220 + $0x37c] sm:$0xf]
      %v518 = vld [vmem:[%s220 + $0x380] sm:$0xf]
      %v519 = vld [vmem:[%s220 + $0x384] sm:$0xf]
      %v520 = vld [vmem:[%s220 + $0x388] sm:$0xf]
      %v521 = vld [vmem:[%s220 + $0x38c] sm:$0xf]
      %v522 = vld [vmem:[%s220 + $0x390] sm:$0xf]
      %v523 = vld [vmem:[%s220 + $0x394] sm:$0xf]
      %v524 = vld [vmem:[%s220 + $0x398] sm:$0xf]
      %v525 = vld [vmem:[%s220 + $0x39c] sm:$0xf]
      %v526 = vld [vmem:[%s220 + $0x3a0] sm:$0xf]
      %v527 = vld [vmem:[%s220 + $0x3a4] sm:$0xf]
      %v528 = vld [vmem:[%s220 + $0x3a8] sm:$0xf]
      %v529 = vld [vmem:[%s220 + $0x3ac] sm:$0xf]
      %v530 = vld [vmem:[%s220 + $0x3b0] sm:$0xf]
      %v531 = vld [vmem:[%s220 + $0x3b4] sm:$0xf]
      %v532 = vld [vmem:[%s220 + $0x3b8] sm:$0xf]
      %v533 = vld [vmem:[%s220 + $0x3bc] sm:$0xf]
      %v534 = vld [vmem:[%s220 + $0x3c0] sm:$0xf]
      %v535 = vld [vmem:[%s220 + $0x3c4] sm:$0xf]
      %v536 = vld [vmem:[%s220 + $0x3c8] sm:$0xf]
      %v537 = vld [vmem:[%s220 + $0x3cc] sm:$0xf]
      %v538 = vld [vmem:[%s220 + $0x3d0] sm:$0xf]
      %v539 = vld [vmem:[%s220 + $0x3d4] sm:$0xf]
      %v540 = vld [vmem:[%s220 + $0x3d8] sm:$0xf]
      %v541 = vld [vmem:[%s220 + $0x3dc] sm:$0xf]
      %v542 = vld [vmem:[%s220 + $0x3e0] sm:$0xf]
      %v543 = vld [vmem:[%s220 + $0x3e4] sm:$0xf]
      %v544 = vld [vmem:[%s220 + $0x3e8] sm:$0xf]
      %v545 = vld [vmem:[%s220 + $0x3ec] sm:$0xf]
      %v546 = vld [vmem:[%s220 + $0x3f0] sm:$0xf]
      %v547 = vld [vmem:[%s220 + $0x3f4] sm:$0xf]
      %v548 = vld [vmem:[%s220 + $0x3f8] sm:$0xf]
      %v549 = vld [vmem:[%s220 + $0x3fc] sm:$0xf]
      %v614 = vunpack.c.l.b16 %v230
      %v615 = vunpack.c.h.b16 %v230
      %v616 = vunpack.c.l.b16 %v231
      %v617 = vunpack.c.h.b16 %v231
      %v618 = vunpack.c.l.b16 %v232
      %v619 = vunpack.c.h.b16 %v232
      %v620 = vunpack.c.l.b16 %v233
      %v621 = vunpack.c.h.b16 %v233
      %v622 = vunpack.c.l.b16 %v234
      %v623 = vunpack.c.h.b16 %v234
      %v624 = vunpack.c.l.b16 %v235
      %v625 = vunpack.c.h.b16 %v235
      %v626 = vunpack.c.l.b16 %v236
      %v627 = vunpack.c.h.b16 %v236
      %v628 = vunpack.c.l.b16 %v237
      %v629 = vunpack.c.h.b16 %v237
      %v630 = vunpack.c.l.b16 %v238
      %v631 = vunpack.c.h.b16 %v238
      %v632 = vunpack.c.l.b16 %v239
      %v633 = vunpack.c.h.b16 %v239
      %v634 = vunpack.c.l.b16 %v240
      %v635 = vunpack.c.h.b16 %v240
      %v636 = vunpack.c.l.b16 %v241
      %v637 = vunpack.c.h.b16 %v241
      %v638 = vunpack.c.l.b16 %v242
      %v639 = vunpack.c.h.b16 %v242
      %v640 = vunpack.c.l.b16 %v243
      %v641 = vunpack.c.h.b16 %v243
      %v642 = vunpack.c.l.b16 %v244
      %v643 = vunpack.c.h.b16 %v244
      %v644 = vunpack.c.l.b16 %v245
      %v645 = vunpack.c.h.b16 %v245
      %v646 = vunpack.c.l.b16 %v246
      %v647 = vunpack.c.h.b16 %v246
      %v648 = vunpack.c.l.b16 %v247
      %v649 = vunpack.c.h.b16 %v247
      %v650 = vunpack.c.l.b16 %v248
      %v651 = vunpack.c.h.b16 %v248
      %v652 = vunpack.c.l.b16 %v249
      %v653 = vunpack.c.h.b16 %v249
      %v654 = vunpack.c.l.b16 %v250
      %v655 = vunpack.c.h.b16 %v250
      %v656 = vunpack.c.l.b16 %v251
      %v657 = vunpack.c.h.b16 %v251
      %v658 = vunpack.c.l.b16 %v252
      %v659 = vunpack.c.h.b16 %v252
      %v660 = vunpack.c.l.b16 %v253
      %v661 = vunpack.c.h.b16 %v253
      %v662 = vunpack.c.l.b16 %v254
      %v663 = vunpack.c.h.b16 %v254
      %v664 = vunpack.c.l.b16 %v255
      %v665 = vunpack.c.h.b16 %v255
      %v666 = vunpack.c.l.b16 %v256
      %v667 = vunpack.c.h.b16 %v256
      %v668 = vunpack.c.l.b16 %v257
      %v669 = vunpack.c.h.b16 %v257
      %v670 = vunpack.c.l.b16 %v258
      %v671 = vunpack.c.h.b16 %v258
      %v672 = vunpack.c.l.b16 %v259
      %v673 = vunpack.c.h.b16 %v259
      %v674 = vunpack.c.l.b16 %v260
      %v675 = vunpack.c.h.b16 %v260
      %v676 = vunpack.c.l.b16 %v261
      %v677 = vunpack.c.h.b16 %v261
      %v678 = vunpack.c.l.b16 %v262
      %v679 = vunpack.c.h.b16 %v262
      %v680 = vunpack.c.l.b16 %v263
      %v681 = vunpack.c.h.b16 %v263
      %v682 = vunpack.c.l.b16 %v264
      %v683 = vunpack.c.h.b16 %v264
      %v684 = vunpack.c.l.b16 %v265
      %v685 = vunpack.c.h.b16 %v265
      %v686 = vunpack.c.l.b16 %v266
      %v687 = vunpack.c.h.b16 %v266
      %v688 = vunpack.c.l.b16 %v267
      %v689 = vunpack.c.h.b16 %v267
      %v690 = vunpack.c.l.b16 %v268
      %v691 = vunpack.c.h.b16 %v268
      %v692 = vunpack.c.l.b16 %v269
      %v693 = vunpack.c.h.b16 %v269
      %v694 = vunpack.c.l.b16 %v270
      %v695 = vunpack.c.h.b16 %v270
      %v696 = vunpack.c.l.b16 %v271
      %v697 = vunpack.c.h.b16 %v271
      %v698 = vunpack.c.l.b16 %v272
      %v699 = vunpack.c.h.b16 %v272
      %v700 = vunpack.c.l.b16 %v273
      %v701 = vunpack.c.h.b16 %v273
      %v702 = vunpack.c.l.b16 %v274
      %v703 = vunpack.c.h.b16 %v274
      %v704 = vunpack.c.l.b16 %v275
      %v705 = vunpack.c.h.b16 %v275
      %v706 = vunpack.c.l.b16 %v276
      %v707 = vunpack.c.h.b16 %v276
      %v708 = vunpack.c.l.b16 %v277
      %v709 = vunpack.c.h.b16 %v277
      %v710 = vunpack.c.l.b16 %v278
      %v711 = vunpack.c.h.b16 %v278
      %v712 = vunpack.c.l.b16 %v279
      %v713 = vunpack.c.h.b16 %v279
      %v714 = vunpack.c.l.b16 %v280
      %v715 = vunpack.c.h.b16 %v280
      %v716 = vunpack.c.l.b16 %v281
      %v717 = vunpack.c.h.b16 %v281
      %v718 = vunpack.c.l.b16 %v282
      %v719 = vunpack.c.h.b16 %v282
      %v720 = vunpack.c.l.b16 %v283
      %v721 = vunpack.c.h.b16 %v283
      %v722 = vunpack.c.l.b16 %v284
      %v723 = vunpack.c.h.b16 %v284
      %v724 = vunpack.c.l.b16 %v285
      %v725 = vunpack.c.h.b16 %v285
      %v726 = vunpack.c.l.b16 %v286
      %v727 = vunpack.c.h.b16 %v286
      %v728 = vunpack.c.l.b16 %v287
      %v729 = vunpack.c.h.b16 %v287
      %v730 = vunpack.c.l.b16 %v288
      %v731 = vunpack.c.h.b16 %v288
      %v732 = vunpack.c.l.b16 %v289
      %v733 = vunpack.c.h.b16 %v289
      %v734 = vunpack.c.l.b16 %v290
      %v735 = vunpack.c.h.b16 %v290
      %v736 = vunpack.c.l.b16 %v291
      %v737 = vunpack.c.h.b16 %v291
      %v738 = vunpack.c.l.b16 %v292
      %v739 = vunpack.c.h.b16 %v292
      %v740 = vunpack.c.l.b16 %v293
      %v741 = vunpack.c.h.b16 %v293
      %v742 = vpack.c.b16 %v630, %v614
      %v743 = vpack.c.b16 %v631, %v615
      %v744 = vpack.c.b16 %v632, %v616
      %v745 = vpack.c.b16 %v633, %v617
      %v746 = vpack.c.b16 %v634, %v618
      %v747 = vpack.c.b16 %v635, %v619
      %v748 = vpack.c.b16 %v636, %v620
      %v749 = vpack.c.b16 %v637, %v621
      %v750 = vpack.c.b16 %v638, %v622
      %v751 = vpack.c.b16 %v639, %v623
      %v752 = vpack.c.b16 %v640, %v624
      %v753 = vpack.c.b16 %v641, %v625
      %v754 = vpack.c.b16 %v642, %v626
      %v755 = vpack.c.b16 %v643, %v627
      %v756 = vpack.c.b16 %v644, %v628
      %v757 = vpack.c.b16 %v645, %v629
      %v758 = vpack.c.b16 %v662, %v646
      %v759 = vpack.c.b16 %v663, %v647
      %v760 = vpack.c.b16 %v664, %v648
      %v761 = vpack.c.b16 %v665, %v649
      %v762 = vpack.c.b16 %v666, %v650
      %v763 = vpack.c.b16 %v667, %v651
      %v764 = vpack.c.b16 %v668, %v652
      %v765 = vpack.c.b16 %v669, %v653
      %v766 = vpack.c.b16 %v670, %v654
      %v767 = vpack.c.b16 %v671, %v655
      %v768 = vpack.c.b16 %v672, %v656
      %v769 = vpack.c.b16 %v673, %v657
      %v770 = vpack.c.b16 %v674, %v658
      %v771 = vpack.c.b16 %v675, %v659
      %v772 = vpack.c.b16 %v676, %v660
      %v773 = vpack.c.b16 %v677, %v661
      %v774 = vpack.c.b16 %v694, %v678
      %v775 = vpack.c.b16 %v695, %v679
      %v776 = vpack.c.b16 %v696, %v680
      %v777 = vpack.c.b16 %v697, %v681
      %v778 = vpack.c.b16 %v698, %v682
      %v779 = vpack.c.b16 %v699, %v683
      %v780 = vpack.c.b16 %v700, %v684
      %v781 = vpack.c.b16 %v701, %v685
      %v782 = vpack.c.b16 %v702, %v686
      %v783 = vpack.c.b16 %v703, %v687
      %v784 = vpack.c.b16 %v704, %v688
      %v785 = vpack.c.b16 %v705, %v689
      %v786 = vpack.c.b16 %v706, %v690
      %v787 = vpack.c.b16 %v707, %v691
      %v788 = vpack.c.b16 %v708, %v692
      %v789 = vpack.c.b16 %v709, %v693
      %v790 = vpack.c.b16 %v726, %v710
      %v791 = vpack.c.b16 %v727, %v711
      %v792 = vpack.c.b16 %v728, %v712
      %v793 = vpack.c.b16 %v729, %v713
      %v794 = vpack.c.b16 %v730, %v714
      %v795 = vpack.c.b16 %v731, %v715
      %v796 = vpack.c.b16 %v732, %v716
      %v797 = vpack.c.b16 %v733, %v717
      %v798 = vpack.c.b16 %v734, %v718
      %v799 = vpack.c.b16 %v735, %v719
      %v800 = vpack.c.b16 %v736, %v720
      %v801 = vpack.c.b16 %v737, %v721
      %v802 = vpack.c.b16 %v738, %v722
      %v803 = vpack.c.b16 %v739, %v723
      %v804 = vpack.c.b16 %v740, %v724
      %v805 = vpack.c.b16 %v741, %v725
      %v1126 = vunpack.c.l.b16 %v294
      %v1127 = vunpack.c.l.b16 %v295
      %v1128 = vunpack.c.l.b16 %v296
      %v1129 = vunpack.c.l.b16 %v297
      %v1130 = vunpack.c.l.b16 %v298
      %v1131 = vunpack.c.l.b16 %v299
      %v1132 = vunpack.c.l.b16 %v300
      %v1133 = vunpack.c.l.b16 %v301
      %v1134 = vunpack.c.l.b16 %v302
      %v1135 = vunpack.c.l.b16 %v303
      %v1136 = vunpack.c.l.b16 %v304
      %v1137 = vunpack.c.l.b16 %v305
      %v1138 = vunpack.c.l.b16 %v306
      %v1139 = vunpack.c.l.b16 %v307
      %v1140 = vunpack.c.l.b16 %v308
      %v1141 = vunpack.c.l.b16 %v309
      %v1142 = vunpack.c.l.b16 %v310
      %v1143 = vunpack.c.l.b16 %v311
      %v1144 = vunpack.c.l.b16 %v312
      %v1145 = vunpack.c.l.b16 %v313
      %v1146 = vunpack.c.l.b16 %v314
      %v1147 = vunpack.c.l.b16 %v315
      %v1148 = vunpack.c.l.b16 %v316
      %v1149 = vunpack.c.l.b16 %v317
      %v1150 = vunpack.c.l.b16 %v318
      %v1151 = vunpack.c.l.b16 %v319
      %v1152 = vunpack.c.l.b16 %v320
      %v1153 = vunpack.c.l.b16 %v321
      %v1154 = vunpack.c.l.b16 %v322
      %v1155 = vunpack.c.l.b16 %v323
      %v1156 = vunpack.c.l.b16 %v324
      %v1157 = vunpack.c.l.b16 %v325
      %v1158 = vunpack.c.l.b16 %v326
      %v1159 = vunpack.c.l.b16 %v327
      %v1160 = vunpack.c.l.b16 %v328
      %v1161 = vunpack.c.l.b16 %v329
      %v1162 = vunpack.c.l.b16 %v330
      %v1163 = vunpack.c.l.b16 %v331
      %v1164 = vunpack.c.l.b16 %v332
      %v1165 = vunpack.c.l.b16 %v333
      %v1166 = vunpack.c.l.b16 %v334
      %v1167 = vunpack.c.l.b16 %v335
      %v1168 = vunpack.c.l.b16 %v336
      %v1169 = vunpack.c.l.b16 %v337
      %v1170 = vunpack.c.l.b16 %v338
      %v1171 = vunpack.c.l.b16 %v339
      %v1172 = vunpack.c.l.b16 %v340
      %v1173 = vunpack.c.l.b16 %v341
      %v1174 = vunpack.c.l.b16 %v342
      %v1175 = vunpack.c.l.b16 %v343
      %v1176 = vunpack.c.l.b16 %v344
      %v1177 = vunpack.c.l.b16 %v345
      %v1178 = vunpack.c.l.b16 %v346
      %v1179 = vunpack.c.l.b16 %v347
      %v1180 = vunpack.c.l.b16 %v348
      %v1181 = vunpack.c.l.b16 %v349
      %v1182 = vunpack.c.l.b16 %v350
      %v1183 = vunpack.c.l.b16 %v351
      %v1184 = vunpack.c.l.b16 %v352
      %v1185 = vunpack.c.l.b16 %v353
      %v1186 = vunpack.c.l.b16 %v354
      %v1187 = vunpack.c.l.b16 %v355
      %v1188 = vunpack.c.l.b16 %v356
      %v1189 = vunpack.c.l.b16 %v357
      %v1190 = vunpack.c.l.b16 %v358
      %v1191 = vunpack.c.l.b16 %v359
      %v1192 = vunpack.c.l.b16 %v360
      %v1193 = vunpack.c.l.b16 %v361
      %v1194 = vunpack.c.l.b16 %v362
      %v1195 = vunpack.c.l.b16 %v363
      %v1196 = vunpack.c.l.b16 %v364
      %v1197 = vunpack.c.l.b16 %v365
      %v1198 = vunpack.c.l.b16 %v366
      %v1199 = vunpack.c.l.b16 %v367
      %v1200 = vunpack.c.l.b16 %v368
      %v1201 = vunpack.c.l.b16 %v369
      %v1202 = vunpack.c.l.b16 %v370
      %v1203 = vunpack.c.l.b16 %v371
      %v1204 = vunpack.c.l.b16 %v372
      %v1205 = vunpack.c.l.b16 %v373
      %v1206 = vunpack.c.l.b16 %v374
      %v1207 = vunpack.c.l.b16 %v375
      %v1208 = vunpack.c.l.b16 %v376
      %v1209 = vunpack.c.l.b16 %v377
      %v1210 = vunpack.c.l.b16 %v378
      %v1211 = vunpack.c.l.b16 %v379
      %v1212 = vunpack.c.l.b16 %v380
      %v1213 = vunpack.c.l.b16 %v381
      %v1214 = vunpack.c.l.b16 %v382
      %v1215 = vunpack.c.l.b16 %v383
      %v1216 = vunpack.c.l.b16 %v384
      %v1217 = vunpack.c.l.b16 %v385
      %v1218 = vunpack.c.l.b16 %v386
      %v1219 = vunpack.c.l.b16 %v387
      %v1220 = vunpack.c.l.b16 %v388
      %v1221 = vunpack.c.l.b16 %v389
      %v1222 = vunpack.c.l.b16 %v390
      %v1223 = vunpack.c.l.b16 %v391
      %v1224 = vunpack.c.l.b16 %v392
      %v1225 = vunpack.c.l.b16 %v393
      %v1226 = vunpack.c.l.b16 %v394
      %v1227 = vunpack.c.l.b16 %v395
      %v1228 = vunpack.c.l.b16 %v396
      %v1229 = vunpack.c.l.b16 %v397
      %v1230 = vunpack.c.l.b16 %v398
      %v1231 = vunpack.c.l.b16 %v399
      %v1232 = vunpack.c.l.b16 %v400
      %v1233 = vunpack.c.l.b16 %v401
      %v1234 = vunpack.c.l.b16 %v402
      %v1235 = vunpack.c.l.b16 %v403
      %v1236 = vunpack.c.l.b16 %v404
      %v1237 = vunpack.c.l.b16 %v405
      %v1238 = vunpack.c.l.b16 %v406
      %v1239 = vunpack.c.l.b16 %v407
      %v1240 = vunpack.c.l.b16 %v408
      %v1241 = vunpack.c.l.b16 %v409
      %v1242 = vunpack.c.l.b16 %v410
      %v1243 = vunpack.c.l.b16 %v411
      %v1244 = vunpack.c.l.b16 %v412
      %v1245 = vunpack.c.l.b16 %v413
      %v1246 = vunpack.c.l.b16 %v414
      %v1247 = vunpack.c.l.b16 %v415
      %v1248 = vunpack.c.l.b16 %v416
      %v1249 = vunpack.c.l.b16 %v417
      %v1250 = vunpack.c.l.b16 %v418
      %v1251 = vunpack.c.l.b16 %v419
      %v1252 = vunpack.c.l.b16 %v420
      %v1253 = vunpack.c.l.b16 %v421
      %v1254 = vunpack.c.l.b16 %v422
      %v1255 = vunpack.c.l.b16 %v423
      %v1256 = vunpack.c.l.b16 %v424
      %v1257 = vunpack.c.l.b16 %v425
      %v1258 = vunpack.c.l.b16 %v426
      %v1259 = vunpack.c.l.b16 %v427
      %v1260 = vunpack.c.l.b16 %v428
      %v1261 = vunpack.c.l.b16 %v429
      %v1262 = vunpack.c.l.b16 %v430
      %v1263 = vunpack.c.l.b16 %v431
      %v1264 = vunpack.c.l.b16 %v432
      %v1265 = vunpack.c.l.b16 %v433
      %v1266 = vunpack.c.l.b16 %v434
      %v1267 = vunpack.c.l.b16 %v435
      %v1268 = vunpack.c.l.b16 %v436
      %v1269 = vunpack.c.l.b16 %v437
      %v1270 = vunpack.c.l.b16 %v438
      %v1271 = vunpack.c.l.b16 %v439
      %v1272 = vunpack.c.l.b16 %v440
      %v1273 = vunpack.c.l.b16 %v441
      %v1274 = vunpack.c.l.b16 %v442
      %v1275 = vunpack.c.l.b16 %v443
      %v1276 = vunpack.c.l.b16 %v444
      %v1277 = vunpack.c.l.b16 %v445
      %v1278 = vunpack.c.l.b16 %v446
      %v1279 = vunpack.c.l.b16 %v447
      %v1280 = vunpack.c.l.b16 %v448
      %v1281 = vunpack.c.l.b16 %v449
      %v1282 = vunpack.c.l.b16 %v450
      %v1283 = vunpack.c.l.b16 %v451
      %v1284 = vunpack.c.l.b16 %v452
      %v1285 = vunpack.c.l.b16 %v453
      %v1286 = vunpack.c.l.b16 %v454
      %v1287 = vunpack.c.l.b16 %v455
      %v1288 = vunpack.c.l.b16 %v456
      %v1289 = vunpack.c.l.b16 %v457
      %v1290 = vunpack.c.l.b16 %v458
      %v1291 = vunpack.c.l.b16 %v459
      %v1292 = vunpack.c.l.b16 %v460
      %v1293 = vunpack.c.l.b16 %v461
      %v1294 = vunpack.c.l.b16 %v462
      %v1295 = vunpack.c.l.b16 %v463
      %v1296 = vunpack.c.l.b16 %v464
      %v1297 = vunpack.c.l.b16 %v465
      %v1298 = vunpack.c.l.b16 %v466
      %v1299 = vunpack.c.l.b16 %v467
      %v1300 = vunpack.c.l.b16 %v468
      %v1301 = vunpack.c.l.b16 %v469
      %v1302 = vunpack.c.l.b16 %v470
      %v1303 = vunpack.c.l.b16 %v471
      %v1304 = vunpack.c.l.b16 %v472
      %v1305 = vunpack.c.l.b16 %v473
      %v1306 = vunpack.c.l.b16 %v474
      %v1307 = vunpack.c.l.b16 %v475
      %v1308 = vunpack.c.l.b16 %v476
      %v1309 = vunpack.c.l.b16 %v477
      %v1310 = vunpack.c.l.b16 %v478
      %v1311 = vunpack.c.l.b16 %v479
      %v1312 = vunpack.c.l.b16 %v480
      %v1313 = vunpack.c.l.b16 %v481
      %v1314 = vunpack.c.l.b16 %v482
      %v1315 = vunpack.c.l.b16 %v483
      %v1316 = vunpack.c.l.b16 %v484
      %v1317 = vunpack.c.l.b16 %v485
      %v1318 = vunpack.c.l.b16 %v486
      %v1319 = vunpack.c.l.b16 %v487
      %v1320 = vunpack.c.l.b16 %v488
      %v1321 = vunpack.c.l.b16 %v489
      %v1322 = vunpack.c.l.b16 %v490
      %v1323 = vunpack.c.l.b16 %v491
      %v1324 = vunpack.c.l.b16 %v492
      %v1325 = vunpack.c.l.b16 %v493
      %v1326 = vunpack.c.l.b16 %v494
      %v1327 = vunpack.c.l.b16 %v495
      %v1328 = vunpack.c.l.b16 %v496
      %v1329 = vunpack.c.l.b16 %v497
      %v1330 = vunpack.c.l.b16 %v498
      %v1331 = vunpack.c.l.b16 %v499
      %v1332 = vunpack.c.l.b16 %v500
      %v1333 = vunpack.c.l.b16 %v501
      %v1334 = vunpack.c.l.b16 %v502
      %v1335 = vunpack.c.l.b16 %v503
      %v1336 = vunpack.c.l.b16 %v504
      %v1337 = vunpack.c.l.b16 %v505
      %v1338 = vunpack.c.l.b16 %v506
      %v1339 = vunpack.c.l.b16 %v507
      %v1340 = vunpack.c.l.b16 %v508
      %v1341 = vunpack.c.l.b16 %v509
      %v1342 = vunpack.c.l.b16 %v510
      %v1343 = vunpack.c.l.b16 %v511
      %v1344 = vunpack.c.l.b16 %v512
      %v1345 = vunpack.c.l.b16 %v513
      %v1346 = vunpack.c.l.b16 %v514
      %v1347 = vunpack.c.l.b16 %v515
      %v1348 = vunpack.c.l.b16 %v516
      %v1349 = vunpack.c.l.b16 %v517
      %v1350 = vunpack.c.l.b16 %v518
      %v1351 = vunpack.c.l.b16 %v519
      %v1352 = vunpack.c.l.b16 %v520
      %v1353 = vunpack.c.l.b16 %v521
      %v1354 = vunpack.c.l.b16 %v522
      %v1355 = vunpack.c.l.b16 %v523
      %v1356 = vunpack.c.l.b16 %v524
      %v1357 = vunpack.c.l.b16 %v525
      %v1358 = vunpack.c.l.b16 %v526
      %v1359 = vunpack.c.l.b16 %v527
      %v1360 = vunpack.c.l.b16 %v528
      %v1361 = vunpack.c.l.b16 %v529
      %v1362 = vunpack.c.l.b16 %v530
      %v1363 = vunpack.c.l.b16 %v531
      %v1364 = vunpack.c.l.b16 %v532
      %v1365 = vunpack.c.l.b16 %v533
      %v1366 = vunpack.c.l.b16 %v534
      %v1367 = vunpack.c.l.b16 %v535
      %v1368 = vunpack.c.l.b16 %v536
      %v1369 = vunpack.c.l.b16 %v537
      %v1370 = vunpack.c.l.b16 %v538
      %v1371 = vunpack.c.l.b16 %v539
      %v1372 = vunpack.c.l.b16 %v540
      %v1373 = vunpack.c.l.b16 %v541
      %v1374 = vunpack.c.l.b16 %v542
      %v1375 = vunpack.c.l.b16 %v543
      %v1376 = vunpack.c.l.b16 %v544
      %v1377 = vunpack.c.l.b16 %v545
      %v1378 = vunpack.c.l.b16 %v546
      %v1379 = vunpack.c.l.b16 %v547
      %v1380 = vunpack.c.l.b16 %v548
      %v1381 = vunpack.c.l.b16 %v549
      %v1382 = vpack.c.b16 %v1127, %v1126
      %v1383 = vpack.c.b16 %v1129, %v1128
      %v1384 = vpack.c.b16 %v1131, %v1130
      %v1385 = vpack.c.b16 %v1133, %v1132
      %v1386 = vpack.c.b16 %v1135, %v1134
      %v1387 = vpack.c.b16 %v1137, %v1136
      %v1388 = vpack.c.b16 %v1139, %v1138
      %v1389 = vpack.c.b16 %v1141, %v1140
      %v1390 = vpack.c.b16 %v1143, %v1142
      %v1391 = vpack.c.b16 %v1145, %v1144
      %v1392 = vpack.c.b16 %v1147, %v1146
      %v1393 = vpack.c.b16 %v1149, %v1148
      %v1394 = vpack.c.b16 %v1151, %v1150
      %v1395 = vpack.c.b16 %v1153, %v1152
      %v1396 = vpack.c.b16 %v1155, %v1154
      %v1397 = vpack.c.b16 %v1157, %v1156
      %v1398 = vpack.c.b16 %v1159, %v1158
      %v1399 = vpack.c.b16 %v1161, %v1160
      %v1400 = vpack.c.b16 %v1163, %v1162
      %v1401 = vpack.c.b16 %v1165, %v1164
      %v1402 = vpack.c.b16 %v1167, %v1166
      %v1403 = vpack.c.b16 %v1169, %v1168
      %v1404 = vpack.c.b16 %v1171, %v1170
      %v1405 = vpack.c.b16 %v1173, %v1172
      %v1406 = vpack.c.b16 %v1175, %v1174
      %v1407 = vpack.c.b16 %v1177, %v1176
      %v1408 = vpack.c.b16 %v1179, %v1178
      %v1409 = vpack.c.b16 %v1181, %v1180
      %v1410 = vpack.c.b16 %v1183, %v1182
      %v1411 = vpack.c.b16 %v1185, %v1184
      %v1412 = vpack.c.b16 %v1187, %v1186
      %v1413 = vpack.c.b16 %v1189, %v1188
      %v1414 = vpack.c.b16 %v1191, %v1190
      %v1415 = vpack.c.b16 %v1193, %v1192
      %v1416 = vpack.c.b16 %v1195, %v1194
      %v1417 = vpack.c.b16 %v1197, %v1196
      %v1418 = vpack.c.b16 %v1199, %v1198
      %v1419 = vpack.c.b16 %v1201, %v1200
      %v1420 = vpack.c.b16 %v1203, %v1202
      %v1421 = vpack.c.b16 %v1205, %v1204
      %v1422 = vpack.c.b16 %v1207, %v1206
      %v1423 = vpack.c.b16 %v1209, %v1208
      %v1424 = vpack.c.b16 %v1211, %v1210
      %v1425 = vpack.c.b16 %v1213, %v1212
      %v1426 = vpack.c.b16 %v1215, %v1214
      %v1427 = vpack.c.b16 %v1217, %v1216
      %v1428 = vpack.c.b16 %v1219, %v1218
      %v1429 = vpack.c.b16 %v1221, %v1220
      %v1430 = vpack.c.b16 %v1223, %v1222
      %v1431 = vpack.c.b16 %v1225, %v1224
      %v1432 = vpack.c.b16 %v1227, %v1226
      %v1433 = vpack.c.b16 %v1229, %v1228
      %v1434 = vpack.c.b16 %v1231, %v1230
      %v1435 = vpack.c.b16 %v1233, %v1232
      %v1436 = vpack.c.b16 %v1235, %v1234
      %v1437 = vpack.c.b16 %v1237, %v1236
      %v1438 = vpack.c.b16 %v1239, %v1238
      %v1439 = vpack.c.b16 %v1241, %v1240
      %v1440 = vpack.c.b16 %v1243, %v1242
      %v1441 = vpack.c.b16 %v1245, %v1244
      %v1442 = vpack.c.b16 %v1247, %v1246
      %v1443 = vpack.c.b16 %v1249, %v1248
      %v1444 = vpack.c.b16 %v1251, %v1250
      %v1445 = vpack.c.b16 %v1253, %v1252
      %v1446 = vpack.c.b16 %v1255, %v1254
      %v1447 = vpack.c.b16 %v1257, %v1256
      %v1448 = vpack.c.b16 %v1259, %v1258
      %v1449 = vpack.c.b16 %v1261, %v1260
      %v1450 = vpack.c.b16 %v1263, %v1262
      %v1451 = vpack.c.b16 %v1265, %v1264
      %v1452 = vpack.c.b16 %v1267, %v1266
      %v1453 = vpack.c.b16 %v1269, %v1268
      %v1454 = vpack.c.b16 %v1271, %v1270
      %v1455 = vpack.c.b16 %v1273, %v1272
      %v1456 = vpack.c.b16 %v1275, %v1274
      %v1457 = vpack.c.b16 %v1277, %v1276
      %v1458 = vpack.c.b16 %v1279, %v1278
      %v1459 = vpack.c.b16 %v1281, %v1280
      %v1460 = vpack.c.b16 %v1283, %v1282
      %v1461 = vpack.c.b16 %v1285, %v1284
      %v1462 = vpack.c.b16 %v1287, %v1286
      %v1463 = vpack.c.b16 %v1289, %v1288
      %v1464 = vpack.c.b16 %v1291, %v1290
      %v1465 = vpack.c.b16 %v1293, %v1292
      %v1466 = vpack.c.b16 %v1295, %v1294
      %v1467 = vpack.c.b16 %v1297, %v1296
      %v1468 = vpack.c.b16 %v1299, %v1298
      %v1469 = vpack.c.b16 %v1301, %v1300
      %v1470 = vpack.c.b16 %v1303, %v1302
      %v1471 = vpack.c.b16 %v1305, %v1304
      %v1472 = vpack.c.b16 %v1307, %v1306
      %v1473 = vpack.c.b16 %v1309, %v1308
      %v1474 = vpack.c.b16 %v1311, %v1310
      %v1475 = vpack.c.b16 %v1313, %v1312
      %v1476 = vpack.c.b16 %v1315, %v1314
      %v1477 = vpack.c.b16 %v1317, %v1316
      %v1478 = vpack.c.b16 %v1319, %v1318
      %v1479 = vpack.c.b16 %v1321, %v1320
      %v1480 = vpack.c.b16 %v1323, %v1322
      %v1481 = vpack.c.b16 %v1325, %v1324
      %v1482 = vpack.c.b16 %v1327, %v1326
      %v1483 = vpack.c.b16 %v1329, %v1328
      %v1484 = vpack.c.b16 %v1331, %v1330
      %v1485 = vpack.c.b16 %v1333, %v1332
      %v1486 = vpack.c.b16 %v1335, %v1334
      %v1487 = vpack.c.b16 %v1337, %v1336
      %v1488 = vpack.c.b16 %v1339, %v1338
      %v1489 = vpack.c.b16 %v1341, %v1340
      %v1490 = vpack.c.b16 %v1343, %v1342
      %v1491 = vpack.c.b16 %v1345, %v1344
      %v1492 = vpack.c.b16 %v1347, %v1346
      %v1493 = vpack.c.b16 %v1349, %v1348
      %v1494 = vpack.c.b16 %v1351, %v1350
      %v1495 = vpack.c.b16 %v1353, %v1352
      %v1496 = vpack.c.b16 %v1355, %v1354
      %v1497 = vpack.c.b16 %v1357, %v1356
      %v1498 = vpack.c.b16 %v1359, %v1358
      %v1499 = vpack.c.b16 %v1361, %v1360
      %v1500 = vpack.c.b16 %v1363, %v1362
      %v1501 = vpack.c.b16 %v1365, %v1364
      %v1502 = vpack.c.b16 %v1367, %v1366
      %v1503 = vpack.c.b16 %v1369, %v1368
      %v1504 = vpack.c.b16 %v1371, %v1370
      %v1505 = vpack.c.b16 %v1373, %v1372
      %v1506 = vpack.c.b16 %v1375, %v1374
      %v1507 = vpack.c.b16 %v1377, %v1376
      %v1508 = vpack.c.b16 %v1379, %v1378
      %v1509 = vpack.c.b16 %v1381, %v1380
      %1638 = vmatprep.subr.bf16.mxu0 0
      %1639 = vmatpush1.bf16.msra.mxu0 %v1389
      %1640 = vmatprep.subr.bf16.mxu0 0
      %1641 = vmatpush1.bf16.msra.mxu0 %v1388
      %1642 = vmatprep.subr.bf16.mxu0 0
      %1643 = vmatpush1.bf16.msra.mxu0 %v1387
      %1644 = vmatprep.subr.bf16.mxu0 0
      %1645 = vmatpush1.bf16.msra.mxu0 %v1386
      %1646 = vmatprep.subr.bf16.mxu0 0
      %1647 = vmatpush1.bf16.msra.mxu0 %v1385
      %1648 = vmatprep.subr.bf16.mxu0 0
      %1649 = vmatpush1.bf16.msra.mxu0 %v1384
      %1650 = vmatprep.subr.bf16.mxu0 0
      %1651 = vmatpush1.bf16.msra.mxu0 %v1383
      %1652 = vmatprep.subr.bf16.mxu0 0
      %1653 = vmatpush1.bf16.msra.mxu0 %v1382
      %1654 = vmatprep.subr.bf16.mxu0 0
      %1655 = vmatpush2.bf16.msra.mxu0 %v1397
      %1656 = vmatprep.subr.bf16.mxu0 0
      %1657 = vmatpush2.bf16.msra.mxu0 %v1396
      %1658 = vmatprep.subr.bf16.mxu0 0
      %1659 = vmatpush2.bf16.msra.mxu0 %v1395
      %1660 = vmatprep.subr.bf16.mxu0 0
      %1661 = vmatpush2.bf16.msra.mxu0 %v1394
      %1662 = vmatprep.subr.bf16.mxu0 0
      %1663 = vmatpush2.bf16.msra.mxu0 %v1393
      %1664 = vmatprep.subr.bf16.mxu0 0
      %1665 = vmatpush2.bf16.msra.mxu0 %v1392
      %1666 = vmatprep.subr.bf16.mxu0 0
      %1667 = vmatpush2.bf16.msra.mxu0 %v1391
      %1668 = vmatprep.subr.bf16.mxu0 0
      %1669 = vmatpush2.bf16.msra.mxu0 %v1390
      %1670 = vmatprep.mubr.bf16.mxu0 %v743
      %1671 = vmatmul.mubr.bf16.gmra.mxu0 %v742
      %v1672 = vpop.f32.mrf.mxu0
      %v1673 = vadd.f32 0.0, %v1672
      %v1674 = vpop.f32.mrf.mxu0
      %v1675 = vpop.f32.mrf.mxu0
      %v1676 = vadd.f32 0.0, %v1675
      %v1677 = vpop.f32.mrf.mxu0
      %1678 = vmatprep.mubr.bf16.mxu0 %v759
      %1679 = vmatmul.mubr.bf16.gmra.mxu0 %v758
      %v1680 = vpop.f32.mrf.mxu0
      %v1681 = vadd.f32 0.0, %v1680
      %v1682 = vpop.f32.mrf.mxu0
      %v1683 = vpop.f32.mrf.mxu0
      %v1684 = vadd.f32 0.0, %v1683
      %v1685 = vpop.f32.mrf.mxu0
      %1686 = vmatprep.mubr.bf16.mxu0 %v775
      %1687 = vmatmul.mubr.bf16.gmra.mxu0 %v774
      %v1688 = vpop.f32.mrf.mxu0
      %v1689 = vadd.f32 0.0, %v1688
      %v1690 = vpop.f32.mrf.mxu0
      %v1691 = vpop.f32.mrf.mxu0
      %v1692 = vadd.f32 0.0, %v1691
      %v1693 = vpop.f32.mrf.mxu0
      %1694 = vmatprep.mubr.bf16.mxu0 %v791
      %1695 = vmatmul.mubr.bf16.gmra.mxu0 %v790
      %v1696 = vpop.f32.mrf.mxu0
      %v1697 = vadd.f32 0.0, %v1696
      %v1698 = vpop.f32.mrf.mxu0
      %v1699 = vpop.f32.mrf.mxu0
      %v1700 = vadd.f32 0.0, %v1699
      %v1701 = vpop.f32.mrf.mxu0
      %1702 = vdwg.mxu0
      %1703 = vmatprep.subr.bf16.mxu0 0
      %1704 = vmatpush1.bf16.msra.mxu0 %v1405
      %1705 = vmatprep.subr.bf16.mxu0 0
      %1706 = vmatpush1.bf16.msra.mxu0 %v1404
      %1707 = vmatprep.subr.bf16.mxu0 0
      %1708 = vmatpush1.bf16.msra.mxu0 %v1403
      %1709 = vmatprep.subr.bf16.mxu0 0
      %1710 = vmatpush1.bf16.msra.mxu0 %v1402
      %1711 = vmatprep.subr.bf16.mxu0 0
      %1712 = vmatpush1.bf16.msra.mxu0 %v1401
      %1713 = vmatprep.subr.bf16.mxu0 0
      %1714 = vmatpush1.bf16.msra.mxu0 %v1400
      %1715 = vmatprep.subr.bf16.mxu0 0
      %1716 = vmatpush1.bf16.msra.mxu0 %v1399
      %1717 = vmatprep.subr.bf16.mxu0 0
      %1718 = vmatpush1.bf16.msra.mxu0 %v1398
      %1719 = vmatprep.subr.bf16.mxu0 0
      %1720 = vmatpush2.bf16.msra.mxu0 %v1413
      %1721 = vmatprep.subr.bf16.mxu0 0
      %1722 = vmatpush2.bf16.msra.mxu0 %v1412
      %1723 = vmatprep.subr.bf16.mxu0 0
      %1724 = vmatpush2.bf16.msra.mxu0 %v1411
      %1725 = vmatprep.subr.bf16.mxu0 0
      %1726 = vmatpush2.bf16.msra.mxu0 %v1410
      %1727 = vmatprep.subr.bf16.mxu0 0
      %1728 = vmatpush2.bf16.msra.mxu0 %v1409
      %1729 = vmatprep.subr.bf16.mxu0 0
      %1730 = vmatpush2.bf16.msra.mxu0 %v1408
      %1731 = vmatprep.subr.bf16.mxu0 0
      %1732 = vmatpush2.bf16.msra.mxu0 %v1407
      %1733 = vmatprep.subr.bf16.mxu0 0
      %1734 = vmatpush2.bf16.msra.mxu0 %v1406
      %1735 = vmatprep.mubr.bf16.mxu0 %v745
      %1736 = vmatmul.mubr.bf16.gmra.mxu0 %v744
      %v1737 = vpop.f32.mrf.mxu0
      %v1738 = vadd.f32 %v1673, %v1737
      %v1739 = vpop.f32.mrf.mxu0
      %v1740 = vpop.f32.mrf.mxu0
      %v1741 = vadd.f32 %v1676, %v1740
      %v1742 = vpop.f32.mrf.mxu0
      %1743 = vmatprep.mubr.bf16.mxu0 %v761
      %1744 = vmatmul.mubr.bf16.gmra.mxu0 %v760
      %v1745 = vpop.f32.mrf.mxu0
      %v1746 = vadd.f32 %v1681, %v1745
      %v1747 = vpop.f32.mrf.mxu0
      %v1748 = vpop.f32.mrf.mxu0
      %v1749 = vadd.f32 %v1684, %v1748
      %v1750 = vpop.f32.mrf.mxu0
      %1751 = vmatprep.mubr.bf16.mxu0 %v777
      %1752 = vmatmul.mubr.bf16.gmra.mxu0 %v776
      %v1753 = vpop.f32.mrf.mxu0
      %v1754 = vadd.f32 %v1689, %v1753
      %v1755 = vpop.f32.mrf.mxu0
      %v1756 = vpop.f32.mrf.mxu0
      %v1757 = vadd.f32 %v1692, %v1756
      %v1758 = vpop.f32.mrf.mxu0
      %1759 = vmatprep.mubr.bf16.mxu0 %v793
      %1760 = vmatmul.mubr.bf16.gmra.mxu0 %v792
      %v1761 = vpop.f32.mrf.mxu0
      %v1762 = vadd.f32 %v1697, %v1761
      %v1763 = vpop.f32.mrf.mxu0
      %v1764 = vpop.f32.mrf.mxu0
      %v1765 = vadd.f32 %v1700, %v1764
      %v1766 = vpop.f32.mrf.mxu0
      %1767 = vdwg.mxu0
      %1768 = vmatprep.subr.bf16.mxu0 0
      %1769 = vmatpush1.bf16.msra.mxu0 %v1421
      %1770 = vmatprep.subr.bf16.mxu0 0
      %1771 = vmatpush1.bf16.msra.mxu0 %v1420
      %1772 = vmatprep.subr.bf16.mxu0 0
      %1773 = vmatpush1.bf16.msra.mxu0 %v1419
      %1774 = vmatprep.subr.bf16.mxu0 0
      %1775 = vmatpush1.bf16.msra.mxu0 %v1418
      %1776 = vmatprep.subr.bf16.mxu0 0
      %1777 = vmatpush1.bf16.msra.mxu0 %v1417
      %1778 = vmatprep.subr.bf16.mxu0 0
      %1779 = vmatpush1.bf16.msra.mxu0 %v1416
      %1780 = vmatprep.subr.bf16.mxu0 0
      %1781 = vmatpush1.bf16.msra.mxu0 %v1415
      %1782 = vmatprep.subr.bf16.mxu0 0
      %1783 = vmatpush1.bf16.msra.mxu0 %v1414
      %1784 = vmatprep.subr.bf16.mxu0 0
      %1785 = vmatpush2.bf16.msra.mxu0 %v1429
      %1786 = vmatprep.subr.bf16.mxu0 0
      %1787 = vmatpush2.bf16.msra.mxu0 %v1428
      %1788 = vmatprep.subr.bf16.mxu0 0
      %1789 = vmatpush2.bf16.msra.mxu0 %v1427
      %1790 = vmatprep.subr.bf16.mxu0 0
      %1791 = vmatpush2.bf16.msra.mxu0 %v1426
      %1792 = vmatprep.subr.bf16.mxu0 0
      %1793 = vmatpush2.bf16.msra.mxu0 %v1425
      %1794 = vmatprep.subr.bf16.mxu0 0
      %1795 = vmatpush2.bf16.msra.mxu0 %v1424
      %1796 = vmatprep.subr.bf16.mxu0 0
      %1797 = vmatpush2.bf16.msra.mxu0 %v1423
      %1798 = vmatprep.subr.bf16.mxu0 0
      %1799 = vmatpush2.bf16.msra.mxu0 %v1422
      %1800 = vmatprep.mubr.bf16.mxu0 %v747
      %1801 = vmatmul.mubr.bf16.gmra.mxu0 %v746
      %v1802 = vpop.f32.mrf.mxu0
      %v1803 = vadd.f32 %v1738, %v1802
      %v1804 = vpop.f32.mrf.mxu0
      %v1805 = vpop.f32.mrf.mxu0
      %v1806 = vadd.f32 %v1741, %v1805
      %v1807 = vpop.f32.mrf.mxu0
      %1808 = vmatprep.mubr.bf16.mxu0 %v763
      %1809 = vmatmul.mubr.bf16.gmra.mxu0 %v762
      %v1810 = vpop.f32.mrf.mxu0
      %v1811 = vadd.f32 %v1746, %v1810
      %v1812 = vpop.f32.mrf.mxu0
      %v1813 = vpop.f32.mrf.mxu0
      %v1814 = vadd.f32 %v1749, %v1813
      %v1815 = vpop.f32.mrf.mxu0
      %1816 = vmatprep.mubr.bf16.mxu0 %v779
      %1817 = vmatmul.mubr.bf16.gmra.mxu0 %v778
      %v1818 = vpop.f32.mrf.mxu0
      %v1819 = vadd.f32 %v1754, %v1818
      %v1820 = vpop.f32.mrf.mxu0
      %v1821 = vpop.f32.mrf.mxu0
      %v1822 = vadd.f32 %v1757, %v1821
      %v1823 = vpop.f32.mrf.mxu0
      %1824 = vmatprep.mubr.bf16.mxu0 %v795
      %1825 = vmatmul.mubr.bf16.gmra.mxu0 %v794
      %v1826 = vpop.f32.mrf.mxu0
      %v1827 = vadd.f32 %v1762, %v1826
      %v1828 = vpop.f32.mrf.mxu0
      %v1829 = vpop.f32.mrf.mxu0
      %v1830 = vadd.f32 %v1765, %v1829
      %v1831 = vpop.f32.mrf.mxu0
      %1832 = vdwg.mxu0
      %1833 = vmatprep.subr.bf16.mxu0 0
      %1834 = vmatpush1.bf16.msra.mxu0 %v1437
      %1835 = vmatprep.subr.bf16.mxu0 0
      %1836 = vmatpush1.bf16.msra.mxu0 %v1436
      %1837 = vmatprep.subr.bf16.mxu0 0
      %1838 = vmatpush1.bf16.msra.mxu0 %v1435
      %1839 = vmatprep.subr.bf16.mxu0 0
      %1840 = vmatpush1.bf16.msra.mxu0 %v1434
      %1841 = vmatprep.subr.bf16.mxu0 0
      %1842 = vmatpush1.bf16.msra.mxu0 %v1433
      %1843 = vmatprep.subr.bf16.mxu0 0
      %1844 = vmatpush1.bf16.msra.mxu0 %v1432
      %1845 = vmatprep.subr.bf16.mxu0 0
      %1846 = vmatpush1.bf16.msra.mxu0 %v1431
      %1847 = vmatprep.subr.bf16.mxu0 0
      %1848 = vmatpush1.bf16.msra.mxu0 %v1430
      %1849 = vmatprep.subr.bf16.mxu0 0
      %1850 = vmatpush2.bf16.msra.mxu0 %v1445
      %1851 = vmatprep.subr.bf16.mxu0 0
      %1852 = vmatpush2.bf16.msra.mxu0 %v1444
      %1853 = vmatprep.subr.bf16.mxu0 0
      %1854 = vmatpush2.bf16.msra.mxu0 %v1443
      %1855 = vmatprep.subr.bf16.mxu0 0
      %1856 = vmatpush2.bf16.msra.mxu0 %v1442
      %1857 = vmatprep.subr.bf16.mxu0 0
      %1858 = vmatpush2.bf16.msra.mxu0 %v1441
      %1859 = vmatprep.subr.bf16.mxu0 0
      %1860 = vmatpush2.bf16.msra.mxu0 %v1440
      %1861 = vmatprep.subr.bf16.mxu0 0
      %1862 = vmatpush2.bf16.msra.mxu0 %v1439
      %1863 = vmatprep.subr.bf16.mxu0 0
      %1864 = vmatpush2.bf16.msra.mxu0 %v1438
      %1865 = vmatprep.mubr.bf16.mxu0 %v749
      %1866 = vmatmul.mubr.bf16.gmra.mxu0 %v748
      %v1867 = vpop.f32.mrf.mxu0
      %v1868 = vadd.f32 %v1803, %v1867
      %v1869 = vpop.f32.mrf.mxu0
      %v1870 = vpop.f32.mrf.mxu0
      %v1871 = vadd.f32 %v1806, %v1870
      %v1872 = vpop.f32.mrf.mxu0
      %1873 = vmatprep.mubr.bf16.mxu0 %v765
      %1874 = vmatmul.mubr.bf16.gmra.mxu0 %v764
      %v1875 = vpop.f32.mrf.mxu0
      %v1876 = vadd.f32 %v1811, %v1875
      %v1877 = vpop.f32.mrf.mxu0
      %v1878 = vpop.f32.mrf.mxu0
      %v1879 = vadd.f32 %v1814, %v1878
      %v1880 = vpop.f32.mrf.mxu0
      %1881 = vmatprep.mubr.bf16.mxu0 %v781
      %1882 = vmatmul.mubr.bf16.gmra.mxu0 %v780
      %v1883 = vpop.f32.mrf.mxu0
      %v1884 = vadd.f32 %v1819, %v1883
      %v1885 = vpop.f32.mrf.mxu0
      %v1886 = vpop.f32.mrf.mxu0
      %v1887 = vadd.f32 %v1822, %v1886
      %v1888 = vpop.f32.mrf.mxu0
      %1889 = vmatprep.mubr.bf16.mxu0 %v797
      %1890 = vmatmul.mubr.bf16.gmra.mxu0 %v796
      %v1891 = vpop.f32.mrf.mxu0
      %v1892 = vadd.f32 %v1827, %v1891
      %v1893 = vpop.f32.mrf.mxu0
      %v1894 = vpop.f32.mrf.mxu0
      %v1895 = vadd.f32 %v1830, %v1894
      %v1896 = vpop.f32.mrf.mxu0
      %1897 = vdwg.mxu0
      %1898 = vmatprep.subr.bf16.mxu0 0
      %1899 = vmatpush1.bf16.msra.mxu0 %v1453
      %1900 = vmatprep.subr.bf16.mxu0 0
      %1901 = vmatpush1.bf16.msra.mxu0 %v1452
      %1902 = vmatprep.subr.bf16.mxu0 0
      %1903 = vmatpush1.bf16.msra.mxu0 %v1451
      %1904 = vmatprep.subr.bf16.mxu0 0
      %1905 = vmatpush1.bf16.msra.mxu0 %v1450
      %1906 = vmatprep.subr.bf16.mxu0 0
      %1907 = vmatpush1.bf16.msra.mxu0 %v1449
      %1908 = vmatprep.subr.bf16.mxu0 0
      %1909 = vmatpush1.bf16.msra.mxu0 %v1448
      %1910 = vmatprep.subr.bf16.mxu0 0
      %1911 = vmatpush1.bf16.msra.mxu0 %v1447
      %1912 = vmatprep.subr.bf16.mxu0 0
      %1913 = vmatpush1.bf16.msra.mxu0 %v1446
      %1914 = vmatprep.subr.bf16.mxu0 0
      %1915 = vmatpush2.bf16.msra.mxu0 %v1461
      %1916 = vmatprep.subr.bf16.mxu0 0
      %1917 = vmatpush2.bf16.msra.mxu0 %v1460
      %1918 = vmatprep.subr.bf16.mxu0 0
      %1919 = vmatpush2.bf16.msra.mxu0 %v1459
      %1920 = vmatprep.subr.bf16.mxu0 0
      %1921 = vmatpush2.bf16.msra.mxu0 %v1458
      %1922 = vmatprep.subr.bf16.mxu0 0
      %1923 = vmatpush2.bf16.msra.mxu0 %v1457
      %1924 = vmatprep.subr.bf16.mxu0 0
      %1925 = vmatpush2.bf16.msra.mxu0 %v1456
      %1926 = vmatprep.subr.bf16.mxu0 0
      %1927 = vmatpush2.bf16.msra.mxu0 %v1455
      %1928 = vmatprep.subr.bf16.mxu0 0
      %1929 = vmatpush2.bf16.msra.mxu0 %v1454
      %1930 = vmatprep.mubr.bf16.mxu0 %v751
      %1931 = vmatmul.mubr.bf16.gmra.mxu0 %v750
      %v1932 = vpop.f32.mrf.mxu0
      %v1933 = vadd.f32 %v1868, %v1932
      %v1934 = vpop.f32.mrf.mxu0
      %v1935 = vpop.f32.mrf.mxu0
      %v1936 = vadd.f32 %v1871, %v1935
      %v1937 = vpop.f32.mrf.mxu0
      %1938 = vmatprep.mubr.bf16.mxu0 %v767
      %1939 = vmatmul.mubr.bf16.gmra.mxu0 %v766
      %v1940 = vpop.f32.mrf.mxu0
      %v1941 = vadd.f32 %v1876, %v1940
      %v1942 = vpop.f32.mrf.mxu0
      %v1943 = vpop.f32.mrf.mxu0
      %v1944 = vadd.f32 %v1879, %v1943
      %v1945 = vpop.f32.mrf.mxu0
      %1946 = vmatprep.mubr.bf16.mxu0 %v783
      %1947 = vmatmul.mubr.bf16.gmra.mxu0 %v782
      %v1948 = vpop.f32.mrf.mxu0
      %v1949 = vadd.f32 %v1884, %v1948
      %v1950 = vpop.f32.mrf.mxu0
      %v1951 = vpop.f32.mrf.mxu0
      %v1952 = vadd.f32 %v1887, %v1951
      %v1953 = vpop.f32.mrf.mxu0
      %1954 = vmatprep.mubr.bf16.mxu0 %v799
      %1955 = vmatmul.mubr.bf16.gmra.mxu0 %v798
      %v1956 = vpop.f32.mrf.mxu0
      %v1957 = vadd.f32 %v1892, %v1956
      %v1958 = vpop.f32.mrf.mxu0
      %v1959 = vpop.f32.mrf.mxu0
      %v1960 = vadd.f32 %v1895, %v1959
      %v1961 = vpop.f32.mrf.mxu0
      %1962 = vdwg.mxu0
      %1963 = vmatprep.subr.bf16.mxu0 0
      %1964 = vmatpush1.bf16.msra.mxu0 %v1469
      %1965 = vmatprep.subr.bf16.mxu0 0
      %1966 = vmatpush1.bf16.msra.mxu0 %v1468
      %1967 = vmatprep.subr.bf16.mxu0 0
      %1968 = vmatpush1.bf16.msra.mxu0 %v1467
      %1969 = vmatprep.subr.bf16.mxu0 0
      %1970 = vmatpush1.bf16.msra.mxu0 %v1466
      %1971 = vmatprep.subr.bf16.mxu0 0
      %1972 = vmatpush1.bf16.msra.mxu0 %v1465
      %1973 = vmatprep.subr.bf16.mxu0 0
      %1974 = vmatpush1.bf16.msra.mxu0 %v1464
      %1975 = vmatprep.subr.bf16.mxu0 0
      %1976 = vmatpush1.bf16.msra.mxu0 %v1463
      %1977 = vmatprep.subr.bf16.mxu0 0
      %1978 = vmatpush1.bf16.msra.mxu0 %v1462
      %1979 = vmatprep.subr.bf16.mxu0 0
      %1980 = vmatpush2.bf16.msra.mxu0 %v1477
      %1981 = vmatprep.subr.bf16.mxu0 0
      %1982 = vmatpush2.bf16.msra.mxu0 %v1476
      %1983 = vmatprep.subr.bf16.mxu0 0
      %1984 = vmatpush2.bf16.msra.mxu0 %v1475
      %1985 = vmatprep.subr.bf16.mxu0 0
      %1986 = vmatpush2.bf16.msra.mxu0 %v1474
      %1987 = vmatprep.subr.bf16.mxu0 0
      %1988 = vmatpush2.bf16.msra.mxu0 %v1473
      %1989 = vmatprep.subr.bf16.mxu0 0
      %1990 = vmatpush2.bf16.msra.mxu0 %v1472
      %1991 = vmatprep.subr.bf16.mxu0 0
      %1992 = vmatpush2.bf16.msra.mxu0 %v1471
      %1993 = vmatprep.subr.bf16.mxu0 0
      %1994 = vmatpush2.bf16.msra.mxu0 %v1470
      %1995 = vmatprep.mubr.bf16.mxu0 %v753
      %1996 = vmatmul.mubr.bf16.gmra.mxu0 %v752
      %v1997 = vpop.f32.mrf.mxu0
      %v1998 = vadd.f32 %v1933, %v1997
      %v1999 = vpop.f32.mrf.mxu0
      %v2000 = vpop.f32.mrf.mxu0
      %v2001 = vadd.f32 %v1936, %v2000
      %v2002 = vpop.f32.mrf.mxu0
      %2003 = vmatprep.mubr.bf16.mxu0 %v769
      %2004 = vmatmul.mubr.bf16.gmra.mxu0 %v768
      %v2005 = vpop.f32.mrf.mxu0
      %v2006 = vadd.f32 %v1941, %v2005
      %v2007 = vpop.f32.mrf.mxu0
      %v2008 = vpop.f32.mrf.mxu0
      %v2009 = vadd.f32 %v1944, %v2008
      %v2010 = vpop.f32.mrf.mxu0
      %2011 = vmatprep.mubr.bf16.mxu0 %v785
      %2012 = vmatmul.mubr.bf16.gmra.mxu0 %v784
      %v2013 = vpop.f32.mrf.mxu0
      %v2014 = vadd.f32 %v1949, %v2013
      %v2015 = vpop.f32.mrf.mxu0
      %v2016 = vpop.f32.mrf.mxu0
      %v2017 = vadd.f32 %v1952, %v2016
      %v2018 = vpop.f32.mrf.mxu0
      %2019 = vmatprep.mubr.bf16.mxu0 %v801
      %2020 = vmatmul.mubr.bf16.gmra.mxu0 %v800
      %v2021 = vpop.f32.mrf.mxu0
      %v2022 = vadd.f32 %v1957, %v2021
      %v2023 = vpop.f32.mrf.mxu0
      %v2024 = vpop.f32.mrf.mxu0
      %v2025 = vadd.f32 %v1960, %v2024
      %v2026 = vpop.f32.mrf.mxu0
      %2027 = vdwg.mxu0
      %2028 = vmatprep.subr.bf16.mxu0 0
      %2029 = vmatpush1.bf16.msra.mxu0 %v1485
      %2030 = vmatprep.subr.bf16.mxu0 0
      %2031 = vmatpush1.bf16.msra.mxu0 %v1484
      %2032 = vmatprep.subr.bf16.mxu0 0
      %2033 = vmatpush1.bf16.msra.mxu0 %v1483
      %2034 = vmatprep.subr.bf16.mxu0 0
      %2035 = vmatpush1.bf16.msra.mxu0 %v1482
      %2036 = vmatprep.subr.bf16.mxu0 0
      %2037 = vmatpush1.bf16.msra.mxu0 %v1481
      %2038 = vmatprep.subr.bf16.mxu0 0
      %2039 = vmatpush1.bf16.msra.mxu0 %v1480
      %2040 = vmatprep.subr.bf16.mxu0 0
      %2041 = vmatpush1.bf16.msra.mxu0 %v1479
      %2042 = vmatprep.subr.bf16.mxu0 0
      %2043 = vmatpush1.bf16.msra.mxu0 %v1478
      %2044 = vmatprep.subr.bf16.mxu0 0
      %2045 = vmatpush2.bf16.msra.mxu0 %v1493
      %2046 = vmatprep.subr.bf16.mxu0 0
      %2047 = vmatpush2.bf16.msra.mxu0 %v1492
      %2048 = vmatprep.subr.bf16.mxu0 0
      %2049 = vmatpush2.bf16.msra.mxu0 %v1491
      %2050 = vmatprep.subr.bf16.mxu0 0
      %2051 = vmatpush2.bf16.msra.mxu0 %v1490
      %2052 = vmatprep.subr.bf16.mxu0 0
      %2053 = vmatpush2.bf16.msra.mxu0 %v1489
      %2054 = vmatprep.subr.bf16.mxu0 0
      %2055 = vmatpush2.bf16.msra.mxu0 %v1488
      %2056 = vmatprep.subr.bf16.mxu0 0
      %2057 = vmatpush2.bf16.msra.mxu0 %v1487
      %2058 = vmatprep.subr.bf16.mxu0 0
      %2059 = vmatpush2.bf16.msra.mxu0 %v1486
      %2060 = vmatprep.mubr.bf16.mxu0 %v755
      %2061 = vmatmul.mubr.bf16.gmra.mxu0 %v754
      %v2062 = vpop.f32.mrf.mxu0
      %v2063 = vadd.f32 %v1998, %v2062
      %v2064 = vpop.f32.mrf.mxu0
      %v2065 = vpop.f32.mrf.mxu0
      %v2066 = vadd.f32 %v2001, %v2065
      %v2067 = vpop.f32.mrf.mxu0
      %2068 = vmatprep.mubr.bf16.mxu0 %v771
      %2069 = vmatmul.mubr.bf16.gmra.mxu0 %v770
      %v2070 = vpop.f32.mrf.mxu0
      %v2071 = vadd.f32 %v2006, %v2070
      %v2072 = vpop.f32.mrf.mxu0
      %v2073 = vpop.f32.mrf.mxu0
      %v2074 = vadd.f32 %v2009, %v2073
      %v2075 = vpop.f32.mrf.mxu0
      %2076 = vmatprep.mubr.bf16.mxu0 %v787
      %2077 = vmatmul.mubr.bf16.gmra.mxu0 %v786
      %v2078 = vpop.f32.mrf.mxu0
      %v2079 = vadd.f32 %v2014, %v2078
      %v2080 = vpop.f32.mrf.mxu0
      %v2081 = vpop.f32.mrf.mxu0
      %v2082 = vadd.f32 %v2017, %v2081
      %v2083 = vpop.f32.mrf.mxu0
      %2084 = vmatprep.mubr.bf16.mxu0 %v803
      %2085 = vmatmul.mubr.bf16.gmra.mxu0 %v802
      %v2086 = vpop.f32.mrf.mxu0
      %v2087 = vadd.f32 %v2022, %v2086
      %v2088 = vpop.f32.mrf.mxu0
      %v2089 = vpop.f32.mrf.mxu0
      %v2090 = vadd.f32 %v2025, %v2089
      %v2091 = vpop.f32.mrf.mxu0
      %2092 = vdwg.mxu0
      %2093 = vmatprep.subr.bf16.mxu0 0
      %2094 = vmatpush1.bf16.msra.mxu0 %v1501
      %2095 = vmatprep.subr.bf16.mxu0 0
      %2096 = vmatpush1.bf16.msra.mxu0 %v1500
      %2097 = vmatprep.subr.bf16.mxu0 0
      %2098 = vmatpush1.bf16.msra.mxu0 %v1499
      %2099 = vmatprep.subr.bf16.mxu0 0
      %2100 = vmatpush1.bf16.msra.mxu0 %v1498
      %2101 = vmatprep.subr.bf16.mxu0 0
      %2102 = vmatpush1.bf16.msra.mxu0 %v1497
      %2103 = vmatprep.subr.bf16.mxu0 0
      %2104 = vmatpush1.bf16.msra.mxu0 %v1496
      %2105 = vmatprep.subr.bf16.mxu0 0
      %2106 = vmatpush1.bf16.msra.mxu0 %v1495
      %2107 = vmatprep.subr.bf16.mxu0 0
      %2108 = vmatpush1.bf16.msra.mxu0 %v1494
      %2109 = vmatprep.subr.bf16.mxu0 0
      %2110 = vmatpush2.bf16.msra.mxu0 %v1509
      %2111 = vmatprep.subr.bf16.mxu0 0
      %2112 = vmatpush2.bf16.msra.mxu0 %v1508
      %2113 = vmatprep.subr.bf16.mxu0 0
      %2114 = vmatpush2.bf16.msra.mxu0 %v1507
      %2115 = vmatprep.subr.bf16.mxu0 0
      %2116 = vmatpush2.bf16.msra.mxu0 %v1506
      %2117 = vmatprep.subr.bf16.mxu0 0
      %2118 = vmatpush2.bf16.msra.mxu0 %v1505
      %2119 = vmatprep.subr.bf16.mxu0 0
      %2120 = vmatpush2.bf16.msra.mxu0 %v1504
      %2121 = vmatprep.subr.bf16.mxu0 0
      %2122 = vmatpush2.bf16.msra.mxu0 %v1503
      %2123 = vmatprep.subr.bf16.mxu0 0
      %2124 = vmatpush2.bf16.msra.mxu0 %v1502
      %2125 = vmatprep.mubr.bf16.mxu0 %v757
      %2126 = vmatmul.mubr.bf16.gmra.mxu0 %v756
      %v2127 = vpop.f32.mrf.mxu0
      %v2128 = vadd.f32 %v2063, %v2127
      %v2129 = vpop.f32.mrf.mxu0
      %v2130 = vpop.f32.mrf.mxu0
      %v2131 = vadd.f32 %v2066, %v2130
      %v2132 = vpop.f32.mrf.mxu0
      %2133 = vmatprep.mubr.bf16.mxu0 %v773
      %2134 = vmatmul.mubr.bf16.gmra.mxu0 %v772
      %v2135 = vpop.f32.mrf.mxu0
      %v2136 = vadd.f32 %v2071, %v2135
      %v2137 = vpop.f32.mrf.mxu0
      %v2138 = vpop.f32.mrf.mxu0
      %v2139 = vadd.f32 %v2074, %v2138
      %v2140 = vpop.f32.mrf.mxu0
      %2141 = vmatprep.mubr.bf16.mxu0 %v789
      %2142 = vmatmul.mubr.bf16.gmra.mxu0 %v788
      %v2143 = vpop.f32.mrf.mxu0
      %v2144 = vadd.f32 %v2079, %v2143
      %v2145 = vpop.f32.mrf.mxu0
      %v2146 = vpop.f32.mrf.mxu0
      %v2147 = vadd.f32 %v2082, %v2146
      %v2148 = vpop.f32.mrf.mxu0
      %2149 = vmatprep.mubr.bf16.mxu0 %v805
      %2150 = vmatmul.mubr.bf16.gmra.mxu0 %v804
      %v2151 = vpop.f32.mrf.mxu0
      %v2152 = vadd.f32 %v2087, %v2151
      %v2153 = vpop.f32.mrf.mxu0
      %v2154 = vpop.f32.mrf.mxu0
      %v2155 = vadd.f32 %v2090, %v2154
      %v2156 = vpop.f32.mrf.mxu0
      %2157 = vdwg.mxu0
      %v2158 = vld [vmem:[%s2] sm:$0xff]
      %v2159 = vld [vmem:[%s2 + $0x8] sm:$0xff]
      %v2160 = vld [vmem:[%s2 + $0x10] sm:$0xff]
      %v2161 = vld [vmem:[%s2 + $0x18] sm:$0xff]
      %v2162 = vld [vmem:[%s2 + $0x20] sm:$0xff]
      %v2163 = vld [vmem:[%s2 + $0x28] sm:$0xff]
      %v2164 = vld [vmem:[%s2 + $0x30] sm:$0xff]
      %v2165 = vld [vmem:[%s2 + $0x38] sm:$0xff]
      %2167 = vset.pattern.permute.xlu0 0
      %2168 = vperm.xlu0 %2167, %v2158
      %v2169 = vpop.permute.xlu0 %2168
      %2172 = vset.pattern.permute.xlu0 0
      %2173 = vperm.xlu0 %2172, %v2159
      %v2174 = vpop.permute.xlu0 %2173
      %2177 = vset.pattern.permute.xlu0 0
      %2178 = vperm.xlu0 %2177, %v2160
      %v2179 = vpop.permute.xlu0 %2178
      %2182 = vset.pattern.permute.xlu0 0
      %2183 = vperm.xlu0 %2182, %v2161
      %v2184 = vpop.permute.xlu0 %2183
      %2187 = vset.pattern.permute.xlu0 0
      %2188 = vperm.xlu0 %2187, %v2162
      %v2189 = vpop.permute.xlu0 %2188
      %2192 = vset.pattern.permute.xlu0 0
      %2193 = vperm.xlu0 %2192, %v2163
      %v2194 = vpop.permute.xlu0 %2193
      %2197 = vset.pattern.permute.xlu0 0
      %2198 = vperm.xlu0 %2197, %v2164
      %v2199 = vpop.permute.xlu0 %2198
      %2202 = vset.pattern.permute.xlu0 0
      %2203 = vperm.xlu0 %2202, %v2165
      %v2204 = vpop.permute.xlu0 %2203
      %v2206 = vmul.f32 %v2128, %v2169
      %v2207 = vmul.f32 %v2131, %v2174
      %v2208 = vmul.f32 %v2136, %v2179
      %v2209 = vmul.f32 %v2139, %v2184
      %v2210 = vmul.f32 %v2144, %v2189
      %v2211 = vmul.f32 %v2147, %v2194
      %v2212 = vmul.f32 %v2152, %v2199
      %v2213 = vmul.f32 %v2155, %v2204
      %v2214 = vld [vmem:[%s3] sm:$0xff]
      %v2215 = vld [vmem:[%s3 + $0x8] sm:$0xff]
      %v2216 = vld [vmem:[%s3 + $0x10] sm:$0xff]
      %v2217 = vld [vmem:[%s3 + $0x18] sm:$0xff]
      %v2218 = vld [vmem:[%s3 + $0x20] sm:$0xff]
      %v2219 = vld [vmem:[%s3 + $0x28] sm:$0xff]
      %v2220 = vld [vmem:[%s3 + $0x30] sm:$0xff]
      %v2221 = vld [vmem:[%s3 + $0x38] sm:$0xff]
      %2223 = vset.pattern.permute.xlu0 0
      %2224 = vperm.xlu0 %2223, %v2214
      %v2225 = vpop.permute.xlu0 %2224
      %2228 = vset.pattern.permute.xlu0 0
      %2229 = vperm.xlu0 %2228, %v2215
      %v2230 = vpop.permute.xlu0 %2229
      %2233 = vset.pattern.permute.xlu0 0
      %2234 = vperm.xlu0 %2233, %v2216
      %v2235 = vpop.permute.xlu0 %2234
      %2238 = vset.pattern.permute.xlu0 0
      %2239 = vperm.xlu0 %2238, %v2217
      %v2240 = vpop.permute.xlu0 %2239
      %2243 = vset.pattern.permute.xlu0 0
      %2244 = vperm.xlu0 %2243, %v2218
      %v2245 = vpop.permute.xlu0 %2244
      %2248 = vset.pattern.permute.xlu0 0
      %2249 = vperm.xlu0 %2248, %v2219
      %v2250 = vpop.permute.xlu0 %2249
      %2253 = vset.pattern.permute.xlu0 0
      %2254 = vperm.xlu0 %2253, %v2220
      %v2255 = vpop.permute.xlu0 %2254
      %2258 = vset.pattern.permute.xlu0 0
      %2259 = vperm.xlu0 %2258, %v2221
      %v2260 = vpop.permute.xlu0 %2259
      %v2262 = vadd.f32 %v2206, %v2225
      %v2263 = vadd.f32 %v2207, %v2230
      %v2264 = vadd.f32 %v2208, %v2235
      %v2265 = vadd.f32 %v2209, %v2240
      %v2266 = vadd.f32 %v2210, %v2245
      %v2267 = vadd.f32 %v2211, %v2250
      %v2268 = vadd.f32 %v2212, %v2255
      %v2269 = vadd.f32 %v2213, %v2260
      %vm2270 = vcmp.ge.f32.partialorder %v2262, 0.0
      %vm2271 = vcmp.ge.f32.partialorder %v2263, 0.0
      %vm2272 = vcmp.ge.f32.partialorder %v2264, 0.0
      %vm2273 = vcmp.ge.f32.partialorder %v2265, 0.0
      %vm2274 = vcmp.ge.f32.partialorder %v2266, 0.0
      %vm2275 = vcmp.ge.f32.partialorder %v2267, 0.0
      %vm2276 = vcmp.ge.f32.partialorder %v2268, 0.0
      %vm2277 = vcmp.ge.f32.partialorder %v2269, 0.0
      %v2278 = vmul.f32 %v2262, 0.2
      %v2279 = vmul.f32 %v2263, 0.2
      %v2280 = vmul.f32 %v2264, 0.2
      %v2281 = vmul.f32 %v2265, 0.2
      %v2282 = vmul.f32 %v2266, 0.2
      %v2283 = vmul.f32 %v2267, 0.2
      %v2284 = vmul.f32 %v2268, 0.2
      %v2285 = vmul.f32 %v2269, 0.2
      %v2286 = vsel %vm2270, %v2262, %v2278
      %v2287 = vsel %vm2271, %v2263, %v2279
      %v2288 = vsel %vm2272, %v2264, %v2280
      %v2289 = vsel %vm2273, %v2265, %v2281
      %v2290 = vsel %vm2274, %v2266, %v2282
      %v2291 = vsel %vm2275, %v2267, %v2283
      %v2292 = vsel %vm2276, %v2268, %v2284
      %v2293 = vsel %vm2277, %v2269, %v2285
      %v2294 = vpack.c.bf16 %v2287, %v2286
      %v2295 = vpack.c.bf16 %v2289, %v2288
      %v2296 = vpack.c.bf16 %v2291, %v2290
      %v2297 = vpack.c.bf16 %v2293, %v2292
      %v2302 = vunpack.c.l.b16 %v2294
      %v2303 = vunpack.c.h.b16 %v2294
      %v2304 = vunpack.c.l.b16 %v2295
      %v2305 = vunpack.c.h.b16 %v2295
      %v2306 = vunpack.c.l.b16 %v2296
      %v2307 = vunpack.c.h.b16 %v2296
      %v2308 = vunpack.c.l.b16 %v2297
      %v2309 = vunpack.c.h.b16 %v2297
      %v2310 = vpack.c.b16 %v2302, %v2302
      %v2311 = vpack.c.b16 %v2303, %v2303
      %v2312 = vpack.c.b16 %v2304, %v2304
      %v2313 = vpack.c.b16 %v2305, %v2305
      %v2314 = vpack.c.b16 %v2306, %v2306
      %v2315 = vpack.c.b16 %v2307, %v2307
      %v2316 = vpack.c.b16 %v2308, %v2308
      %v2317 = vpack.c.b16 %v2309, %v2309
      %2326 = vst [vmem:[%s228] sm:$0xf] %v2310
      %2327 = vst [vmem:[%s228 + $0x4] sm:$0xf] %v2311
      %2328 = vst [vmem:[%s228 + $0x8] sm:$0xf] %v2312
      %2329 = vst [vmem:[%s228 + $0xc] sm:$0xf] %v2313
      %2330 = vst [vmem:[%s228 + $0x10] sm:$0xf] %v2314
      %2331 = vst [vmem:[%s228 + $0x14] sm:$0xf] %v2315
      %2332 = vst [vmem:[%s228 + $0x18] sm:$0xf] %v2316
      %2333 = vst [vmem:[%s228 + $0x1c] sm:$0xf] %v2317
      %p2334 = scmp.lt.s32.totalorder %s19, 1
      %s2335 = scalar_select %p2334, %s19, 1
      %p2336 = scmp.lt.s32.totalorder %s20, 0
      %s2337 = scalar_select %p2336, %s20, 0
      %s2338 = smul.addr %s2335, 8
      %s2339 = sadd.s32 %s2337, %s2338
      %s2340 = smul.addr %s2339, 4
      %s2341 = scalar_lea.vmem %s4, %s2340
      // Predicated region
      $region37: #{_lambda_.8} parent=35 // pred_check
        %p2342 = pneg %p138
      $region38: #{_lambda_.8} parent=35 // pred_check_branch
        %2344 = sbr.rel (%p2342) target = $region40
      $region39: #{_lambda_.8} parent=35 // pred_region
        _
      $region40: #{_lambda_.8} parent=35 // pred_fallthru
        _
    $region36: #{_lambda_.8} parent=5 // pred_fallthru
      _
    %p2345 = scmp.le.s32.totalorder 2, %s10
    // Predicated region
    $region41: #{_lambda_.8} parent=5 // pred_check
      %p2346 = pneg %p2345
    $region42: #{_lambda_.8} parent=5 // pred_check_branch
      %2348 = sbr.rel (%p2346) target = $region44
    $region43: #{_lambda_.8} parent=5 // pred_region
      %s2349 = ssub.s32 %s10, 2
      // Predicated region
      $region45: #{_lambda_.8} parent=43 // pred_check
        %p2350 = pneg %p144
      $region46: #{_lambda_.8} parent=43 // pred_check_branch
        %2352 = sbr.rel (%p2350) target = $region48
      $region47: #{_lambda_.8} parent=43 // pred_region
        %p2353 = scmp.lt.s32.totalorder %s21, 1
        %s2354 = scalar_select %p2353, %s21, 1
        %p2355 = scmp.lt.s32.totalorder %s22, 0
        %s2356 = scalar_select %p2355, %s22, 0
        %s2357 = smul.addr %s2354, 8
        %s2358 = sadd.s32 %s2356, %s2357
        %s2359 = smul.addr %s2358, 4
        %s2360 = scalar_lea.vmem %s4, %s2359
      $region48: #{_lambda_.8} parent=43 // pred_fallthru
        _
    $region44: #{_lambda_.8} parent=5 // pred_fallthru
      _
  $region6: #{_lambda_.8} parent=0 // loop_footer
    %s14 = sadd.s32 1, %s10
  $region7: #{_lambda_.8} parent=0 // loop_footer_branch
    %9 = sbr.rel target = $region3
  $region8: #{_lambda_.8} parent=0 // loop_exit
    _

// kernel: _lambda_.9
$region0: #{_lambda_.9}
  #allocation0 [shape = 'u32[]', space=smem, size = 0x4, offset = 0x4, fixed_abs, tag = 'smem constant byte address 0x4 - core index']
  #allocation1 [shape = 'u32[144,128]{1,0:T(1,128)}', space=vmem, size = 0x12000, scoped, tag = 'internal scratch']
  %s0 = inlined_call_operand.vmem [shape: bf16[16,4096], index: 0, kind: input, shape index: {}]
  %s1 = inlined_call_operand.vmem [shape: bf16[2,4096,128], index: 1, kind: input, shape index: {}]
  %s2 = inlined_call_operand.vmem [shape: f32[16,1], index: 2, kind: input, shape index: {}]
  %s3 = inlined_call_operand.vmem [shape: f32[16,1], index: 3, kind: input, shape index: {}]
  %s4 = inlined_call_operand.vmem [shape: f32[2,16,128], index: 4, kind: output, shape index: {}]
  %s5 = sld [smem:[#allocation0]]
  $region49: #{_lambda_.9} parent=0
    _
  %s7 = ssub.s32 1, %s5
  %s8 = scalar_select 0, %s7, %s5
  loop: start=0, step=1, limit=4
  $region2: #{_lambda_.9} parent=0 // loop_pre_header
    _
  $region3: #{_lambda_.9} parent=0 // loop_header
    %s10 = sphi 0, %s14
    %p11 = scmp.ge.s32.totalorder %s10, 4
    %s17 = sphi 0, %s29
    %s18 = sphi 0, %s25
    %s19 = sphi 0, %s17
    %s20 = sphi 0, %s18
    %s21 = sphi 0, %s19
    %s22 = sphi 0, %s20
    %s30 = sphi 0, %s30
    %s32 = sphi 0, %s30
    %s33 = sphi 0, %s32
    %s47 = sphi 0, %s33
    %s55 = sphi 0, %s57
    %s58 = sphi 0, %s55
    %s59 = sphi 0, %s58
    %s75 = sphi 0, %s59
    %s79 = sphi 0, %s79
    %s81 = sphi 0, %s79
    %s82 = sphi 0, %s81
    %s96 = sphi 0, %s82
    %s100 = sphi 0, %s100
    %s102 = sphi 0, %s100
    %s103 = sphi 0, %s102
    %s117 = sphi 0, %s103
    %s125 = sphi 0, %s127
    %s128 = sphi 0, %s125
    %s129 = sphi 0, %s128
    %s145 = sphi 0, %s129
  $region4: #{_lambda_.9} parent=0 // loop_header_branch
    %13 = sbr.rel (%p11) target = $region8
  $region5: #{_lambda_.9} parent=0 // loop_body
    %s15 = ssub.s32 %s10, 1
    %s16 = ssub.s32 %s10, 2
    %s23 = sadd.s32 1, %s18
    %p24 = scmp.ge.s32.totalorder %s23, 1
    %s25 = scalar_select %p24, 0, %s23
    %s26 = sadd.s32 1, %s17
    %s27 = scalar_select %p24, %s26, %s17
    %p28 = scmp.ge.s32.totalorder %s27, 2
    %s29 = scalar_select %p28, 0, %s27
    %s31 = sadd.s32 %s30, 1
    %p34 = scmp.eq.s32.totalorder %s10, 1
    %p35 = scmp.ne.s32.totalorder %s30, %s32
    %p36 = scmp.eq.s32.totalorder %s10, 0
    %p37 = por %p35, %p36
    %p38 = scmp.ne.s32.totalorder %s30, %s32
    %p39 = scmp.eq.s32.totalorder %s15, 1
    %p40 = por %p38, %p39
    %p41 = scmp.ne.s32.totalorder %s32, %s33
    %p42 = scmp.eq.s32.totalorder %s15, 0
    %p43 = por %p41, %p42
    %p44 = scmp.ne.s32.totalorder %s32, %s33
    %p45 = scmp.eq.s32.totalorder %s16, 1
    %p46 = por %p44, %p45
    %p48 = scmp.ne.s32.totalorder %s33, %s47
    %p49 = scmp.eq.s32.totalorder %s16, 0
    %p50 = por %p48, %p49
    %s51 = ssub.s32 %s17, %s29
    %s52 = ssub.s32 %s18, %s25
    %s53 = sor.u32 %s51, %s52
    %p54 = scmp.eq.s32.totalorder %s53, 0
    %s56 = sadd.s32 %s55, 1
    %s57 = scalar_select %p54, %s55, %s56
    %p60 = pneg %p54
    %p61 = scmp.eq.s32.totalorder %s10, 1
    %p62 = por %p60, %p61
    %p63 = scmp.ne.s32.totalorder %s55, %s58
    %p64 = scmp.eq.s32.totalorder %s10, 0
    %p65 = por %p63, %p64
    %p66 = scmp.ne.s32.totalorder %s55, %s58
    %p67 = scmp.eq.s32.totalorder %s15, 1
    %p68 = por %p66, %p67
    %p69 = scmp.ne.s32.totalorder %s58, %s59
    %p70 = scmp.eq.s32.totalorder %s15, 0
    %p71 = por %p69, %p70
    %p72 = scmp.ne.s32.totalorder %s58, %s59
    %p73 = scmp.eq.s32.totalorder %s16, 1
    %p74 = por %p72, %p73
    %p76 = scmp.ne.s32.totalorder %s59, %s75
    %p77 = scmp.eq.s32.totalorder %s16, 0
    %p78 = por %p76, %p77
    %s80 = sadd.s32 %s79, 1
    %p83 = scmp.eq.s32.totalorder %s10, 1
    %p84 = scmp.ne.s32.totalorder %s79, %s81
    %p85 = scmp.eq.s32.totalorder %s10, 0
    %p86 = por %p84, %p85
    %p87 = scmp.ne.s32.totalorder %s79, %s81
    %p88 = scmp.eq.s32.totalorder %s15, 1
    %p89 = por %p87, %p88
    %p90 = scmp.ne.s32.totalorder %s81, %s82
    %p91 = scmp.eq.s32.totalorder %s15, 0
    %p92 = por %p90, %p91
    %p93 = scmp.ne.s32.totalorder %s81, %s82
    %p94 = scmp.eq.s32.totalorder %s16, 1
    %p95 = por %p93, %p94
    %p97 = scmp.ne.s32.totalorder %s82, %s96
    %p98 = scmp.eq.s32.totalorder %s16, 0
    %p99 = por %p97, %p98
    %s101 = sadd.s32 %s100, 1
    %p104 = scmp.eq.s32.totalorder %s10, 1
    %p105 = scmp.ne.s32.totalorder %s100, %s102
    %p106 = scmp.eq.s32.totalorder %s10, 0
    %p107 = por %p105, %p106
    %p108 = scmp.ne.s32.totalorder %s100, %s102
    %p109 = scmp.eq.s32.totalorder %s15, 1
    %p110 = por %p108, %p109
    %p111 = scmp.ne.s32.totalorder %s102, %s103
    %p112 = scmp.eq.s32.totalorder %s15, 0
    %p113 = por %p111, %p112
    %p114 = scmp.ne.s32.totalorder %s102, %s103
    %p115 = scmp.eq.s32.totalorder %s16, 1
    %p116 = por %p114, %p115
    %p118 = scmp.ne.s32.totalorder %s103, %s117
    %p119 = scmp.eq.s32.totalorder %s16, 0
    %p120 = por %p118, %p119
    %s121 = ssub.s32 %s17, %s29
    %s122 = ssub.s32 %s18, %s25
    %s123 = sor.u32 %s121, %s122
    %p124 = scmp.eq.s32.totalorder %s123, 0
    %s126 = sadd.s32 %s125, 1
    %s127 = scalar_select %p124, %s125, %s126
    %p130 = pneg %p124
    %p131 = scmp.eq.s32.totalorder %s10, 1
    %p132 = por %p130, %p131
    %p133 = scmp.ne.s32.totalorder %s125, %s128
    %p134 = scmp.eq.s32.totalorder %s10, 0
    %p135 = por %p133, %p134
    %p136 = scmp.ne.s32.totalorder %s125, %s128
    %p137 = scmp.eq.s32.totalorder %s15, 1
    %p138 = por %p136, %p137
    %p139 = scmp.ne.s32.totalorder %s128, %s129
    %p140 = scmp.eq.s32.totalorder %s15, 0
    %p141 = por %p139, %p140
    %p142 = scmp.ne.s32.totalorder %s128, %s129
    %p143 = scmp.eq.s32.totalorder %s16, 1
    %p144 = por %p142, %p143
    %p146 = scmp.ne.s32.totalorder %s129, %s145
    %p147 = scmp.eq.s32.totalorder %s16, 0
    %p148 = por %p146, %p147
    %p149 = scmp.le.s32.totalorder 1, %s10
    %p150 = scmp.lt.s32.totalorder %s10, 3
    %p151 = pnand %p149, %p150
    %p152 = pneg %p151
    // Predicated region
    $region9: #{_lambda_.9} parent=5 // pred_check
      _
    $region10: #{_lambda_.9} parent=5 // pred_check_branch
      %154 = sbr.rel (%p151) target = $region12
    $region11: #{_lambda_.9} parent=5 // pred_region
      %s155 = ssub.s32 %s10, 1
      // Predicated region
      $region13: #{_lambda_.9} parent=11 // pred_check
        %p156 = pneg %p43
      $region14: #{_lambda_.9} parent=11 // pred_check_branch
        %158 = sbr.rel (%p156) target = $region16
      $region15: #{_lambda_.9} parent=11 // pred_region
        _
      $region16: #{_lambda_.9} parent=11 // pred_fallthru
        _
      // Predicated region
      $region17: #{_lambda_.9} parent=11 // pred_check
        %p159 = pneg %p92
      $region18: #{_lambda_.9} parent=11 // pred_check_branch
        %161 = sbr.rel (%p159) target = $region20
      $region19: #{_lambda_.9} parent=11 // pred_region
        _
      $region20: #{_lambda_.9} parent=11 // pred_fallthru
        _
      // Predicated region
      $region21: #{_lambda_.9} parent=11 // pred_check
        %p162 = pneg %p113
      $region22: #{_lambda_.9} parent=11 // pred_check_branch
        %164 = sbr.rel (%p162) target = $region24
      $region23: #{_lambda_.9} parent=11 // pred_region
        _
      $region24: #{_lambda_.9} parent=11 // pred_fallthru
        _
    $region12: #{_lambda_.9} parent=5 // pred_fallthru
      _
    %p165 = scmp.lt.s32.totalorder %s10, 2
    // Predicated region
    $region25: #{_lambda_.9} parent=5 // pred_check
      %p166 = pneg %p165
    $region26: #{_lambda_.9} parent=5 // pred_check_branch
      %168 = sbr.rel (%p166) target = $region28
    $region27: #{_lambda_.9} parent=5 // pred_region
      // Predicated region
      $region29: #{_lambda_.9} parent=27 // pred_check
        %p169 = pneg %p65
      $region30: #{_lambda_.9} parent=27 // pred_check_branch
        %171 = sbr.rel (%p169) target = $region32
      $region31: #{_lambda_.9} parent=27 // pred_region
        %p172 = scmp.lt.s32.totalorder %s17, 1
        %s173 = scalar_select %p172, %s17, 1
        %p174 = scmp.lt.s32.totalorder %s18, 0
        %s175 = scalar_select %p174, %s18, 0
        %s176 = smul.addr %s173, 512
        %s177 = sadd.s32 %s175, %s176
        %s178 = smul.addr %s177, 4
        %s179 = scalar_lea.vmem %s1, %s178
      $region32: #{_lambda_.9} parent=27 // pred_fallthru
        _
    $region28: #{_lambda_.9} parent=5 // pred_fallthru
      _
    %p180 = scmp.le.s32.totalorder 1, %s10
    %p181 = scmp.lt.s32.totalorder %s10, 3
    %p182 = pnand %p180, %p181
    %p183 = pneg %p182
    // Predicated region
    $region33: #{_lambda_.9} parent=5 // pred_check
      _
    $region34: #{_lambda_.9} parent=5 // pred_check_branch
      %185 = sbr.rel (%p182) target = $region36
    $region35: #{_lambda_.9} parent=5 // pred_region
      %s186 = ssub.s32 %s10, 1
      %p187 = pneg %p43
      %p188 = pneg %p40
      %p189 = scmp.lt.s32.totalorder %s19, 1
      %s190 = scalar_select %p189, %s19, 1
      %p191 = scmp.lt.s32.totalorder %s20, 0
      %s192 = scalar_select %p191, %s20, 0
      %s193 = smul.addr %s190, 512
      %s194 = sadd.s32 %s192, %s193
      %s195 = smul.addr %s194, 4
      %s196 = scalar_lea.vmem %s1, %s195
      %p197 = pneg %p71
      %p198 = pneg %p68
      %p199 = pneg %p92
      %p200 = pneg %p89
      %p201 = pneg %p113
      %p202 = pneg %p110
      %p203 = pneg %p141
      %p204 = pneg %p138
      %p205 = scmp.lt.s32.totalorder %s19, 1
      %s206 = scalar_select %p205, %s19, 1
      %p207 = scmp.lt.s32.totalorder %s20, 0
      %s208 = scalar_select %p207, %s20, 0
      %s209 = smul.addr %s206, 2
      %s210 = sadd.s32 %s208, %s209
      %s211 = smul.addr %s210, 8
      %s212 = scalar_lea.vmem %s4, %s211
      %p213 = scmp.lt.s32.totalorder %s19, 1
      %s214 = scalar_select %p213, %s19, 1
      %p215 = scmp.lt.s32.totalorder %s20, 0
      %s216 = scalar_select %p215, %s20, 0
      %s217 = smul.addr %s214, 512
      %s218 = sadd.s32 %s216, %s217
      %s219 = smul.addr %s218, 4
      %s220 = scalar_lea.vmem %s1, %s219
      %p221 = scmp.lt.s32.totalorder %s19, 1
      %s222 = scalar_select %p221, %s19, 1
      %p223 = scmp.lt.s32.totalorder %s20, 0
      %s224 = scalar_select %p223, %s20, 0
      %s225 = smul.addr %s222, 2
      %s226 = sadd.s32 %s224, %s225
      %s227 = smul.addr %s226, 8
      %s228 = scalar_lea.vmem %s4, %s227
      %v230 = vld [vmem:[%s0] sm:$0xff]
      %v231 = vld [vmem:[%s0 + $0x8] sm:$0xff]
      %v232 = vld [vmem:[%s0 + $0x10] sm:$0xff]
      %v233 = vld [vmem:[%s0 + $0x18] sm:$0xff]
      %v234 = vld [vmem:[%s0 + $0x20] sm:$0xff]
      %v235 = vld [vmem:[%s0 + $0x28] sm:$0xff]
      %v236 = vld [vmem:[%s0 + $0x30] sm:$0xff]
      %v237 = vld [vmem:[%s0 + $0x38] sm:$0xff]
      %v238 = vld [vmem:[%s0 + $0x40] sm:$0xff]
      %v239 = vld [vmem:[%s0 + $0x48] sm:$0xff]
      %v240 = vld [vmem:[%s0 + $0x50] sm:$0xff]
      %v241 = vld [vmem:[%s0 + $0x58] sm:$0xff]
      %v242 = vld [vmem:[%s0 + $0x60] sm:$0xff]
      %v243 = vld [vmem:[%s0 + $0x68] sm:$0xff]
      %v244 = vld [vmem:[%s0 + $0x70] sm:$0xff]
      %v245 = vld [vmem:[%s0 + $0x78] sm:$0xff]
      %v246 = vld [vmem:[%s0 + $0x80] sm:$0xff]
      %v247 = vld [vmem:[%s0 + $0x88] sm:$0xff]
      %v248 = vld [vmem:[%s0 + $0x90] sm:$0xff]
      %v249 = vld [vmem:[%s0 + $0x98] sm:$0xff]
      %v250 = vld [vmem:[%s0 + $0xa0] sm:$0xff]
      %v251 = vld [vmem:[%s0 + $0xa8] sm:$0xff]
      %v252 = vld [vmem:[%s0 + $0xb0] sm:$0xff]
      %v253 = vld [vmem:[%s0 + $0xb8] sm:$0xff]
      %v254 = vld [vmem:[%s0 + $0xc0] sm:$0xff]
      %v255 = vld [vmem:[%s0 + $0xc8] sm:$0xff]
      %v256 = vld [vmem:[%s0 + $0xd0] sm:$0xff]
      %v257 = vld [vmem:[%s0 + $0xd8] sm:$0xff]
      %v258 = vld [vmem:[%s0 + $0xe0] sm:$0xff]
      %v259 = vld [vmem:[%s0 + $0xe8] sm:$0xff]
      %v260 = vld [vmem:[%s0 + $0xf0] sm:$0xff]
      %v261 = vld [vmem:[%s0 + $0xf8] sm:$0xff]
      %v262 = vld [vmem:[%s220] sm:$0xf]
      %v263 = vld [vmem:[%s220 + $0x4] sm:$0xf]
      %v264 = vld [vmem:[%s220 + $0x8] sm:$0xf]
      %v265 = vld [vmem:[%s220 + $0xc] sm:$0xf]
      %v266 = vld [vmem:[%s220 + $0x10] sm:$0xf]
      %v267 = vld [vmem:[%s220 + $0x14] sm:$0xf]
      %v268 = vld [vmem:[%s220 + $0x18] sm:$0xf]
      %v269 = vld [vmem:[%s220 + $0x1c] sm:$0xf]
      %v270 = vld [vmem:[%s220 + $0x20] sm:$0xf]
      %v271 = vld [vmem:[%s220 + $0x24] sm:$0xf]
      %v272 = vld [vmem:[%s220 + $0x28] sm:$0xf]
      %v273 = vld [vmem:[%s220 + $0x2c] sm:$0xf]
      %v274 = vld [vmem:[%s220 + $0x30] sm:$0xf]
      %v275 = vld [vmem:[%s220 + $0x34] sm:$0xf]
      %v276 = vld [vmem:[%s220 + $0x38] sm:$0xf]
      %v277 = vld [vmem:[%s220 + $0x3c] sm:$0xf]
      %v278 = vld [vmem:[%s220 + $0x40] sm:$0xf]
      %v279 = vld [vmem:[%s220 + $0x44] sm:$0xf]
      %v280 = vld [vmem:[%s220 + $0x48] sm:$0xf]
      %v281 = vld [vmem:[%s220 + $0x4c] sm:$0xf]
      %v282 = vld [vmem:[%s220 + $0x50] sm:$0xf]
      %v283 = vld [vmem:[%s220 + $0x54] sm:$0xf]
      %v284 = vld [vmem:[%s220 + $0x58] sm:$0xf]
      %v285 = vld [vmem:[%s220 + $0x5c] sm:$0xf]
      %v286 = vld [vmem:[%s220 + $0x60] sm:$0xf]
      %v287 = vld [vmem:[%s220 + $0x64] sm:$0xf]
      %v288 = vld [vmem:[%s220 + $0x68] sm:$0xf]
      %v289 = vld [vmem:[%s220 + $0x6c] sm:$0xf]
      %v290 = vld [vmem:[%s220 + $0x70] sm:$0xf]
      %v291 = vld [vmem:[%s220 + $0x74] sm:$0xf]
      %v292 = vld [vmem:[%s220 + $0x78] sm:$0xf]
      %v293 = vld [vmem:[%s220 + $0x7c] sm:$0xf]
      %v294 = vld [vmem:[%s220 + $0x80] sm:$0xf]
      %v295 = vld [vmem:[%s220 + $0x84] sm:$0xf]
      %v296 = vld [vmem:[%s220 + $0x88] sm:$0xf]
      %v297 = vld [vmem:[%s220 + $0x8c] sm:$0xf]
      %v298 = vld [vmem:[%s220 + $0x90] sm:$0xf]
      %v299 = vld [vmem:[%s220 + $0x94] sm:$0xf]
      %v300 = vld [vmem:[%s220 + $0x98] sm:$0xf]
      %v301 = vld [vmem:[%s220 + $0x9c] sm:$0xf]
      %v302 = vld [vmem:[%s220 + $0xa0] sm:$0xf]
      %v303 = vld [vmem:[%s220 + $0xa4] sm:$0xf]
      %v304 = vld [vmem:[%s220 + $0xa8] sm:$0xf]
      %v305 = vld [vmem:[%s220 + $0xac] sm:$0xf]
      %v306 = vld [vmem:[%s220 + $0xb0] sm:$0xf]
      %v307 = vld [vmem:[%s220 + $0xb4] sm:$0xf]
      %v308 = vld [vmem:[%s220 + $0xb8] sm:$0xf]
      %v309 = vld [vmem:[%s220 + $0xbc] sm:$0xf]
      %v310 = vld [vmem:[%s220 + $0xc0] sm:$0xf]
      %v311 = vld [vmem:[%s220 + $0xc4] sm:$0xf]
      %v312 = vld [vmem:[%s220 + $0xc8] sm:$0xf]
      %v313 = vld [vmem:[%s220 + $0xcc] sm:$0xf]
      %v314 = vld [vmem:[%s220 + $0xd0] sm:$0xf]
      %v315 = vld [vmem:[%s220 + $0xd4] sm:$0xf]
      %v316 = vld [vmem:[%s220 + $0xd8] sm:$0xf]
      %v317 = vld [vmem:[%s220 + $0xdc] sm:$0xf]
      %v318 = vld [vmem:[%s220 + $0xe0] sm:$0xf]
      %v319 = vld [vmem:[%s220 + $0xe4] sm:$0xf]
      %v320 = vld [vmem:[%s220 + $0xe8] sm:$0xf]
      %v321 = vld [vmem:[%s220 + $0xec] sm:$0xf]
      %v322 = vld [vmem:[%s220 + $0xf0] sm:$0xf]
      %v323 = vld [vmem:[%s220 + $0xf4] sm:$0xf]
      %v324 = vld [vmem:[%s220 + $0xf8] sm:$0xf]
      %v325 = vld [vmem:[%s220 + $0xfc] sm:$0xf]
      %v326 = vld [vmem:[%s220 + $0x100] sm:$0xf]
      %v327 = vld [vmem:[%s220 + $0x104] sm:$0xf]
      %v328 = vld [vmem:[%s220 + $0x108] sm:$0xf]
      %v329 = vld [vmem:[%s220 + $0x10c] sm:$0xf]
      %v330 = vld [vmem:[%s220 + $0x110] sm:$0xf]
      %v331 = vld [vmem:[%s220 + $0x114] sm:$0xf]
      %v332 = vld [vmem:[%s220 + $0x118] sm:$0xf]
      %v333 = vld [vmem:[%s220 + $0x11c] sm:$0xf]
      %v334 = vld [vmem:[%s220 + $0x120] sm:$0xf]
      %v335 = vld [vmem:[%s220 + $0x124] sm:$0xf]
      %v336 = vld [vmem:[%s220 + $0x128] sm:$0xf]
      %v337 = vld [vmem:[%s220 + $0x12c] sm:$0xf]
      %v338 = vld [vmem:[%s220 + $0x130] sm:$0xf]
      %v339 = vld [vmem:[%s220 + $0x134] sm:$0xf]
      %v340 = vld [vmem:[%s220 + $0x138] sm:$0xf]
      %v341 = vld [vmem:[%s220 + $0x13c] sm:$0xf]
      %v342 = vld [vmem:[%s220 + $0x140] sm:$0xf]
      %v343 = vld [vmem:[%s220 + $0x144] sm:$0xf]
      %v344 = vld [vmem:[%s220 + $0x148] sm:$0xf]
      %v345 = vld [vmem:[%s220 + $0x14c] sm:$0xf]
      %v346 = vld [vmem:[%s220 + $0x150] sm:$0xf]
      %v347 = vld [vmem:[%s220 + $0x154] sm:$0xf]
      %v348 = vld [vmem:[%s220 + $0x158] sm:$0xf]
      %v349 = vld [vmem:[%s220 + $0x15c] sm:$0xf]
      %v350 = vld [vmem:[%s220 + $0x160] sm:$0xf]
      %v351 = vld [vmem:[%s220 + $0x164] sm:$0xf]
      %v352 = vld [vmem:[%s220 + $0x168] sm:$0xf]
      %v353 = vld [vmem:[%s220 + $0x16c] sm:$0xf]
      %v354 = vld [vmem:[%s220 + $0x170] sm:$0xf]
      %v355 = vld [vmem:[%s220 + $0x174] sm:$0xf]
      %v356 = vld [vmem:[%s220 + $0x178] sm:$0xf]
      %v357 = vld [vmem:[%s220 + $0x17c] sm:$0xf]
      %v358 = vld [vmem:[%s220 + $0x180] sm:$0xf]
      %v359 = vld [vmem:[%s220 + $0x184] sm:$0xf]
      %v360 = vld [vmem:[%s220 + $0x188] sm:$0xf]
      %v361 = vld [vmem:[%s220 + $0x18c] sm:$0xf]
      %v362 = vld [vmem:[%s220 + $0x190] sm:$0xf]
      %v363 = vld [vmem:[%s220 + $0x194] sm:$0xf]
      %v364 = vld [vmem:[%s220 + $0x198] sm:$0xf]
      %v365 = vld [vmem:[%s220 + $0x19c] sm:$0xf]
      %v366 = vld [vmem:[%s220 + $0x1a0] sm:$0xf]
      %v367 = vld [vmem:[%s220 + $0x1a4] sm:$0xf]
      %v368 = vld [vmem:[%s220 + $0x1a8] sm:$0xf]
      %v369 = vld [vmem:[%s220 + $0x1ac] sm:$0xf]
      %v370 = vld [vmem:[%s220 + $0x1b0] sm:$0xf]
      %v371 = vld [vmem:[%s220 + $0x1b4] sm:$0xf]
      %v372 = vld [vmem:[%s220 + $0x1b8] sm:$0xf]
      %v373 = vld [vmem:[%s220 + $0x1bc] sm:$0xf]
      %v374 = vld [vmem:[%s220 + $0x1c0] sm:$0xf]
      %v375 = vld [vmem:[%s220 + $0x1c4] sm:$0xf]
      %v376 = vld [vmem:[%s220 + $0x1c8] sm:$0xf]
      %v377 = vld [vmem:[%s220 + $0x1cc] sm:$0xf]
      %v378 = vld [vmem:[%s220 + $0x1d0] sm:$0xf]
      %v379 = vld [vmem:[%s220 + $0x1d4] sm:$0xf]
      %v380 = vld [vmem:[%s220 + $0x1d8] sm:$0xf]
      %v381 = vld [vmem:[%s220 + $0x1dc] sm:$0xf]
      %v382 = vld [vmem:[%s220 + $0x1e0] sm:$0xf]
      %v383 = vld [vmem:[%s220 + $0x1e4] sm:$0xf]
      %v384 = vld [vmem:[%s220 + $0x1e8] sm:$0xf]
      %v385 = vld [vmem:[%s220 + $0x1ec] sm:$0xf]
      %v386 = vld [vmem:[%s220 + $0x1f0] sm:$0xf]
      %v387 = vld [vmem:[%s220 + $0x1f4] sm:$0xf]
      %v388 = vld [vmem:[%s220 + $0x1f8] sm:$0xf]
      %v389 = vld [vmem:[%s220 + $0x1fc] sm:$0xf]
      %v390 = vld [vmem:[%s220 + $0x200] sm:$0xf]
      %v391 = vld [vmem:[%s220 + $0x204] sm:$0xf]
      %v392 = vld [vmem:[%s220 + $0x208] sm:$0xf]
      %v393 = vld [vmem:[%s220 + $0x20c] sm:$0xf]
      %v394 = vld [vmem:[%s220 + $0x210] sm:$0xf]
      %v395 = vld [vmem:[%s220 + $0x214] sm:$0xf]
      %v396 = vld [vmem:[%s220 + $0x218] sm:$0xf]
      %v397 = vld [vmem:[%s220 + $0x21c] sm:$0xf]
      %v398 = vld [vmem:[%s220 + $0x220] sm:$0xf]
      %v399 = vld [vmem:[%s220 + $0x224] sm:$0xf]
      %v400 = vld [vmem:[%s220 + $0x228] sm:$0xf]
      %v401 = vld [vmem:[%s220 + $0x22c] sm:$0xf]
      %v402 = vld [vmem:[%s220 + $0x230] sm:$0xf]
      %v403 = vld [vmem:[%s220 + $0x234] sm:$0xf]
      %v404 = vld [vmem:[%s220 + $0x238] sm:$0xf]
      %v405 = vld [vmem:[%s220 + $0x23c] sm:$0xf]
      %v406 = vld [vmem:[%s220 + $0x240] sm:$0xf]
      %v407 = vld [vmem:[%s220 + $0x244] sm:$0xf]
      %v408 = vld [vmem:[%s220 + $0x248] sm:$0xf]
      %v409 = vld [vmem:[%s220 + $0x24c] sm:$0xf]
      %v410 = vld [vmem:[%s220 + $0x250] sm:$0xf]
      %v411 = vld [vmem:[%s220 + $0x254] sm:$0xf]
      %v412 = vld [vmem:[%s220 + $0x258] sm:$0xf]
      %v413 = vld [vmem:[%s220 + $0x25c] sm:$0xf]
      %v414 = vld [vmem:[%s220 + $0x260] sm:$0xf]
      %v415 = vld [vmem:[%s220 + $0x264] sm:$0xf]
      %v416 = vld [vmem:[%s220 + $0x268] sm:$0xf]
      %v417 = vld [vmem:[%s220 + $0x26c] sm:$0xf]
      %v418 = vld [vmem:[%s220 + $0x270] sm:$0xf]
      %v419 = vld [vmem:[%s220 + $0x274] sm:$0xf]
      %v420 = vld [vmem:[%s220 + $0x278] sm:$0xf]
      %v421 = vld [vmem:[%s220 + $0x27c] sm:$0xf]
      %v422 = vld [vmem:[%s220 + $0x280] sm:$0xf]
      %v423 = vld [vmem:[%s220 + $0x284] sm:$0xf]
      %v424 = vld [vmem:[%s220 + $0x288] sm:$0xf]
      %v425 = vld [vmem:[%s220 + $0x28c] sm:$0xf]
      %v426 = vld [vmem:[%s220 + $0x290] sm:$0xf]
      %v427 = vld [vmem:[%s220 + $0x294] sm:$0xf]
      %v428 = vld [vmem:[%s220 + $0x298] sm:$0xf]
      %v429 = vld [vmem:[%s220 + $0x29c] sm:$0xf]
      %v430 = vld [vmem:[%s220 + $0x2a0] sm:$0xf]
      %v431 = vld [vmem:[%s220 + $0x2a4] sm:$0xf]
      %v432 = vld [vmem:[%s220 + $0x2a8] sm:$0xf]
      %v433 = vld [vmem:[%s220 + $0x2ac] sm:$0xf]
      %v434 = vld [vmem:[%s220 + $0x2b0] sm:$0xf]
      %v435 = vld [vmem:[%s220 + $0x2b4] sm:$0xf]
      %v436 = vld [vmem:[%s220 + $0x2b8] sm:$0xf]
      %v437 = vld [vmem:[%s220 + $0x2bc] sm:$0xf]
      %v438 = vld [vmem:[%s220 + $0x2c0] sm:$0xf]
      %v439 = vld [vmem:[%s220 + $0x2c4] sm:$0xf]
      %v440 = vld [vmem:[%s220 + $0x2c8] sm:$0xf]
      %v441 = vld [vmem:[%s220 + $0x2cc] sm:$0xf]
      %v442 = vld [vmem:[%s220 + $0x2d0] sm:$0xf]
      %v443 = vld [vmem:[%s220 + $0x2d4] sm:$0xf]
      %v444 = vld [vmem:[%s220 + $0x2d8] sm:$0xf]
      %v445 = vld [vmem:[%s220 + $0x2dc] sm:$0xf]
      %v446 = vld [vmem:[%s220 + $0x2e0] sm:$0xf]
      %v447 = vld [vmem:[%s220 + $0x2e4] sm:$0xf]
      %v448 = vld [vmem:[%s220 + $0x2e8] sm:$0xf]
      %v449 = vld [vmem:[%s220 + $0x2ec] sm:$0xf]
      %v450 = vld [vmem:[%s220 + $0x2f0] sm:$0xf]
      %v451 = vld [vmem:[%s220 + $0x2f4] sm:$0xf]
      %v452 = vld [vmem:[%s220 + $0x2f8] sm:$0xf]
      %v453 = vld [vmem:[%s220 + $0x2fc] sm:$0xf]
      %v454 = vld [vmem:[%s220 + $0x300] sm:$0xf]
      %v455 = vld [vmem:[%s220 + $0x304] sm:$0xf]
      %v456 = vld [vmem:[%s220 + $0x308] sm:$0xf]
      %v457 = vld [vmem:[%s220 + $0x30c] sm:$0xf]
      %v458 = vld [vmem:[%s220 + $0x310] sm:$0xf]
      %v459 = vld [vmem:[%s220 + $0x314] sm:$0xf]
      %v460 = vld [vmem:[%s220 + $0x318] sm:$0xf]
      %v461 = vld [vmem:[%s220 + $0x31c] sm:$0xf]
      %v462 = vld [vmem:[%s220 + $0x320] sm:$0xf]
      %v463 = vld [vmem:[%s220 + $0x324] sm:$0xf]
      %v464 = vld [vmem:[%s220 + $0x328] sm:$0xf]
      %v465 = vld [vmem:[%s220 + $0x32c] sm:$0xf]
      %v466 = vld [vmem:[%s220 + $0x330] sm:$0xf]
      %v467 = vld [vmem:[%s220 + $0x334] sm:$0xf]
      %v468 = vld [vmem:[%s220 + $0x338] sm:$0xf]
      %v469 = vld [vmem:[%s220 + $0x33c] sm:$0xf]
      %v470 = vld [vmem:[%s220 + $0x340] sm:$0xf]
      %v471 = vld [vmem:[%s220 + $0x344] sm:$0xf]
      %v472 = vld [vmem:[%s220 + $0x348] sm:$0xf]
      %v473 = vld [vmem:[%s220 + $0x34c] sm:$0xf]
      %v474 = vld [vmem:[%s220 + $0x350] sm:$0xf]
      %v475 = vld [vmem:[%s220 + $0x354] sm:$0xf]
      %v476 = vld [vmem:[%s220 + $0x358] sm:$0xf]
      %v477 = vld [vmem:[%s220 + $0x35c] sm:$0xf]
      %v478 = vld [vmem:[%s220 + $0x360] sm:$0xf]
      %v479 = vld [vmem:[%s220 + $0x364] sm:$0xf]
      %v480 = vld [vmem:[%s220 + $0x368] sm:$0xf]
      %v481 = vld [vmem:[%s220 + $0x36c] sm:$0xf]
      %v482 = vld [vmem:[%s220 + $0x370] sm:$0xf]
      %v483 = vld [vmem:[%s220 + $0x374] sm:$0xf]
      %v484 = vld [vmem:[%s220 + $0x378] sm:$0xf]
      %v485 = vld [vmem:[%s220 + $0x37c] sm:$0xf]
      %v486 = vld [vmem:[%s220 + $0x380] sm:$0xf]
      %v487 = vld [vmem:[%s220 + $0x384] sm:$0xf]
      %v488 = vld [vmem:[%s220 + $0x388] sm:$0xf]
      %v489 = vld [vmem:[%s220 + $0x38c] sm:$0xf]
      %v490 = vld [vmem:[%s220 + $0x390] sm:$0xf]
      %v491 = vld [vmem:[%s220 + $0x394] sm:$0xf]
      %v492 = vld [vmem:[%s220 + $0x398] sm:$0xf]
      %v493 = vld [vmem:[%s220 + $0x39c] sm:$0xf]
      %v494 = vld [vmem:[%s220 + $0x3a0] sm:$0xf]
      %v495 = vld [vmem:[%s220 + $0x3a4] sm:$0xf]
      %v496 = vld [vmem:[%s220 + $0x3a8] sm:$0xf]
      %v497 = vld [vmem:[%s220 + $0x3ac] sm:$0xf]
      %v498 = vld [vmem:[%s220 + $0x3b0] sm:$0xf]
      %v499 = vld [vmem:[%s220 + $0x3b4] sm:$0xf]
      %v500 = vld [vmem:[%s220 + $0x3b8] sm:$0xf]
      %v501 = vld [vmem:[%s220 + $0x3bc] sm:$0xf]
      %v502 = vld [vmem:[%s220 + $0x3c0] sm:$0xf]
      %v503 = vld [vmem:[%s220 + $0x3c4] sm:$0xf]
      %v504 = vld [vmem:[%s220 + $0x3c8] sm:$0xf]
      %v505 = vld [vmem:[%s220 + $0x3cc] sm:$0xf]
      %v506 = vld [vmem:[%s220 + $0x3d0] sm:$0xf]
      %v507 = vld [vmem:[%s220 + $0x3d4] sm:$0xf]
      %v508 = vld [vmem:[%s220 + $0x3d8] sm:$0xf]
      %v509 = vld [vmem:[%s220 + $0x3dc] sm:$0xf]
      %v510 = vld [vmem:[%s220 + $0x3e0] sm:$0xf]
      %v511 = vld [vmem:[%s220 + $0x3e4] sm:$0xf]
      %v512 = vld [vmem:[%s220 + $0x3e8] sm:$0xf]
      %v513 = vld [vmem:[%s220 + $0x3ec] sm:$0xf]
      %v514 = vld [vmem:[%s220 + $0x3f0] sm:$0xf]
      %v515 = vld [vmem:[%s220 + $0x3f4] sm:$0xf]
      %v516 = vld [vmem:[%s220 + $0x3f8] sm:$0xf]
      %v517 = vld [vmem:[%s220 + $0x3fc] sm:$0xf]
      %v518 = vld [vmem:[%s220 + $0x400] sm:$0xf]
      %v519 = vld [vmem:[%s220 + $0x404] sm:$0xf]
      %v520 = vld [vmem:[%s220 + $0x408] sm:$0xf]
      %v521 = vld [vmem:[%s220 + $0x40c] sm:$0xf]
      %v522 = vld [vmem:[%s220 + $0x410] sm:$0xf]
      %v523 = vld [vmem:[%s220 + $0x414] sm:$0xf]
      %v524 = vld [vmem:[%s220 + $0x418] sm:$0xf]
      %v525 = vld [vmem:[%s220 + $0x41c] sm:$0xf]
      %v526 = vld [vmem:[%s220 + $0x420] sm:$0xf]
      %v527 = vld [vmem:[%s220 + $0x424] sm:$0xf]
      %v528 = vld [vmem:[%s220 + $0x428] sm:$0xf]
      %v529 = vld [vmem:[%s220 + $0x42c] sm:$0xf]
      %v530 = vld [vmem:[%s220 + $0x430] sm:$0xf]
      %v531 = vld [vmem:[%s220 + $0x434] sm:$0xf]
      %v532 = vld [vmem:[%s220 + $0x438] sm:$0xf]
      %v533 = vld [vmem:[%s220 + $0x43c] sm:$0xf]
      %v534 = vld [vmem:[%s220 + $0x440] sm:$0xf]
      %v535 = vld [vmem:[%s220 + $0x444] sm:$0xf]
      %v536 = vld [vmem:[%s220 + $0x448] sm:$0xf]
      %v537 = vld [vmem:[%s220 + $0x44c] sm:$0xf]
      %v538 = vld [vmem:[%s220 + $0x450] sm:$0xf]
      %v539 = vld [vmem:[%s220 + $0x454] sm:$0xf]
      %v540 = vld [vmem:[%s220 + $0x458] sm:$0xf]
      %v541 = vld [vmem:[%s220 + $0x45c] sm:$0xf]
      %v542 = vld [vmem:[%s220 + $0x460] sm:$0xf]
      %v543 = vld [vmem:[%s220 + $0x464] sm:$0xf]
      %v544 = vld [vmem:[%s220 + $0x468] sm:$0xf]
      %v545 = vld [vmem:[%s220 + $0x46c] sm:$0xf]
      %v546 = vld [vmem:[%s220 + $0x470] sm:$0xf]
      %v547 = vld [vmem:[%s220 + $0x474] sm:$0xf]
      %v548 = vld [vmem:[%s220 + $0x478] sm:$0xf]
      %v549 = vld [vmem:[%s220 + $0x47c] sm:$0xf]
      %v550 = vld [vmem:[%s220 + $0x480] sm:$0xf]
      %v551 = vld [vmem:[%s220 + $0x484] sm:$0xf]
      %v552 = vld [vmem:[%s220 + $0x488] sm:$0xf]
      %v553 = vld [vmem:[%s220 + $0x48c] sm:$0xf]
      %v554 = vld [vmem:[%s220 + $0x490] sm:$0xf]
      %v555 = vld [vmem:[%s220 + $0x494] sm:$0xf]
      %v556 = vld [vmem:[%s220 + $0x498] sm:$0xf]
      %v557 = vld [vmem:[%s220 + $0x49c] sm:$0xf]
      %v558 = vld [vmem:[%s220 + $0x4a0] sm:$0xf]
      %v559 = vld [vmem:[%s220 + $0x4a4] sm:$0xf]
      %v560 = vld [vmem:[%s220 + $0x4a8] sm:$0xf]
      %v561 = vld [vmem:[%s220 + $0x4ac] sm:$0xf]
      %v562 = vld [vmem:[%s220 + $0x4b0] sm:$0xf]
      %v563 = vld [vmem:[%s220 + $0x4b4] sm:$0xf]
      %v564 = vld [vmem:[%s220 + $0x4b8] sm:$0xf]
      %v565 = vld [vmem:[%s220 + $0x4bc] sm:$0xf]
      %v566 = vld [vmem:[%s220 + $0x4c0] sm:$0xf]
      %v567 = vld [vmem:[%s220 + $0x4c4] sm:$0xf]
      %v568 = vld [vmem:[%s220 + $0x4c8] sm:$0xf]
      %v569 = vld [vmem:[%s220 + $0x4cc] sm:$0xf]
      %v570 = vld [vmem:[%s220 + $0x4d0] sm:$0xf]
      %v571 = vld [vmem:[%s220 + $0x4d4] sm:$0xf]
      %v572 = vld [vmem:[%s220 + $0x4d8] sm:$0xf]
      %v573 = vld [vmem:[%s220 + $0x4dc] sm:$0xf]
      %v574 = vld [vmem:[%s220 + $0x4e0] sm:$0xf]
      %v575 = vld [vmem:[%s220 + $0x4e4] sm:$0xf]
      %v576 = vld [vmem:[%s220 + $0x4e8] sm:$0xf]
      %v577 = vld [vmem:[%s220 + $0x4ec] sm:$0xf]
      %v578 = vld [vmem:[%s220 + $0x4f0] sm:$0xf]
      %v579 = vld [vmem:[%s220 + $0x4f4] sm:$0xf]
      %v580 = vld [vmem:[%s220 + $0x4f8] sm:$0xf]
      %v581 = vld [vmem:[%s220 + $0x4fc] sm:$0xf]
      %v582 = vld [vmem:[%s220 + $0x500] sm:$0xf]
      %v583 = vld [vmem:[%s220 + $0x504] sm:$0xf]
      %v584 = vld [vmem:[%s220 + $0x508] sm:$0xf]
      %v585 = vld [vmem:[%s220 + $0x50c] sm:$0xf]
      %v586 = vld [vmem:[%s220 + $0x510] sm:$0xf]
      %v587 = vld [vmem:[%s220 + $0x514] sm:$0xf]
      %v588 = vld [vmem:[%s220 + $0x518] sm:$0xf]
      %v589 = vld [vmem:[%s220 + $0x51c] sm:$0xf]
      %v590 = vld [vmem:[%s220 + $0x520] sm:$0xf]
      %v591 = vld [vmem:[%s220 + $0x524] sm:$0xf]
      %v592 = vld [vmem:[%s220 + $0x528] sm:$0xf]
      %v593 = vld [vmem:[%s220 + $0x52c] sm:$0xf]
      %v594 = vld [vmem:[%s220 + $0x530] sm:$0xf]
      %v595 = vld [vmem:[%s220 + $0x534] sm:$0xf]
      %v596 = vld [vmem:[%s220 + $0x538] sm:$0xf]
      %v597 = vld [vmem:[%s220 + $0x53c] sm:$0xf]
      %v598 = vld [vmem:[%s220 + $0x540] sm:$0xf]
      %v599 = vld [vmem:[%s220 + $0x544] sm:$0xf]
      %v600 = vld [vmem:[%s220 + $0x548] sm:$0xf]
      %v601 = vld [vmem:[%s220 + $0x54c] sm:$0xf]
      %v602 = vld [vmem:[%s220 + $0x550] sm:$0xf]
      %v603 = vld [vmem:[%s220 + $0x554] sm:$0xf]
      %v604 = vld [vmem:[%s220 + $0x558] sm:$0xf]
      %v605 = vld [vmem:[%s220 + $0x55c] sm:$0xf]
      %v606 = vld [vmem:[%s220 + $0x560] sm:$0xf]
      %v607 = vld [vmem:[%s220 + $0x564] sm:$0xf]
      %v608 = vld [vmem:[%s220 + $0x568] sm:$0xf]
      %v609 = vld [vmem:[%s220 + $0x56c] sm:$0xf]
      %v610 = vld [vmem:[%s220 + $0x570] sm:$0xf]
      %v611 = vld [vmem:[%s220 + $0x574] sm:$0xf]
      %v612 = vld [vmem:[%s220 + $0x578] sm:$0xf]
      %v613 = vld [vmem:[%s220 + $0x57c] sm:$0xf]
      %v614 = vld [vmem:[%s220 + $0x580] sm:$0xf]
      %v615 = vld [vmem:[%s220 + $0x584] sm:$0xf]
      %v616 = vld [vmem:[%s220 + $0x588] sm:$0xf]
      %v617 = vld [vmem:[%s220 + $0x58c] sm:$0xf]
      %v618 = vld [vmem:[%s220 + $0x590] sm:$0xf]
      %v619 = vld [vmem:[%s220 + $0x594] sm:$0xf]
      %v620 = vld [vmem:[%s220 + $0x598] sm:$0xf]
      %v621 = vld [vmem:[%s220 + $0x59c] sm:$0xf]
      %v622 = vld [vmem:[%s220 + $0x5a0] sm:$0xf]
      %v623 = vld [vmem:[%s220 + $0x5a4] sm:$0xf]
      %v624 = vld [vmem:[%s220 + $0x5a8] sm:$0xf]
      %v625 = vld [vmem:[%s220 + $0x5ac] sm:$0xf]
      %v626 = vld [vmem:[%s220 + $0x5b0] sm:$0xf]
      %v627 = vld [vmem:[%s220 + $0x5b4] sm:$0xf]
      %v628 = vld [vmem:[%s220 + $0x5b8] sm:$0xf]
      %v629 = vld [vmem:[%s220 + $0x5bc] sm:$0xf]
      %v630 = vld [vmem:[%s220 + $0x5c0] sm:$0xf]
      %v631 = vld [vmem:[%s220 + $0x5c4] sm:$0xf]
      %v632 = vld [vmem:[%s220 + $0x5c8] sm:$0xf]
      %v633 = vld [vmem:[%s220 + $0x5cc] sm:$0xf]
      %v634 = vld [vmem:[%s220 + $0x5d0] sm:$0xf]
      %v635 = vld [vmem:[%s220 + $0x5d4] sm:$0xf]
      %v636 = vld [vmem:[%s220 + $0x5d8] sm:$0xf]
      %v637 = vld [vmem:[%s220 + $0x5dc] sm:$0xf]
      %v638 = vld [vmem:[%s220 + $0x5e0] sm:$0xf]
      %v639 = vld [vmem:[%s220 + $0x5e4] sm:$0xf]
      %v640 = vld [vmem:[%s220 + $0x5e8] sm:$0xf]
      %v641 = vld [vmem:[%s220 + $0x5ec] sm:$0xf]
      %v642 = vld [vmem:[%s220 + $0x5f0] sm:$0xf]
      %v643 = vld [vmem:[%s220 + $0x5f4] sm:$0xf]
      %v644 = vld [vmem:[%s220 + $0x5f8] sm:$0xf]
      %v645 = vld [vmem:[%s220 + $0x5fc] sm:$0xf]
      %v646 = vld [vmem:[%s220 + $0x600] sm:$0xf]
      %v647 = vld [vmem:[%s220 + $0x604] sm:$0xf]
      %v648 = vld [vmem:[%s220 + $0x608] sm:$0xf]
      %v649 = vld [vmem:[%s220 + $0x60c] sm:$0xf]
      %v650 = vld [vmem:[%s220 + $0x610] sm:$0xf]
      %v651 = vld [vmem:[%s220 + $0x614] sm:$0xf]
      %v652 = vld [vmem:[%s220 + $0x618] sm:$0xf]
      %v653 = vld [vmem:[%s220 + $0x61c] sm:$0xf]
      %v654 = vld [vmem:[%s220 + $0x620] sm:$0xf]
      %v655 = vld [vmem:[%s220 + $0x624] sm:$0xf]
      %v656 = vld [vmem:[%s220 + $0x628] sm:$0xf]
      %v657 = vld [vmem:[%s220 + $0x62c] sm:$0xf]
      %v658 = vld [vmem:[%s220 + $0x630] sm:$0xf]
      %v659 = vld [vmem:[%s220 + $0x634] sm:$0xf]
      %v660 = vld [vmem:[%s220 + $0x638] sm:$0xf]
      %v661 = vld [vmem:[%s220 + $0x63c] sm:$0xf]
      %v662 = vld [vmem:[%s220 + $0x640] sm:$0xf]
      %v663 = vld [vmem:[%s220 + $0x644] sm:$0xf]
      %v664 = vld [vmem:[%s220 + $0x648] sm:$0xf]
      %v665 = vld [vmem:[%s220 + $0x64c] sm:$0xf]
      %v666 = vld [vmem:[%s220 + $0x650] sm:$0xf]
      %v667 = vld [vmem:[%s220 + $0x654] sm:$0xf]
      %v668 = vld [vmem:[%s220 + $0x658] sm:$0xf]
      %v669 = vld [vmem:[%s220 + $0x65c] sm:$0xf]
      %v670 = vld [vmem:[%s220 + $0x660] sm:$0xf]
      %v671 = vld [vmem:[%s220 + $0x664] sm:$0xf]
      %v672 = vld [vmem:[%s220 + $0x668] sm:$0xf]
      %v673 = vld [vmem:[%s220 + $0x66c] sm:$0xf]
      %v674 = vld [vmem:[%s220 + $0x670] sm:$0xf]
      %v675 = vld [vmem:[%s220 + $0x674] sm:$0xf]
      %v676 = vld [vmem:[%s220 + $0x678] sm:$0xf]
      %v677 = vld [vmem:[%s220 + $0x67c] sm:$0xf]
      %v678 = vld [vmem:[%s220 + $0x680] sm:$0xf]
      %v679 = vld [vmem:[%s220 + $0x684] sm:$0xf]
      %v680 = vld [vmem:[%s220 + $0x688] sm:$0xf]
      %v681 = vld [vmem:[%s220 + $0x68c] sm:$0xf]
      %v682 = vld [vmem:[%s220 + $0x690] sm:$0xf]
      %v683 = vld [vmem:[%s220 + $0x694] sm:$0xf]
      %v684 = vld [vmem:[%s220 + $0x698] sm:$0xf]
      %v685 = vld [vmem:[%s220 + $0x69c] sm:$0xf]
      %v686 = vld [vmem:[%s220 + $0x6a0] sm:$0xf]
      %v687 = vld [vmem:[%s220 + $0x6a4] sm:$0xf]
      %v688 = vld [vmem:[%s220 + $0x6a8] sm:$0xf]
      %v689 = vld [vmem:[%s220 + $0x6ac] sm:$0xf]
      %v690 = vld [vmem:[%s220 + $0x6b0] sm:$0xf]
      %v691 = vld [vmem:[%s220 + $0x6b4] sm:$0xf]
      %v692 = vld [vmem:[%s220 + $0x6b8] sm:$0xf]
      %v693 = vld [vmem:[%s220 + $0x6bc] sm:$0xf]
      %v694 = vld [vmem:[%s220 + $0x6c0] sm:$0xf]
      %v695 = vld [vmem:[%s220 + $0x6c4] sm:$0xf]
      %v696 = vld [vmem:[%s220 + $0x6c8] sm:$0xf]
      %v697 = vld [vmem:[%s220 + $0x6cc] sm:$0xf]
      %v698 = vld [vmem:[%s220 + $0x6d0] sm:$0xf]
      %v699 = vld [vmem:[%s220 + $0x6d4] sm:$0xf]
      %v700 = vld [vmem:[%s220 + $0x6d8] sm:$0xf]
      %v701 = vld [vmem:[%s220 + $0x6dc] sm:$0xf]
      %v702 = vld [vmem:[%s220 + $0x6e0] sm:$0xf]
      %v703 = vld [vmem:[%s220 + $0x6e4] sm:$0xf]
      %v704 = vld [vmem:[%s220 + $0x6e8] sm:$0xf]
      %v705 = vld [vmem:[%s220 + $0x6ec] sm:$0xf]
      %v706 = vld [vmem:[%s220 + $0x6f0] sm:$0xf]
      %v707 = vld [vmem:[%s220 + $0x6f4] sm:$0xf]
      %v708 = vld [vmem:[%s220 + $0x6f8] sm:$0xf]
      %v709 = vld [vmem:[%s220 + $0x6fc] sm:$0xf]
      %v710 = vld [vmem:[%s220 + $0x700] sm:$0xf]
      %v711 = vld [vmem:[%s220 + $0x704] sm:$0xf]
      %v712 = vld [vmem:[%s220 + $0x708] sm:$0xf]
      %v713 = vld [vmem:[%s220 + $0x70c] sm:$0xf]
      %v714 = vld [vmem:[%s220 + $0x710] sm:$0xf]
      %v715 = vld [vmem:[%s220 + $0x714] sm:$0xf]
      %v716 = vld [vmem:[%s220 + $0x718] sm:$0xf]
      %v717 = vld [vmem:[%s220 + $0x71c] sm:$0xf]
      %v718 = vld [vmem:[%s220 + $0x720] sm:$0xf]
      %v719 = vld [vmem:[%s220 + $0x724] sm:$0xf]
      %v720 = vld [vmem:[%s220 + $0x728] sm:$0xf]
      %v721 = vld [vmem:[%s220 + $0x72c] sm:$0xf]
      %v722 = vld [vmem:[%s220 + $0x730] sm:$0xf]
      %v723 = vld [vmem:[%s220 + $0x734] sm:$0xf]
      %v724 = vld [vmem:[%s220 + $0x738] sm:$0xf]
      %v725 = vld [vmem:[%s220 + $0x73c] sm:$0xf]
      %v726 = vld [vmem:[%s220 + $0x740] sm:$0xf]
      %v727 = vld [vmem:[%s220 + $0x744] sm:$0xf]
      %v728 = vld [vmem:[%s220 + $0x748] sm:$0xf]
      %v729 = vld [vmem:[%s220 + $0x74c] sm:$0xf]
      %v730 = vld [vmem:[%s220 + $0x750] sm:$0xf]
      %v731 = vld [vmem:[%s220 + $0x754] sm:$0xf]
      %v732 = vld [vmem:[%s220 + $0x758] sm:$0xf]
      %v733 = vld [vmem:[%s220 + $0x75c] sm:$0xf]
      %v734 = vld [vmem:[%s220 + $0x760] sm:$0xf]
      %v735 = vld [vmem:[%s220 + $0x764] sm:$0xf]
      %v736 = vld [vmem:[%s220 + $0x768] sm:$0xf]
      %v737 = vld [vmem:[%s220 + $0x76c] sm:$0xf]
      %v738 = vld [vmem:[%s220 + $0x770] sm:$0xf]
      %v739 = vld [vmem:[%s220 + $0x774] sm:$0xf]
      %v740 = vld [vmem:[%s220 + $0x778] sm:$0xf]
      %v741 = vld [vmem:[%s220 + $0x77c] sm:$0xf]
      %v742 = vld [vmem:[%s220 + $0x780] sm:$0xf]
      %v743 = vld [vmem:[%s220 + $0x784] sm:$0xf]
      %v744 = vld [vmem:[%s220 + $0x788] sm:$0xf]
      %v745 = vld [vmem:[%s220 + $0x78c] sm:$0xf]
      %v746 = vld [vmem:[%s220 + $0x790] sm:$0xf]
      %v747 = vld [vmem:[%s220 + $0x794] sm:$0xf]
      %v748 = vld [vmem:[%s220 + $0x798] sm:$0xf]
      %v749 = vld [vmem:[%s220 + $0x79c] sm:$0xf]
      %v750 = vld [vmem:[%s220 + $0x7a0] sm:$0xf]
      %v751 = vld [vmem:[%s220 + $0x7a4] sm:$0xf]
      %v752 = vld [vmem:[%s220 + $0x7a8] sm:$0xf]
      %v753 = vld [vmem:[%s220 + $0x7ac] sm:$0xf]
      %v754 = vld [vmem:[%s220 + $0x7b0] sm:$0xf]
      %v755 = vld [vmem:[%s220 + $0x7b4] sm:$0xf]
      %v756 = vld [vmem:[%s220 + $0x7b8] sm:$0xf]
      %v757 = vld [vmem:[%s220 + $0x7bc] sm:$0xf]
      %v758 = vld [vmem:[%s220 + $0x7c0] sm:$0xf]
      %v759 = vld [vmem:[%s220 + $0x7c4] sm:$0xf]
      %v760 = vld [vmem:[%s220 + $0x7c8] sm:$0xf]
      %v761 = vld [vmem:[%s220 + $0x7cc] sm:$0xf]
      %v762 = vld [vmem:[%s220 + $0x7d0] sm:$0xf]
      %v763 = vld [vmem:[%s220 + $0x7d4] sm:$0xf]
      %v764 = vld [vmem:[%s220 + $0x7d8] sm:$0xf]
      %v765 = vld [vmem:[%s220 + $0x7dc] sm:$0xf]
      %v766 = vld [vmem:[%s220 + $0x7e0] sm:$0xf]
      %v767 = vld [vmem:[%s220 + $0x7e4] sm:$0xf]
      %v768 = vld [vmem:[%s220 + $0x7e8] sm:$0xf]
      %v769 = vld [vmem:[%s220 + $0x7ec] sm:$0xf]
      %v770 = vld [vmem:[%s220 + $0x7f0] sm:$0xf]
      %v771 = vld [vmem:[%s220 + $0x7f4] sm:$0xf]
      %v772 = vld [vmem:[%s220 + $0x7f8] sm:$0xf]
      %v773 = vld [vmem:[%s220 + $0x7fc] sm:$0xf]
      %v806 = vunpack.c.l.b16 %v230
      %v807 = vunpack.c.h.b16 %v230
      %v808 = vunpack.c.l.b16 %v231
      %v809 = vunpack.c.h.b16 %v231
      %v810 = vunpack.c.l.b16 %v232
      %v811 = vunpack.c.h.b16 %v232
      %v812 = vunpack.c.l.b16 %v233
      %v813 = vunpack.c.h.b16 %v233
      %v814 = vunpack.c.l.b16 %v234
      %v815 = vunpack.c.h.b16 %v234
      %v816 = vunpack.c.l.b16 %v235
      %v817 = vunpack.c.h.b16 %v235
      %v818 = vunpack.c.l.b16 %v236
      %v819 = vunpack.c.h.b16 %v236
      %v820 = vunpack.c.l.b16 %v237
      %v821 = vunpack.c.h.b16 %v237
      %v822 = vunpack.c.l.b16 %v238
      %v823 = vunpack.c.h.b16 %v238
      %v824 = vunpack.c.l.b16 %v239
      %v825 = vunpack.c.h.b16 %v239
      %v826 = vunpack.c.l.b16 %v240
      %v827 = vunpack.c.h.b16 %v240
      %v828 = vunpack.c.l.b16 %v241
      %v829 = vunpack.c.h.b16 %v241
      %v830 = vunpack.c.l.b16 %v242
      %v831 = vunpack.c.h.b16 %v242
      %v832 = vunpack.c.l.b16 %v243
      %v833 = vunpack.c.h.b16 %v243
      %v834 = vunpack.c.l.b16 %v244
      %v835 = vunpack.c.h.b16 %v244
      %v836 = vunpack.c.l.b16 %v245
      %v837 = vunpack.c.h.b16 %v245
      %v838 = vunpack.c.l.b16 %v246
      %v839 = vunpack.c.h.b16 %v246
      %v840 = vunpack.c.l.b16 %v247
      %v841 = vunpack.c.h.b16 %v247
      %v842 = vunpack.c.l.b16 %v248
      %v843 = vunpack.c.h.b16 %v248
      %v844 = vunpack.c.l.b16 %v249
      %v845 = vunpack.c.h.b16 %v249
      %v846 = vunpack.c.l.b16 %v250
      %v847 = vunpack.c.h.b16 %v250
      %v848 = vunpack.c.l.b16 %v251
      %v849 = vunpack.c.h.b16 %v251
      %v850 = vunpack.c.l.b16 %v252
      %v851 = vunpack.c.h.b16 %v252
      %v852 = vunpack.c.l.b16 %v253
      %v853 = vunpack.c.h.b16 %v253
      %v854 = vunpack.c.l.b16 %v254
      %v855 = vunpack.c.h.b16 %v254
      %v856 = vunpack.c.l.b16 %v255
      %v857 = vunpack.c.h.b16 %v255
      %v858 = vunpack.c.l.b16 %v256
      %v859 = vunpack.c.h.b16 %v256
      %v860 = vunpack.c.l.b16 %v257
      %v861 = vunpack.c.h.b16 %v257
      %v862 = vunpack.c.l.b16 %v258
      %v863 = vunpack.c.h.b16 %v258
      %v864 = vunpack.c.l.b16 %v259
      %v865 = vunpack.c.h.b16 %v259
      %v866 = vunpack.c.l.b16 %v260
      %v867 = vunpack.c.h.b16 %v260
      %v868 = vunpack.c.l.b16 %v261
      %v869 = vunpack.c.h.b16 %v261
      %v870 = vpack.c.b16 %v838, %v806
      %v871 = vpack.c.b16 %v839, %v807
      %v872 = vpack.c.b16 %v840, %v808
      %v873 = vpack.c.b16 %v841, %v809
      %v874 = vpack.c.b16 %v842, %v810
      %v875 = vpack.c.b16 %v843, %v811
      %v876 = vpack.c.b16 %v844, %v812
      %v877 = vpack.c.b16 %v845, %v813
      %v878 = vpack.c.b16 %v846, %v814
      %v879 = vpack.c.b16 %v847, %v815
      %v880 = vpack.c.b16 %v848, %v816
      %v881 = vpack.c.b16 %v849, %v817
      %v882 = vpack.c.b16 %v850, %v818
      %v883 = vpack.c.b16 %v851, %v819
      %v884 = vpack.c.b16 %v852, %v820
      %v885 = vpack.c.b16 %v853, %v821
      %v886 = vpack.c.b16 %v854, %v822
      %v887 = vpack.c.b16 %v855, %v823
      %v888 = vpack.c.b16 %v856, %v824
      %v889 = vpack.c.b16 %v857, %v825
      %v890 = vpack.c.b16 %v858, %v826
      %v891 = vpack.c.b16 %v859, %v827
      %v892 = vpack.c.b16 %v860, %v828
      %v893 = vpack.c.b16 %v861, %v829
      %v894 = vpack.c.b16 %v862, %v830
      %v895 = vpack.c.b16 %v863, %v831
      %v896 = vpack.c.b16 %v864, %v832
      %v897 = vpack.c.b16 %v865, %v833
      %v898 = vpack.c.b16 %v866, %v834
      %v899 = vpack.c.b16 %v867, %v835
      %v900 = vpack.c.b16 %v868, %v836
      %v901 = vpack.c.b16 %v869, %v837
      %v1446 = vunpack.c.l.b16 %v262
      %v1447 = vunpack.c.l.b16 %v263
      %v1448 = vunpack.c.l.b16 %v264
      %v1449 = vunpack.c.l.b16 %v265
      %v1450 = vunpack.c.l.b16 %v266
      %v1451 = vunpack.c.l.b16 %v267
      %v1452 = vunpack.c.l.b16 %v268
      %v1453 = vunpack.c.l.b16 %v269
      %v1454 = vunpack.c.l.b16 %v270
      %v1455 = vunpack.c.l.b16 %v271
      %v1456 = vunpack.c.l.b16 %v272
      %v1457 = vunpack.c.l.b16 %v273
      %v1458 = vunpack.c.l.b16 %v274
      %v1459 = vunpack.c.l.b16 %v275
      %v1460 = vunpack.c.l.b16 %v276
      %v1461 = vunpack.c.l.b16 %v277
      %v1462 = vunpack.c.l.b16 %v278
      %v1463 = vunpack.c.l.b16 %v279
      %v1464 = vunpack.c.l.b16 %v280
      %v1465 = vunpack.c.l.b16 %v281
      %v1466 = vunpack.c.l.b16 %v282
      %v1467 = vunpack.c.l.b16 %v283
      %v1468 = vunpack.c.l.b16 %v284
      %v1469 = vunpack.c.l.b16 %v285
      %v1470 = vunpack.c.l.b16 %v286
      %v1471 = vunpack.c.l.b16 %v287
      %v1472 = vunpack.c.l.b16 %v288
      %v1473 = vunpack.c.l.b16 %v289
      %v1474 = vunpack.c.l.b16 %v290
      %v1475 = vunpack.c.l.b16 %v291
      %v1476 = vunpack.c.l.b16 %v292
      %v1477 = vunpack.c.l.b16 %v293
      %v1478 = vunpack.c.l.b16 %v294
      %v1479 = vunpack.c.l.b16 %v295
      %v1480 = vunpack.c.l.b16 %v296
      %v1481 = vunpack.c.l.b16 %v297
      %v1482 = vunpack.c.l.b16 %v298
      %v1483 = vunpack.c.l.b16 %v299
      %v1484 = vunpack.c.l.b16 %v300
      %v1485 = vunpack.c.l.b16 %v301
      %v1486 = vunpack.c.l.b16 %v302
      %v1487 = vunpack.c.l.b16 %v303
      %v1488 = vunpack.c.l.b16 %v304
      %v1489 = vunpack.c.l.b16 %v305
      %v1490 = vunpack.c.l.b16 %v306
      %v1491 = vunpack.c.l.b16 %v307
      %v1492 = vunpack.c.l.b16 %v308
      %v1493 = vunpack.c.l.b16 %v309
      %v1494 = vunpack.c.l.b16 %v310
      %v1495 = vunpack.c.l.b16 %v311
      %v1496 = vunpack.c.l.b16 %v312
      %v1497 = vunpack.c.l.b16 %v313
      %v1498 = vunpack.c.l.b16 %v314
      %v1499 = vunpack.c.l.b16 %v315
      %v1500 = vunpack.c.l.b16 %v316
      %v1501 = vunpack.c.l.b16 %v317
      %v1502 = vunpack.c.l.b16 %v318
      %v1503 = vunpack.c.l.b16 %v319
      %v1504 = vunpack.c.l.b16 %v320
      %v1505 = vunpack.c.l.b16 %v321
      %v1506 = vunpack.c.l.b16 %v322
      %v1507 = vunpack.c.l.b16 %v323
      %v1508 = vunpack.c.l.b16 %v324
      %v1509 = vunpack.c.l.b16 %v325
      %v1510 = vunpack.c.l.b16 %v326
      %v1511 = vunpack.c.l.b16 %v327
      %v1512 = vunpack.c.l.b16 %v328
      %v1513 = vunpack.c.l.b16 %v329
      %v1514 = vunpack.c.l.b16 %v330
      %v1515 = vunpack.c.l.b16 %v331
      %v1516 = vunpack.c.l.b16 %v332
      %v1517 = vunpack.c.l.b16 %v333
      %v1518 = vunpack.c.l.b16 %v334
      %v1519 = vunpack.c.l.b16 %v335
      %v1520 = vunpack.c.l.b16 %v336
      %v1521 = vunpack.c.l.b16 %v337
      %v1522 = vunpack.c.l.b16 %v338
      %v1523 = vunpack.c.l.b16 %v339
      %v1524 = vunpack.c.l.b16 %v340
      %v1525 = vunpack.c.l.b16 %v341
      %v1526 = vunpack.c.l.b16 %v342
      %v1527 = vunpack.c.l.b16 %v343
      %v1528 = vunpack.c.l.b16 %v344
      %v1529 = vunpack.c.l.b16 %v345
      %v1530 = vunpack.c.l.b16 %v346
      %v1531 = vunpack.c.l.b16 %v347
      %v1532 = vunpack.c.l.b16 %v348
      %v1533 = vunpack.c.l.b16 %v349
      %v1534 = vunpack.c.l.b16 %v350
      %v1535 = vunpack.c.l.b16 %v351
      %v1536 = vunpack.c.l.b16 %v352
      %v1537 = vunpack.c.l.b16 %v353
      %v1538 = vunpack.c.l.b16 %v354
      %v1539 = vunpack.c.l.b16 %v355
      %v1540 = vunpack.c.l.b16 %v356
      %v1541 = vunpack.c.l.b16 %v357
      %v1542 = vunpack.c.l.b16 %v358
      %v1543 = vunpack.c.l.b16 %v359
      %v1544 = vunpack.c.l.b16 %v360
      %v1545 = vunpack.c.l.b16 %v361
      %v1546 = vunpack.c.l.b16 %v362
      %v1547 = vunpack.c.l.b16 %v363
      %v1548 = vunpack.c.l.b16 %v364
      %v1549 = vunpack.c.l.b16 %v365
      %v1550 = vunpack.c.l.b16 %v366
      %v1551 = vunpack.c.l.b16 %v367
      %v1552 = vunpack.c.l.b16 %v368
      %v1553 = vunpack.c.l.b16 %v369
      %v1554 = vunpack.c.l.b16 %v370
      %v1555 = vunpack.c.l.b16 %v371
      %v1556 = vunpack.c.l.b16 %v372
      %v1557 = vunpack.c.l.b16 %v373
      %v1558 = vunpack.c.l.b16 %v374
      %v1559 = vunpack.c.l.b16 %v375
      %v1560 = vunpack.c.l.b16 %v376
      %v1561 = vunpack.c.l.b16 %v377
      %v1562 = vunpack.c.l.b16 %v378
      %v1563 = vunpack.c.l.b16 %v379
      %v1564 = vunpack.c.l.b16 %v380
      %v1565 = vunpack.c.l.b16 %v381
      %v1566 = vunpack.c.l.b16 %v382
      %v1567 = vunpack.c.l.b16 %v383
      %v1568 = vunpack.c.l.b16 %v384
      %v1569 = vunpack.c.l.b16 %v385
      %v1570 = vunpack.c.l.b16 %v386
      %v1571 = vunpack.c.l.b16 %v387
      %v1572 = vunpack.c.l.b16 %v388
      %v1573 = vunpack.c.l.b16 %v389
      %v1574 = vunpack.c.l.b16 %v390
      %v1575 = vunpack.c.l.b16 %v391
      %v1576 = vunpack.c.l.b16 %v392
      %v1577 = vunpack.c.l.b16 %v393
      %v1578 = vunpack.c.l.b16 %v394
      %v1579 = vunpack.c.l.b16 %v395
      %v1580 = vunpack.c.l.b16 %v396
      %v1581 = vunpack.c.l.b16 %v397
      %v1582 = vunpack.c.l.b16 %v398
      %v1583 = vunpack.c.l.b16 %v399
      %v1584 = vunpack.c.l.b16 %v400
      %v1585 = vunpack.c.l.b16 %v401
      %v1586 = vunpack.c.l.b16 %v402
      %v1587 = vunpack.c.l.b16 %v403
      %v1588 = vunpack.c.l.b16 %v404
      %v1589 = vunpack.c.l.b16 %v405
      %v1590 = vunpack.c.l.b16 %v406
      %v1591 = vunpack.c.l.b16 %v407
      %v1592 = vunpack.c.l.b16 %v408
      %v1593 = vunpack.c.l.b16 %v409
      %v1594 = vunpack.c.l.b16 %v410
      %v1595 = vunpack.c.l.b16 %v411
      %v1596 = vunpack.c.l.b16 %v412
      %v1597 = vunpack.c.l.b16 %v413
      %v1598 = vunpack.c.l.b16 %v414
      %v1599 = vunpack.c.l.b16 %v415
      %v1600 = vunpack.c.l.b16 %v416
      %v1601 = vunpack.c.l.b16 %v417
      %v1602 = vunpack.c.l.b16 %v418
      %v1603 = vunpack.c.l.b16 %v419
      %v1604 = vunpack.c.l.b16 %v420
      %v1605 = vunpack.c.l.b16 %v421
      %v1606 = vunpack.c.l.b16 %v422
      %v1607 = vunpack.c.l.b16 %v423
      %v1608 = vunpack.c.l.b16 %v424
      %v1609 = vunpack.c.l.b16 %v425
      %v1610 = vunpack.c.l.b16 %v426
      %v1611 = vunpack.c.l.b16 %v427
      %v1612 = vunpack.c.l.b16 %v428
      %v1613 = vunpack.c.l.b16 %v429
      %v1614 = vunpack.c.l.b16 %v430
      %v1615 = vunpack.c.l.b16 %v431
      %v1616 = vunpack.c.l.b16 %v432
      %v1617 = vunpack.c.l.b16 %v433
      %v1618 = vunpack.c.l.b16 %v434
      %v1619 = vunpack.c.l.b16 %v435
      %v1620 = vunpack.c.l.b16 %v436
      %v1621 = vunpack.c.l.b16 %v437
      %v1622 = vunpack.c.l.b16 %v438
      %v1623 = vunpack.c.l.b16 %v439
      %v1624 = vunpack.c.l.b16 %v440
      %v1625 = vunpack.c.l.b16 %v441
      %v1626 = vunpack.c.l.b16 %v442
      %v1627 = vunpack.c.l.b16 %v443
      %v1628 = vunpack.c.l.b16 %v444
      %v1629 = vunpack.c.l.b16 %v445
      %v1630 = vunpack.c.l.b16 %v446
      %v1631 = vunpack.c.l.b16 %v447
      %v1632 = vunpack.c.l.b16 %v448
      %v1633 = vunpack.c.l.b16 %v449
      %v1634 = vunpack.c.l.b16 %v450
      %v1635 = vunpack.c.l.b16 %v451
      %v1636 = vunpack.c.l.b16 %v452
      %v1637 = vunpack.c.l.b16 %v453
      %v1638 = vunpack.c.l.b16 %v454
      %v1639 = vunpack.c.l.b16 %v455
      %v1640 = vunpack.c.l.b16 %v456
      %v1641 = vunpack.c.l.b16 %v457
      %v1642 = vunpack.c.l.b16 %v458
      %v1643 = vunpack.c.l.b16 %v459
      %v1644 = vunpack.c.l.b16 %v460
      %v1645 = vunpack.c.l.b16 %v461
      %v1646 = vunpack.c.l.b16 %v462
      %v1647 = vunpack.c.l.b16 %v463
      %v1648 = vunpack.c.l.b16 %v464
      %v1649 = vunpack.c.l.b16 %v465
      %v1650 = vunpack.c.l.b16 %v466
      %v1651 = vunpack.c.l.b16 %v467
      %v1652 = vunpack.c.l.b16 %v468
      %v1653 = vunpack.c.l.b16 %v469
      %v1654 = vunpack.c.l.b16 %v470
      %v1655 = vunpack.c.l.b16 %v471
      %v1656 = vunpack.c.l.b16 %v472
      %v1657 = vunpack.c.l.b16 %v473
      %v1658 = vunpack.c.l.b16 %v474
      %v1659 = vunpack.c.l.b16 %v475
      %v1660 = vunpack.c.l.b16 %v476
      %v1661 = vunpack.c.l.b16 %v477
      %v1662 = vunpack.c.l.b16 %v478
      %v1663 = vunpack.c.l.b16 %v479
      %v1664 = vunpack.c.l.b16 %v480
      %v1665 = vunpack.c.l.b16 %v481
      %v1666 = vunpack.c.l.b16 %v482
      %v1667 = vunpack.c.l.b16 %v483
      %v1668 = vunpack.c.l.b16 %v484
      %v1669 = vunpack.c.l.b16 %v485
      %v1670 = vunpack.c.l.b16 %v486
      %v1671 = vunpack.c.l.b16 %v487
      %v1672 = vunpack.c.l.b16 %v488
      %v1673 = vunpack.c.l.b16 %v489
      %v1674 = vunpack.c.l.b16 %v490
      %v1675 = vunpack.c.l.b16 %v491
      %v1676 = vunpack.c.l.b16 %v492
      %v1677 = vunpack.c.l.b16 %v493
      %v1678 = vunpack.c.l.b16 %v494
      %v1679 = vunpack.c.l.b16 %v495
      %v1680 = vunpack.c.l.b16 %v496
      %v1681 = vunpack.c.l.b16 %v497
      %v1682 = vunpack.c.l.b16 %v498
      %v1683 = vunpack.c.l.b16 %v499
      %v1684 = vunpack.c.l.b16 %v500
      %v1685 = vunpack.c.l.b16 %v501
      %v1686 = vunpack.c.l.b16 %v502
      %v1687 = vunpack.c.l.b16 %v503
      %v1688 = vunpack.c.l.b16 %v504
      %v1689 = vunpack.c.l.b16 %v505
      %v1690 = vunpack.c.l.b16 %v506
      %v1691 = vunpack.c.l.b16 %v507
      %v1692 = vunpack.c.l.b16 %v508
      %v1693 = vunpack.c.l.b16 %v509
      %v1694 = vunpack.c.l.b16 %v510
      %v1695 = vunpack.c.l.b16 %v511
      %v1696 = vunpack.c.l.b16 %v512
      %v1697 = vunpack.c.l.b16 %v513
      %v1698 = vunpack.c.l.b16 %v514
      %v1699 = vunpack.c.l.b16 %v515
      %v1700 = vunpack.c.l.b16 %v516
      %v1701 = vunpack.c.l.b16 %v517
      %v1702 = vunpack.c.l.b16 %v518
      %v1703 = vunpack.c.l.b16 %v519
      %v1704 = vunpack.c.l.b16 %v520
      %v1705 = vunpack.c.l.b16 %v521
      %v1706 = vunpack.c.l.b16 %v522
      %v1707 = vunpack.c.l.b16 %v523
      %v1708 = vunpack.c.l.b16 %v524
      %v1709 = vunpack.c.l.b16 %v525
      %v1710 = vunpack.c.l.b16 %v526
      %v1711 = vunpack.c.l.b16 %v527
      %v1712 = vunpack.c.l.b16 %v528
      %v1713 = vunpack.c.l.b16 %v529
      %v1714 = vunpack.c.l.b16 %v530
      %v1715 = vunpack.c.l.b16 %v531
      %v1716 = vunpack.c.l.b16 %v532
      %v1717 = vunpack.c.l.b16 %v533
      %v1718 = vunpack.c.l.b16 %v534
      %v1719 = vunpack.c.l.b16 %v535
      %v1720 = vunpack.c.l.b16 %v536
      %v1721 = vunpack.c.l.b16 %v537
      %v1722 = vunpack.c.l.b16 %v538
      %v1723 = vunpack.c.l.b16 %v539
      %v1724 = vunpack.c.l.b16 %v540
      %v1725 = vunpack.c.l.b16 %v541
      %v1726 = vunpack.c.l.b16 %v542
      %v1727 = vunpack.c.l.b16 %v543
      %v1728 = vunpack.c.l.b16 %v544
      %v1729 = vunpack.c.l.b16 %v545
      %v1730 = vunpack.c.l.b16 %v546
      %v1731 = vunpack.c.l.b16 %v547
      %v1732 = vunpack.c.l.b16 %v548
      %v1733 = vunpack.c.l.b16 %v549
      %v1734 = vunpack.c.l.b16 %v550
      %v1735 = vunpack.c.l.b16 %v551
      %v1736 = vunpack.c.l.b16 %v552
      %v1737 = vunpack.c.l.b16 %v553
      %v1738 = vunpack.c.l.b16 %v554
      %v1739 = vunpack.c.l.b16 %v555
      %v1740 = vunpack.c.l.b16 %v556
      %v1741 = vunpack.c.l.b16 %v557
      %v1742 = vunpack.c.l.b16 %v558
      %v1743 = vunpack.c.l.b16 %v559
      %v1744 = vunpack.c.l.b16 %v560
      %v1745 = vunpack.c.l.b16 %v561
      %v1746 = vunpack.c.l.b16 %v562
      %v1747 = vunpack.c.l.b16 %v563
      %v1748 = vunpack.c.l.b16 %v564
      %v1749 = vunpack.c.l.b16 %v565
      %v1750 = vunpack.c.l.b16 %v566
      %v1751 = vunpack.c.l.b16 %v567
      %v1752 = vunpack.c.l.b16 %v568
      %v1753 = vunpack.c.l.b16 %v569
      %v1754 = vunpack.c.l.b16 %v570
      %v1755 = vunpack.c.l.b16 %v571
      %v1756 = vunpack.c.l.b16 %v572
      %v1757 = vunpack.c.l.b16 %v573
      %v1758 = vunpack.c.l.b16 %v574
      %v1759 = vunpack.c.l.b16 %v575
      %v1760 = vunpack.c.l.b16 %v576
      %v1761 = vunpack.c.l.b16 %v577
      %v1762 = vunpack.c.l.b16 %v578
      %v1763 = vunpack.c.l.b16 %v579
      %v1764 = vunpack.c.l.b16 %v580
      %v1765 = vunpack.c.l.b16 %v581
      %v1766 = vunpack.c.l.b16 %v582
      %v1767 = vunpack.c.l.b16 %v583
      %v1768 = vunpack.c.l.b16 %v584
      %v1769 = vunpack.c.l.b16 %v585
      %v1770 = vunpack.c.l.b16 %v586
      %v1771 = vunpack.c.l.b16 %v587
      %v1772 = vunpack.c.l.b16 %v588
      %v1773 = vunpack.c.l.b16 %v589
      %v1774 = vunpack.c.l.b16 %v590
      %v1775 = vunpack.c.l.b16 %v591
      %v1776 = vunpack.c.l.b16 %v592
      %v1777 = vunpack.c.l.b16 %v593
      %v1778 = vunpack.c.l.b16 %v594
      %v1779 = vunpack.c.l.b16 %v595
      %v1780 = vunpack.c.l.b16 %v596
      %v1781 = vunpack.c.l.b16 %v597
      %v1782 = vunpack.c.l.b16 %v598
      %v1783 = vunpack.c.l.b16 %v599
      %v1784 = vunpack.c.l.b16 %v600
      %v1785 = vunpack.c.l.b16 %v601
      %v1786 = vunpack.c.l.b16 %v602
      %v1787 = vunpack.c.l.b16 %v603
      %v1788 = vunpack.c.l.b16 %v604
      %v1789 = vunpack.c.l.b16 %v605
      %v1790 = vunpack.c.l.b16 %v606
      %v1791 = vunpack.c.l.b16 %v607
      %v1792 = vunpack.c.l.b16 %v608
      %v1793 = vunpack.c.l.b16 %v609
      %v1794 = vunpack.c.l.b16 %v610
      %v1795 = vunpack.c.l.b16 %v611
      %v1796 = vunpack.c.l.b16 %v612
      %v1797 = vunpack.c.l.b16 %v613
      %v1798 = vunpack.c.l.b16 %v614
      %v1799 = vunpack.c.l.b16 %v615
      %v1800 = vunpack.c.l.b16 %v616
      %v1801 = vunpack.c.l.b16 %v617
      %v1802 = vunpack.c.l.b16 %v618
      %v1803 = vunpack.c.l.b16 %v619
      %v1804 = vunpack.c.l.b16 %v620
      %v1805 = vunpack.c.l.b16 %v621
      %v1806 = vunpack.c.l.b16 %v622
      %v1807 = vunpack.c.l.b16 %v623
      %v1808 = vunpack.c.l.b16 %v624
      %v1809 = vunpack.c.l.b16 %v625
      %v1810 = vunpack.c.l.b16 %v626
      %v1811 = vunpack.c.l.b16 %v627
      %v1812 = vunpack.c.l.b16 %v628
      %v1813 = vunpack.c.l.b16 %v629
      %v1814 = vunpack.c.l.b16 %v630
      %v1815 = vunpack.c.l.b16 %v631
      %v1816 = vunpack.c.l.b16 %v632
      %v1817 = vunpack.c.l.b16 %v633
      %v1818 = vunpack.c.l.b16 %v634
      %v1819 = vunpack.c.l.b16 %v635
      %v1820 = vunpack.c.l.b16 %v636
      %v1821 = vunpack.c.l.b16 %v637
      %v1822 = vunpack.c.l.b16 %v638
      %v1823 = vunpack.c.l.b16 %v639
      %v1824 = vunpack.c.l.b16 %v640
      %v1825 = vunpack.c.l.b16 %v641
      %v1826 = vunpack.c.l.b16 %v642
      %v1827 = vunpack.c.l.b16 %v643
      %v1828 = vunpack.c.l.b16 %v644
      %v1829 = vunpack.c.l.b16 %v645
      %v1830 = vunpack.c.l.b16 %v646
      %v1831 = vunpack.c.l.b16 %v647
      %v1832 = vunpack.c.l.b16 %v648
      %v1833 = vunpack.c.l.b16 %v649
      %v1834 = vunpack.c.l.b16 %v650
      %v1835 = vunpack.c.l.b16 %v651
      %v1836 = vunpack.c.l.b16 %v652
      %v1837 = vunpack.c.l.b16 %v653
      %v1838 = vunpack.c.l.b16 %v654
      %v1839 = vunpack.c.l.b16 %v655
      %v1840 = vunpack.c.l.b16 %v656
      %v1841 = vunpack.c.l.b16 %v657
      %v1842 = vunpack.c.l.b16 %v658
      %v1843 = vunpack.c.l.b16 %v659
      %v1844 = vunpack.c.l.b16 %v660
      %v1845 = vunpack.c.l.b16 %v661
      %v1846 = vunpack.c.l.b16 %v662
      %v1847 = vunpack.c.l.b16 %v663
      %v1848 = vunpack.c.l.b16 %v664
      %v1849 = vunpack.c.l.b16 %v665
      %v1850 = vunpack.c.l.b16 %v666
      %v1851 = vunpack.c.l.b16 %v667
      %v1852 = vunpack.c.l.b16 %v668
      %v1853 = vunpack.c.l.b16 %v669
      %v1854 = vunpack.c.l.b16 %v670
      %v1855 = vunpack.c.l.b16 %v671
      %v1856 = vunpack.c.l.b16 %v672
      %v1857 = vunpack.c.l.b16 %v673
      %v1858 = vunpack.c.l.b16 %v674
      %v1859 = vunpack.c.l.b16 %v675
      %v1860 = vunpack.c.l.b16 %v676
      %v1861 = vunpack.c.l.b16 %v677
      %v1862 = vunpack.c.l.b16 %v678
      %v1863 = vunpack.c.l.b16 %v679
      %v1864 = vunpack.c.l.b16 %v680
      %v1865 = vunpack.c.l.b16 %v681
      %v1866 = vunpack.c.l.b16 %v682
      %v1867 = vunpack.c.l.b16 %v683
      %v1868 = vunpack.c.l.b16 %v684
      %v1869 = vunpack.c.l.b16 %v685
      %v1870 = vunpack.c.l.b16 %v686
      %v1871 = vunpack.c.l.b16 %v687
      %v1872 = vunpack.c.l.b16 %v688
      %v1873 = vunpack.c.l.b16 %v689
      %v1874 = vunpack.c.l.b16 %v690
      %v1875 = vunpack.c.l.b16 %v691
      %v1876 = vunpack.c.l.b16 %v692
      %v1877 = vunpack.c.l.b16 %v693
      %v1878 = vunpack.c.l.b16 %v694
      %v1879 = vunpack.c.l.b16 %v695
      %v1880 = vunpack.c.l.b16 %v696
      %v1881 = vunpack.c.l.b16 %v697
      %v1882 = vunpack.c.l.b16 %v698
      %v1883 = vunpack.c.l.b16 %v699
      %v1884 = vunpack.c.l.b16 %v700
      %v1885 = vunpack.c.l.b16 %v701
      %v1886 = vunpack.c.l.b16 %v702
      %v1887 = vunpack.c.l.b16 %v703
      %v1888 = vunpack.c.l.b16 %v704
      %v1889 = vunpack.c.l.b16 %v705
      %v1890 = vunpack.c.l.b16 %v706
      %v1891 = vunpack.c.l.b16 %v707
      %v1892 = vunpack.c.l.b16 %v708
      %v1893 = vunpack.c.l.b16 %v709
      %v1894 = vunpack.c.l.b16 %v710
      %v1895 = vunpack.c.l.b16 %v711
      %v1896 = vunpack.c.l.b16 %v712
      %v1897 = vunpack.c.l.b16 %v713
      %v1898 = vunpack.c.l.b16 %v714
      %v1899 = vunpack.c.l.b16 %v715
      %v1900 = vunpack.c.l.b16 %v716
      %v1901 = vunpack.c.l.b16 %v717
      %v1902 = vunpack.c.l.b16 %v718
      %v1903 = vunpack.c.l.b16 %v719
      %v1904 = vunpack.c.l.b16 %v720
      %v1905 = vunpack.c.l.b16 %v721
      %v1906 = vunpack.c.l.b16 %v722
      %v1907 = vunpack.c.l.b16 %v723
      %v1908 = vunpack.c.l.b16 %v724
      %v1909 = vunpack.c.l.b16 %v725
      %v1910 = vunpack.c.l.b16 %v726
      %v1911 = vunpack.c.l.b16 %v727
      %v1912 = vunpack.c.l.b16 %v728
      %v1913 = vunpack.c.l.b16 %v729
      %v1914 = vunpack.c.l.b16 %v730
      %v1915 = vunpack.c.l.b16 %v731
      %v1916 = vunpack.c.l.b16 %v732
      %v1917 = vunpack.c.l.b16 %v733
      %v1918 = vunpack.c.l.b16 %v734
      %v1919 = vunpack.c.l.b16 %v735
      %v1920 = vunpack.c.l.b16 %v736
      %v1921 = vunpack.c.l.b16 %v737
      %v1922 = vunpack.c.l.b16 %v738
      %v1923 = vunpack.c.l.b16 %v739
      %v1924 = vunpack.c.l.b16 %v740
      %v1925 = vunpack.c.l.b16 %v741
      %v1926 = vunpack.c.l.b16 %v742
      %v1927 = vunpack.c.l.b16 %v743
      %v1928 = vunpack.c.l.b16 %v744
      %v1929 = vunpack.c.l.b16 %v745
      %v1930 = vunpack.c.l.b16 %v746
      %v1931 = vunpack.c.l.b16 %v747
      %v1932 = vunpack.c.l.b16 %v748
      %v1933 = vunpack.c.l.b16 %v749
      %v1934 = vunpack.c.l.b16 %v750
      %v1935 = vunpack.c.l.b16 %v751
      %v1936 = vunpack.c.l.b16 %v752
      %v1937 = vunpack.c.l.b16 %v753
      %v1938 = vunpack.c.l.b16 %v754
      %v1939 = vunpack.c.l.b16 %v755
      %v1940 = vunpack.c.l.b16 %v756
      %v1941 = vunpack.c.l.b16 %v757
      %v1942 = vunpack.c.l.b16 %v758
      %v1943 = vunpack.c.l.b16 %v759
      %v1944 = vunpack.c.l.b16 %v760
      %v1945 = vunpack.c.l.b16 %v761
      %v1946 = vunpack.c.l.b16 %v762
      %v1947 = vunpack.c.l.b16 %v763
      %v1948 = vunpack.c.l.b16 %v764
      %v1949 = vunpack.c.l.b16 %v765
      %v1950 = vunpack.c.l.b16 %v766
      %v1951 = vunpack.c.l.b16 %v767
      %v1952 = vunpack.c.l.b16 %v768
      %v1953 = vunpack.c.l.b16 %v769
      %v1954 = vunpack.c.l.b16 %v770
      %v1955 = vunpack.c.l.b16 %v771
      %v1956 = vunpack.c.l.b16 %v772
      %v1957 = vunpack.c.l.b16 %v773
      %v1958 = vpack.c.b16 %v1447, %v1446
      %v1959 = vpack.c.b16 %v1449, %v1448
      %v1960 = vpack.c.b16 %v1451, %v1450
      %v1961 = vpack.c.b16 %v1453, %v1452
      %v1962 = vpack.c.b16 %v1455, %v1454
      %v1963 = vpack.c.b16 %v1457, %v1456
      %v1964 = vpack.c.b16 %v1459, %v1458
      %v1965 = vpack.c.b16 %v1461, %v1460
      %v1966 = vpack.c.b16 %v1463, %v1462
      %v1967 = vpack.c.b16 %v1465, %v1464
      %v1968 = vpack.c.b16 %v1467, %v1466
      %v1969 = vpack.c.b16 %v1469, %v1468
      %v1970 = vpack.c.b16 %v1471, %v1470
      %v1971 = vpack.c.b16 %v1473, %v1472
      %v1972 = vpack.c.b16 %v1475, %v1474
      %v1973 = vpack.c.b16 %v1477, %v1476
      %v1974 = vpack.c.b16 %v1479, %v1478
      %v1975 = vpack.c.b16 %v1481, %v1480
      %v1976 = vpack.c.b16 %v1483, %v1482
      %v1977 = vpack.c.b16 %v1485, %v1484
      %v1978 = vpack.c.b16 %v1487, %v1486
      %v1979 = vpack.c.b16 %v1489, %v1488
      %v1980 = vpack.c.b16 %v1491, %v1490
      %v1981 = vpack.c.b16 %v1493, %v1492
      %v1982 = vpack.c.b16 %v1495, %v1494
      %v1983 = vpack.c.b16 %v1497, %v1496
      %v1984 = vpack.c.b16 %v1499, %v1498
      %v1985 = vpack.c.b16 %v1501, %v1500
      %v1986 = vpack.c.b16 %v1503, %v1502
      %v1987 = vpack.c.b16 %v1505, %v1504
      %v1988 = vpack.c.b16 %v1507, %v1506
      %v1989 = vpack.c.b16 %v1509, %v1508
      %v1990 = vpack.c.b16 %v1511, %v1510
      %v1991 = vpack.c.b16 %v1513, %v1512
      %v1992 = vpack.c.b16 %v1515, %v1514
      %v1993 = vpack.c.b16 %v1517, %v1516
      %v1994 = vpack.c.b16 %v1519, %v1518
      %v1995 = vpack.c.b16 %v1521, %v1520
      %v1996 = vpack.c.b16 %v1523, %v1522
      %v1997 = vpack.c.b16 %v1525, %v1524
      %v1998 = vpack.c.b16 %v1527, %v1526
      %v1999 = vpack.c.b16 %v1529, %v1528
      %v2000 = vpack.c.b16 %v1531, %v1530
      %v2001 = vpack.c.b16 %v1533, %v1532
      %v2002 = vpack.c.b16 %v1535, %v1534
      %v2003 = vpack.c.b16 %v1537, %v1536
      %v2004 = vpack.c.b16 %v1539, %v1538
      %v2005 = vpack.c.b16 %v1541, %v1540
      %v2006 = vpack.c.b16 %v1543, %v1542
      %v2007 = vpack.c.b16 %v1545, %v1544
      %v2008 = vpack.c.b16 %v1547, %v1546
      %v2009 = vpack.c.b16 %v1549, %v1548
      %v2010 = vpack.c.b16 %v1551, %v1550
      %v2011 = vpack.c.b16 %v1553, %v1552
      %v2012 = vpack.c.b16 %v1555, %v1554
      %v2013 = vpack.c.b16 %v1557, %v1556
      %v2014 = vpack.c.b16 %v1559, %v1558
      %v2015 = vpack.c.b16 %v1561, %v1560
      %v2016 = vpack.c.b16 %v1563, %v1562
      %v2017 = vpack.c.b16 %v1565, %v1564
      %v2018 = vpack.c.b16 %v1567, %v1566
      %v2019 = vpack.c.b16 %v1569, %v1568
      %v2020 = vpack.c.b16 %v1571, %v1570
      %v2021 = vpack.c.b16 %v1573, %v1572
      %v2022 = vpack.c.b16 %v1575, %v1574
      %v2023 = vpack.c.b16 %v1577, %v1576
      %v2024 = vpack.c.b16 %v1579, %v1578
      %v2025 = vpack.c.b16 %v1581, %v1580
      %v2026 = vpack.c.b16 %v1583, %v1582
      %v2027 = vpack.c.b16 %v1585, %v1584
      %v2028 = vpack.c.b16 %v1587, %v1586
      %v2029 = vpack.c.b16 %v1589, %v1588
      %v2030 = vpack.c.b16 %v1591, %v1590
      %v2031 = vpack.c.b16 %v1593, %v1592
      %v2032 = vpack.c.b16 %v1595, %v1594
      %v2033 = vpack.c.b16 %v1597, %v1596
      %v2034 = vpack.c.b16 %v1599, %v1598
      %v2035 = vpack.c.b16 %v1601, %v1600
      %v2036 = vpack.c.b16 %v1603, %v1602
      %v2037 = vpack.c.b16 %v1605, %v1604
      %v2038 = vpack.c.b16 %v1607, %v1606
      %v2039 = vpack.c.b16 %v1609, %v1608
      %v2040 = vpack.c.b16 %v1611, %v1610
      %v2041 = vpack.c.b16 %v1613, %v1612
      %v2042 = vpack.c.b16 %v1615, %v1614
      %v2043 = vpack.c.b16 %v1617, %v1616
      %v2044 = vpack.c.b16 %v1619, %v1618
      %v2045 = vpack.c.b16 %v1621, %v1620
      %v2046 = vpack.c.b16 %v1623, %v1622
      %v2047 = vpack.c.b16 %v1625, %v1624
      %v2048 = vpack.c.b16 %v1627, %v1626
      %v2049 = vpack.c.b16 %v1629, %v1628
      %v2050 = vpack.c.b16 %v1631, %v1630
      %v2051 = vpack.c.b16 %v1633, %v1632
      %v2052 = vpack.c.b16 %v1635, %v1634
      %v2053 = vpack.c.b16 %v1637, %v1636
      %v2054 = vpack.c.b16 %v1639, %v1638
      %v2055 = vpack.c.b16 %v1641, %v1640
      %v2056 = vpack.c.b16 %v1643, %v1642
      %v2057 = vpack.c.b16 %v1645, %v1644
      %v2058 = vpack.c.b16 %v1647, %v1646
      %v2059 = vpack.c.b16 %v1649, %v1648
      %v2060 = vpack.c.b16 %v1651, %v1650
      %v2061 = vpack.c.b16 %v1653, %v1652
      %v2062 = vpack.c.b16 %v1655, %v1654
      %v2063 = vpack.c.b16 %v1657, %v1656
      %v2064 = vpack.c.b16 %v1659, %v1658
      %v2065 = vpack.c.b16 %v1661, %v1660
      %v2066 = vpack.c.b16 %v1663, %v1662
      %v2067 = vpack.c.b16 %v1665, %v1664
      %v2068 = vpack.c.b16 %v1667, %v1666
      %v2069 = vpack.c.b16 %v1669, %v1668
      %v2070 = vpack.c.b16 %v1671, %v1670
      %v2071 = vpack.c.b16 %v1673, %v1672
      %v2072 = vpack.c.b16 %v1675, %v1674
      %v2073 = vpack.c.b16 %v1677, %v1676
      %v2074 = vpack.c.b16 %v1679, %v1678
      %v2075 = vpack.c.b16 %v1681, %v1680
      %v2076 = vpack.c.b16 %v1683, %v1682
      %v2077 = vpack.c.b16 %v1685, %v1684
      %v2078 = vpack.c.b16 %v1687, %v1686
      %v2079 = vpack.c.b16 %v1689, %v1688
      %v2080 = vpack.c.b16 %v1691, %v1690
      %v2081 = vpack.c.b16 %v1693, %v1692
      %v2082 = vpack.c.b16 %v1695, %v1694
      %v2083 = vpack.c.b16 %v1697, %v1696
      %v2084 = vpack.c.b16 %v1699, %v1698
      %v2085 = vpack.c.b16 %v1701, %v1700
      %v2086 = vpack.c.b16 %v1703, %v1702
      %v2087 = vpack.c.b16 %v1705, %v1704
      %v2088 = vpack.c.b16 %v1707, %v1706
      %v2089 = vpack.c.b16 %v1709, %v1708
      %v2090 = vpack.c.b16 %v1711, %v1710
      %v2091 = vpack.c.b16 %v1713, %v1712
      %v2092 = vpack.c.b16 %v1715, %v1714
      %v2093 = vpack.c.b16 %v1717, %v1716
      %v2094 = vpack.c.b16 %v1719, %v1718
      %v2095 = vpack.c.b16 %v1721, %v1720
      %v2096 = vpack.c.b16 %v1723, %v1722
      %v2097 = vpack.c.b16 %v1725, %v1724
      %v2098 = vpack.c.b16 %v1727, %v1726
      %v2099 = vpack.c.b16 %v1729, %v1728
      %v2100 = vpack.c.b16 %v1731, %v1730
      %v2101 = vpack.c.b16 %v1733, %v1732
      %v2102 = vpack.c.b16 %v1735, %v1734
      %v2103 = vpack.c.b16 %v1737, %v1736
      %v2104 = vpack.c.b16 %v1739, %v1738
      %v2105 = vpack.c.b16 %v1741, %v1740
      %v2106 = vpack.c.b16 %v1743, %v1742
      %v2107 = vpack.c.b16 %v1745, %v1744
      %v2108 = vpack.c.b16 %v1747, %v1746
      %v2109 = vpack.c.b16 %v1749, %v1748
      %v2110 = vpack.c.b16 %v1751, %v1750
      %v2111 = vpack.c.b16 %v1753, %v1752
      %v2112 = vpack.c.b16 %v1755, %v1754
      %v2113 = vpack.c.b16 %v1757, %v1756
      %v2114 = vpack.c.b16 %v1759, %v1758
      %v2115 = vpack.c.b16 %v1761, %v1760
      %v2116 = vpack.c.b16 %v1763, %v1762
      %v2117 = vpack.c.b16 %v1765, %v1764
      %v2118 = vpack.c.b16 %v1767, %v1766
      %v2119 = vpack.c.b16 %v1769, %v1768
      %v2120 = vpack.c.b16 %v1771, %v1770
      %v2121 = vpack.c.b16 %v1773, %v1772
      %v2122 = vpack.c.b16 %v1775, %v1774
      %v2123 = vpack.c.b16 %v1777, %v1776
      %v2124 = vpack.c.b16 %v1779, %v1778
      %v2125 = vpack.c.b16 %v1781, %v1780
      %v2126 = vpack.c.b16 %v1783, %v1782
      %v2127 = vpack.c.b16 %v1785, %v1784
      %v2128 = vpack.c.b16 %v1787, %v1786
      %v2129 = vpack.c.b16 %v1789, %v1788
      %v2130 = vpack.c.b16 %v1791, %v1790
      %v2131 = vpack.c.b16 %v1793, %v1792
      %v2132 = vpack.c.b16 %v1795, %v1794
      %v2133 = vpack.c.b16 %v1797, %v1796
      %v2134 = vpack.c.b16 %v1799, %v1798
      %v2135 = vpack.c.b16 %v1801, %v1800
      %v2136 = vpack.c.b16 %v1803, %v1802
      %v2137 = vpack.c.b16 %v1805, %v1804
      %v2138 = vpack.c.b16 %v1807, %v1806
      %v2139 = vpack.c.b16 %v1809, %v1808
      %v2140 = vpack.c.b16 %v1811, %v1810
      %v2141 = vpack.c.b16 %v1813, %v1812
      %v2142 = vpack.c.b16 %v1815, %v1814
      %v2143 = vpack.c.b16 %v1817, %v1816
      %v2144 = vpack.c.b16 %v1819, %v1818
      %v2145 = vpack.c.b16 %v1821, %v1820
      %v2146 = vpack.c.b16 %v1823, %v1822
      %v2147 = vpack.c.b16 %v1825, %v1824
      %v2148 = vpack.c.b16 %v1827, %v1826
      %v2149 = vpack.c.b16 %v1829, %v1828
      %v2150 = vpack.c.b16 %v1831, %v1830
      %v2151 = vpack.c.b16 %v1833, %v1832
      %v2152 = vpack.c.b16 %v1835, %v1834
      %v2153 = vpack.c.b16 %v1837, %v1836
      %v2154 = vpack.c.b16 %v1839, %v1838
      %v2155 = vpack.c.b16 %v1841, %v1840
      %v2156 = vpack.c.b16 %v1843, %v1842
      %v2157 = vpack.c.b16 %v1845, %v1844
      %v2158 = vpack.c.b16 %v1847, %v1846
      %v2159 = vpack.c.b16 %v1849, %v1848
      %v2160 = vpack.c.b16 %v1851, %v1850
      %v2161 = vpack.c.b16 %v1853, %v1852
      %v2162 = vpack.c.b16 %v1855, %v1854
      %v2163 = vpack.c.b16 %v1857, %v1856
      %v2164 = vpack.c.b16 %v1859, %v1858
      %v2165 = vpack.c.b16 %v1861, %v1860
      %v2166 = vpack.c.b16 %v1863, %v1862
      %v2167 = vpack.c.b16 %v1865, %v1864
      %v2168 = vpack.c.b16 %v1867, %v1866
      %v2169 = vpack.c.b16 %v1869, %v1868
      %v2170 = vpack.c.b16 %v1871, %v1870
      %v2171 = vpack.c.b16 %v1873, %v1872
      %v2172 = vpack.c.b16 %v1875, %v1874
      %v2173 = vpack.c.b16 %v1877, %v1876
      %v2174 = vpack.c.b16 %v1879, %v1878
      %v2175 = vpack.c.b16 %v1881, %v1880
      %v2176 = vpack.c.b16 %v1883, %v1882
      %v2177 = vpack.c.b16 %v1885, %v1884
      %v2178 = vpack.c.b16 %v1887, %v1886
      %v2179 = vpack.c.b16 %v1889, %v1888
      %v2180 = vpack.c.b16 %v1891, %v1890
      %v2181 = vpack.c.b16 %v1893, %v1892
      %v2182 = vpack.c.b16 %v1895, %v1894
      %v2183 = vpack.c.b16 %v1897, %v1896
      %v2184 = vpack.c.b16 %v1899, %v1898
      %v2185 = vpack.c.b16 %v1901, %v1900
      %v2186 = vpack.c.b16 %v1903, %v1902
      %v2187 = vpack.c.b16 %v1905, %v1904
      %v2188 = vpack.c.b16 %v1907, %v1906
      %v2189 = vpack.c.b16 %v1909, %v1908
      %v2190 = vpack.c.b16 %v1911, %v1910
      %v2191 = vpack.c.b16 %v1913, %v1912
      %v2192 = vpack.c.b16 %v1915, %v1914
      %v2193 = vpack.c.b16 %v1917, %v1916
      %v2194 = vpack.c.b16 %v1919, %v1918
      %v2195 = vpack.c.b16 %v1921, %v1920
      %v2196 = vpack.c.b16 %v1923, %v1922
      %v2197 = vpack.c.b16 %v1925, %v1924
      %v2198 = vpack.c.b16 %v1927, %v1926
      %v2199 = vpack.c.b16 %v1929, %v1928
      %v2200 = vpack.c.b16 %v1931, %v1930
      %v2201 = vpack.c.b16 %v1933, %v1932
      %v2202 = vpack.c.b16 %v1935, %v1934
      %v2203 = vpack.c.b16 %v1937, %v1936
      %v2204 = vpack.c.b16 %v1939, %v1938
      %v2205 = vpack.c.b16 %v1941, %v1940
      %v2206 = vpack.c.b16 %v1943, %v1942
      %v2207 = vpack.c.b16 %v1945, %v1944
      %v2208 = vpack.c.b16 %v1947, %v1946
      %v2209 = vpack.c.b16 %v1949, %v1948
      %v2210 = vpack.c.b16 %v1951, %v1950
      %v2211 = vpack.c.b16 %v1953, %v1952
      %v2212 = vpack.c.b16 %v1955, %v1954
      %v2213 = vpack.c.b16 %v1957, %v1956
      %2470 = vmatprep.subr.bf16.mxu0 0
      %2471 = vmatpush1.bf16.msra.mxu0 %v1965
      %2472 = vmatprep.subr.bf16.mxu0 0
      %2473 = vmatpush1.bf16.msra.mxu0 %v1964
      %2474 = vmatprep.subr.bf16.mxu0 0
      %2475 = vmatpush1.bf16.msra.mxu0 %v1963
      %2476 = vmatprep.subr.bf16.mxu0 0
      %2477 = vmatpush1.bf16.msra.mxu0 %v1962
      %2478 = vmatprep.subr.bf16.mxu0 0
      %2479 = vmatpush1.bf16.msra.mxu0 %v1961
      %2480 = vmatprep.subr.bf16.mxu0 0
      %2481 = vmatpush1.bf16.msra.mxu0 %v1960
      %2482 = vmatprep.subr.bf16.mxu0 0
      %2483 = vmatpush1.bf16.msra.mxu0 %v1959
      %2484 = vmatprep.subr.bf16.mxu0 0
      %2485 = vmatpush1.bf16.msra.mxu0 %v1958
      %2486 = vmatprep.subr.bf16.mxu0 0
      %2487 = vmatpush2.bf16.msra.mxu0 %v1973
      %2488 = vmatprep.subr.bf16.mxu0 0
      %2489 = vmatpush2.bf16.msra.mxu0 %v1972
      %2490 = vmatprep.subr.bf16.mxu0 0
      %2491 = vmatpush2.bf16.msra.mxu0 %v1971
      %2492 = vmatprep.subr.bf16.mxu0 0
      %2493 = vmatpush2.bf16.msra.mxu0 %v1970
      %2494 = vmatprep.subr.bf16.mxu0 0
      %2495 = vmatpush2.bf16.msra.mxu0 %v1969
      %2496 = vmatprep.subr.bf16.mxu0 0
      %2497 = vmatpush2.bf16.msra.mxu0 %v1968
      %2498 = vmatprep.subr.bf16.mxu0 0
      %2499 = vmatpush2.bf16.msra.mxu0 %v1967
      %2500 = vmatprep.subr.bf16.mxu0 0
      %2501 = vmatpush2.bf16.msra.mxu0 %v1966
      %2502 = vmatprep.mubr.bf16.mxu0 %v871
      %2503 = vmatmul.mubr.bf16.gmra.mxu0 %v870
      %v2504 = vpop.f32.mrf.mxu0
      %v2505 = vadd.f32 0.0, %v2504
      %v2506 = vpop.f32.mrf.mxu0
      %v2507 = vpop.f32.mrf.mxu0
      %v2508 = vadd.f32 0.0, %v2507
      %v2509 = vpop.f32.mrf.mxu0
      %2510 = vdwg.mxu0
      %2511 = vmatprep.subr.bf16.mxu0 0
      %2512 = vmatpush1.bf16.msra.mxu0 %v1981
      %2513 = vmatprep.subr.bf16.mxu0 0
      %2514 = vmatpush1.bf16.msra.mxu0 %v1980
      %2515 = vmatprep.subr.bf16.mxu0 0
      %2516 = vmatpush1.bf16.msra.mxu0 %v1979
      %2517 = vmatprep.subr.bf16.mxu0 0
      %2518 = vmatpush1.bf16.msra.mxu0 %v1978
      %2519 = vmatprep.subr.bf16.mxu0 0
      %2520 = vmatpush1.bf16.msra.mxu0 %v1977
      %2521 = vmatprep.subr.bf16.mxu0 0
      %2522 = vmatpush1.bf16.msra.mxu0 %v1976
      %2523 = vmatprep.subr.bf16.mxu0 0
      %2524 = vmatpush1.bf16.msra.mxu0 %v1975
      %2525 = vmatprep.subr.bf16.mxu0 0
      %2526 = vmatpush1.bf16.msra.mxu0 %v1974
      %2527 = vmatprep.subr.bf16.mxu0 0
      %2528 = vmatpush2.bf16.msra.mxu0 %v1989
      %2529 = vmatprep.subr.bf16.mxu0 0
      %2530 = vmatpush2.bf16.msra.mxu0 %v1988
      %2531 = vmatprep.subr.bf16.mxu0 0
      %2532 = vmatpush2.bf16.msra.mxu0 %v1987
      %2533 = vmatprep.subr.bf16.mxu0 0
      %2534 = vmatpush2.bf16.msra.mxu0 %v1986
      %2535 = vmatprep.subr.bf16.mxu0 0
      %2536 = vmatpush2.bf16.msra.mxu0 %v1985
      %2537 = vmatprep.subr.bf16.mxu0 0
      %2538 = vmatpush2.bf16.msra.mxu0 %v1984
      %2539 = vmatprep.subr.bf16.mxu0 0
      %2540 = vmatpush2.bf16.msra.mxu0 %v1983
      %2541 = vmatprep.subr.bf16.mxu0 0
      %2542 = vmatpush2.bf16.msra.mxu0 %v1982
      %2543 = vmatprep.mubr.bf16.mxu0 %v873
      %2544 = vmatmul.mubr.bf16.gmra.mxu0 %v872
      %v2545 = vpop.f32.mrf.mxu0
      %v2546 = vadd.f32 %v2505, %v2545
      %v2547 = vpop.f32.mrf.mxu0
      %v2548 = vpop.f32.mrf.mxu0
      %v2549 = vadd.f32 %v2508, %v2548
      %v2550 = vpop.f32.mrf.mxu0
      %2551 = vdwg.mxu0
      %2552 = vmatprep.subr.bf16.mxu0 0
      %2553 = vmatpush1.bf16.msra.mxu0 %v1997
      %2554 = vmatprep.subr.bf16.mxu0 0
      %2555 = vmatpush1.bf16.msra.mxu0 %v1996
      %2556 = vmatprep.subr.bf16.mxu0 0
      %2557 = vmatpush1.bf16.msra.mxu0 %v1995
      %2558 = vmatprep.subr.bf16.mxu0 0
      %2559 = vmatpush1.bf16.msra.mxu0 %v1994
      %2560 = vmatprep.subr.bf16.mxu0 0
      %2561 = vmatpush1.bf16.msra.mxu0 %v1993
      %2562 = vmatprep.subr.bf16.mxu0 0
      %2563 = vmatpush1.bf16.msra.mxu0 %v1992
      %2564 = vmatprep.subr.bf16.mxu0 0
      %2565 = vmatpush1.bf16.msra.mxu0 %v1991
      %2566 = vmatprep.subr.bf16.mxu0 0
      %2567 = vmatpush1.bf16.msra.mxu0 %v1990
      %2568 = vmatprep.subr.bf16.mxu0 0
      %2569 = vmatpush2.bf16.msra.mxu0 %v2005
      %2570 = vmatprep.subr.bf16.mxu0 0
      %2571 = vmatpush2.bf16.msra.mxu0 %v2004
      %2572 = vmatprep.subr.bf16.mxu0 0
      %2573 = vmatpush2.bf16.msra.mxu0 %v2003
      %2574 = vmatprep.subr.bf16.mxu0 0
      %2575 = vmatpush2.bf16.msra.mxu0 %v2002
      %2576 = vmatprep.subr.bf16.mxu0 0
      %2577 = vmatpush2.bf16.msra.mxu0 %v2001
      %2578 = vmatprep.subr.bf16.mxu0 0
      %2579 = vmatpush2.bf16.msra.mxu0 %v2000
      %2580 = vmatprep.subr.bf16.mxu0 0
      %2581 = vmatpush2.bf16.msra.mxu0 %v1999
      %2582 = vmatprep.subr.bf16.mxu0 0
      %2583 = vmatpush2.bf16.msra.mxu0 %v1998
      %2584 = vmatprep.mubr.bf16.mxu0 %v875
      %2585 = vmatmul.mubr.bf16.gmra.mxu0 %v874
      %v2586 = vpop.f32.mrf.mxu0
      %v2587 = vadd.f32 %v2546, %v2586
      %v2588 = vpop.f32.mrf.mxu0
      %v2589 = vpop.f32.mrf.mxu0
      %v2590 = vadd.f32 %v2549, %v2589
      %v2591 = vpop.f32.mrf.mxu0
      %2592 = vdwg.mxu0
      %2593 = vmatprep.subr.bf16.mxu0 0
      %2594 = vmatpush1.bf16.msra.mxu0 %v2013
      %2595 = vmatprep.subr.bf16.mxu0 0
      %2596 = vmatpush1.bf16.msra.mxu0 %v2012
      %2597 = vmatprep.subr.bf16.mxu0 0
      %2598 = vmatpush1.bf16.msra.mxu0 %v2011
      %2599 = vmatprep.subr.bf16.mxu0 0
      %2600 = vmatpush1.bf16.msra.mxu0 %v2010
      %2601 = vmatprep.subr.bf16.mxu0 0
      %2602 = vmatpush1.bf16.msra.mxu0 %v2009
      %2603 = vmatprep.subr.bf16.mxu0 0
      %2604 = vmatpush1.bf16.msra.mxu0 %v2008
      %2605 = vmatprep.subr.bf16.mxu0 0
      %2606 = vmatpush1.bf16.msra.mxu0 %v2007
      %2607 = vmatprep.subr.bf16.mxu0 0
      %2608 = vmatpush1.bf16.msra.mxu0 %v2006
      %2609 = vmatprep.subr.bf16.mxu0 0
      %2610 = vmatpush2.bf16.msra.mxu0 %v2021
      %2611 = vmatprep.subr.bf16.mxu0 0
      %2612 = vmatpush2.bf16.msra.mxu0 %v2020
      %2613 = vmatprep.subr.bf16.mxu0 0
      %2614 = vmatpush2.bf16.msra.mxu0 %v2019
      %2615 = vmatprep.subr.bf16.mxu0 0
      %2616 = vmatpush2.bf16.msra.mxu0 %v2018
      %2617 = vmatprep.subr.bf16.mxu0 0
      %2618 = vmatpush2.bf16.msra.mxu0 %v2017
      %2619 = vmatprep.subr.bf16.mxu0 0
      %2620 = vmatpush2.bf16.msra.mxu0 %v2016
      %2621 = vmatprep.subr.bf16.mxu0 0
      %2622 = vmatpush2.bf16.msra.mxu0 %v2015
      %2623 = vmatprep.subr.bf16.mxu0 0
      %2624 = vmatpush2.bf16.msra.mxu0 %v2014
      %2625 = vmatprep.mubr.bf16.mxu0 %v877
      %2626 = vmatmul.mubr.bf16.gmra.mxu0 %v876
      %v2627 = vpop.f32.mrf.mxu0
      %v2628 = vadd.f32 %v2587, %v2627
      %v2629 = vpop.f32.mrf.mxu0
      %v2630 = vpop.f32.mrf.mxu0
      %v2631 = vadd.f32 %v2590, %v2630
      %v2632 = vpop.f32.mrf.mxu0
      %2633 = vdwg.mxu0
      %2634 = vmatprep.subr.bf16.mxu0 0
      %2635 = vmatpush1.bf16.msra.mxu0 %v2029
      %2636 = vmatprep.subr.bf16.mxu0 0
      %2637 = vmatpush1.bf16.msra.mxu0 %v2028
      %2638 = vmatprep.subr.bf16.mxu0 0
      %2639 = vmatpush1.bf16.msra.mxu0 %v2027
      %2640 = vmatprep.subr.bf16.mxu0 0
      %2641 = vmatpush1.bf16.msra.mxu0 %v2026
      %2642 = vmatprep.subr.bf16.mxu0 0
      %2643 = vmatpush1.bf16.msra.mxu0 %v2025
      %2644 = vmatprep.subr.bf16.mxu0 0
      %2645 = vmatpush1.bf16.msra.mxu0 %v2024
      %2646 = vmatprep.subr.bf16.mxu0 0
      %2647 = vmatpush1.bf16.msra.mxu0 %v2023
      %2648 = vmatprep.subr.bf16.mxu0 0
      %2649 = vmatpush1.bf16.msra.mxu0 %v2022
      %2650 = vmatprep.subr.bf16.mxu0 0
      %2651 = vmatpush2.bf16.msra.mxu0 %v2037
      %2652 = vmatprep.subr.bf16.mxu0 0
      %2653 = vmatpush2.bf16.msra.mxu0 %v2036
      %2654 = vmatprep.subr.bf16.mxu0 0
      %2655 = vmatpush2.bf16.msra.mxu0 %v2035
      %2656 = vmatprep.subr.bf16.mxu0 0
      %2657 = vmatpush2.bf16.msra.mxu0 %v2034
      %2658 = vmatprep.subr.bf16.mxu0 0
      %2659 = vmatpush2.bf16.msra.mxu0 %v2033
      %2660 = vmatprep.subr.bf16.mxu0 0
      %2661 = vmatpush2.bf16.msra.mxu0 %v2032
      %2662 = vmatprep.subr.bf16.mxu0 0
      %2663 = vmatpush2.bf16.msra.mxu0 %v2031
      %2664 = vmatprep.subr.bf16.mxu0 0
      %2665 = vmatpush2.bf16.msra.mxu0 %v2030
      %2666 = vmatprep.mubr.bf16.mxu0 %v879
      %2667 = vmatmul.mubr.bf16.gmra.mxu0 %v878
      %v2668 = vpop.f32.mrf.mxu0
      %v2669 = vadd.f32 %v2628, %v2668
      %v2670 = vpop.f32.mrf.mxu0
      %v2671 = vpop.f32.mrf.mxu0
      %v2672 = vadd.f32 %v2631, %v2671
      %v2673 = vpop.f32.mrf.mxu0
      %2674 = vdwg.mxu0
      %2675 = vmatprep.subr.bf16.mxu0 0
      %2676 = vmatpush1.bf16.msra.mxu0 %v2045
      %2677 = vmatprep.subr.bf16.mxu0 0
      %2678 = vmatpush1.bf16.msra.mxu0 %v2044
      %2679 = vmatprep.subr.bf16.mxu0 0
      %2680 = vmatpush1.bf16.msra.mxu0 %v2043
      %2681 = vmatprep.subr.bf16.mxu0 0
      %2682 = vmatpush1.bf16.msra.mxu0 %v2042
      %2683 = vmatprep.subr.bf16.mxu0 0
      %2684 = vmatpush1.bf16.msra.mxu0 %v2041
      %2685 = vmatprep.subr.bf16.mxu0 0
      %2686 = vmatpush1.bf16.msra.mxu0 %v2040
      %2687 = vmatprep.subr.bf16.mxu0 0
      %2688 = vmatpush1.bf16.msra.mxu0 %v2039
      %2689 = vmatprep.subr.bf16.mxu0 0
      %2690 = vmatpush1.bf16.msra.mxu0 %v2038
      %2691 = vmatprep.subr.bf16.mxu0 0
      %2692 = vmatpush2.bf16.msra.mxu0 %v2053
      %2693 = vmatprep.subr.bf16.mxu0 0
      %2694 = vmatpush2.bf16.msra.mxu0 %v2052
      %2695 = vmatprep.subr.bf16.mxu0 0
      %2696 = vmatpush2.bf16.msra.mxu0 %v2051
      %2697 = vmatprep.subr.bf16.mxu0 0
      %2698 = vmatpush2.bf16.msra.mxu0 %v2050
      %2699 = vmatprep.subr.bf16.mxu0 0
      %2700 = vmatpush2.bf16.msra.mxu0 %v2049
      %2701 = vmatprep.subr.bf16.mxu0 0
      %2702 = vmatpush2.bf16.msra.mxu0 %v2048
      %2703 = vmatprep.subr.bf16.mxu0 0
      %2704 = vmatpush2.bf16.msra.mxu0 %v2047
      %2705 = vmatprep.subr.bf16.mxu0 0
      %2706 = vmatpush2.bf16.msra.mxu0 %v2046
      %2707 = vmatprep.mubr.bf16.mxu0 %v881
      %2708 = vmatmul.mubr.bf16.gmra.mxu0 %v880
      %v2709 = vpop.f32.mrf.mxu0
      %v2710 = vadd.f32 %v2669, %v2709
      %v2711 = vpop.f32.mrf.mxu0
      %v2712 = vpop.f32.mrf.mxu0
      %v2713 = vadd.f32 %v2672, %v2712
      %v2714 = vpop.f32.mrf.mxu0
      %2715 = vdwg.mxu0
      %2716 = vmatprep.subr.bf16.mxu0 0
      %2717 = vmatpush1.bf16.msra.mxu0 %v2061
      %2718 = vmatprep.subr.bf16.mxu0 0
      %2719 = vmatpush1.bf16.msra.mxu0 %v2060
      %2720 = vmatprep.subr.bf16.mxu0 0
      %2721 = vmatpush1.bf16.msra.mxu0 %v2059
      %2722 = vmatprep.subr.bf16.mxu0 0
      %2723 = vmatpush1.bf16.msra.mxu0 %v2058
      %2724 = vmatprep.subr.bf16.mxu0 0
      %2725 = vmatpush1.bf16.msra.mxu0 %v2057
      %2726 = vmatprep.subr.bf16.mxu0 0
      %2727 = vmatpush1.bf16.msra.mxu0 %v2056
      %2728 = vmatprep.subr.bf16.mxu0 0
      %2729 = vmatpush1.bf16.msra.mxu0 %v2055
      %2730 = vmatprep.subr.bf16.mxu0 0
      %2731 = vmatpush1.bf16.msra.mxu0 %v2054
      %2732 = vmatprep.subr.bf16.mxu0 0
      %2733 = vmatpush2.bf16.msra.mxu0 %v2069
      %2734 = vmatprep.subr.bf16.mxu0 0
      %2735 = vmatpush2.bf16.msra.mxu0 %v2068
      %2736 = vmatprep.subr.bf16.mxu0 0
      %2737 = vmatpush2.bf16.msra.mxu0 %v2067
      %2738 = vmatprep.subr.bf16.mxu0 0
      %2739 = vmatpush2.bf16.msra.mxu0 %v2066
      %2740 = vmatprep.subr.bf16.mxu0 0
      %2741 = vmatpush2.bf16.msra.mxu0 %v2065
      %2742 = vmatprep.subr.bf16.mxu0 0
      %2743 = vmatpush2.bf16.msra.mxu0 %v2064
      %2744 = vmatprep.subr.bf16.mxu0 0
      %2745 = vmatpush2.bf16.msra.mxu0 %v2063
      %2746 = vmatprep.subr.bf16.mxu0 0
      %2747 = vmatpush2.bf16.msra.mxu0 %v2062
      %2748 = vmatprep.mubr.bf16.mxu0 %v883
      %2749 = vmatmul.mubr.bf16.gmra.mxu0 %v882
      %v2750 = vpop.f32.mrf.mxu0
      %v2751 = vadd.f32 %v2710, %v2750
      %v2752 = vpop.f32.mrf.mxu0
      %v2753 = vpop.f32.mrf.mxu0
      %v2754 = vadd.f32 %v2713, %v2753
      %v2755 = vpop.f32.mrf.mxu0
      %2756 = vdwg.mxu0
      %2757 = vmatprep.subr.bf16.mxu0 0
      %2758 = vmatpush1.bf16.msra.mxu0 %v2077
      %2759 = vmatprep.subr.bf16.mxu0 0
      %2760 = vmatpush1.bf16.msra.mxu0 %v2076
      %2761 = vmatprep.subr.bf16.mxu0 0
      %2762 = vmatpush1.bf16.msra.mxu0 %v2075
      %2763 = vmatprep.subr.bf16.mxu0 0
      %2764 = vmatpush1.bf16.msra.mxu0 %v2074
      %2765 = vmatprep.subr.bf16.mxu0 0
      %2766 = vmatpush1.bf16.msra.mxu0 %v2073
      %2767 = vmatprep.subr.bf16.mxu0 0
      %2768 = vmatpush1.bf16.msra.mxu0 %v2072
      %2769 = vmatprep.subr.bf16.mxu0 0
      %2770 = vmatpush1.bf16.msra.mxu0 %v2071
      %2771 = vmatprep.subr.bf16.mxu0 0
      %2772 = vmatpush1.bf16.msra.mxu0 %v2070
      %2773 = vmatprep.subr.bf16.mxu0 0
      %2774 = vmatpush2.bf16.msra.mxu0 %v2085
      %2775 = vmatprep.subr.bf16.mxu0 0
      %2776 = vmatpush2.bf16.msra.mxu0 %v2084
      %2777 = vmatprep.subr.bf16.mxu0 0
      %2778 = vmatpush2.bf16.msra.mxu0 %v2083
      %2779 = vmatprep.subr.bf16.mxu0 0
      %2780 = vmatpush2.bf16.msra.mxu0 %v2082
      %2781 = vmatprep.subr.bf16.mxu0 0
      %2782 = vmatpush2.bf16.msra.mxu0 %v2081
      %2783 = vmatprep.subr.bf16.mxu0 0
      %2784 = vmatpush2.bf16.msra.mxu0 %v2080
      %2785 = vmatprep.subr.bf16.mxu0 0
      %2786 = vmatpush2.bf16.msra.mxu0 %v2079
      %2787 = vmatprep.subr.bf16.mxu0 0
      %2788 = vmatpush2.bf16.msra.mxu0 %v2078
      %2789 = vmatprep.mubr.bf16.mxu0 %v885
      %2790 = vmatmul.mubr.bf16.gmra.mxu0 %v884
      %v2791 = vpop.f32.mrf.mxu0
      %v2792 = vadd.f32 %v2751, %v2791
      %v2793 = vpop.f32.mrf.mxu0
      %v2794 = vpop.f32.mrf.mxu0
      %v2795 = vadd.f32 %v2754, %v2794
      %v2796 = vpop.f32.mrf.mxu0
      %2797 = vdwg.mxu0
      %2798 = vmatprep.subr.bf16.mxu0 0
      %2799 = vmatpush1.bf16.msra.mxu0 %v2093
      %2800 = vmatprep.subr.bf16.mxu0 0
      %2801 = vmatpush1.bf16.msra.mxu0 %v2092
      %2802 = vmatprep.subr.bf16.mxu0 0
      %2803 = vmatpush1.bf16.msra.mxu0 %v2091
      %2804 = vmatprep.subr.bf16.mxu0 0
      %2805 = vmatpush1.bf16.msra.mxu0 %v2090
      %2806 = vmatprep.subr.bf16.mxu0 0
      %2807 = vmatpush1.bf16.msra.mxu0 %v2089
      %2808 = vmatprep.subr.bf16.mxu0 0
      %2809 = vmatpush1.bf16.msra.mxu0 %v2088
      %2810 = vmatprep.subr.bf16.mxu0 0
      %2811 = vmatpush1.bf16.msra.mxu0 %v2087
      %2812 = vmatprep.subr.bf16.mxu0 0
      %2813 = vmatpush1.bf16.msra.mxu0 %v2086
      %2814 = vmatprep.subr.bf16.mxu0 0
      %2815 = vmatpush2.bf16.msra.mxu0 %v2101
      %2816 = vmatprep.subr.bf16.mxu0 0
      %2817 = vmatpush2.bf16.msra.mxu0 %v2100
      %2818 = vmatprep.subr.bf16.mxu0 0
      %2819 = vmatpush2.bf16.msra.mxu0 %v2099
      %2820 = vmatprep.subr.bf16.mxu0 0
      %2821 = vmatpush2.bf16.msra.mxu0 %v2098
      %2822 = vmatprep.subr.bf16.mxu0 0
      %2823 = vmatpush2.bf16.msra.mxu0 %v2097
      %2824 = vmatprep.subr.bf16.mxu0 0
      %2825 = vmatpush2.bf16.msra.mxu0 %v2096
      %2826 = vmatprep.subr.bf16.mxu0 0
      %2827 = vmatpush2.bf16.msra.mxu0 %v2095
      %2828 = vmatprep.subr.bf16.mxu0 0
      %2829 = vmatpush2.bf16.msra.mxu0 %v2094
      %2830 = vmatprep.mubr.bf16.mxu0 %v887
      %2831 = vmatmul.mubr.bf16.gmra.mxu0 %v886
      %v2832 = vpop.f32.mrf.mxu0
      %v2833 = vadd.f32 %v2792, %v2832
      %v2834 = vpop.f32.mrf.mxu0
      %v2835 = vpop.f32.mrf.mxu0
      %v2836 = vadd.f32 %v2795, %v2835
      %v2837 = vpop.f32.mrf.mxu0
      %2838 = vdwg.mxu0
      %2839 = vmatprep.subr.bf16.mxu0 0
      %2840 = vmatpush1.bf16.msra.mxu0 %v2109
      %2841 = vmatprep.subr.bf16.mxu0 0
      %2842 = vmatpush1.bf16.msra.mxu0 %v2108
      %2843 = vmatprep.subr.bf16.mxu0 0
      %2844 = vmatpush1.bf16.msra.mxu0 %v2107
      %2845 = vmatprep.subr.bf16.mxu0 0
      %2846 = vmatpush1.bf16.msra.mxu0 %v2106
      %2847 = vmatprep.subr.bf16.mxu0 0
      %2848 = vmatpush1.bf16.msra.mxu0 %v2105
      %2849 = vmatprep.subr.bf16.mxu0 0
      %2850 = vmatpush1.bf16.msra.mxu0 %v2104
      %2851 = vmatprep.subr.bf16.mxu0 0
      %2852 = vmatpush1.bf16.msra.mxu0 %v2103
      %2853 = vmatprep.subr.bf16.mxu0 0
      %2854 = vmatpush1.bf16.msra.mxu0 %v2102
      %2855 = vmatprep.subr.bf16.mxu0 0
      %2856 = vmatpush2.bf16.msra.mxu0 %v2117
      %2857 = vmatprep.subr.bf16.mxu0 0
      %2858 = vmatpush2.bf16.msra.mxu0 %v2116
      %2859 = vmatprep.subr.bf16.mxu0 0
      %2860 = vmatpush2.bf16.msra.mxu0 %v2115
      %2861 = vmatprep.subr.bf16.mxu0 0
      %2862 = vmatpush2.bf16.msra.mxu0 %v2114
      %2863 = vmatprep.subr.bf16.mxu0 0
      %2864 = vmatpush2.bf16.msra.mxu0 %v2113
      %2865 = vmatprep.subr.bf16.mxu0 0
      %2866 = vmatpush2.bf16.msra.mxu0 %v2112
      %2867 = vmatprep.subr.bf16.mxu0 0
      %2868 = vmatpush2.bf16.msra.mxu0 %v2111
      %2869 = vmatprep.subr.bf16.mxu0 0
      %2870 = vmatpush2.bf16.msra.mxu0 %v2110
      %2871 = vmatprep.mubr.bf16.mxu0 %v889
      %2872 = vmatmul.mubr.bf16.gmra.mxu0 %v888
      %v2873 = vpop.f32.mrf.mxu0
      %v2874 = vadd.f32 %v2833, %v2873
      %v2875 = vpop.f32.mrf.mxu0
      %v2876 = vpop.f32.mrf.mxu0
      %v2877 = vadd.f32 %v2836, %v2876
      %v2878 = vpop.f32.mrf.mxu0
      %2879 = vdwg.mxu0
      %2880 = vmatprep.subr.bf16.mxu0 0
      %2881 = vmatpush1.bf16.msra.mxu0 %v2125
      %2882 = vmatprep.subr.bf16.mxu0 0
      %2883 = vmatpush1.bf16.msra.mxu0 %v2124
      %2884 = vmatprep.subr.bf16.mxu0 0
      %2885 = vmatpush1.bf16.msra.mxu0 %v2123
      %2886 = vmatprep.subr.bf16.mxu0 0
      %2887 = vmatpush1.bf16.msra.mxu0 %v2122
      %2888 = vmatprep.subr.bf16.mxu0 0
      %2889 = vmatpush1.bf16.msra.mxu0 %v2121
      %2890 = vmatprep.subr.bf16.mxu0 0
      %2891 = vmatpush1.bf16.msra.mxu0 %v2120
      %2892 = vmatprep.subr.bf16.mxu0 0
      %2893 = vmatpush1.bf16.msra.mxu0 %v2119
      %2894 = vmatprep.subr.bf16.mxu0 0
      %2895 = vmatpush1.bf16.msra.mxu0 %v2118
      %2896 = vmatprep.subr.bf16.mxu0 0
      %2897 = vmatpush2.bf16.msra.mxu0 %v2133
      %2898 = vmatprep.subr.bf16.mxu0 0
      %2899 = vmatpush2.bf16.msra.mxu0 %v2132
      %2900 = vmatprep.subr.bf16.mxu0 0
      %2901 = vmatpush2.bf16.msra.mxu0 %v2131
      %2902 = vmatprep.subr.bf16.mxu0 0
      %2903 = vmatpush2.bf16.msra.mxu0 %v2130
      %2904 = vmatprep.subr.bf16.mxu0 0
      %2905 = vmatpush2.bf16.msra.mxu0 %v2129
      %2906 = vmatprep.subr.bf16.mxu0 0
      %2907 = vmatpush2.bf16.msra.mxu0 %v2128
      %2908 = vmatprep.subr.bf16.mxu0 0
      %2909 = vmatpush2.bf16.msra.mxu0 %v2127
      %2910 = vmatprep.subr.bf16.mxu0 0
      %2911 = vmatpush2.bf16.msra.mxu0 %v2126
      %2912 = vmatprep.mubr.bf16.mxu0 %v891
      %2913 = vmatmul.mubr.bf16.gmra.mxu0 %v890
      %v2914 = vpop.f32.mrf.mxu0
      %v2915 = vadd.f32 %v2874, %v2914
      %v2916 = vpop.f32.mrf.mxu0
      %v2917 = vpop.f32.mrf.mxu0
      %v2918 = vadd.f32 %v2877, %v2917
      %v2919 = vpop.f32.mrf.mxu0
      %2920 = vdwg.mxu0
      %2921 = vmatprep.subr.bf16.mxu0 0
      %2922 = vmatpush1.bf16.msra.mxu0 %v2141
      %2923 = vmatprep.subr.bf16.mxu0 0
      %2924 = vmatpush1.bf16.msra.mxu0 %v2140
      %2925 = vmatprep.subr.bf16.mxu0 0
      %2926 = vmatpush1.bf16.msra.mxu0 %v2139
      %2927 = vmatprep.subr.bf16.mxu0 0
      %2928 = vmatpush1.bf16.msra.mxu0 %v2138
      %2929 = vmatprep.subr.bf16.mxu0 0
      %2930 = vmatpush1.bf16.msra.mxu0 %v2137
      %2931 = vmatprep.subr.bf16.mxu0 0
      %2932 = vmatpush1.bf16.msra.mxu0 %v2136
      %2933 = vmatprep.subr.bf16.mxu0 0
      %2934 = vmatpush1.bf16.msra.mxu0 %v2135
      %2935 = vmatprep.subr.bf16.mxu0 0
      %2936 = vmatpush1.bf16.msra.mxu0 %v2134
      %2937 = vmatprep.subr.bf16.mxu0 0
      %2938 = vmatpush2.bf16.msra.mxu0 %v2149
      %2939 = vmatprep.subr.bf16.mxu0 0
      %2940 = vmatpush2.bf16.msra.mxu0 %v2148
      %2941 = vmatprep.subr.bf16.mxu0 0
      %2942 = vmatpush2.bf16.msra.mxu0 %v2147
      %2943 = vmatprep.subr.bf16.mxu0 0
      %2944 = vmatpush2.bf16.msra.mxu0 %v2146
      %2945 = vmatprep.subr.bf16.mxu0 0
      %2946 = vmatpush2.bf16.msra.mxu0 %v2145
      %2947 = vmatprep.subr.bf16.mxu0 0
      %2948 = vmatpush2.bf16.msra.mxu0 %v2144
      %2949 = vmatprep.subr.bf16.mxu0 0
      %2950 = vmatpush2.bf16.msra.mxu0 %v2143
      %2951 = vmatprep.subr.bf16.mxu0 0
      %2952 = vmatpush2.bf16.msra.mxu0 %v2142
      %2953 = vmatprep.mubr.bf16.mxu0 %v893
      %2954 = vmatmul.mubr.bf16.gmra.mxu0 %v892
      %v2955 = vpop.f32.mrf.mxu0
      %v2956 = vadd.f32 %v2915, %v2955
      %v2957 = vpop.f32.mrf.mxu0
      %v2958 = vpop.f32.mrf.mxu0
      %v2959 = vadd.f32 %v2918, %v2958
      %v2960 = vpop.f32.mrf.mxu0
      %2961 = vdwg.mxu0
      %2962 = vmatprep.subr.bf16.mxu0 0
      %2963 = vmatpush1.bf16.msra.mxu0 %v2157
      %2964 = vmatprep.subr.bf16.mxu0 0
      %2965 = vmatpush1.bf16.msra.mxu0 %v2156
      %2966 = vmatprep.subr.bf16.mxu0 0
      %2967 = vmatpush1.bf16.msra.mxu0 %v2155
      %2968 = vmatprep.subr.bf16.mxu0 0
      %2969 = vmatpush1.bf16.msra.mxu0 %v2154
      %2970 = vmatprep.subr.bf16.mxu0 0
      %2971 = vmatpush1.bf16.msra.mxu0 %v2153
      %2972 = vmatprep.subr.bf16.mxu0 0
      %2973 = vmatpush1.bf16.msra.mxu0 %v2152
      %2974 = vmatprep.subr.bf16.mxu0 0
      %2975 = vmatpush1.bf16.msra.mxu0 %v2151
      %2976 = vmatprep.subr.bf16.mxu0 0
      %2977 = vmatpush1.bf16.msra.mxu0 %v2150
      %2978 = vmatprep.subr.bf16.mxu0 0
      %2979 = vmatpush2.bf16.msra.mxu0 %v2165
      %2980 = vmatprep.subr.bf16.mxu0 0
      %2981 = vmatpush2.bf16.msra.mxu0 %v2164
      %2982 = vmatprep.subr.bf16.mxu0 0
      %2983 = vmatpush2.bf16.msra.mxu0 %v2163
      %2984 = vmatprep.subr.bf16.mxu0 0
      %2985 = vmatpush2.bf16.msra.mxu0 %v2162
      %2986 = vmatprep.subr.bf16.mxu0 0
      %2987 = vmatpush2.bf16.msra.mxu0 %v2161
      %2988 = vmatprep.subr.bf16.mxu0 0
      %2989 = vmatpush2.bf16.msra.mxu0 %v2160
      %2990 = vmatprep.subr.bf16.mxu0 0
      %2991 = vmatpush2.bf16.msra.mxu0 %v2159
      %2992 = vmatprep.subr.bf16.mxu0 0
      %2993 = vmatpush2.bf16.msra.mxu0 %v2158
      %2994 = vmatprep.mubr.bf16.mxu0 %v895
      %2995 = vmatmul.mubr.bf16.gmra.mxu0 %v894
      %v2996 = vpop.f32.mrf.mxu0
      %v2997 = vadd.f32 %v2956, %v2996
      %v2998 = vpop.f32.mrf.mxu0
      %v2999 = vpop.f32.mrf.mxu0
      %v3000 = vadd.f32 %v2959, %v2999
      %v3001 = vpop.f32.mrf.mxu0
      %3002 = vdwg.mxu0
      %3003 = vmatprep.subr.bf16.mxu0 0
      %3004 = vmatpush1.bf16.msra.mxu0 %v2173
      %3005 = vmatprep.subr.bf16.mxu0 0
      %3006 = vmatpush1.bf16.msra.mxu0 %v2172
      %3007 = vmatprep.subr.bf16.mxu0 0
      %3008 = vmatpush1.bf16.msra.mxu0 %v2171
      %3009 = vmatprep.subr.bf16.mxu0 0
      %3010 = vmatpush1.bf16.msra.mxu0 %v2170
      %3011 = vmatprep.subr.bf16.mxu0 0
      %3012 = vmatpush1.bf16.msra.mxu0 %v2169
      %3013 = vmatprep.subr.bf16.mxu0 0
      %3014 = vmatpush1.bf16.msra.mxu0 %v2168
      %3015 = vmatprep.subr.bf16.mxu0 0
      %3016 = vmatpush1.bf16.msra.mxu0 %v2167
      %3017 = vmatprep.subr.bf16.mxu0 0
      %3018 = vmatpush1.bf16.msra.mxu0 %v2166
      %3019 = vmatprep.subr.bf16.mxu0 0
      %3020 = vmatpush2.bf16.msra.mxu0 %v2181
      %3021 = vmatprep.subr.bf16.mxu0 0
      %3022 = vmatpush2.bf16.msra.mxu0 %v2180
      %3023 = vmatprep.subr.bf16.mxu0 0
      %3024 = vmatpush2.bf16.msra.mxu0 %v2179
      %3025 = vmatprep.subr.bf16.mxu0 0
      %3026 = vmatpush2.bf16.msra.mxu0 %v2178
      %3027 = vmatprep.subr.bf16.mxu0 0
      %3028 = vmatpush2.bf16.msra.mxu0 %v2177
      %3029 = vmatprep.subr.bf16.mxu0 0
      %3030 = vmatpush2.bf16.msra.mxu0 %v2176
      %3031 = vmatprep.subr.bf16.mxu0 0
      %3032 = vmatpush2.bf16.msra.mxu0 %v2175
      %3033 = vmatprep.subr.bf16.mxu0 0
      %3034 = vmatpush2.bf16.msra.mxu0 %v2174
      %3035 = vmatprep.mubr.bf16.mxu0 %v897
      %3036 = vmatmul.mubr.bf16.gmra.mxu0 %v896
      %v3037 = vpop.f32.mrf.mxu0
      %v3038 = vadd.f32 %v2997, %v3037
      %v3039 = vpop.f32.mrf.mxu0
      %v3040 = vpop.f32.mrf.mxu0
      %v3041 = vadd.f32 %v3000, %v3040
      %v3042 = vpop.f32.mrf.mxu0
      %3043 = vdwg.mxu0
      %3044 = vmatprep.subr.bf16.mxu0 0
      %3045 = vmatpush1.bf16.msra.mxu0 %v2189
      %3046 = vmatprep.subr.bf16.mxu0 0
      %3047 = vmatpush1.bf16.msra.mxu0 %v2188
      %3048 = vmatprep.subr.bf16.mxu0 0
      %3049 = vmatpush1.bf16.msra.mxu0 %v2187
      %3050 = vmatprep.subr.bf16.mxu0 0
      %3051 = vmatpush1.bf16.msra.mxu0 %v2186
      %3052 = vmatprep.subr.bf16.mxu0 0
      %3053 = vmatpush1.bf16.msra.mxu0 %v2185
      %3054 = vmatprep.subr.bf16.mxu0 0
      %3055 = vmatpush1.bf16.msra.mxu0 %v2184
      %3056 = vmatprep.subr.bf16.mxu0 0
      %3057 = vmatpush1.bf16.msra.mxu0 %v2183
      %3058 = vmatprep.subr.bf16.mxu0 0
      %3059 = vmatpush1.bf16.msra.mxu0 %v2182
      %3060 = vmatprep.subr.bf16.mxu0 0
      %3061 = vmatpush2.bf16.msra.mxu0 %v2197
      %3062 = vmatprep.subr.bf16.mxu0 0
      %3063 = vmatpush2.bf16.msra.mxu0 %v2196
      %3064 = vmatprep.subr.bf16.mxu0 0
      %3065 = vmatpush2.bf16.msra.mxu0 %v2195
      %3066 = vmatprep.subr.bf16.mxu0 0
      %3067 = vmatpush2.bf16.msra.mxu0 %v2194
      %3068 = vmatprep.subr.bf16.mxu0 0
      %3069 = vmatpush2.bf16.msra.mxu0 %v2193
      %3070 = vmatprep.subr.bf16.mxu0 0
      %3071 = vmatpush2.bf16.msra.mxu0 %v2192
      %3072 = vmatprep.subr.bf16.mxu0 0
      %3073 = vmatpush2.bf16.msra.mxu0 %v2191
      %3074 = vmatprep.subr.bf16.mxu0 0
      %3075 = vmatpush2.bf16.msra.mxu0 %v2190
      %3076 = vmatprep.mubr.bf16.mxu0 %v899
      %3077 = vmatmul.mubr.bf16.gmra.mxu0 %v898
      %v3078 = vpop.f32.mrf.mxu0
      %v3079 = vadd.f32 %v3038, %v3078
      %v3080 = vpop.f32.mrf.mxu0
      %v3081 = vpop.f32.mrf.mxu0
      %v3082 = vadd.f32 %v3041, %v3081
      %v3083 = vpop.f32.mrf.mxu0
      %3084 = vdwg.mxu0
      %3085 = vmatprep.subr.bf16.mxu0 0
      %3086 = vmatpush1.bf16.msra.mxu0 %v2205
      %3087 = vmatprep.subr.bf16.mxu0 0
      %3088 = vmatpush1.bf16.msra.mxu0 %v2204
      %3089 = vmatprep.subr.bf16.mxu0 0
      %3090 = vmatpush1.bf16.msra.mxu0 %v2203
      %3091 = vmatprep.subr.bf16.mxu0 0
      %3092 = vmatpush1.bf16.msra.mxu0 %v2202
      %3093 = vmatprep.subr.bf16.mxu0 0
      %3094 = vmatpush1.bf16.msra.mxu0 %v2201
      %3095 = vmatprep.subr.bf16.mxu0 0
      %3096 = vmatpush1.bf16.msra.mxu0 %v2200
      %3097 = vmatprep.subr.bf16.mxu0 0
      %3098 = vmatpush1.bf16.msra.mxu0 %v2199
      %3099 = vmatprep.subr.bf16.mxu0 0
      %3100 = vmatpush1.bf16.msra.mxu0 %v2198
      %3101 = vmatprep.subr.bf16.mxu0 0
      %3102 = vmatpush2.bf16.msra.mxu0 %v2213
      %3103 = vmatprep.subr.bf16.mxu0 0
      %3104 = vmatpush2.bf16.msra.mxu0 %v2212
      %3105 = vmatprep.subr.bf16.mxu0 0
      %3106 = vmatpush2.bf16.msra.mxu0 %v2211
      %3107 = vmatprep.subr.bf16.mxu0 0
      %3108 = vmatpush2.bf16.msra.mxu0 %v2210
      %3109 = vmatprep.subr.bf16.mxu0 0
      %3110 = vmatpush2.bf16.msra.mxu0 %v2209
      %3111 = vmatprep.subr.bf16.mxu0 0
      %3112 = vmatpush2.bf16.msra.mxu0 %v2208
      %3113 = vmatprep.subr.bf16.mxu0 0
      %3114 = vmatpush2.bf16.msra.mxu0 %v2207
      %3115 = vmatprep.subr.bf16.mxu0 0
      %3116 = vmatpush2.bf16.msra.mxu0 %v2206
      %3117 = vmatprep.mubr.bf16.mxu0 %v901
      %3118 = vmatmul.mubr.bf16.gmra.mxu0 %v900
      %v3119 = vpop.f32.mrf.mxu0
      %v3120 = vadd.f32 %v3079, %v3119
      %v3121 = vpop.f32.mrf.mxu0
      %v3122 = vpop.f32.mrf.mxu0
      %v3123 = vadd.f32 %v3082, %v3122
      %v3124 = vpop.f32.mrf.mxu0
      %3125 = vdwg.mxu0
      %v3126 = vld [vmem:[%s2] sm:$0xff]
      %v3127 = vld [vmem:[%s2 + $0x8] sm:$0xff]
      %3129 = vset.pattern.permute.xlu0 0
      %3130 = vperm.xlu0 %3129, %v3126
      %v3131 = vpop.permute.xlu0 %3130
      %3134 = vset.pattern.permute.xlu0 0
      %3135 = vperm.xlu0 %3134, %v3127
      %v3136 = vpop.permute.xlu0 %3135
      %v3138 = vmul.f32 %v3120, %v3131
      %v3139 = vmul.f32 %v3123, %v3136
      %v3140 = vld [vmem:[%s3] sm:$0xff]
      %v3141 = vld [vmem:[%s3 + $0x8] sm:$0xff]
      %3143 = vset.pattern.permute.xlu0 0
      %3144 = vperm.xlu0 %3143, %v3140
      %v3145 = vpop.permute.xlu0 %3144
      %3148 = vset.pattern.permute.xlu0 0
      %3149 = vperm.xlu0 %3148, %v3141
      %v3150 = vpop.permute.xlu0 %3149
      %v3152 = vadd.f32 %v3138, %v3145
      %v3153 = vadd.f32 %v3139, %v3150
      %3154 = vst [vmem:[%s228] sm:$0xff] %v3152
      %3155 = vst [vmem:[%s228 + $0x8] sm:$0xff] %v3153
      %p3156 = scmp.lt.s32.totalorder %s19, 1
      %s3157 = scalar_select %p3156, %s19, 1
      %p3158 = scmp.lt.s32.totalorder %s20, 0
      %s3159 = scalar_select %p3158, %s20, 0
      %s3160 = smul.addr %s3157, 2
      %s3161 = sadd.s32 %s3159, %s3160
      %s3162 = smul.addr %s3161, 8
      %s3163 = scalar_lea.vmem %s4, %s3162
      // Predicated region
      $region37: #{_lambda_.9} parent=35 // pred_check
        %p3164 = pneg %p138
      $region38: #{_lambda_.9} parent=35 // pred_check_branch
        %3166 = sbr.rel (%p3164) target = $region40
      $region39: #{_lambda_.9} parent=35 // pred_region
        _
      $region40: #{_lambda_.9} parent=35 // pred_fallthru
        _
    $region36: #{_lambda_.9} parent=5 // pred_fallthru
      _
    %p3167 = scmp.le.s32.totalorder 2, %s10
    // Predicated region
    $region41: #{_lambda_.9} parent=5 // pred_check
      %p3168 = pneg %p3167
    $region42: #{_lambda_.9} parent=5 // pred_check_branch
      %3170 = sbr.rel (%p3168) target = $region44
    $region43: #{_lambda_.9} parent=5 // pred_region
      %s3171 = ssub.s32 %s10, 2
      // Predicated region
      $region45: #{_lambda_.9} parent=43 // pred_check
        %p3172 = pneg %p144
      $region46: #{_lambda_.9} parent=43 // pred_check_branch
        %3174 = sbr.rel (%p3172) target = $region48
      $region47: #{_lambda_.9} parent=43 // pred_region
        %p3175 = scmp.lt.s32.totalorder %s21, 1
        %s3176 = scalar_select %p3175, %s21, 1
        %p3177 = scmp.lt.s32.totalorder %s22, 0
        %s3178 = scalar_select %p3177, %s22, 0
        %s3179 = smul.addr %s3176, 2
        %s3180 = sadd.s32 %s3178, %s3179
        %s3181 = smul.addr %s3180, 8
        %s3182 = scalar_lea.vmem %s4, %s3181
      $region48: #{_lambda_.9} parent=43 // pred_fallthru
        _
    $region44: #{_lambda_.9} parent=5 // pred_fallthru
      _
  $region6: #{_lambda_.9} parent=0 // loop_footer
    %s14 = sadd.s32 1, %s10
  $region7: #{_lambda_.9} parent=0 // loop_footer_branch
    %9 = sbr.rel target = $region3
  $region8: #{_lambda_.9} parent=0 // loop_exit
    _

</llo_original>
